<compile_context>
chip_gen: v6e
topology: v6e:2x2x1
jax: 0.10.0
libtpu: 0.0.40
codegen_flags: <defaults>
</compile_context>

<pallas_src>
import jax
import jax.numpy as jnp
from jax import lax
from jax.experimental import pallas as pl
from jax.experimental.pallas import tpu as pltpu


def _gru_kernel(idx_ref, wgi_hbm, whh_ref, bhn_ref, h0_ref,
                out_ref, hT_ref, gi_buf, sem):
    """Shapes (all static, derived from refs):
      idx_ref : (T*Bp,)       int32  SMEM  time-major, batch-padded token ids
      wgi_hbm : (V, 3*Hp)     f32    HBM   fused emb @ W_ih^T + b_ih + b_hh[r,z]
      whh_ref : (H, 3*Hp)     bf16   VMEM  W_hh^T, gate-lane-padded, no K padding
      bhn_ref : (1, Hp)       f32    VMEM  b_hh (n gate only)
      h0_ref  : (Bp, Hp)      f32    VMEM
      out_ref : (T, Bp, Hp)   f32    VMEM  time-major hidden states
      hT_ref  : (Bp, Hp)      f32    VMEM  final hidden state
      gi_buf  : (2, Bp, 3*Hp) f32    VMEM  double-buffered gathered input rows
      sem     : (2,)          DMA semaphores (one per buffer slot)
    """
    T, Bp, Hp = out_ref.shape
    Hk = whh_ref.shape[0]          # true (un-padded) hidden size = MXU K dim

    def start_fetch(t, slot):
        # Gather the Bp fused-input rows of timestep t from HBM (pure DMA; the
        # old (rows, V) one-hot + matmul is gone).  Bp is small and static.
        for b in range(Bp):
            tok = idx_ref[t * Bp + b]
            pltpu.make_async_copy(wgi_hbm.at[tok], gi_buf.at[slot, b],
                                  sem.at[slot]).start()

    def wait_fetch(slot):
        # Each wait consumes one row's byte count; after Bp waits all Bp row
        # copies issued on sem[slot] have completed.  Descriptor refs only carry
        # the shape, so static indices are fine here.
        for _ in range(Bp):
            pltpu.make_async_copy(wgi_hbm.at[0], gi_buf.at[0, 0],
                                  sem.at[slot]).wait()

    start_fetch(0, 0)                                    # prime slot 0

    bhn = jnp.broadcast_to(bhn_ref[...], (Bp, Hp))       # hoisted (1 vreg)

    def step(t, h_prev):
        slot = t % 2
        wait_fetch(slot)

        @pl.when(t + 1 < T)
        def _():
            start_fetch(t + 1, 1 - slot)                 # prefetch next step

        gi = gi_buf[slot]                                # (Bp, 3*Hp), biases pre-folded
        # Only the hidden-state projection remains inside the recurrence.
        # W_hh is re-read from VMEM each step (not pinned in vregs across the
        # unrolled loop); bf16 x bf16 with f32 accumulation, K = Hk.
        gh = jnp.dot(h_prev[:, :Hk].astype(jnp.bfloat16), whh_ref[...],
                     preferred_element_type=jnp.float32)  # (Bp, 3*Hp)
        # lane-aligned gate blocks: [0:Hp]=r, [Hp:2Hp]=z, [2Hp:3Hp]=n
        r = jax.nn.sigmoid(gi[:, 0:Hp] + gh[:, 0:Hp])
        z = jax.nn.sigmoid(gi[:, Hp:2 * Hp] + gh[:, Hp:2 * Hp])
        n = jnp.tanh(gi[:, 2 * Hp:] + r * (gh[:, 2 * Hp:] + bhn))
        h_new = (1.0 - z) * n + z * h_prev
        out_ref[t] = h_new                               # dense (8,128) store
        return h_new

    # T is small and static here -> full unroll is appropriate.
    hT_ref[...] = lax.fori_loop(0, T, step, h0_ref[...], unroll=True)


def make_encoder_gru_params(emb_mat, w_ih, w_hh, b_ih, b_hh):
    """One-time weight preparation; cache the result across forward calls."""
    V, _ = emb_mat.shape
    H = w_hh.shape[1]
    Hp = ((H + 127) // 128) * 128        # lane-pad each gate to a 128 multiple

    def pad_gate_cols(w):
        # (..., 3H) -> (..., 3*Hp): each gate block zero-padded to Hp lanes.
        parts = []
        for g in range(3):
            blk = w[..., g * H:(g + 1) * H]
            parts.append(jnp.pad(blk, [(0, 0)] * (w.ndim - 1) + [(0, Hp - H)]))
        return jnp.concatenate(parts, axis=-1)

    # r/z components of b_hh commute out of the recurrence -> fold them (and all
    # of b_ih) into the gathered rows; only b_hh_n stays inside r * ( . ).
    b_pre = b_ih + jnp.concatenate(
        [b_hh[:H], b_hh[H:2 * H], jnp.zeros_like(b_hh[2 * H:])])
    # Fused table: one gathered row == x_t @ W_ih^T + b_ih + b_hh[r,z].
    w_gi = pad_gate_cols(emb_mat @ w_ih.T + b_pre[None, :]).astype(jnp.float32)
    w_hh_p = pad_gate_cols(w_hh.T).astype(jnp.bfloat16)             # (H, 3*Hp)
    b_hh_n = jnp.pad(b_hh[2 * H:].reshape(1, H),
                     ((0, 0), (0, Hp - H))).astype(jnp.float32)     # (1, Hp)
    return dict(w_gi=w_gi, w_hh=w_hh_p, b_hh_n=b_hh_n, H=H, Hp=Hp, V=V)


def encoder_gru_forward(params, idx, hidden):
    """idx: (B, T) int32; hidden: (1, B, H) f32.

    Returns (output (B, T, H), hidden (1, B, H)) -- same semantics as
    EncoderGRU.forward (embedding -> nn.GRU(batch_first=True), gates [r, z, n]).
    """
    B, T = idx.shape
    H, Hp = params["H"], params["Hp"]
    Bp = ((B + 7) // 8) * 8              # sublane-pad the batch

    h0 = jnp.pad(hidden[0].astype(jnp.float32), ((0, Bp - B), (0, Hp - H)))
    # Time-major, batch-padded token ids; padded batch rows gather table row 0
    # and run a harmless garbage recurrence that is sliced off below.
    idx_flat = jnp.pad(idx.T.astype(jnp.int32),
                       ((0, 0), (0, Bp - B))).reshape(T * Bp)

    out_k, h_T = pl.pallas_call(
        _gru_kernel,
        grid=(),
        in_specs=[
            pl.BlockSpec(memory_space=pltpu.MemorySpace.SMEM),   # token ids
            pl.BlockSpec(memory_space=pl.ANY),                   # w_gi stays in HBM
            pl.BlockSpec(memory_space=pltpu.MemorySpace.VMEM),   # w_hh (bf16)
            pl.BlockSpec(memory_space=pltpu.MemorySpace.VMEM),   # b_hh_n
            pl.BlockSpec(memory_space=pltpu.MemorySpace.VMEM),   # h0
        ],
        out_specs=(
            pl.BlockSpec(memory_space=pltpu.MemorySpace.VMEM),
            pl.BlockSpec(memory_space=pltpu.MemorySpace.VMEM),
        ),
        out_shape=(
            jax.ShapeDtypeStruct((T, Bp, Hp), jnp.float32),
            jax.ShapeDtypeStruct((Bp, Hp), jnp.float32),
        ),
        scratch_shapes=[
            pltpu.VMEM((2, Bp, 3 * Hp), jnp.float32),            # GI double buffer
            pltpu.SemaphoreType.DMA((2,)),
        ],
        compiler_params=pltpu.CompilerParams(
            vmem_limit_bytes=32 * 1024 * 1024),
    )(idx_flat, params["w_gi"], params["w_hh"], params["b_hh_n"], h0)

    output = jnp.transpose(out_k, (1, 0, 2))[:B, :, :H]   # (B, T, H) batch-first
    h_final = h_T[:B, :H][None, :, :]                     # (1, B, H)
    return output, h_final


def _reference_forward(idx, hidden, emb_mat, w_ih, w_hh, b_ih, b_hh):
    """Pure-JAX reference matching torch embedding + nn.GRU(batch_first)."""
    H = w_hh.shape[1]
    x = emb_mat[idx]                  # (B, T, E)
    h = hidden[0]                     # (B, H)
    outs = []
    for t in range(idx.shape[1]):
        x_t = x[:, t, :]
        gi = x_t @ w_ih.T + b_ih
        gh = h @ w_hh.T + b_hh
        i_r, i_z, i_n = gi[:, :H], gi[:, H:2 * H], gi[:, 2 * H:]
        h_r, h_z, h_n = gh[:, :H], gh[:, H:2 * H], gh[:, 2 * H:]
        r = jax.nn.sigmoid(i_r + h_r)
        z = jax.nn.sigmoid(i_z + h_z)
        n = jnp.tanh(i_n + r * h_n)
        h = (1.0 - z) * n + z * h
        outs.append(h)
    return jnp.stack(outs, axis=1), h[None]


if __name__ == "__main__":
    # small, forward-consistent shapes
    B, T = 2, 8          # batch, sequence length
    V, E = 50, 16        # vocab size, embedding dim (weight_mat shape)
    H = 32               # hidden_size
    direction, layer = 1, 1

    key = jax.random.PRNGKey(0)
    k_emb, k_wih, k_whh, k_bih, k_bhh, k_idx = jax.random.split(key, 6)

    # deterministic "pretrained" embedding matrix + GRU parameters
    emb_mat = jax.random.normal(k_emb, (V, E), dtype=jnp.float32) * 0.1
    w_ih = jax.random.normal(k_wih, (3 * H, E), dtype=jnp.float32) * 0.1
    w_hh = jax.random.normal(k_whh, (3 * H, H), dtype=jnp.float32) * 0.1
    b_ih = jax.random.normal(k_bih, (3 * H,), dtype=jnp.float32) * 0.1
    b_hh = jax.random.normal(k_bhh, (3 * H,), dtype=jnp.float32) * 0.1

    idx = jax.random.randint(k_idx, (B, T), 0, V, dtype=jnp.int32)
    hidden0 = jnp.zeros((direction * layer, B, H), dtype=jnp.float32)  # initHidden

    # weight prep done once (cached), not per forward call
    params = make_encoder_gru_params(emb_mat, w_ih, w_hh, b_ih, b_hh)

    out, h_final = encoder_gru_forward(params, idx, hidden0)
    out = jax.block_until_ready(out)
    h_final = jax.block_until_ready(h_final)

    ref_out, ref_h = _reference_forward(idx, hidden0, emb_mat, w_ih, w_hh, b_ih, b_hh)
    assert out.shape == (B, T, H) and h_final.shape == (1, B, H)
    # tolerance loosened vs the pure-f32 version: W_hh / h operand of the
    # recurrent matmul are bf16 (f32 accumulation and gate math).
    assert jnp.allclose(out, ref_out, atol=2e-2), "output mismatch vs reference"
    assert jnp.allclose(h_final, ref_h, atol=2e-2), "hidden mismatch vs reference"

    print("KERNEL_OK")
</pallas_src>

<mosaic_0001>
module attributes {stable_mosaic.version = 11 : i64} {
  func.func @_gru_kernel(%arg0: memref<64xi32, #tpu.memory_space<smem>>, %arg1: memref<50x384xf32, #tpu.memory_space<any>>, %arg2: memref<32x384xbf16, #tpu.memory_space<vmem>>, %arg3: memref<1x128xf32, #tpu.memory_space<vmem>>, %arg4: memref<8x128xf32, #tpu.memory_space<vmem>>, %arg5: memref<8x8x128xf32, #tpu.memory_space<vmem>>, %arg6: memref<8x128xf32, #tpu.memory_space<vmem>>, %arg7: memref<2x8x384xf32, #tpu.memory_space<vmem>>, %arg8: memref<2x!tpu.dma_semaphore, #tpu.memory_space<semaphore_mem>>) attributes {dimension_semantics = [], scalar_prefetch = 0 : i64, scratch_operands = 2 : i64, tpu.core_type = #tpu.core_type<tc>} {
    %c0 = arith.constant 0 : index
    %0 = memref.load %arg0[%c0] : memref<64xi32, #tpu.memory_space<smem>>
    %c0_i32 = arith.constant 0 : i32
    %c0_i32_0 = arith.constant 0 : i32
    %c0_i32_1 = arith.constant 0 : i32
    %c0_i32_2 = arith.constant 0 : i32
    %1 = tpu.memref_slice %arg1[%0, %c0_i32_2] : memref<50x384xf32, #tpu.memory_space<any>> -> memref<1x384xf32, #tpu.memory_space<any>>
    %2 = tpu.memref_squeeze %1 : memref<1x384xf32, #tpu.memory_space<any>> -> memref<384xf32, #tpu.memory_space<any>>
    %c0_i32_3 = arith.constant 0 : i32
    %3 = tpu.memref_slice %arg7[%c0_i32, %c0_i32_0, %c0_i32_3] : memref<2x8x384xf32, #tpu.memory_space<vmem>> -> memref<1x1x384xf32, #tpu.memory_space<vmem>>
    %4 = tpu.memref_squeeze %3 : memref<1x1x384xf32, #tpu.memory_space<vmem>> -> memref<384xf32, #tpu.memory_space<vmem>>
    %5 = tpu.memref_slice %arg8[%c0_i32_1] : memref<2x!tpu.dma_semaphore, #tpu.memory_space<semaphore_mem>> -> memref<1x!tpu.dma_semaphore, #tpu.memory_space<semaphore_mem>>
    %6 = tpu.memref_squeeze %5 : memref<1x!tpu.dma_semaphore, #tpu.memory_space<semaphore_mem>> -> memref<!tpu.dma_semaphore, #tpu.memory_space<semaphore_mem>>
    tpu.enqueue_dma source(%2 : memref<384xf32, #tpu.memory_space<any>>) target(%4 : memref<384xf32, #tpu.memory_space<vmem>>) target_semaphore(%6 : memref<!tpu.dma_semaphore, #tpu.memory_space<semaphore_mem>>)
    %c1 = arith.constant 1 : index
    %7 = memref.load %arg0[%c1] : memref<64xi32, #tpu.memory_space<smem>>
    %c0_i32_4 = arith.constant 0 : i32
    %c1_i32 = arith.constant 1 : i32
    %c0_i32_5 = arith.constant 0 : i32
    %c0_i32_6 = arith.constant 0 : i32
    %8 = tpu.memref_slice %arg1[%7, %c0_i32_6] : memref<50x384xf32, #tpu.memory_space<any>> -> memref<1x384xf32, #tpu.memory_space<any>>
    %9 = tpu.memref_squeeze %8 : memref<1x384xf32, #tpu.memory_space<any>> -> memref<384xf32, #tpu.memory_space<any>>
    %c0_i32_7 = arith.constant 0 : i32
    %10 = tpu.memref_slice %arg7[%c0_i32_4, %c1_i32, %c0_i32_7] : memref<2x8x384xf32, #tpu.memory_space<vmem>> -> memref<1x1x384xf32, #tpu.memory_space<vmem>>
    %11 = tpu.memref_squeeze %10 : memref<1x1x384xf32, #tpu.memory_space<vmem>> -> memref<384xf32, #tpu.memory_space<vmem>>
    %12 = tpu.memref_slice %arg8[%c0_i32_5] : memref<2x!tpu.dma_semaphore, #tpu.memory_space<semaphore_mem>> -> memref<1x!tpu.dma_semaphore, #tpu.memory_space<semaphore_mem>>
    %13 = tpu.memref_squeeze %12 : memref<1x!tpu.dma_semaphore, #tpu.memory_space<semaphore_mem>> -> memref<!tpu.dma_semaphore, #tpu.memory_space<semaphore_mem>>
    tpu.enqueue_dma source(%9 : memref<384xf32, #tpu.memory_space<any>>) target(%11 : memref<384xf32, #tpu.memory_space<vmem>>) target_semaphore(%13 : memref<!tpu.dma_semaphore, #tpu.memory_space<semaphore_mem>>)
    %c2 = arith.constant 2 : index
    %14 = memref.load %arg0[%c2] : memref<64xi32, #tpu.memory_space<smem>>
    %c0_i32_8 = arith.constant 0 : i32
    %c2_i32 = arith.constant 2 : i32
    %c0_i32_9 = arith.constant 0 : i32
    %c0_i32_10 = arith.constant 0 : i32
    %15 = tpu.memref_slice %arg1[%14, %c0_i32_10] : memref<50x384xf32, #tpu.memory_space<any>> -> memref<1x384xf32, #tpu.memory_space<any>>
    %16 = tpu.memref_squeeze %15 : memref<1x384xf32, #tpu.memory_space<any>> -> memref<384xf32, #tpu.memory_space<any>>
    %c0_i32_11 = arith.constant 0 : i32
    %17 = tpu.memref_slice %arg7[%c0_i32_8, %c2_i32, %c0_i32_11] : memref<2x8x384xf32, #tpu.memory_space<vmem>> -> memref<1x1x384xf32, #tpu.memory_space<vmem>>
    %18 = tpu.memref_squeeze %17 : memref<1x1x384xf32, #tpu.memory_space<vmem>> -> memref<384xf32, #tpu.memory_space<vmem>>
    %19 = tpu.memref_slice %arg8[%c0_i32_9] : memref<2x!tpu.dma_semaphore, #tpu.memory_space<semaphore_mem>> -> memref<1x!tpu.dma_semaphore, #tpu.memory_space<semaphore_mem>>
    %20 = tpu.memref_squeeze %19 : memref<1x!tpu.dma_semaphore, #tpu.memory_space<semaphore_mem>> -> memref<!tpu.dma_semaphore, #tpu.memory_space<semaphore_mem>>
    tpu.enqueue_dma source(%16 : memref<384xf32, #tpu.memory_space<any>>) target(%18 : memref<384xf32, #tpu.memory_space<vmem>>) target_semaphore(%20 : memref<!tpu.dma_semaphore, #tpu.memory_space<semaphore_mem>>)
    %c3 = arith.constant 3 : index
    %21 = memref.load %arg0[%c3] : memref<64xi32, #tpu.memory_space<smem>>
    %c0_i32_12 = arith.constant 0 : i32
    %c3_i32 = arith.constant 3 : i32
    %c0_i32_13 = arith.constant 0 : i32
    %c0_i32_14 = arith.constant 0 : i32
    %22 = tpu.memref_slice %arg1[%21, %c0_i32_14] : memref<50x384xf32, #tpu.memory_space<any>> -> memref<1x384xf32, #tpu.memory_space<any>>
    %23 = tpu.memref_squeeze %22 : memref<1x384xf32, #tpu.memory_space<any>> -> memref<384xf32, #tpu.memory_space<any>>
    %c0_i32_15 = arith.constant 0 : i32
    %24 = tpu.memref_slice %arg7[%c0_i32_12, %c3_i32, %c0_i32_15] : memref<2x8x384xf32, #tpu.memory_space<vmem>> -> memref<1x1x384xf32, #tpu.memory_space<vmem>>
    %25 = tpu.memref_squeeze %24 : memref<1x1x384xf32, #tpu.memory_space<vmem>> -> memref<384xf32, #tpu.memory_space<vmem>>
    %26 = tpu.memref_slice %arg8[%c0_i32_13] : memref<2x!tpu.dma_semaphore, #tpu.memory_space<semaphore_mem>> -> memref<1x!tpu.dma_semaphore, #tpu.memory_space<semaphore_mem>>
    %27 = tpu.memref_squeeze %26 : memref<1x!tpu.dma_semaphore, #tpu.memory_space<semaphore_mem>> -> memref<!tpu.dma_semaphore, #tpu.memory_space<semaphore_mem>>
    tpu.enqueue_dma source(%23 : memref<384xf32, #tpu.memory_space<any>>) target(%25 : memref<384xf32, #tpu.memory_space<vmem>>) target_semaphore(%27 : memref<!tpu.dma_semaphore, #tpu.memory_space<semaphore_mem>>)
    %c4 = arith.constant 4 : index
    %28 = memref.load %arg0[%c4] : memref<64xi32, #tpu.memory_space<smem>>
    %c0_i32_16 = arith.constant 0 : i32
    %c4_i32 = arith.constant 4 : i32
    %c0_i32_17 = arith.constant 0 : i32
    %c0_i32_18 = arith.constant 0 : i32
    %29 = tpu.memref_slice %arg1[%28, %c0_i32_18] : memref<50x384xf32, #tpu.memory_space<any>> -> memref<1x384xf32, #tpu.memory_space<any>>
    %30 = tpu.memref_squeeze %29 : memref<1x384xf32, #tpu.memory_space<any>> -> memref<384xf32, #tpu.memory_space<any>>
    %c0_i32_19 = arith.constant 0 : i32
    %31 = tpu.memref_slice %arg7[%c0_i32_16, %c4_i32, %c0_i32_19] : memref<2x8x384xf32, #tpu.memory_space<vmem>> -> memref<1x1x384xf32, #tpu.memory_space<vmem>>
    %32 = tpu.memref_squeeze %31 : memref<1x1x384xf32, #tpu.memory_space<vmem>> -> memref<384xf32, #tpu.memory_space<vmem>>
    %33 = tpu.memref_slice %arg8[%c0_i32_17] : memref<2x!tpu.dma_semaphore, #tpu.memory_space<semaphore_mem>> -> memref<1x!tpu.dma_semaphore, #tpu.memory_space<semaphore_mem>>
    %34 = tpu.memref_squeeze %33 : memref<1x!tpu.dma_semaphore, #tpu.memory_space<semaphore_mem>> -> memref<!tpu.dma_semaphore, #tpu.memory_space<semaphore_mem>>
    tpu.enqueue_dma source(%30 : memref<384xf32, #tpu.memory_space<any>>) target(%32 : memref<384xf32, #tpu.memory_space<vmem>>) target_semaphore(%34 : memref<!tpu.dma_semaphore, #tpu.memory_space<semaphore_mem>>)
    %c5 = arith.constant 5 : index
    %35 = memref.load %arg0[%c5] : memref<64xi32, #tpu.memory_space<smem>>
    %c0_i32_20 = arith.constant 0 : i32
    %c5_i32 = arith.constant 5 : i32
    %c0_i32_21 = arith.constant 0 : i32
    %c0_i32_22 = arith.constant 0 : i32
    %36 = tpu.memref_slice %arg1[%35, %c0_i32_22] : memref<50x384xf32, #tpu.memory_space<any>> -> memref<1x384xf32, #tpu.memory_space<any>>
    %37 = tpu.memref_squeeze %36 : memref<1x384xf32, #tpu.memory_space<any>> -> memref<384xf32, #tpu.memory_space<any>>
    %c0_i32_23 = arith.constant 0 : i32
    %38 = tpu.memref_slice %arg7[%c0_i32_20, %c5_i32, %c0_i32_23] : memref<2x8x384xf32, #tpu.memory_space<vmem>> -> memref<1x1x384xf32, #tpu.memory_space<vmem>>
    %39 = tpu.memref_squeeze %38 : memref<1x1x384xf32, #tpu.memory_space<vmem>> -> memref<384xf32, #tpu.memory_space<vmem>>
    %40 = tpu.memref_slice %arg8[%c0_i32_21] : memref<2x!tpu.dma_semaphore, #tpu.memory_space<semaphore_mem>> -> memref<1x!tpu.dma_semaphore, #tpu.memory_space<semaphore_mem>>
    %41 = tpu.memref_squeeze %40 : memref<1x!tpu.dma_semaphore, #tpu.memory_space<semaphore_mem>> -> memref<!tpu.dma_semaphore, #tpu.memory_space<semaphore_mem>>
    tpu.enqueue_dma source(%37 : memref<384xf32, #tpu.memory_space<any>>) target(%39 : memref<384xf32, #tpu.memory_space<vmem>>) target_semaphore(%41 : memref<!tpu.dma_semaphore, #tpu.memory_space<semaphore_mem>>)
    %c6 = arith.constant 6 : index
    %42 = memref.load %arg0[%c6] : memref<64xi32, #tpu.memory_space<smem>>
    %c0_i32_24 = arith.constant 0 : i32
    %c6_i32 = arith.constant 6 : i32
    %c0_i32_25 = arith.constant 0 : i32
    %c0_i32_26 = arith.constant 0 : i32
    %43 = tpu.memref_slice %arg1[%42, %c0_i32_26] : memref<50x384xf32, #tpu.memory_space<any>> -> memref<1x384xf32, #tpu.memory_space<any>>
    %44 = tpu.memref_squeeze %43 : memref<1x384xf32, #tpu.memory_space<any>> -> memref<384xf32, #tpu.memory_space<any>>
    %c0_i32_27 = arith.constant 0 : i32
    %45 = tpu.memref_slice %arg7[%c0_i32_24, %c6_i32, %c0_i32_27] : memref<2x8x384xf32, #tpu.memory_space<vmem>> -> memref<1x1x384xf32, #tpu.memory_space<vmem>>
    %46 = tpu.memref_squeeze %45 : memref<1x1x384xf32, #tpu.memory_space<vmem>> -> memref<384xf32, #tpu.memory_space<vmem>>
    %47 = tpu.memref_slice %arg8[%c0_i32_25] : memref<2x!tpu.dma_semaphore, #tpu.memory_space<semaphore_mem>> -> memref<1x!tpu.dma_semaphore, #tpu.memory_space<semaphore_mem>>
    %48 = tpu.memref_squeeze %47 : memref<1x!tpu.dma_semaphore, #tpu.memory_space<semaphore_mem>> -> memref<!tpu.dma_semaphore, #tpu.memory_space<semaphore_mem>>
    tpu.enqueue_dma source(%44 : memref<384xf32, #tpu.memory_space<any>>) target(%46 : memref<384xf32, #tpu.memory_space<vmem>>) target_semaphore(%48 : memref<!tpu.dma_semaphore, #tpu.memory_space<semaphore_mem>>)
    %c7 = arith.constant 7 : index
    %49 = memref.load %arg0[%c7] : memref<64xi32, #tpu.memory_space<smem>>
    %c0_i32_28 = arith.constant 0 : i32
    %c7_i32 = arith.constant 7 : i32
    %c0_i32_29 = arith.constant 0 : i32
    %c0_i32_30 = arith.constant 0 : i32
    %50 = tpu.memref_slice %arg1[%49, %c0_i32_30] : memref<50x384xf32, #tpu.memory_space<any>> -> memref<1x384xf32, #tpu.memory_space<any>>
    %51 = tpu.memref_squeeze %50 : memref<1x384xf32, #tpu.memory_space<any>> -> memref<384xf32, #tpu.memory_space<any>>
    %c0_i32_31 = arith.constant 0 : i32
    %52 = tpu.memref_slice %arg7[%c0_i32_28, %c7_i32, %c0_i32_31] : memref<2x8x384xf32, #tpu.memory_space<vmem>> -> memref<1x1x384xf32, #tpu.memory_space<vmem>>
    %53 = tpu.memref_squeeze %52 : memref<1x1x384xf32, #tpu.memory_space<vmem>> -> memref<384xf32, #tpu.memory_space<vmem>>
    %54 = tpu.memref_slice %arg8[%c0_i32_29] : memref<2x!tpu.dma_semaphore, #tpu.memory_space<semaphore_mem>> -> memref<1x!tpu.dma_semaphore, #tpu.memory_space<semaphore_mem>>
    %55 = tpu.memref_squeeze %54 : memref<1x!tpu.dma_semaphore, #tpu.memory_space<semaphore_mem>> -> memref<!tpu.dma_semaphore, #tpu.memory_space<semaphore_mem>>
    tpu.enqueue_dma source(%51 : memref<384xf32, #tpu.memory_space<any>>) target(%53 : memref<384xf32, #tpu.memory_space<vmem>>) target_semaphore(%55 : memref<!tpu.dma_semaphore, #tpu.memory_space<semaphore_mem>>)
    %c0_32 = arith.constant 0 : index
    %c0_33 = arith.constant 0 : index
    %56 = vector.load %arg3[%c0_32, %c0_33] : memref<1x128xf32, #tpu.memory_space<vmem>>, vector<1x128xf32>
    %57 = vector.shape_cast %56 : vector<1x128xf32> to vector<1x128xf32>
    %58 = vector.broadcast %57 : vector<1x128xf32> to vector<8x128xf32>
    %c0_34 = arith.constant 0 : index
    %c0_35 = arith.constant 0 : index
    %59 = vector.load %arg4[%c0_34, %c0_35] : memref<8x128xf32, #tpu.memory_space<vmem>>, vector<8x128xf32>
    %c0_i32_36 = arith.constant 0 : i32
    %c2_i32_37 = arith.constant 2 : i32
    %c0_i32_38 = arith.constant 0 : i32
    %60 = arith.cmpi eq, %c2_i32_37, %c0_i32_38 : i32
    %c1_i32_39 = arith.constant 1 : i32
    %61 = arith.select %60, %c1_i32_39, %c2_i32_37 : i32
    %62 = arith.remsi %c0_i32_36, %61 : i32
    %c0_i32_40 = arith.constant 0 : i32
    %63 = arith.cmpi ne, %62, %c0_i32_40 : i32
    %c0_i32_41 = arith.constant 0 : i32
    %64 = arith.cmpi slt, %62, %c0_i32_41 : i32
    %c0_i32_42 = arith.constant 0 : i32
    %65 = arith.cmpi slt, %61, %c0_i32_42 : i32
    %66 = arith.xori %64, %65 : i1
    %67 = arith.andi %66, %63 : i1
    %68 = arith.addi %62, %61 : i32
    %69 = arith.select %67, %68, %62 : i32
    %c0_i32_43 = arith.constant 0 : i32
    %c0_i32_44 = arith.constant 0 : i32
    %c0_i32_45 = arith.constant 0 : i32
    %c0_i32_46 = arith.constant 0 : i32
    %70 = tpu.memref_slice %arg1[%c0_i32_43, %c0_i32_46] : memref<50x384xf32, #tpu.memory_space<any>> -> memref<1x384xf32, #tpu.memory_space<any>>
    %71 = tpu.memref_squeeze %70 : memref<1x384xf32, #tpu.memory_space<any>> -> memref<384xf32, #tpu.memory_space<any>>
    %c0_i32_47 = arith.constant 0 : i32
    %72 = tpu.memref_slice %arg7[%c0_i32_44, %c0_i32_45, %c0_i32_47] : memref<2x8x384xf32, #tpu.memory_space<vmem>> -> memref<1x1x384xf32, #tpu.memory_space<vmem>>
    %73 = tpu.memref_squeeze %72 : memref<1x1x384xf32, #tpu.memory_space<vmem>> -> memref<384xf32, #tpu.memory_space<vmem>>
    %74 = tpu.memref_slice %arg8[%69] : memref<2x!tpu.dma_semaphore, #tpu.memory_space<semaphore_mem>> -> memref<1x!tpu.dma_semaphore, #tpu.memory_space<semaphore_mem>>
    %75 = tpu.memref_squeeze %74 : memref<1x!tpu.dma_semaphore, #tpu.memory_space<semaphore_mem>> -> memref<!tpu.dma_semaphore, #tpu.memory_space<semaphore_mem>>
    tpu.wait_dma2 semaphore(%75 : memref<!tpu.dma_semaphore, #tpu.memory_space<semaphore_mem>>) src(%71 : memref<384xf32, #tpu.memory_space<any>>) dst(%73 : memref<384xf32, #tpu.memory_space<vmem>>)
    %c0_i32_48 = arith.constant 0 : i32
    %c0_i32_49 = arith.constant 0 : i32
    %c0_i32_50 = arith.constant 0 : i32
    %c0_i32_51 = arith.constant 0 : i32
    %76 = tpu.memref_slice %arg1[%c0_i32_48, %c0_i32_51] : memref<50x384xf32, #tpu.memory_space<any>> -> memref<1x384xf32, #tpu.memory_space<any>>
    %77 = tpu.memref_squeeze %76 : memref<1x384xf32, #tpu.memory_space<any>> -> memref<384xf32, #tpu.memory_space<any>>
    %c0_i32_52 = arith.constant 0 : i32
    %78 = tpu.memref_slice %arg7[%c0_i32_49, %c0_i32_50, %c0_i32_52] : memref<2x8x384xf32, #tpu.memory_space<vmem>> -> memref<1x1x384xf32, #tpu.memory_space<vmem>>
    %79 = tpu.memref_squeeze %78 : memref<1x1x384xf32, #tpu.memory_space<vmem>> -> memref<384xf32, #tpu.memory_space<vmem>>
    %80 = tpu.memref_slice %arg8[%69] : memref<2x!tpu.dma_semaphore, #tpu.memory_space<semaphore_mem>> -> memref<1x!tpu.dma_semaphore, #tpu.memory_space<semaphore_mem>>
    %81 = tpu.memref_squeeze %80 : memref<1x!tpu.dma_semaphore, #tpu.memory_space<semaphore_mem>> -> memref<!tpu.dma_semaphore, #tpu.memory_space<semaphore_mem>>
    tpu.wait_dma2 semaphore(%81 : memref<!tpu.dma_semaphore, #tpu.memory_space<semaphore_mem>>) src(%77 : memref<384xf32, #tpu.memory_space<any>>) dst(%79 : memref<384xf32, #tpu.memory_space<vmem>>)
    %c0_i32_53 = arith.constant 0 : i32
    %c0_i32_54 = arith.constant 0 : i32
    %c0_i32_55 = arith.constant 0 : i32
    %c0_i32_56 = arith.constant 0 : i32
    %82 = tpu.memref_slice %arg1[%c0_i32_53, %c0_i32_56] : memref<50x384xf32, #tpu.memory_space<any>> -> memref<1x384xf32, #tpu.memory_space<any>>
    %83 = tpu.memref_squeeze %82 : memref<1x384xf32, #tpu.memory_space<any>> -> memref<384xf32, #tpu.memory_space<any>>
    %c0_i32_57 = arith.constant 0 : i32
    %84 = tpu.memref_slice %arg7[%c0_i32_54, %c0_i32_55, %c0_i32_57] : memref<2x8x384xf32, #tpu.memory_space<vmem>> -> memref<1x1x384xf32, #tpu.memory_space<vmem>>
    %85 = tpu.memref_squeeze %84 : memref<1x1x384xf32, #tpu.memory_space<vmem>> -> memref<384xf32, #tpu.memory_space<vmem>>
    %86 = tpu.memref_slice %arg8[%69] : memref<2x!tpu.dma_semaphore, #tpu.memory_space<semaphore_mem>> -> memref<1x!tpu.dma_semaphore, #tpu.memory_space<semaphore_mem>>
    %87 = tpu.memref_squeeze %86 : memref<1x!tpu.dma_semaphore, #tpu.memory_space<semaphore_mem>> -> memref<!tpu.dma_semaphore, #tpu.memory_space<semaphore_mem>>
    tpu.wait_dma2 semaphore(%87 : memref<!tpu.dma_semaphore, #tpu.memory_space<semaphore_mem>>) src(%83 : memref<384xf32, #tpu.memory_space<any>>) dst(%85 : memref<384xf32, #tpu.memory_space<vmem>>)
    %c0_i32_58 = arith.constant 0 : i32
    %c0_i32_59 = arith.constant 0 : i32
    %c0_i32_60 = arith.constant 0 : i32
    %c0_i32_61 = arith.constant 0 : i32
    %88 = tpu.memref_slice %arg1[%c0_i32_58, %c0_i32_61] : memref<50x384xf32, #tpu.memory_space<any>> -> memref<1x384xf32, #tpu.memory_space<any>>
    %89 = tpu.memref_squeeze %88 : memref<1x384xf32, #tpu.memory_space<any>> -> memref<384xf32, #tpu.memory_space<any>>
    %c0_i32_62 = arith.constant 0 : i32
    %90 = tpu.memref_slice %arg7[%c0_i32_59, %c0_i32_60, %c0_i32_62] : memref<2x8x384xf32, #tpu.memory_space<vmem>> -> memref<1x1x384xf32, #tpu.memory_space<vmem>>
    %91 = tpu.memref_squeeze %90 : memref<1x1x384xf32, #tpu.memory_space<vmem>> -> memref<384xf32, #tpu.memory_space<vmem>>
    %92 = tpu.memref_slice %arg8[%69] : memref<2x!tpu.dma_semaphore, #tpu.memory_space<semaphore_mem>> -> memref<1x!tpu.dma_semaphore, #tpu.memory_space<semaphore_mem>>
    %93 = tpu.memref_squeeze %92 : memref<1x!tpu.dma_semaphore, #tpu.memory_space<semaphore_mem>> -> memref<!tpu.dma_semaphore, #tpu.memory_space<semaphore_mem>>
    tpu.wait_dma2 semaphore(%93 : memref<!tpu.dma_semaphore, #tpu.memory_space<semaphore_mem>>) src(%89 : memref<384xf32, #tpu.memory_space<any>>) dst(%91 : memref<384xf32, #tpu.memory_space<vmem>>)
    %c0_i32_63 = arith.constant 0 : i32
    %c0_i32_64 = arith.constant 0 : i32
    %c0_i32_65 = arith.constant 0 : i32
    %c0_i32_66 = arith.constant 0 : i32
    %94 = tpu.memref_slice %arg1[%c0_i32_63, %c0_i32_66] : memref<50x384xf32, #tpu.memory_space<any>> -> memref<1x384xf32, #tpu.memory_space<any>>
    %95 = tpu.memref_squeeze %94 : memref<1x384xf32, #tpu.memory_space<any>> -> memref<384xf32, #tpu.memory_space<any>>
    %c0_i32_67 = arith.constant 0 : i32
    %96 = tpu.memref_slice %arg7[%c0_i32_64, %c0_i32_65, %c0_i32_67] : memref<2x8x384xf32, #tpu.memory_space<vmem>> -> memref<1x1x384xf32, #tpu.memory_space<vmem>>
    %97 = tpu.memref_squeeze %96 : memref<1x1x384xf32, #tpu.memory_space<vmem>> -> memref<384xf32, #tpu.memory_space<vmem>>
    %98 = tpu.memref_slice %arg8[%69] : memref<2x!tpu.dma_semaphore, #tpu.memory_space<semaphore_mem>> -> memref<1x!tpu.dma_semaphore, #tpu.memory_space<semaphore_mem>>
    %99 = tpu.memref_squeeze %98 : memref<1x!tpu.dma_semaphore, #tpu.memory_space<semaphore_mem>> -> memref<!tpu.dma_semaphore, #tpu.memory_space<semaphore_mem>>
    tpu.wait_dma2 semaphore(%99 : memref<!tpu.dma_semaphore, #tpu.memory_space<semaphore_mem>>) src(%95 : memref<384xf32, #tpu.memory_space<any>>) dst(%97 : memref<384xf32, #tpu.memory_space<vmem>>)
    %c0_i32_68 = arith.constant 0 : i32
    %c0_i32_69 = arith.constant 0 : i32
    %c0_i32_70 = arith.constant 0 : i32
    %c0_i32_71 = arith.constant 0 : i32
    %100 = tpu.memref_slice %arg1[%c0_i32_68, %c0_i32_71] : memref<50x384xf32, #tpu.memory_space<any>> -> memref<1x384xf32, #tpu.memory_space<any>>
    %101 = tpu.memref_squeeze %100 : memref<1x384xf32, #tpu.memory_space<any>> -> memref<384xf32, #tpu.memory_space<any>>
    %c0_i32_72 = arith.constant 0 : i32
    %102 = tpu.memref_slice %arg7[%c0_i32_69, %c0_i32_70, %c0_i32_72] : memref<2x8x384xf32, #tpu.memory_space<vmem>> -> memref<1x1x384xf32, #tpu.memory_space<vmem>>
    %103 = tpu.memref_squeeze %102 : memref<1x1x384xf32, #tpu.memory_space<vmem>> -> memref<384xf32, #tpu.memory_space<vmem>>
    %104 = tpu.memref_slice %arg8[%69] : memref<2x!tpu.dma_semaphore, #tpu.memory_space<semaphore_mem>> -> memref<1x!tpu.dma_semaphore, #tpu.memory_space<semaphore_mem>>
    %105 = tpu.memref_squeeze %104 : memref<1x!tpu.dma_semaphore, #tpu.memory_space<semaphore_mem>> -> memref<!tpu.dma_semaphore, #tpu.memory_space<semaphore_mem>>
    tpu.wait_dma2 semaphore(%105 : memref<!tpu.dma_semaphore, #tpu.memory_space<semaphore_mem>>) src(%101 : memref<384xf32, #tpu.memory_space<any>>) dst(%103 : memref<384xf32, #tpu.memory_space<vmem>>)
    %c0_i32_73 = arith.constant 0 : i32
    %c0_i32_74 = arith.constant 0 : i32
    %c0_i32_75 = arith.constant 0 : i32
    %c0_i32_76 = arith.constant 0 : i32
    %106 = tpu.memref_slice %arg1[%c0_i32_73, %c0_i32_76] : memref<50x384xf32, #tpu.memory_space<any>> -> memref<1x384xf32, #tpu.memory_space<any>>
    %107 = tpu.memref_squeeze %106 : memref<1x384xf32, #tpu.memory_space<any>> -> memref<384xf32, #tpu.memory_space<any>>
    %c0_i32_77 = arith.constant 0 : i32
    %108 = tpu.memref_slice %arg7[%c0_i32_74, %c0_i32_75, %c0_i32_77] : memref<2x8x384xf32, #tpu.memory_space<vmem>> -> memref<1x1x384xf32, #tpu.memory_space<vmem>>
    %109 = tpu.memref_squeeze %108 : memref<1x1x384xf32, #tpu.memory_space<vmem>> -> memref<384xf32, #tpu.memory_space<vmem>>
    %110 = tpu.memref_slice %arg8[%69] : memref<2x!tpu.dma_semaphore, #tpu.memory_space<semaphore_mem>> -> memref<1x!tpu.dma_semaphore, #tpu.memory_space<semaphore_mem>>
    %111 = tpu.memref_squeeze %110 : memref<1x!tpu.dma_semaphore, #tpu.memory_space<semaphore_mem>> -> memref<!tpu.dma_semaphore, #tpu.memory_space<semaphore_mem>>
    tpu.wait_dma2 semaphore(%111 : memref<!tpu.dma_semaphore, #tpu.memory_space<semaphore_mem>>) src(%107 : memref<384xf32, #tpu.memory_space<any>>) dst(%109 : memref<384xf32, #tpu.memory_space<vmem>>)
    %c0_i32_78 = arith.constant 0 : i32
    %c0_i32_79 = arith.constant 0 : i32
    %c0_i32_80 = arith.constant 0 : i32
    %c0_i32_81 = arith.constant 0 : i32
    %112 = tpu.memref_slice %arg1[%c0_i32_78, %c0_i32_81] : memref<50x384xf32, #tpu.memory_space<any>> -> memref<1x384xf32, #tpu.memory_space<any>>
    %113 = tpu.memref_squeeze %112 : memref<1x384xf32, #tpu.memory_space<any>> -> memref<384xf32, #tpu.memory_space<any>>
    %c0_i32_82 = arith.constant 0 : i32
    %114 = tpu.memref_slice %arg7[%c0_i32_79, %c0_i32_80, %c0_i32_82] : memref<2x8x384xf32, #tpu.memory_space<vmem>> -> memref<1x1x384xf32, #tpu.memory_space<vmem>>
    %115 = tpu.memref_squeeze %114 : memref<1x1x384xf32, #tpu.memory_space<vmem>> -> memref<384xf32, #tpu.memory_space<vmem>>
    %116 = tpu.memref_slice %arg8[%69] : memref<2x!tpu.dma_semaphore, #tpu.memory_space<semaphore_mem>> -> memref<1x!tpu.dma_semaphore, #tpu.memory_space<semaphore_mem>>
    %117 = tpu.memref_squeeze %116 : memref<1x!tpu.dma_semaphore, #tpu.memory_space<semaphore_mem>> -> memref<!tpu.dma_semaphore, #tpu.memory_space<semaphore_mem>>
    tpu.wait_dma2 semaphore(%117 : memref<!tpu.dma_semaphore, #tpu.memory_space<semaphore_mem>>) src(%113 : memref<384xf32, #tpu.memory_space<any>>) dst(%115 : memref<384xf32, #tpu.memory_space<vmem>>)
    %c1_i32_83 = arith.constant 1 : i32
    %118 = arith.addi %c0_i32_36, %c1_i32_83 : i32
    %c8_i32 = arith.constant 8 : i32
    %119 = arith.cmpi slt, %118, %c8_i32 : i32
    %120 = arith.extui %119 : i1 to i32
    %c0_i32_84 = arith.constant 0 : i32
    %121 = arith.cmpi ne, %120, %c0_i32_84 : i32
    scf.if %121 {
      %c1_i32_517 = arith.constant 1 : i32
      %861 = arith.addi %c0_i32_36, %c1_i32_517 : i32
      %c1_i32_518 = arith.constant 1 : i32
      %862 = arith.subi %c1_i32_518, %69 : i32
      %c8_i32_519 = arith.constant 8 : i32
      %863 = arith.muli %861, %c8_i32_519 : i32
      %c0_i32_520 = arith.constant 0 : i32
      %864 = arith.addi %863, %c0_i32_520 : i32
      %865 = arith.index_cast %864 : i32 to index
      %866 = memref.load %arg0[%865] : memref<64xi32, #tpu.memory_space<smem>>
      %c0_i32_521 = arith.constant 0 : i32
      %c0_i32_522 = arith.constant 0 : i32
      %867 = tpu.memref_slice %arg1[%866, %c0_i32_522] : memref<50x384xf32, #tpu.memory_space<any>> -> memref<1x384xf32, #tpu.memory_space<any>>
      %868 = tpu.memref_squeeze %867 : memref<1x384xf32, #tpu.memory_space<any>> -> memref<384xf32, #tpu.memory_space<any>>
      %c0_i32_523 = arith.constant 0 : i32
      %869 = tpu.memref_slice %arg7[%862, %c0_i32_521, %c0_i32_523] : memref<2x8x384xf32, #tpu.memory_space<vmem>> -> memref<1x1x384xf32, #tpu.memory_space<vmem>>
      %870 = tpu.memref_squeeze %869 : memref<1x1x384xf32, #tpu.memory_space<vmem>> -> memref<384xf32, #tpu.memory_space<vmem>>
      %871 = tpu.memref_slice %arg8[%862] : memref<2x!tpu.dma_semaphore, #tpu.memory_space<semaphore_mem>> -> memref<1x!tpu.dma_semaphore, #tpu.memory_space<semaphore_mem>>
      %872 = tpu.memref_squeeze %871 : memref<1x!tpu.dma_semaphore, #tpu.memory_space<semaphore_mem>> -> memref<!tpu.dma_semaphore, #tpu.memory_space<semaphore_mem>>
      tpu.enqueue_dma source(%868 : memref<384xf32, #tpu.memory_space<any>>) target(%870 : memref<384xf32, #tpu.memory_space<vmem>>) target_semaphore(%872 : memref<!tpu.dma_semaphore, #tpu.memory_space<semaphore_mem>>)
      %c8_i32_524 = arith.constant 8 : i32
      %873 = arith.muli %861, %c8_i32_524 : i32
      %c1_i32_525 = arith.constant 1 : i32
      %874 = arith.addi %873, %c1_i32_525 : i32
      %875 = arith.index_cast %874 : i32 to index
      %876 = memref.load %arg0[%875] : memref<64xi32, #tpu.memory_space<smem>>
      %c1_i32_526 = arith.constant 1 : i32
      %c0_i32_527 = arith.constant 0 : i32
      %877 = tpu.memref_slice %arg1[%876, %c0_i32_527] : memref<50x384xf32, #tpu.memory_space<any>> -> memref<1x384xf32, #tpu.memory_space<any>>
      %878 = tpu.memref_squeeze %877 : memref<1x384xf32, #tpu.memory_space<any>> -> memref<384xf32, #tpu.memory_space<any>>
      %c0_i32_528 = arith.constant 0 : i32
      %879 = tpu.memref_slice %arg7[%862, %c1_i32_526, %c0_i32_528] : memref<2x8x384xf32, #tpu.memory_space<vmem>> -> memref<1x1x384xf32, #tpu.memory_space<vmem>>
      %880 = tpu.memref_squeeze %879 : memref<1x1x384xf32, #tpu.memory_space<vmem>> -> memref<384xf32, #tpu.memory_space<vmem>>
      %881 = tpu.memref_slice %arg8[%862] : memref<2x!tpu.dma_semaphore, #tpu.memory_space<semaphore_mem>> -> memref<1x!tpu.dma_semaphore, #tpu.memory_space<semaphore_mem>>
      %882 = tpu.memref_squeeze %881 : memref<1x!tpu.dma_semaphore, #tpu.memory_space<semaphore_mem>> -> memref<!tpu.dma_semaphore, #tpu.memory_space<semaphore_mem>>
      tpu.enqueue_dma source(%878 : memref<384xf32, #tpu.memory_space<any>>) target(%880 : memref<384xf32, #tpu.memory_space<vmem>>) target_semaphore(%882 : memref<!tpu.dma_semaphore, #tpu.memory_space<semaphore_mem>>)
      %c8_i32_529 = arith.constant 8 : i32
      %883 = arith.muli %861, %c8_i32_529 : i32
      %c2_i32_530 = arith.constant 2 : i32
      %884 = arith.addi %883, %c2_i32_530 : i32
      %885 = arith.index_cast %884 : i32 to index
      %886 = memref.load %arg0[%885] : memref<64xi32, #tpu.memory_space<smem>>
      %c2_i32_531 = arith.constant 2 : i32
      %c0_i32_532 = arith.constant 0 : i32
      %887 = tpu.memref_slice %arg1[%886, %c0_i32_532] : memref<50x384xf32, #tpu.memory_space<any>> -> memref<1x384xf32, #tpu.memory_space<any>>
      %888 = tpu.memref_squeeze %887 : memref<1x384xf32, #tpu.memory_space<any>> -> memref<384xf32, #tpu.memory_space<any>>
      %c0_i32_533 = arith.constant 0 : i32
      %889 = tpu.memref_slice %arg7[%862, %c2_i32_531, %c0_i32_533] : memref<2x8x384xf32, #tpu.memory_space<vmem>> -> memref<1x1x384xf32, #tpu.memory_space<vmem>>
      %890 = tpu.memref_squeeze %889 : memref<1x1x384xf32, #tpu.memory_space<vmem>> -> memref<384xf32, #tpu.memory_space<vmem>>
      %891 = tpu.memref_slice %arg8[%862] : memref<2x!tpu.dma_semaphore, #tpu.memory_space<semaphore_mem>> -> memref<1x!tpu.dma_semaphore, #tpu.memory_space<semaphore_mem>>
      %892 = tpu.memref_squeeze %891 : memref<1x!tpu.dma_semaphore, #tpu.memory_space<semaphore_mem>> -> memref<!tpu.dma_semaphore, #tpu.memory_space<semaphore_mem>>
      tpu.enqueue_dma source(%888 : memref<384xf32, #tpu.memory_space<any>>) target(%890 : memref<384xf32, #tpu.memory_space<vmem>>) target_semaphore(%892 : memref<!tpu.dma_semaphore, #tpu.memory_space<semaphore_mem>>)
      %c8_i32_534 = arith.constant 8 : i32
      %893 = arith.muli %861, %c8_i32_534 : i32
      %c3_i32_535 = arith.constant 3 : i32
      %894 = arith.addi %893, %c3_i32_535 : i32
      %895 = arith.index_cast %894 : i32 to index
      %896 = memref.load %arg0[%895] : memref<64xi32, #tpu.memory_space<smem>>
      %c3_i32_536 = arith.constant 3 : i32
      %c0_i32_537 = arith.constant 0 : i32
      %897 = tpu.memref_slice %arg1[%896, %c0_i32_537] : memref<50x384xf32, #tpu.memory_space<any>> -> memref<1x384xf32, #tpu.memory_space<any>>
      %898 = tpu.memref_squeeze %897 : memref<1x384xf32, #tpu.memory_space<any>> -> memref<384xf32, #tpu.memory_space<any>>
      %c0_i32_538 = arith.constant 0 : i32
      %899 = tpu.memref_slice %arg7[%862, %c3_i32_536, %c0_i32_538] : memref<2x8x384xf32, #tpu.memory_space<vmem>> -> memref<1x1x384xf32, #tpu.memory_space<vmem>>
      %900 = tpu.memref_squeeze %899 : memref<1x1x384xf32, #tpu.memory_space<vmem>> -> memref<384xf32, #tpu.memory_space<vmem>>
      %901 = tpu.memref_slice %arg8[%862] : memref<2x!tpu.dma_semaphore, #tpu.memory_space<semaphore_mem>> -> memref<1x!tpu.dma_semaphore, #tpu.memory_space<semaphore_mem>>
      %902 = tpu.memref_squeeze %901 : memref<1x!tpu.dma_semaphore, #tpu.memory_space<semaphore_mem>> -> memref<!tpu.dma_semaphore, #tpu.memory_space<semaphore_mem>>
      tpu.enqueue_dma source(%898 : memref<384xf32, #tpu.memory_space<any>>) target(%900 : memref<384xf32, #tpu.memory_space<vmem>>) target_semaphore(%902 : memref<!tpu.dma_semaphore, #tpu.memory_space<semaphore_mem>>)
      %c8_i32_539 = arith.constant 8 : i32
      %903 = arith.muli %861, %c8_i32_539 : i32
      %c4_i32_540 = arith.constant 4 : i32
      %904 = arith.addi %903, %c4_i32_540 : i32
      %905 = arith.index_cast %904 : i32 to index
      %906 = memref.load %arg0[%905] : memref<64xi32, #tpu.memory_space<smem>>
      %c4_i32_541 = arith.constant 4 : i32
      %c0_i32_542 = arith.constant 0 : i32
      %907 = tpu.memref_slice %arg1[%906, %c0_i32_542] : memref<50x384xf32, #tpu.memory_space<any>> -> memref<1x384xf32, #tpu.memory_space<any>>
      %908 = tpu.memref_squeeze %907 : memref<1x384xf32, #tpu.memory_space<any>> -> memref<384xf32, #tpu.memory_space<any>>
      %c0_i32_543 = arith.constant 0 : i32
      %909 = tpu.memref_slice %arg7[%862, %c4_i32_541, %c0_i32_543] : memref<2x8x384xf32, #tpu.memory_space<vmem>> -> memref<1x1x384xf32, #tpu.memory_space<vmem>>
      %910 = tpu.memref_squeeze %909 : memref<1x1x384xf32, #tpu.memory_space<vmem>> -> memref<384xf32, #tpu.memory_space<vmem>>
      %911 = tpu.memref_slice %arg8[%862] : memref<2x!tpu.dma_semaphore, #tpu.memory_space<semaphore_mem>> -> memref<1x!tpu.dma_semaphore, #tpu.memory_space<semaphore_mem>>
      %912 = tpu.memref_squeeze %911 : memref<1x!tpu.dma_semaphore, #tpu.memory_space<semaphore_mem>> -> memref<!tpu.dma_semaphore, #tpu.memory_space<semaphore_mem>>
      tpu.enqueue_dma source(%908 : memref<384xf32, #tpu.memory_space<any>>) target(%910 : memref<384xf32, #tpu.memory_space<vmem>>) target_semaphore(%912 : memref<!tpu.dma_semaphore, #tpu.memory_space<semaphore_mem>>)
      %c8_i32_544 = arith.constant 8 : i32
      %913 = arith.muli %861, %c8_i32_544 : i32
      %c5_i32_545 = arith.constant 5 : i32
      %914 = arith.addi %913, %c5_i32_545 : i32
      %915 = arith.index_cast %914 : i32 to index
      %916 = memref.load %arg0[%915] : memref<64xi32, #tpu.memory_space<smem>>
      %c5_i32_546 = arith.constant 5 : i32
      %c0_i32_547 = arith.constant 0 : i32
      %917 = tpu.memref_slice %arg1[%916, %c0_i32_547] : memref<50x384xf32, #tpu.memory_space<any>> -> memref<1x384xf32, #tpu.memory_space<any>>
      %918 = tpu.memref_squeeze %917 : memref<1x384xf32, #tpu.memory_space<any>> -> memref<384xf32, #tpu.memory_space<any>>
      %c0_i32_548 = arith.constant 0 : i32
      %919 = tpu.memref_slice %arg7[%862, %c5_i32_546, %c0_i32_548] : memref<2x8x384xf32, #tpu.memory_space<vmem>> -> memref<1x1x384xf32, #tpu.memory_space<vmem>>
      %920 = tpu.memref_squeeze %919 : memref<1x1x384xf32, #tpu.memory_space<vmem>> -> memref<384xf32, #tpu.memory_space<vmem>>
      %921 = tpu.memref_slice %arg8[%862] : memref<2x!tpu.dma_semaphore, #tpu.memory_space<semaphore_mem>> -> memref<1x!tpu.dma_semaphore, #tpu.memory_space<semaphore_mem>>
      %922 = tpu.memref_squeeze %921 : memref<1x!tpu.dma_semaphore, #tpu.memory_space<semaphore_mem>> -> memref<!tpu.dma_semaphore, #tpu.memory_space<semaphore_mem>>
      tpu.enqueue_dma source(%918 : memref<384xf32, #tpu.memory_space<any>>) target(%920 : memref<384xf32, #tpu.memory_space<vmem>>) target_semaphore(%922 : memref<!tpu.dma_semaphore, #tpu.memory_space<semaphore_mem>>)
      %c8_i32_549 = arith.constant 8 : i32
      %923 = arith.muli %861, %c8_i32_549 : i32
      %c6_i32_550 = arith.constant 6 : i32
      %924 = arith.addi %923, %c6_i32_550 : i32
      %925 = arith.index_cast %924 : i32 to index
      %926 = memref.load %arg0[%925] : memref<64xi32, #tpu.memory_space<smem>>
      %c6_i32_551 = arith.constant 6 : i32
      %c0_i32_552 = arith.constant 0 : i32
      %927 = tpu.memref_slice %arg1[%926, %c0_i32_552] : memref<50x384xf32, #tpu.memory_space<any>> -> memref<1x384xf32, #tpu.memory_space<any>>
      %928 = tpu.memref_squeeze %927 : memref<1x384xf32, #tpu.memory_space<any>> -> memref<384xf32, #tpu.memory_space<any>>
      %c0_i32_553 = arith.constant 0 : i32
      %929 = tpu.memref_slice %arg7[%862, %c6_i32_551, %c0_i32_553] : memref<2x8x384xf32, #tpu.memory_space<vmem>> -> memref<1x1x384xf32, #tpu.memory_space<vmem>>
      %930 = tpu.memref_squeeze %929 : memref<1x1x384xf32, #tpu.memory_space<vmem>> -> memref<384xf32, #tpu.memory_space<vmem>>
      %931 = tpu.memref_slice %arg8[%862] : memref<2x!tpu.dma_semaphore, #tpu.memory_space<semaphore_mem>> -> memref<1x!tpu.dma_semaphore, #tpu.memory_space<semaphore_mem>>
      %932 = tpu.memref_squeeze %931 : memref<1x!tpu.dma_semaphore, #tpu.memory_space<semaphore_mem>> -> memref<!tpu.dma_semaphore, #tpu.memory_space<semaphore_mem>>
      tpu.enqueue_dma source(%928 : memref<384xf32, #tpu.memory_space<any>>) target(%930 : memref<384xf32, #tpu.memory_space<vmem>>) target_semaphore(%932 : memref<!tpu.dma_semaphore, #tpu.memory_space<semaphore_mem>>)
      %c8_i32_554 = arith.constant 8 : i32
      %933 = arith.muli %861, %c8_i32_554 : i32
      %c7_i32_555 = arith.constant 7 : i32
      %934 = arith.addi %933, %c7_i32_555 : i32
      %935 = arith.index_cast %934 : i32 to index
      %936 = memref.load %arg0[%935] : memref<64xi32, #tpu.memory_space<smem>>
      %c7_i32_556 = arith.constant 7 : i32
      %c0_i32_557 = arith.constant 0 : i32
      %937 = tpu.memref_slice %arg1[%936, %c0_i32_557] : memref<50x384xf32, #tpu.memory_space<any>> -> memref<1x384xf32, #tpu.memory_space<any>>
      %938 = tpu.memref_squeeze %937 : memref<1x384xf32, #tpu.memory_space<any>> -> memref<384xf32, #tpu.memory_space<any>>
      %c0_i32_558 = arith.constant 0 : i32
      %939 = tpu.memref_slice %arg7[%862, %c7_i32_556, %c0_i32_558] : memref<2x8x384xf32, #tpu.memory_space<vmem>> -> memref<1x1x384xf32, #tpu.memory_space<vmem>>
      %940 = tpu.memref_squeeze %939 : memref<1x1x384xf32, #tpu.memory_space<vmem>> -> memref<384xf32, #tpu.memory_space<vmem>>
      %941 = tpu.memref_slice %arg8[%862] : memref<2x!tpu.dma_semaphore, #tpu.memory_space<semaphore_mem>> -> memref<1x!tpu.dma_semaphore, #tpu.memory_space<semaphore_mem>>
      %942 = tpu.memref_squeeze %941 : memref<1x!tpu.dma_semaphore, #tpu.memory_space<semaphore_mem>> -> memref<!tpu.dma_semaphore, #tpu.memory_space<semaphore_mem>>
      tpu.enqueue_dma source(%938 : memref<384xf32, #tpu.memory_space<any>>) target(%940 : memref<384xf32, #tpu.memory_space<vmem>>) target_semaphore(%942 : memref<!tpu.dma_semaphore, #tpu.memory_space<semaphore_mem>>)
    } else {
    }
    %122 = arith.index_cast %69 : i32 to index
    %c0_85 = arith.constant 0 : index
    %c0_86 = arith.constant 0 : index
    %123 = vector.load %arg7[%122, %c0_85, %c0_86] : memref<2x8x384xf32, #tpu.memory_space<vmem>>, vector<1x8x384xf32>
    %124 = vector.shape_cast %123 : vector<1x8x384xf32> to vector<8x384xf32>
    %125 = vector.extract_strided_slice %59 {offsets = [0, 0], sizes = [8, 32], strides = [1, 1]} : vector<8x128xf32> to vector<8x32xf32>
    %126 = arith.truncf %125 : vector<8x32xf32> to vector<8x32xbf16>
    %c0_87 = arith.constant 0 : index
    %c0_88 = arith.constant 0 : index
    %127 = vector.load %arg2[%c0_87, %c0_88] : memref<32x384xbf16, #tpu.memory_space<vmem>>, vector<32x384xbf16>
    %cst = arith.constant dense<0.000000e+00> : vector<8x384xf32>
    %128 = tpu.matmul %126, %127, %cst {dimension_numbers = #tpu.dot_dimension_numbers<[1], [0], [0], [1], [0, 0, 1, 1], [], []>} : vector<8x32xbf16>, vector<32x384xbf16>, vector<8x384xf32> -> vector<8x384xf32>
    %129 = vector.extract_strided_slice %124 {offsets = [0, 0], sizes = [8, 128], strides = [1, 1]} : vector<8x384xf32> to vector<8x128xf32>
    %130 = vector.extract_strided_slice %128 {offsets = [0, 0], sizes = [8, 128], strides = [1, 1]} : vector<8x384xf32> to vector<8x128xf32>
    %131 = arith.addf %129, %130 : vector<8x128xf32>
    %132 = arith.negf %131 : vector<8x128xf32>
    %133 = math.exp %132 : vector<8x128xf32>
    %cst_89 = arith.constant 1.000000e+00 : f32
    %134 = vector.broadcast %cst_89 : f32 to vector<8x128xf32>
    %135 = arith.addf %134, %133 : vector<8x128xf32>
    %136 = arith.divf %134, %135 : vector<8x128xf32>
    %137 = vector.extract_strided_slice %124 {offsets = [0, 128], sizes = [8, 128], strides = [1, 1]} : vector<8x384xf32> to vector<8x128xf32>
    %138 = vector.extract_strided_slice %128 {offsets = [0, 128], sizes = [8, 128], strides = [1, 1]} : vector<8x384xf32> to vector<8x128xf32>
    %139 = arith.addf %137, %138 : vector<8x128xf32>
    %140 = arith.negf %139 : vector<8x128xf32>
    %141 = math.exp %140 : vector<8x128xf32>
    %cst_90 = arith.constant 1.000000e+00 : f32
    %142 = vector.broadcast %cst_90 : f32 to vector<8x128xf32>
    %143 = arith.addf %142, %141 : vector<8x128xf32>
    %144 = arith.divf %142, %143 : vector<8x128xf32>
    %145 = vector.extract_strided_slice %124 {offsets = [0, 256], sizes = [8, 128], strides = [1, 1]} : vector<8x384xf32> to vector<8x128xf32>
    %146 = vector.extract_strided_slice %128 {offsets = [0, 256], sizes = [8, 128], strides = [1, 1]} : vector<8x384xf32> to vector<8x128xf32>
    %147 = arith.addf %146, %58 : vector<8x128xf32>
    %148 = arith.mulf %136, %147 : vector<8x128xf32>
    %149 = arith.addf %145, %148 : vector<8x128xf32>
    %150 = math.tanh %149 : vector<8x128xf32>
    %cst_91 = arith.constant 1.000000e+00 : f32
    %151 = vector.broadcast %cst_91 : f32 to vector<8x128xf32>
    %152 = arith.subf %151, %144 : vector<8x128xf32>
    %153 = arith.mulf %152, %150 : vector<8x128xf32>
    %154 = arith.mulf %144, %59 : vector<8x128xf32>
    %155 = arith.addf %153, %154 : vector<8x128xf32>
    %156 = arith.index_cast %c0_i32_36 : i32 to index
    %c0_92 = arith.constant 0 : index
    %c0_93 = arith.constant 0 : index
    %157 = vector.load %arg5[%156, %c0_92, %c0_93] : memref<8x8x128xf32, #tpu.memory_space<vmem>>, vector<1x8x128xf32>
    %158 = vector.shape_cast %157 : vector<1x8x128xf32> to vector<8x128xf32>
    %159 = vector.shape_cast %155 : vector<8x128xf32> to vector<1x8x128xf32>
    tpu.vector_store %arg5[%156, %c0_92, %c0_93], %159 {strides = array<i32>} : memref<8x8x128xf32, #tpu.memory_space<vmem>>, vector<1x8x128xf32>,
    %c1_i32_94 = arith.constant 1 : i32
    %c2_i32_95 = arith.constant 2 : i32
    %c0_i32_96 = arith.constant 0 : i32
    %160 = arith.cmpi eq, %c2_i32_95, %c0_i32_96 : i32
    %c1_i32_97 = arith.constant 1 : i32
    %161 = arith.select %160, %c1_i32_97, %c2_i32_95 : i32
    %162 = arith.remsi %c1_i32_94, %161 : i32
    %c0_i32_98 = arith.constant 0 : i32
    %163 = arith.cmpi ne, %162, %c0_i32_98 : i32
    %c0_i32_99 = arith.constant 0 : i32
    %164 = arith.cmpi slt, %162, %c0_i32_99 : i32
    %c0_i32_100 = arith.constant 0 : i32
    %165 = arith.cmpi slt, %161, %c0_i32_100 : i32
    %166 = arith.xori %164, %165 : i1
    %167 = arith.andi %166, %163 : i1
    %168 = arith.addi %162, %161 : i32
    %169 = arith.select %167, %168, %162 : i32
    %c0_i32_101 = arith.constant 0 : i32
    %c0_i32_102 = arith.constant 0 : i32
    %c0_i32_103 = arith.constant 0 : i32
    %c0_i32_104 = arith.constant 0 : i32
    %170 = tpu.memref_slice %arg1[%c0_i32_101, %c0_i32_104] : memref<50x384xf32, #tpu.memory_space<any>> -> memref<1x384xf32, #tpu.memory_space<any>>
    %171 = tpu.memref_squeeze %170 : memref<1x384xf32, #tpu.memory_space<any>> -> memref<384xf32, #tpu.memory_space<any>>
    %c0_i32_105 = arith.constant 0 : i32
    %172 = tpu.memref_slice %arg7[%c0_i32_102, %c0_i32_103, %c0_i32_105] : memref<2x8x384xf32, #tpu.memory_space<vmem>> -> memref<1x1x384xf32, #tpu.memory_space<vmem>>
    %173 = tpu.memref_squeeze %172 : memref<1x1x384xf32, #tpu.memory_space<vmem>> -> memref<384xf32, #tpu.memory_space<vmem>>
    %174 = tpu.memref_slice %arg8[%169] : memref<2x!tpu.dma_semaphore, #tpu.memory_space<semaphore_mem>> -> memref<1x!tpu.dma_semaphore, #tpu.memory_space<semaphore_mem>>
    %175 = tpu.memref_squeeze %174 : memref<1x!tpu.dma_semaphore, #tpu.memory_space<semaphore_mem>> -> memref<!tpu.dma_semaphore, #tpu.memory_space<semaphore_mem>>
    tpu.wait_dma2 semaphore(%175 : memref<!tpu.dma_semaphore, #tpu.memory_space<semaphore_mem>>) src(%171 : memref<384xf32, #tpu.memory_space<any>>) dst(%173 : memref<384xf32, #tpu.memory_space<vmem>>)
    %c0_i32_106 = arith.constant 0 : i32
    %c0_i32_107 = arith.constant 0 : i32
    %c0_i32_108 = arith.constant 0 : i32
    %c0_i32_109 = arith.constant 0 : i32
    %176 = tpu.memref_slice %arg1[%c0_i32_106, %c0_i32_109] : memref<50x384xf32, #tpu.memory_space<any>> -> memref<1x384xf32, #tpu.memory_space<any>>
    %177 = tpu.memref_squeeze %176 : memref<1x384xf32, #tpu.memory_space<any>> -> memref<384xf32, #tpu.memory_space<any>>
    %c0_i32_110 = arith.constant 0 : i32
    %178 = tpu.memref_slice %arg7[%c0_i32_107, %c0_i32_108, %c0_i32_110] : memref<2x8x384xf32, #tpu.memory_space<vmem>> -> memref<1x1x384xf32, #tpu.memory_space<vmem>>
    %179 = tpu.memref_squeeze %178 : memref<1x1x384xf32, #tpu.memory_space<vmem>> -> memref<384xf32, #tpu.memory_space<vmem>>
    %180 = tpu.memref_slice %arg8[%169] : memref<2x!tpu.dma_semaphore, #tpu.memory_space<semaphore_mem>> -> memref<1x!tpu.dma_semaphore, #tpu.memory_space<semaphore_mem>>
    %181 = tpu.memref_squeeze %180 : memref<1x!tpu.dma_semaphore, #tpu.memory_space<semaphore_mem>> -> memref<!tpu.dma_semaphore, #tpu.memory_space<semaphore_mem>>
    tpu.wait_dma2 semaphore(%181 : memref<!tpu.dma_semaphore, #tpu.memory_space<semaphore_mem>>) src(%177 : memref<384xf32, #tpu.memory_space<any>>) dst(%179 : memref<384xf32, #tpu.memory_space<vmem>>)
    %c0_i32_111 = arith.constant 0 : i32
    %c0_i32_112 = arith.constant 0 : i32
    %c0_i32_113 = arith.constant 0 : i32
    %c0_i32_114 = arith.constant 0 : i32
    %182 = tpu.memref_slice %arg1[%c0_i32_111, %c0_i32_114] : memref<50x384xf32, #tpu.memory_space<any>> -> memref<1x384xf32, #tpu.memory_space<any>>
    %183 = tpu.memref_squeeze %182 : memref<1x384xf32, #tpu.memory_space<any>> -> memref<384xf32, #tpu.memory_space<any>>
    %c0_i32_115 = arith.constant 0 : i32
    %184 = tpu.memref_slice %arg7[%c0_i32_112, %c0_i32_113, %c0_i32_115] : memref<2x8x384xf32, #tpu.memory_space<vmem>> -> memref<1x1x384xf32, #tpu.memory_space<vmem>>
    %185 = tpu.memref_squeeze %184 : memref<1x1x384xf32, #tpu.memory_space<vmem>> -> memref<384xf32, #tpu.memory_space<vmem>>
    %186 = tpu.memref_slice %arg8[%169] : memref<2x!tpu.dma_semaphore, #tpu.memory_space<semaphore_mem>> -> memref<1x!tpu.dma_semaphore, #tpu.memory_space<semaphore_mem>>
    %187 = tpu.memref_squeeze %186 : memref<1x!tpu.dma_semaphore, #tpu.memory_space<semaphore_mem>> -> memref<!tpu.dma_semaphore, #tpu.memory_space<semaphore_mem>>
    tpu.wait_dma2 semaphore(%187 : memref<!tpu.dma_semaphore, #tpu.memory_space<semaphore_mem>>) src(%183 : memref<384xf32, #tpu.memory_space<any>>) dst(%185 : memref<384xf32, #tpu.memory_space<vmem>>)
    %c0_i32_116 = arith.constant 0 : i32
    %c0_i32_117 = arith.constant 0 : i32
    %c0_i32_118 = arith.constant 0 : i32
    %c0_i32_119 = arith.constant 0 : i32
    %188 = tpu.memref_slice %arg1[%c0_i32_116, %c0_i32_119] : memref<50x384xf32, #tpu.memory_space<any>> -> memref<1x384xf32, #tpu.memory_space<any>>
    %189 = tpu.memref_squeeze %188 : memref<1x384xf32, #tpu.memory_space<any>> -> memref<384xf32, #tpu.memory_space<any>>
    %c0_i32_120 = arith.constant 0 : i32
    %190 = tpu.memref_slice %arg7[%c0_i32_117, %c0_i32_118, %c0_i32_120] : memref<2x8x384xf32, #tpu.memory_space<vmem>> -> memref<1x1x384xf32, #tpu.memory_space<vmem>>
    %191 = tpu.memref_squeeze %190 : memref<1x1x384xf32, #tpu.memory_space<vmem>> -> memref<384xf32, #tpu.memory_space<vmem>>
    %192 = tpu.memref_slice %arg8[%169] : memref<2x!tpu.dma_semaphore, #tpu.memory_space<semaphore_mem>> -> memref<1x!tpu.dma_semaphore, #tpu.memory_space<semaphore_mem>>
    %193 = tpu.memref_squeeze %192 : memref<1x!tpu.dma_semaphore, #tpu.memory_space<semaphore_mem>> -> memref<!tpu.dma_semaphore, #tpu.memory_space<semaphore_mem>>
    tpu.wait_dma2 semaphore(%193 : memref<!tpu.dma_semaphore, #tpu.memory_space<semaphore_mem>>) src(%189 : memref<384xf32, #tpu.memory_space<any>>) dst(%191 : memref<384xf32, #tpu.memory_space<vmem>>)
    %c0_i32_121 = arith.constant 0 : i32
    %c0_i32_122 = arith.constant 0 : i32
    %c0_i32_123 = arith.constant 0 : i32
    %c0_i32_124 = arith.constant 0 : i32
    %194 = tpu.memref_slice %arg1[%c0_i32_121, %c0_i32_124] : memref<50x384xf32, #tpu.memory_space<any>> -> memref<1x384xf32, #tpu.memory_space<any>>
    %195 = tpu.memref_squeeze %194 : memref<1x384xf32, #tpu.memory_space<any>> -> memref<384xf32, #tpu.memory_space<any>>
    %c0_i32_125 = arith.constant 0 : i32
    %196 = tpu.memref_slice %arg7[%c0_i32_122, %c0_i32_123, %c0_i32_125] : memref<2x8x384xf32, #tpu.memory_space<vmem>> -> memref<1x1x384xf32, #tpu.memory_space<vmem>>
    %197 = tpu.memref_squeeze %196 : memref<1x1x384xf32, #tpu.memory_space<vmem>> -> memref<384xf32, #tpu.memory_space<vmem>>
    %198 = tpu.memref_slice %arg8[%169] : memref<2x!tpu.dma_semaphore, #tpu.memory_space<semaphore_mem>> -> memref<1x!tpu.dma_semaphore, #tpu.memory_space<semaphore_mem>>
    %199 = tpu.memref_squeeze %198 : memref<1x!tpu.dma_semaphore, #tpu.memory_space<semaphore_mem>> -> memref<!tpu.dma_semaphore, #tpu.memory_space<semaphore_mem>>
    tpu.wait_dma2 semaphore(%199 : memref<!tpu.dma_semaphore, #tpu.memory_space<semaphore_mem>>) src(%195 : memref<384xf32, #tpu.memory_space<any>>) dst(%197 : memref<384xf32, #tpu.memory_space<vmem>>)
    %c0_i32_126 = arith.constant 0 : i32
    %c0_i32_127 = arith.constant 0 : i32
    %c0_i32_128 = arith.constant 0 : i32
    %c0_i32_129 = arith.constant 0 : i32
    %200 = tpu.memref_slice %arg1[%c0_i32_126, %c0_i32_129] : memref<50x384xf32, #tpu.memory_space<any>> -> memref<1x384xf32, #tpu.memory_space<any>>
    %201 = tpu.memref_squeeze %200 : memref<1x384xf32, #tpu.memory_space<any>> -> memref<384xf32, #tpu.memory_space<any>>
    %c0_i32_130 = arith.constant 0 : i32
    %202 = tpu.memref_slice %arg7[%c0_i32_127, %c0_i32_128, %c0_i32_130] : memref<2x8x384xf32, #tpu.memory_space<vmem>> -> memref<1x1x384xf32, #tpu.memory_space<vmem>>
    %203 = tpu.memref_squeeze %202 : memref<1x1x384xf32, #tpu.memory_space<vmem>> -> memref<384xf32, #tpu.memory_space<vmem>>
    %204 = tpu.memref_slice %arg8[%169] : memref<2x!tpu.dma_semaphore, #tpu.memory_space<semaphore_mem>> -> memref<1x!tpu.dma_semaphore, #tpu.memory_space<semaphore_mem>>
    %205 = tpu.memref_squeeze %204 : memref<1x!tpu.dma_semaphore, #tpu.memory_space<semaphore_mem>> -> memref<!tpu.dma_semaphore, #tpu.memory_space<semaphore_mem>>
    tpu.wait_dma2 semaphore(%205 : memref<!tpu.dma_semaphore, #tpu.memory_space<semaphore_mem>>) src(%201 : memref<384xf32, #tpu.memory_space<any>>) dst(%203 : memref<384xf32, #tpu.memory_space<vmem>>)
    %c0_i32_131 = arith.constant 0 : i32
    %c0_i32_132 = arith.constant 0 : i32
    %c0_i32_133 = arith.constant 0 : i32
    %c0_i32_134 = arith.constant 0 : i32
    %206 = tpu.memref_slice %arg1[%c0_i32_131, %c0_i32_134] : memref<50x384xf32, #tpu.memory_space<any>> -> memref<1x384xf32, #tpu.memory_space<any>>
    %207 = tpu.memref_squeeze %206 : memref<1x384xf32, #tpu.memory_space<any>> -> memref<384xf32, #tpu.memory_space<any>>
    %c0_i32_135 = arith.constant 0 : i32
    %208 = tpu.memref_slice %arg7[%c0_i32_132, %c0_i32_133, %c0_i32_135] : memref<2x8x384xf32, #tpu.memory_space<vmem>> -> memref<1x1x384xf32, #tpu.memory_space<vmem>>
    %209 = tpu.memref_squeeze %208 : memref<1x1x384xf32, #tpu.memory_space<vmem>> -> memref<384xf32, #tpu.memory_space<vmem>>
    %210 = tpu.memref_slice %arg8[%169] : memref<2x!tpu.dma_semaphore, #tpu.memory_space<semaphore_mem>> -> memref<1x!tpu.dma_semaphore, #tpu.memory_space<semaphore_mem>>
    %211 = tpu.memref_squeeze %210 : memref<1x!tpu.dma_semaphore, #tpu.memory_space<semaphore_mem>> -> memref<!tpu.dma_semaphore, #tpu.memory_space<semaphore_mem>>
    tpu.wait_dma2 semaphore(%211 : memref<!tpu.dma_semaphore, #tpu.memory_space<semaphore_mem>>) src(%207 : memref<384xf32, #tpu.memory_space<any>>) dst(%209 : memref<384xf32, #tpu.memory_space<vmem>>)
    %c0_i32_136 = arith.constant 0 : i32
    %c0_i32_137 = arith.constant 0 : i32
    %c0_i32_138 = arith.constant 0 : i32
    %c0_i32_139 = arith.constant 0 : i32
    %212 = tpu.memref_slice %arg1[%c0_i32_136, %c0_i32_139] : memref<50x384xf32, #tpu.memory_space<any>> -> memref<1x384xf32, #tpu.memory_space<any>>
    %213 = tpu.memref_squeeze %212 : memref<1x384xf32, #tpu.memory_space<any>> -> memref<384xf32, #tpu.memory_space<any>>
    %c0_i32_140 = arith.constant 0 : i32
    %214 = tpu.memref_slice %arg7[%c0_i32_137, %c0_i32_138, %c0_i32_140] : memref<2x8x384xf32, #tpu.memory_space<vmem>> -> memref<1x1x384xf32, #tpu.memory_space<vmem>>
    %215 = tpu.memref_squeeze %214 : memref<1x1x384xf32, #tpu.memory_space<vmem>> -> memref<384xf32, #tpu.memory_space<vmem>>
    %216 = tpu.memref_slice %arg8[%169] : memref<2x!tpu.dma_semaphore, #tpu.memory_space<semaphore_mem>> -> memref<1x!tpu.dma_semaphore, #tpu.memory_space<semaphore_mem>>
    %217 = tpu.memref_squeeze %216 : memref<1x!tpu.dma_semaphore, #tpu.memory_space<semaphore_mem>> -> memref<!tpu.dma_semaphore, #tpu.memory_space<semaphore_mem>>
    tpu.wait_dma2 semaphore(%217 : memref<!tpu.dma_semaphore, #tpu.memory_space<semaphore_mem>>) src(%213 : memref<384xf32, #tpu.memory_space<any>>) dst(%215 : memref<384xf32, #tpu.memory_space<vmem>>)
    %c1_i32_141 = arith.constant 1 : i32
    %218 = arith.addi %c1_i32_94, %c1_i32_141 : i32
    %c8_i32_142 = arith.constant 8 : i32
    %219 = arith.cmpi slt, %218, %c8_i32_142 : i32
    %220 = arith.extui %219 : i1 to i32
    %c0_i32_143 = arith.constant 0 : i32
    %221 = arith.cmpi ne, %220, %c0_i32_143 : i32
    scf.if %221 {
      %c1_i32_517 = arith.constant 1 : i32
      %861 = arith.addi %c1_i32_94, %c1_i32_517 : i32
      %c1_i32_518 = arith.constant 1 : i32
      %862 = arith.subi %c1_i32_518, %169 : i32
      %c8_i32_519 = arith.constant 8 : i32
      %863 = arith.muli %861, %c8_i32_519 : i32
      %c0_i32_520 = arith.constant 0 : i32
      %864 = arith.addi %863, %c0_i32_520 : i32
      %865 = arith.index_cast %864 : i32 to index
      %866 = memref.load %arg0[%865] : memref<64xi32, #tpu.memory_space<smem>>
      %c0_i32_521 = arith.constant 0 : i32
      %c0_i32_522 = arith.constant 0 : i32
      %867 = tpu.memref_slice %arg1[%866, %c0_i32_522] : memref<50x384xf32, #tpu.memory_space<any>> -> memref<1x384xf32, #tpu.memory_space<any>>
      %868 = tpu.memref_squeeze %867 : memref<1x384xf32, #tpu.memory_space<any>> -> memref<384xf32, #tpu.memory_space<any>>
      %c0_i32_523 = arith.constant 0 : i32
      %869 = tpu.memref_slice %arg7[%862, %c0_i32_521, %c0_i32_523] : memref<2x8x384xf32, #tpu.memory_space<vmem>> -> memref<1x1x384xf32, #tpu.memory_space<vmem>>
      %870 = tpu.memref_squeeze %869 : memref<1x1x384xf32, #tpu.memory_space<vmem>> -> memref<384xf32, #tpu.memory_space<vmem>>
      %871 = tpu.memref_slice %arg8[%862] : memref<2x!tpu.dma_semaphore, #tpu.memory_space<semaphore_mem>> -> memref<1x!tpu.dma_semaphore, #tpu.memory_space<semaphore_mem>>
      %872 = tpu.memref_squeeze %871 : memref<1x!tpu.dma_semaphore, #tpu.memory_space<semaphore_mem>> -> memref<!tpu.dma_semaphore, #tpu.memory_space<semaphore_mem>>
      tpu.enqueue_dma source(%868 : memref<384xf32, #tpu.memory_space<any>>) target(%870 : memref<384xf32, #tpu.memory_space<vmem>>) target_semaphore(%872 : memref<!tpu.dma_semaphore, #tpu.memory_space<semaphore_mem>>)
      %c8_i32_524 = arith.constant 8 : i32
      %873 = arith.muli %861, %c8_i32_524 : i32
      %c1_i32_525 = arith.constant 1 : i32
      %874 = arith.addi %873, %c1_i32_525 : i32
      %875 = arith.index_cast %874 : i32 to index
      %876 = memref.load %arg0[%875] : memref<64xi32, #tpu.memory_space<smem>>
      %c1_i32_526 = arith.constant 1 : i32
      %c0_i32_527 = arith.constant 0 : i32
      %877 = tpu.memref_slice %arg1[%876, %c0_i32_527] : memref<50x384xf32, #tpu.memory_space<any>> -> memref<1x384xf32, #tpu.memory_space<any>>
      %878 = tpu.memref_squeeze %877 : memref<1x384xf32, #tpu.memory_space<any>> -> memref<384xf32, #tpu.memory_space<any>>
      %c0_i32_528 = arith.constant 0 : i32
      %879 = tpu.memref_slice %arg7[%862, %c1_i32_526, %c0_i32_528] : memref<2x8x384xf32, #tpu.memory_space<vmem>> -> memref<1x1x384xf32, #tpu.memory_space<vmem>>
      %880 = tpu.memref_squeeze %879 : memref<1x1x384xf32, #tpu.memory_space<vmem>> -> memref<384xf32, #tpu.memory_space<vmem>>
      %881 = tpu.memref_slice %arg8[%862] : memref<2x!tpu.dma_semaphore, #tpu.memory_space<semaphore_mem>> -> memref<1x!tpu.dma_semaphore, #tpu.memory_space<semaphore_mem>>
      %882 = tpu.memref_squeeze %881 : memref<1x!tpu.dma_semaphore, #tpu.memory_space<semaphore_mem>> -> memref<!tpu.dma_semaphore, #tpu.memory_space<semaphore_mem>>
      tpu.enqueue_dma source(%878 : memref<384xf32, #tpu.memory_space<any>>) target(%880 : memref<384xf32, #tpu.memory_space<vmem>>) target_semaphore(%882 : memref<!tpu.dma_semaphore, #tpu.memory_space<semaphore_mem>>)
      %c8_i32_529 = arith.constant 8 : i32
      %883 = arith.muli %861, %c8_i32_529 : i32
      %c2_i32_530 = arith.constant 2 : i32
      %884 = arith.addi %883, %c2_i32_530 : i32
      %885 = arith.index_cast %884 : i32 to index
      %886 = memref.load %arg0[%885] : memref<64xi32, #tpu.memory_space<smem>>
      %c2_i32_531 = arith.constant 2 : i32
      %c0_i32_532 = arith.constant 0 : i32
      %887 = tpu.memref_slice %arg1[%886, %c0_i32_532] : memref<50x384xf32, #tpu.memory_space<any>> -> memref<1x384xf32, #tpu.memory_space<any>>
      %888 = tpu.memref_squeeze %887 : memref<1x384xf32, #tpu.memory_space<any>> -> memref<384xf32, #tpu.memory_space<any>>
      %c0_i32_533 = arith.constant 0 : i32
      %889 = tpu.memref_slice %arg7[%862, %c2_i32_531, %c0_i32_533] : memref<2x8x384xf32, #tpu.memory_space<vmem>> -> memref<1x1x384xf32, #tpu.memory_space<vmem>>
      %890 = tpu.memref_squeeze %889 : memref<1x1x384xf32, #tpu.memory_space<vmem>> -> memref<384xf32, #tpu.memory_space<vmem>>
      %891 = tpu.memref_slice %arg8[%862] : memref<2x!tpu.dma_semaphore, #tpu.memory_space<semaphore_mem>> -> memref<1x!tpu.dma_semaphore, #tpu.memory_space<semaphore_mem>>
      %892 = tpu.memref_squeeze %891 : memref<1x!tpu.dma_semaphore, #tpu.memory_space<semaphore_mem>> -> memref<!tpu.dma_semaphore, #tpu.memory_space<semaphore_mem>>
      tpu.enqueue_dma source(%888 : memref<384xf32, #tpu.memory_space<any>>) target(%890 : memref<384xf32, #tpu.memory_space<vmem>>) target_semaphore(%892 : memref<!tpu.dma_semaphore, #tpu.memory_space<semaphore_mem>>)
      %c8_i32_534 = arith.constant 8 : i32
      %893 = arith.muli %861, %c8_i32_534 : i32
      %c3_i32_535 = arith.constant 3 : i32
      %894 = arith.addi %893, %c3_i32_535 : i32
      %895 = arith.index_cast %894 : i32 to index
      %896 = memref.load %arg0[%895] : memref<64xi32, #tpu.memory_space<smem>>
      %c3_i32_536 = arith.constant 3 : i32
      %c0_i32_537 = arith.constant 0 : i32
      %897 = tpu.memref_slice %arg1[%896, %c0_i32_537] : memref<50x384xf32, #tpu.memory_space<any>> -> memref<1x384xf32, #tpu.memory_space<any>>
      %898 = tpu.memref_squeeze %897 : memref<1x384xf32, #tpu.memory_space<any>> -> memref<384xf32, #tpu.memory_space<any>>
      %c0_i32_538 = arith.constant 0 : i32
      %899 = tpu.memref_slice %arg7[%862, %c3_i32_536, %c0_i32_538] : memref<2x8x384xf32, #tpu.memory_space<vmem>> -> memref<1x1x384xf32, #tpu.memory_space<vmem>>
      %900 = tpu.memref_squeeze %899 : memref<1x1x384xf32, #tpu.memory_space<vmem>> -> memref<384xf32, #tpu.memory_space<vmem>>
      %901 = tpu.memref_slice %arg8[%862] : memref<2x!tpu.dma_semaphore, #tpu.memory_space<semaphore_mem>> -> memref<1x!tpu.dma_semaphore, #tpu.memory_space<semaphore_mem>>
      %902 = tpu.memref_squeeze %901 : memref<1x!tpu.dma_semaphore, #tpu.memory_space<semaphore_mem>> -> memref<!tpu.dma_semaphore, #tpu.memory_space<semaphore_mem>>
      tpu.enqueue_dma source(%898 : memref<384xf32, #tpu.memory_space<any>>) target(%900 : memref<384xf32, #tpu.memory_space<vmem>>) target_semaphore(%902 : memref<!tpu.dma_semaphore, #tpu.memory_space<semaphore_mem>>)
      %c8_i32_539 = arith.constant 8 : i32
      %903 = arith.muli %861, %c8_i32_539 : i32
      %c4_i32_540 = arith.constant 4 : i32
      %904 = arith.addi %903, %c4_i32_540 : i32
      %905 = arith.index_cast %904 : i32 to index
      %906 = memref.load %arg0[%905] : memref<64xi32, #tpu.memory_space<smem>>
      %c4_i32_541 = arith.constant 4 : i32
      %c0_i32_542 = arith.constant 0 : i32
      %907 = tpu.memref_slice %arg1[%906, %c0_i32_542] : memref<50x384xf32, #tpu.memory_space<any>> -> memref<1x384xf32, #tpu.memory_space<any>>
      %908 = tpu.memref_squeeze %907 : memref<1x384xf32, #tpu.memory_space<any>> -> memref<384xf32, #tpu.memory_space<any>>
      %c0_i32_543 = arith.constant 0 : i32
      %909 = tpu.memref_slice %arg7[%862, %c4_i32_541, %c0_i32_543] : memref<2x8x384xf32, #tpu.memory_space<vmem>> -> memref<1x1x384xf32, #tpu.memory_space<vmem>>
      %910 = tpu.memref_squeeze %909 : memref<1x1x384xf32, #tpu.memory_space<vmem>> -> memref<384xf32, #tpu.memory_space<vmem>>
      %911 = tpu.memref_slice %arg8[%862] : memref<2x!tpu.dma_semaphore, #tpu.memory_space<semaphore_mem>> -> memref<1x!tpu.dma_semaphore, #tpu.memory_space<semaphore_mem>>
      %912 = tpu.memref_squeeze %911 : memref<1x!tpu.dma_semaphore, #tpu.memory_space<semaphore_mem>> -> memref<!tpu.dma_semaphore, #tpu.memory_space<semaphore_mem>>
      tpu.enqueue_dma source(%908 : memref<384xf32, #tpu.memory_space<any>>) target(%910 : memref<384xf32, #tpu.memory_space<vmem>>) target_semaphore(%912 : memref<!tpu.dma_semaphore, #tpu.memory_space<semaphore_mem>>)
      %c8_i32_544 = arith.constant 8 : i32
      %913 = arith.muli %861, %c8_i32_544 : i32
      %c5_i32_545 = arith.constant 5 : i32
      %914 = arith.addi %913, %c5_i32_545 : i32
      %915 = arith.index_cast %914 : i32 to index
      %916 = memref.load %arg0[%915] : memref<64xi32, #tpu.memory_space<smem>>
      %c5_i32_546 = arith.constant 5 : i32
      %c0_i32_547 = arith.constant 0 : i32
      %917 = tpu.memref_slice %arg1[%916, %c0_i32_547] : memref<50x384xf32, #tpu.memory_space<any>> -> memref<1x384xf32, #tpu.memory_space<any>>
      %918 = tpu.memref_squeeze %917 : memref<1x384xf32, #tpu.memory_space<any>> -> memref<384xf32, #tpu.memory_space<any>>
      %c0_i32_548 = arith.constant 0 : i32
      %919 = tpu.memref_slice %arg7[%862, %c5_i32_546, %c0_i32_548] : memref<2x8x384xf32, #tpu.memory_space<vmem>> -> memref<1x1x384xf32, #tpu.memory_space<vmem>>
      %920 = tpu.memref_squeeze %919 : memref<1x1x384xf32, #tpu.memory_space<vmem>> -> memref<384xf32, #tpu.memory_space<vmem>>
      %921 = tpu.memref_slice %arg8[%862] : memref<2x!tpu.dma_semaphore, #tpu.memory_space<semaphore_mem>> -> memref<1x!tpu.dma_semaphore, #tpu.memory_space<semaphore_mem>>
      %922 = tpu.memref_squeeze %921 : memref<1x!tpu.dma_semaphore, #tpu.memory_space<semaphore_mem>> -> memref<!tpu.dma_semaphore, #tpu.memory_space<semaphore_mem>>
      tpu.enqueue_dma source(%918 : memref<384xf32, #tpu.memory_space<any>>) target(%920 : memref<384xf32, #tpu.memory_space<vmem>>) target_semaphore(%922 : memref<!tpu.dma_semaphore, #tpu.memory_space<semaphore_mem>>)
      %c8_i32_549 = arith.constant 8 : i32
      %923 = arith.muli %861, %c8_i32_549 : i32
      %c6_i32_550 = arith.constant 6 : i32
      %924 = arith.addi %923, %c6_i32_550 : i32
      %925 = arith.index_cast %924 : i32 to index
      %926 = memref.load %arg0[%925] : memref<64xi32, #tpu.memory_space<smem>>
      %c6_i32_551 = arith.constant 6 : i32
      %c0_i32_552 = arith.constant 0 : i32
      %927 = tpu.memref_slice %arg1[%926, %c0_i32_552] : memref<50x384xf32, #tpu.memory_space<any>> -> memref<1x384xf32, #tpu.memory_space<any>>
      %928 = tpu.memref_squeeze %927 : memref<1x384xf32, #tpu.memory_space<any>> -> memref<384xf32, #tpu.memory_space<any>>
      %c0_i32_553 = arith.constant 0 : i32
      %929 = tpu.memref_slice %arg7[%862, %c6_i32_551, %c0_i32_553] : memref<2x8x384xf32, #tpu.memory_space<vmem>> -> memref<1x1x384xf32, #tpu.memory_space<vmem>>
      %930 = tpu.memref_squeeze %929 : memref<1x1x384xf32, #tpu.memory_space<vmem>> -> memref<384xf32, #tpu.memory_space<vmem>>
      %931 = tpu.memref_slice %arg8[%862] : memref<2x!tpu.dma_semaphore, #tpu.memory_space<semaphore_mem>> -> memref<1x!tpu.dma_semaphore, #tpu.memory_space<semaphore_mem>>
      %932 = tpu.memref_squeeze %931 : memref<1x!tpu.dma_semaphore, #tpu.memory_space<semaphore_mem>> -> memref<!tpu.dma_semaphore, #tpu.memory_space<semaphore_mem>>
      tpu.enqueue_dma source(%928 : memref<384xf32, #tpu.memory_space<any>>) target(%930 : memref<384xf32, #tpu.memory_space<vmem>>) target_semaphore(%932 : memref<!tpu.dma_semaphore, #tpu.memory_space<semaphore_mem>>)
      %c8_i32_554 = arith.constant 8 : i32
      %933 = arith.muli %861, %c8_i32_554 : i32
      %c7_i32_555 = arith.constant 7 : i32
      %934 = arith.addi %933, %c7_i32_555 : i32
      %935 = arith.index_cast %934 : i32 to index
      %936 = memref.load %arg0[%935] : memref<64xi32, #tpu.memory_space<smem>>
      %c7_i32_556 = arith.constant 7 : i32
      %c0_i32_557 = arith.constant 0 : i32
      %937 = tpu.memref_slice %arg1[%936, %c0_i32_557] : memref<50x384xf32, #tpu.memory_space<any>> -> memref<1x384xf32, #tpu.memory_space<any>>
      %938 = tpu.memref_squeeze %937 : memref<1x384xf32, #tpu.memory_space<any>> -> memref<384xf32, #tpu.memory_space<any>>
      %c0_i32_558 = arith.constant 0 : i32
      %939 = tpu.memref_slice %arg7[%862, %c7_i32_556, %c0_i32_558] : memref<2x8x384xf32, #tpu.memory_space<vmem>> -> memref<1x1x384xf32, #tpu.memory_space<vmem>>
      %940 = tpu.memref_squeeze %939 : memref<1x1x384xf32, #tpu.memory_space<vmem>> -> memref<384xf32, #tpu.memory_space<vmem>>
      %941 = tpu.memref_slice %arg8[%862] : memref<2x!tpu.dma_semaphore, #tpu.memory_space<semaphore_mem>> -> memref<1x!tpu.dma_semaphore, #tpu.memory_space<semaphore_mem>>
      %942 = tpu.memref_squeeze %941 : memref<1x!tpu.dma_semaphore, #tpu.memory_space<semaphore_mem>> -> memref<!tpu.dma_semaphore, #tpu.memory_space<semaphore_mem>>
      tpu.enqueue_dma source(%938 : memref<384xf32, #tpu.memory_space<any>>) target(%940 : memref<384xf32, #tpu.memory_space<vmem>>) target_semaphore(%942 : memref<!tpu.dma_semaphore, #tpu.memory_space<semaphore_mem>>)
    } else {
    }
    %222 = arith.index_cast %169 : i32 to index
    %c0_144 = arith.constant 0 : index
    %c0_145 = arith.constant 0 : index
    %223 = vector.load %arg7[%222, %c0_144, %c0_145] : memref<2x8x384xf32, #tpu.memory_space<vmem>>, vector<1x8x384xf32>
    %224 = vector.shape_cast %223 : vector<1x8x384xf32> to vector<8x384xf32>
    %225 = vector.extract_strided_slice %155 {offsets = [0, 0], sizes = [8, 32], strides = [1, 1]} : vector<8x128xf32> to vector<8x32xf32>
    %226 = arith.truncf %225 : vector<8x32xf32> to vector<8x32xbf16>
    %c0_146 = arith.constant 0 : index
    %c0_147 = arith.constant 0 : index
    %227 = vector.load %arg2[%c0_146, %c0_147] : memref<32x384xbf16, #tpu.memory_space<vmem>>, vector<32x384xbf16>
    %cst_148 = arith.constant dense<0.000000e+00> : vector<8x384xf32>
    %228 = tpu.matmul %226, %227, %cst_148 {dimension_numbers = #tpu.dot_dimension_numbers<[1], [0], [0], [1], [0, 0, 1, 1], [], []>} : vector<8x32xbf16>, vector<32x384xbf16>, vector<8x384xf32> -> vector<8x384xf32>
    %229 = vector.extract_strided_slice %224 {offsets = [0, 0], sizes = [8, 128], strides = [1, 1]} : vector<8x384xf32> to vector<8x128xf32>
    %230 = vector.extract_strided_slice %228 {offsets = [0, 0], sizes = [8, 128], strides = [1, 1]} : vector<8x384xf32> to vector<8x128xf32>
    %231 = arith.addf %229, %230 : vector<8x128xf32>
    %232 = arith.negf %231 : vector<8x128xf32>
    %233 = math.exp %232 : vector<8x128xf32>
    %cst_149 = arith.constant 1.000000e+00 : f32
    %234 = vector.broadcast %cst_149 : f32 to vector<8x128xf32>
    %235 = arith.addf %234, %233 : vector<8x128xf32>
    %236 = arith.divf %234, %235 : vector<8x128xf32>
    %237 = vector.extract_strided_slice %224 {offsets = [0, 128], sizes = [8, 128], strides = [1, 1]} : vector<8x384xf32> to vector<8x128xf32>
    %238 = vector.extract_strided_slice %228 {offsets = [0, 128], sizes = [8, 128], strides = [1, 1]} : vector<8x384xf32> to vector<8x128xf32>
    %239 = arith.addf %237, %238 : vector<8x128xf32>
    %240 = arith.negf %239 : vector<8x128xf32>
    %241 = math.exp %240 : vector<8x128xf32>
    %cst_150 = arith.constant 1.000000e+00 : f32
    %242 = vector.broadcast %cst_150 : f32 to vector<8x128xf32>
    %243 = arith.addf %242, %241 : vector<8x128xf32>
    %244 = arith.divf %242, %243 : vector<8x128xf32>
    %245 = vector.extract_strided_slice %224 {offsets = [0, 256], sizes = [8, 128], strides = [1, 1]} : vector<8x384xf32> to vector<8x128xf32>
    %246 = vector.extract_strided_slice %228 {offsets = [0, 256], sizes = [8, 128], strides = [1, 1]} : vector<8x384xf32> to vector<8x128xf32>
    %247 = arith.addf %246, %58 : vector<8x128xf32>
    %248 = arith.mulf %236, %247 : vector<8x128xf32>
    %249 = arith.addf %245, %248 : vector<8x128xf32>
    %250 = math.tanh %249 : vector<8x128xf32>
    %cst_151 = arith.constant 1.000000e+00 : f32
    %251 = vector.broadcast %cst_151 : f32 to vector<8x128xf32>
    %252 = arith.subf %251, %244 : vector<8x128xf32>
    %253 = arith.mulf %252, %250 : vector<8x128xf32>
    %254 = arith.mulf %244, %155 : vector<8x128xf32>
    %255 = arith.addf %253, %254 : vector<8x128xf32>
    %256 = arith.index_cast %c1_i32_94 : i32 to index
    %c0_152 = arith.constant 0 : index
    %c0_153 = arith.constant 0 : index
    %257 = vector.load %arg5[%256, %c0_152, %c0_153] : memref<8x8x128xf32, #tpu.memory_space<vmem>>, vector<1x8x128xf32>
    %258 = vector.shape_cast %257 : vector<1x8x128xf32> to vector<8x128xf32>
    %259 = vector.shape_cast %255 : vector<8x128xf32> to vector<1x8x128xf32>
    tpu.vector_store %arg5[%256, %c0_152, %c0_153], %259 {strides = array<i32>} : memref<8x8x128xf32, #tpu.memory_space<vmem>>, vector<1x8x128xf32>,
    %c2_i32_154 = arith.constant 2 : i32
    %c2_i32_155 = arith.constant 2 : i32
    %c0_i32_156 = arith.constant 0 : i32
    %260 = arith.cmpi eq, %c2_i32_155, %c0_i32_156 : i32
    %c1_i32_157 = arith.constant 1 : i32
    %261 = arith.select %260, %c1_i32_157, %c2_i32_155 : i32
    %262 = arith.remsi %c2_i32_154, %261 : i32
    %c0_i32_158 = arith.constant 0 : i32
    %263 = arith.cmpi ne, %262, %c0_i32_158 : i32
    %c0_i32_159 = arith.constant 0 : i32
    %264 = arith.cmpi slt, %262, %c0_i32_159 : i32
    %c0_i32_160 = arith.constant 0 : i32
    %265 = arith.cmpi slt, %261, %c0_i32_160 : i32
    %266 = arith.xori %264, %265 : i1
    %267 = arith.andi %266, %263 : i1
    %268 = arith.addi %262, %261 : i32
    %269 = arith.select %267, %268, %262 : i32
    %c0_i32_161 = arith.constant 0 : i32
    %c0_i32_162 = arith.constant 0 : i32
    %c0_i32_163 = arith.constant 0 : i32
    %c0_i32_164 = arith.constant 0 : i32
    %270 = tpu.memref_slice %arg1[%c0_i32_161, %c0_i32_164] : memref<50x384xf32, #tpu.memory_space<any>> -> memref<1x384xf32, #tpu.memory_space<any>>
    %271 = tpu.memref_squeeze %270 : memref<1x384xf32, #tpu.memory_space<any>> -> memref<384xf32, #tpu.memory_space<any>>
    %c0_i32_165 = arith.constant 0 : i32
    %272 = tpu.memref_slice %arg7[%c0_i32_162, %c0_i32_163, %c0_i32_165] : memref<2x8x384xf32, #tpu.memory_space<vmem>> -> memref<1x1x384xf32, #tpu.memory_space<vmem>>
    %273 = tpu.memref_squeeze %272 : memref<1x1x384xf32, #tpu.memory_space<vmem>> -> memref<384xf32, #tpu.memory_space<vmem>>
    %274 = tpu.memref_slice %arg8[%269] : memref<2x!tpu.dma_semaphore, #tpu.memory_space<semaphore_mem>> -> memref<1x!tpu.dma_semaphore, #tpu.memory_space<semaphore_mem>>
    %275 = tpu.memref_squeeze %274 : memref<1x!tpu.dma_semaphore, #tpu.memory_space<semaphore_mem>> -> memref<!tpu.dma_semaphore, #tpu.memory_space<semaphore_mem>>
    tpu.wait_dma2 semaphore(%275 : memref<!tpu.dma_semaphore, #tpu.memory_space<semaphore_mem>>) src(%271 : memref<384xf32, #tpu.memory_space<any>>) dst(%273 : memref<384xf32, #tpu.memory_space<vmem>>)
    %c0_i32_166 = arith.constant 0 : i32
    %c0_i32_167 = arith.constant 0 : i32
    %c0_i32_168 = arith.constant 0 : i32
    %c0_i32_169 = arith.constant 0 : i32
    %276 = tpu.memref_slice %arg1[%c0_i32_166, %c0_i32_169] : memref<50x384xf32, #tpu.memory_space<any>> -> memref<1x384xf32, #tpu.memory_space<any>>
    %277 = tpu.memref_squeeze %276 : memref<1x384xf32, #tpu.memory_space<any>> -> memref<384xf32, #tpu.memory_space<any>>
    %c0_i32_170 = arith.constant 0 : i32
    %278 = tpu.memref_slice %arg7[%c0_i32_167, %c0_i32_168, %c0_i32_170] : memref<2x8x384xf32, #tpu.memory_space<vmem>> -> memref<1x1x384xf32, #tpu.memory_space<vmem>>
    %279 = tpu.memref_squeeze %278 : memref<1x1x384xf32, #tpu.memory_space<vmem>> -> memref<384xf32, #tpu.memory_space<vmem>>
    %280 = tpu.memref_slice %arg8[%269] : memref<2x!tpu.dma_semaphore, #tpu.memory_space<semaphore_mem>> -> memref<1x!tpu.dma_semaphore, #tpu.memory_space<semaphore_mem>>
    %281 = tpu.memref_squeeze %280 : memref<1x!tpu.dma_semaphore, #tpu.memory_space<semaphore_mem>> -> memref<!tpu.dma_semaphore, #tpu.memory_space<semaphore_mem>>
    tpu.wait_dma2 semaphore(%281 : memref<!tpu.dma_semaphore, #tpu.memory_space<semaphore_mem>>) src(%277 : memref<384xf32, #tpu.memory_space<any>>) dst(%279 : memref<384xf32, #tpu.memory_space<vmem>>)
    %c0_i32_171 = arith.constant 0 : i32
    %c0_i32_172 = arith.constant 0 : i32
    %c0_i32_173 = arith.constant 0 : i32
    %c0_i32_174 = arith.constant 0 : i32
    %282 = tpu.memref_slice %arg1[%c0_i32_171, %c0_i32_174] : memref<50x384xf32, #tpu.memory_space<any>> -> memref<1x384xf32, #tpu.memory_space<any>>
    %283 = tpu.memref_squeeze %282 : memref<1x384xf32, #tpu.memory_space<any>> -> memref<384xf32, #tpu.memory_space<any>>
    %c0_i32_175 = arith.constant 0 : i32
    %284 = tpu.memref_slice %arg7[%c0_i32_172, %c0_i32_173, %c0_i32_175] : memref<2x8x384xf32, #tpu.memory_space<vmem>> -> memref<1x1x384xf32, #tpu.memory_space<vmem>>
    %285 = tpu.memref_squeeze %284 : memref<1x1x384xf32, #tpu.memory_space<vmem>> -> memref<384xf32, #tpu.memory_space<vmem>>
    %286 = tpu.memref_slice %arg8[%269] : memref<2x!tpu.dma_semaphore, #tpu.memory_space<semaphore_mem>> -> memref<1x!tpu.dma_semaphore, #tpu.memory_space<semaphore_mem>>
    %287 = tpu.memref_squeeze %286 : memref<1x!tpu.dma_semaphore, #tpu.memory_space<semaphore_mem>> -> memref<!tpu.dma_semaphore, #tpu.memory_space<semaphore_mem>>
    tpu.wait_dma2 semaphore(%287 : memref<!tpu.dma_semaphore, #tpu.memory_space<semaphore_mem>>) src(%283 : memref<384xf32, #tpu.memory_space<any>>) dst(%285 : memref<384xf32, #tpu.memory_space<vmem>>)
    %c0_i32_176 = arith.constant 0 : i32
    %c0_i32_177 = arith.constant 0 : i32
    %c0_i32_178 = arith.constant 0 : i32
    %c0_i32_179 = arith.constant 0 : i32
    %288 = tpu.memref_slice %arg1[%c0_i32_176, %c0_i32_179] : memref<50x384xf32, #tpu.memory_space<any>> -> memref<1x384xf32, #tpu.memory_space<any>>
    %289 = tpu.memref_squeeze %288 : memref<1x384xf32, #tpu.memory_space<any>> -> memref<384xf32, #tpu.memory_space<any>>
    %c0_i32_180 = arith.constant 0 : i32
    %290 = tpu.memref_slice %arg7[%c0_i32_177, %c0_i32_178, %c0_i32_180] : memref<2x8x384xf32, #tpu.memory_space<vmem>> -> memref<1x1x384xf32, #tpu.memory_space<vmem>>
    %291 = tpu.memref_squeeze %290 : memref<1x1x384xf32, #tpu.memory_space<vmem>> -> memref<384xf32, #tpu.memory_space<vmem>>
    %292 = tpu.memref_slice %arg8[%269] : memref<2x!tpu.dma_semaphore, #tpu.memory_space<semaphore_mem>> -> memref<1x!tpu.dma_semaphore, #tpu.memory_space<semaphore_mem>>
    %293 = tpu.memref_squeeze %292 : memref<1x!tpu.dma_semaphore, #tpu.memory_space<semaphore_mem>> -> memref<!tpu.dma_semaphore, #tpu.memory_space<semaphore_mem>>
    tpu.wait_dma2 semaphore(%293 : memref<!tpu.dma_semaphore, #tpu.memory_space<semaphore_mem>>) src(%289 : memref<384xf32, #tpu.memory_space<any>>) dst(%291 : memref<384xf32, #tpu.memory_space<vmem>>)
    %c0_i32_181 = arith.constant 0 : i32
    %c0_i32_182 = arith.constant 0 : i32
    %c0_i32_183 = arith.constant 0 : i32
    %c0_i32_184 = arith.constant 0 : i32
    %294 = tpu.memref_slice %arg1[%c0_i32_181, %c0_i32_184] : memref<50x384xf32, #tpu.memory_space<any>> -> memref<1x384xf32, #tpu.memory_space<any>>
    %295 = tpu.memref_squeeze %294 : memref<1x384xf32, #tpu.memory_space<any>> -> memref<384xf32, #tpu.memory_space<any>>
    %c0_i32_185 = arith.constant 0 : i32
    %296 = tpu.memref_slice %arg7[%c0_i32_182, %c0_i32_183, %c0_i32_185] : memref<2x8x384xf32, #tpu.memory_space<vmem>> -> memref<1x1x384xf32, #tpu.memory_space<vmem>>
    %297 = tpu.memref_squeeze %296 : memref<1x1x384xf32, #tpu.memory_space<vmem>> -> memref<384xf32, #tpu.memory_space<vmem>>
    %298 = tpu.memref_slice %arg8[%269] : memref<2x!tpu.dma_semaphore, #tpu.memory_space<semaphore_mem>> -> memref<1x!tpu.dma_semaphore, #tpu.memory_space<semaphore_mem>>
    %299 = tpu.memref_squeeze %298 : memref<1x!tpu.dma_semaphore, #tpu.memory_space<semaphore_mem>> -> memref<!tpu.dma_semaphore, #tpu.memory_space<semaphore_mem>>
    tpu.wait_dma2 semaphore(%299 : memref<!tpu.dma_semaphore, #tpu.memory_space<semaphore_mem>>) src(%295 : memref<384xf32, #tpu.memory_space<any>>) dst(%297 : memref<384xf32, #tpu.memory_space<vmem>>)
    %c0_i32_186 = arith.constant 0 : i32
    %c0_i32_187 = arith.constant 0 : i32
    %c0_i32_188 = arith.constant 0 : i32
    %c0_i32_189 = arith.constant 0 : i32
    %300 = tpu.memref_slice %arg1[%c0_i32_186, %c0_i32_189] : memref<50x384xf32, #tpu.memory_space<any>> -> memref<1x384xf32, #tpu.memory_space<any>>
    %301 = tpu.memref_squeeze %300 : memref<1x384xf32, #tpu.memory_space<any>> -> memref<384xf32, #tpu.memory_space<any>>
    %c0_i32_190 = arith.constant 0 : i32
    %302 = tpu.memref_slice %arg7[%c0_i32_187, %c0_i32_188, %c0_i32_190] : memref<2x8x384xf32, #tpu.memory_space<vmem>> -> memref<1x1x384xf32, #tpu.memory_space<vmem>>
    %303 = tpu.memref_squeeze %302 : memref<1x1x384xf32, #tpu.memory_space<vmem>> -> memref<384xf32, #tpu.memory_space<vmem>>
    %304 = tpu.memref_slice %arg8[%269] : memref<2x!tpu.dma_semaphore, #tpu.memory_space<semaphore_mem>> -> memref<1x!tpu.dma_semaphore, #tpu.memory_space<semaphore_mem>>
    %305 = tpu.memref_squeeze %304 : memref<1x!tpu.dma_semaphore, #tpu.memory_space<semaphore_mem>> -> memref<!tpu.dma_semaphore, #tpu.memory_space<semaphore_mem>>
    tpu.wait_dma2 semaphore(%305 : memref<!tpu.dma_semaphore, #tpu.memory_space<semaphore_mem>>) src(%301 : memref<384xf32, #tpu.memory_space<any>>) dst(%303 : memref<384xf32, #tpu.memory_space<vmem>>)
    %c0_i32_191 = arith.constant 0 : i32
    %c0_i32_192 = arith.constant 0 : i32
    %c0_i32_193 = arith.constant 0 : i32
    %c0_i32_194 = arith.constant 0 : i32
    %306 = tpu.memref_slice %arg1[%c0_i32_191, %c0_i32_194] : memref<50x384xf32, #tpu.memory_space<any>> -> memref<1x384xf32, #tpu.memory_space<any>>
    %307 = tpu.memref_squeeze %306 : memref<1x384xf32, #tpu.memory_space<any>> -> memref<384xf32, #tpu.memory_space<any>>
    %c0_i32_195 = arith.constant 0 : i32
    %308 = tpu.memref_slice %arg7[%c0_i32_192, %c0_i32_193, %c0_i32_195] : memref<2x8x384xf32, #tpu.memory_space<vmem>> -> memref<1x1x384xf32, #tpu.memory_space<vmem>>
    %309 = tpu.memref_squeeze %308 : memref<1x1x384xf32, #tpu.memory_space<vmem>> -> memref<384xf32, #tpu.memory_space<vmem>>
    %310 = tpu.memref_slice %arg8[%269] : memref<2x!tpu.dma_semaphore, #tpu.memory_space<semaphore_mem>> -> memref<1x!tpu.dma_semaphore, #tpu.memory_space<semaphore_mem>>
    %311 = tpu.memref_squeeze %310 : memref<1x!tpu.dma_semaphore, #tpu.memory_space<semaphore_mem>> -> memref<!tpu.dma_semaphore, #tpu.memory_space<semaphore_mem>>
    tpu.wait_dma2 semaphore(%311 : memref<!tpu.dma_semaphore, #tpu.memory_space<semaphore_mem>>) src(%307 : memref<384xf32, #tpu.memory_space<any>>) dst(%309 : memref<384xf32, #tpu.memory_space<vmem>>)
    %c0_i32_196 = arith.constant 0 : i32
    %c0_i32_197 = arith.constant 0 : i32
    %c0_i32_198 = arith.constant 0 : i32
    %c0_i32_199 = arith.constant 0 : i32
    %312 = tpu.memref_slice %arg1[%c0_i32_196, %c0_i32_199] : memref<50x384xf32, #tpu.memory_space<any>> -> memref<1x384xf32, #tpu.memory_space<any>>
    %313 = tpu.memref_squeeze %312 : memref<1x384xf32, #tpu.memory_space<any>> -> memref<384xf32, #tpu.memory_space<any>>
    %c0_i32_200 = arith.constant 0 : i32
    %314 = tpu.memref_slice %arg7[%c0_i32_197, %c0_i32_198, %c0_i32_200] : memref<2x8x384xf32, #tpu.memory_space<vmem>> -> memref<1x1x384xf32, #tpu.memory_space<vmem>>
    %315 = tpu.memref_squeeze %314 : memref<1x1x384xf32, #tpu.memory_space<vmem>> -> memref<384xf32, #tpu.memory_space<vmem>>
    %316 = tpu.memref_slice %arg8[%269] : memref<2x!tpu.dma_semaphore, #tpu.memory_space<semaphore_mem>> -> memref<1x!tpu.dma_semaphore, #tpu.memory_space<semaphore_mem>>
    %317 = tpu.memref_squeeze %316 : memref<1x!tpu.dma_semaphore, #tpu.memory_space<semaphore_mem>> -> memref<!tpu.dma_semaphore, #tpu.memory_space<semaphore_mem>>
    tpu.wait_dma2 semaphore(%317 : memref<!tpu.dma_semaphore, #tpu.memory_space<semaphore_mem>>) src(%313 : memref<384xf32, #tpu.memory_space<any>>) dst(%315 : memref<384xf32, #tpu.memory_space<vmem>>)
    %c1_i32_201 = arith.constant 1 : i32
    %318 = arith.addi %c2_i32_154, %c1_i32_201 : i32
    %c8_i32_202 = arith.constant 8 : i32
    %319 = arith.cmpi slt, %318, %c8_i32_202 : i32
    %320 = arith.extui %319 : i1 to i32
    %c0_i32_203 = arith.constant 0 : i32
    %321 = arith.cmpi ne, %320, %c0_i32_203 : i32
    scf.if %321 {
      %c1_i32_517 = arith.constant 1 : i32
      %861 = arith.addi %c2_i32_154, %c1_i32_517 : i32
      %c1_i32_518 = arith.constant 1 : i32
      %862 = arith.subi %c1_i32_518, %269 : i32
      %c8_i32_519 = arith.constant 8 : i32
      %863 = arith.muli %861, %c8_i32_519 : i32
      %c0_i32_520 = arith.constant 0 : i32
      %864 = arith.addi %863, %c0_i32_520 : i32
      %865 = arith.index_cast %864 : i32 to index
      %866 = memref.load %arg0[%865] : memref<64xi32, #tpu.memory_space<smem>>
      %c0_i32_521 = arith.constant 0 : i32
      %c0_i32_522 = arith.constant 0 : i32
      %867 = tpu.memref_slice %arg1[%866, %c0_i32_522] : memref<50x384xf32, #tpu.memory_space<any>> -> memref<1x384xf32, #tpu.memory_space<any>>
      %868 = tpu.memref_squeeze %867 : memref<1x384xf32, #tpu.memory_space<any>> -> memref<384xf32, #tpu.memory_space<any>>
      %c0_i32_523 = arith.constant 0 : i32
      %869 = tpu.memref_slice %arg7[%862, %c0_i32_521, %c0_i32_523] : memref<2x8x384xf32, #tpu.memory_space<vmem>> -> memref<1x1x384xf32, #tpu.memory_space<vmem>>
      %870 = tpu.memref_squeeze %869 : memref<1x1x384xf32, #tpu.memory_space<vmem>> -> memref<384xf32, #tpu.memory_space<vmem>>
      %871 = tpu.memref_slice %arg8[%862] : memref<2x!tpu.dma_semaphore, #tpu.memory_space<semaphore_mem>> -> memref<1x!tpu.dma_semaphore, #tpu.memory_space<semaphore_mem>>
      %872 = tpu.memref_squeeze %871 : memref<1x!tpu.dma_semaphore, #tpu.memory_space<semaphore_mem>> -> memref<!tpu.dma_semaphore, #tpu.memory_space<semaphore_mem>>
      tpu.enqueue_dma source(%868 : memref<384xf32, #tpu.memory_space<any>>) target(%870 : memref<384xf32, #tpu.memory_space<vmem>>) target_semaphore(%872 : memref<!tpu.dma_semaphore, #tpu.memory_space<semaphore_mem>>)
      %c8_i32_524 = arith.constant 8 : i32
      %873 = arith.muli %861, %c8_i32_524 : i32
      %c1_i32_525 = arith.constant 1 : i32
      %874 = arith.addi %873, %c1_i32_525 : i32
      %875 = arith.index_cast %874 : i32 to index
      %876 = memref.load %arg0[%875] : memref<64xi32, #tpu.memory_space<smem>>
      %c1_i32_526 = arith.constant 1 : i32
      %c0_i32_527 = arith.constant 0 : i32
      %877 = tpu.memref_slice %arg1[%876, %c0_i32_527] : memref<50x384xf32, #tpu.memory_space<any>> -> memref<1x384xf32, #tpu.memory_space<any>>
      %878 = tpu.memref_squeeze %877 : memref<1x384xf32, #tpu.memory_space<any>> -> memref<384xf32, #tpu.memory_space<any>>
      %c0_i32_528 = arith.constant 0 : i32
      %879 = tpu.memref_slice %arg7[%862, %c1_i32_526, %c0_i32_528] : memref<2x8x384xf32, #tpu.memory_space<vmem>> -> memref<1x1x384xf32, #tpu.memory_space<vmem>>
      %880 = tpu.memref_squeeze %879 : memref<1x1x384xf32, #tpu.memory_space<vmem>> -> memref<384xf32, #tpu.memory_space<vmem>>
      %881 = tpu.memref_slice %arg8[%862] : memref<2x!tpu.dma_semaphore, #tpu.memory_space<semaphore_mem>> -> memref<1x!tpu.dma_semaphore, #tpu.memory_space<semaphore_mem>>
      %882 = tpu.memref_squeeze %881 : memref<1x!tpu.dma_semaphore, #tpu.memory_space<semaphore_mem>> -> memref<!tpu.dma_semaphore, #tpu.memory_space<semaphore_mem>>
      tpu.enqueue_dma source(%878 : memref<384xf32, #tpu.memory_space<any>>) target(%880 : memref<384xf32, #tpu.memory_space<vmem>>) target_semaphore(%882 : memref<!tpu.dma_semaphore, #tpu.memory_space<semaphore_mem>>)
      %c8_i32_529 = arith.constant 8 : i32
      %883 = arith.muli %861, %c8_i32_529 : i32
      %c2_i32_530 = arith.constant 2 : i32
      %884 = arith.addi %883, %c2_i32_530 : i32
      %885 = arith.index_cast %884 : i32 to index
      %886 = memref.load %arg0[%885] : memref<64xi32, #tpu.memory_space<smem>>
      %c2_i32_531 = arith.constant 2 : i32
      %c0_i32_532 = arith.constant 0 : i32
      %887 = tpu.memref_slice %arg1[%886, %c0_i32_532] : memref<50x384xf32, #tpu.memory_space<any>> -> memref<1x384xf32, #tpu.memory_space<any>>
      %888 = tpu.memref_squeeze %887 : memref<1x384xf32, #tpu.memory_space<any>> -> memref<384xf32, #tpu.memory_space<any>>
      %c0_i32_533 = arith.constant 0 : i32
      %889 = tpu.memref_slice %arg7[%862, %c2_i32_531, %c0_i32_533] : memref<2x8x384xf32, #tpu.memory_space<vmem>> -> memref<1x1x384xf32, #tpu.memory_space<vmem>>
      %890 = tpu.memref_squeeze %889 : memref<1x1x384xf32, #tpu.memory_space<vmem>> -> memref<384xf32, #tpu.memory_space<vmem>>
      %891 = tpu.memref_slice %arg8[%862] : memref<2x!tpu.dma_semaphore, #tpu.memory_space<semaphore_mem>> -> memref<1x!tpu.dma_semaphore, #tpu.memory_space<semaphore_mem>>
      %892 = tpu.memref_squeeze %891 : memref<1x!tpu.dma_semaphore, #tpu.memory_space<semaphore_mem>> -> memref<!tpu.dma_semaphore, #tpu.memory_space<semaphore_mem>>
      tpu.enqueue_dma source(%888 : memref<384xf32, #tpu.memory_space<any>>) target(%890 : memref<384xf32, #tpu.memory_space<vmem>>) target_semaphore(%892 : memref<!tpu.dma_semaphore, #tpu.memory_space<semaphore_mem>>)
      %c8_i32_534 = arith.constant 8 : i32
      %893 = arith.muli %861, %c8_i32_534 : i32
      %c3_i32_535 = arith.constant 3 : i32
      %894 = arith.addi %893, %c3_i32_535 : i32
      %895 = arith.index_cast %894 : i32 to index
      %896 = memref.load %arg0[%895] : memref<64xi32, #tpu.memory_space<smem>>
      %c3_i32_536 = arith.constant 3 : i32
      %c0_i32_537 = arith.constant 0 : i32
      %897 = tpu.memref_slice %arg1[%896, %c0_i32_537] : memref<50x384xf32, #tpu.memory_space<any>> -> memref<1x384xf32, #tpu.memory_space<any>>
      %898 = tpu.memref_squeeze %897 : memref<1x384xf32, #tpu.memory_space<any>> -> memref<384xf32, #tpu.memory_space<any>>
      %c0_i32_538 = arith.constant 0 : i32
      %899 = tpu.memref_slice %arg7[%862, %c3_i32_536, %c0_i32_538] : memref<2x8x384xf32, #tpu.memory_space<vmem>> -> memref<1x1x384xf32, #tpu.memory_space<vmem>>
      %900 = tpu.memref_squeeze %899 : memref<1x1x384xf32, #tpu.memory_space<vmem>> -> memref<384xf32, #tpu.memory_space<vmem>>
      %901 = tpu.memref_slice %arg8[%862] : memref<2x!tpu.dma_semaphore, #tpu.memory_space<semaphore_mem>> -> memref<1x!tpu.dma_semaphore, #tpu.memory_space<semaphore_mem>>
      %902 = tpu.memref_squeeze %901 : memref<1x!tpu.dma_semaphore, #tpu.memory_space<semaphore_mem>> -> memref<!tpu.dma_semaphore, #tpu.memory_space<semaphore_mem>>
      tpu.enqueue_dma source(%898 : memref<384xf32, #tpu.memory_space<any>>) target(%900 : memref<384xf32, #tpu.memory_space<vmem>>) target_semaphore(%902 : memref<!tpu.dma_semaphore, #tpu.memory_space<semaphore_mem>>)
      %c8_i32_539 = arith.constant 8 : i32
      %903 = arith.muli %861, %c8_i32_539 : i32
      %c4_i32_540 = arith.constant 4 : i32
      %904 = arith.addi %903, %c4_i32_540 : i32
      %905 = arith.index_cast %904 : i32 to index
      %906 = memref.load %arg0[%905] : memref<64xi32, #tpu.memory_space<smem>>
      %c4_i32_541 = arith.constant 4 : i32
      %c0_i32_542 = arith.constant 0 : i32
      %907 = tpu.memref_slice %arg1[%906, %c0_i32_542] : memref<50x384xf32, #tpu.memory_space<any>> -> memref<1x384xf32, #tpu.memory_space<any>>
      %908 = tpu.memref_squeeze %907 : memref<1x384xf32, #tpu.memory_space<any>> -> memref<384xf32, #tpu.memory_space<any>>
      %c0_i32_543 = arith.constant 0 : i32
      %909 = tpu.memref_slice %arg7[%862, %c4_i32_541, %c0_i32_543] : memref<2x8x384xf32, #tpu.memory_space<vmem>> -> memref<1x1x384xf32, #tpu.memory_space<vmem>>
      %910 = tpu.memref_squeeze %909 : memref<1x1x384xf32, #tpu.memory_space<vmem>> -> memref<384xf32, #tpu.memory_space<vmem>>
      %911 = tpu.memref_slice %arg8[%862] : memref<2x!tpu.dma_semaphore, #tpu.memory_space<semaphore_mem>> -> memref<1x!tpu.dma_semaphore, #tpu.memory_space<semaphore_mem>>
      %912 = tpu.memref_squeeze %911 : memref<1x!tpu.dma_semaphore, #tpu.memory_space<semaphore_mem>> -> memref<!tpu.dma_semaphore, #tpu.memory_space<semaphore_mem>>
      tpu.enqueue_dma source(%908 : memref<384xf32, #tpu.memory_space<any>>) target(%910 : memref<384xf32, #tpu.memory_space<vmem>>) target_semaphore(%912 : memref<!tpu.dma_semaphore, #tpu.memory_space<semaphore_mem>>)
      %c8_i32_544 = arith.constant 8 : i32
      %913 = arith.muli %861, %c8_i32_544 : i32
      %c5_i32_545 = arith.constant 5 : i32
      %914 = arith.addi %913, %c5_i32_545 : i32
      %915 = arith.index_cast %914 : i32 to index
      %916 = memref.load %arg0[%915] : memref<64xi32, #tpu.memory_space<smem>>
      %c5_i32_546 = arith.constant 5 : i32
      %c0_i32_547 = arith.constant 0 : i32
      %917 = tpu.memref_slice %arg1[%916, %c0_i32_547] : memref<50x384xf32, #tpu.memory_space<any>> -> memref<1x384xf32, #tpu.memory_space<any>>
      %918 = tpu.memref_squeeze %917 : memref<1x384xf32, #tpu.memory_space<any>> -> memref<384xf32, #tpu.memory_space<any>>
      %c0_i32_548 = arith.constant 0 : i32
      %919 = tpu.memref_slice %arg7[%862, %c5_i32_546, %c0_i32_548] : memref<2x8x384xf32, #tpu.memory_space<vmem>> -> memref<1x1x384xf32, #tpu.memory_space<vmem>>
      %920 = tpu.memref_squeeze %919 : memref<1x1x384xf32, #tpu.memory_space<vmem>> -> memref<384xf32, #tpu.memory_space<vmem>>
      %921 = tpu.memref_slice %arg8[%862] : memref<2x!tpu.dma_semaphore, #tpu.memory_space<semaphore_mem>> -> memref<1x!tpu.dma_semaphore, #tpu.memory_space<semaphore_mem>>
      %922 = tpu.memref_squeeze %921 : memref<1x!tpu.dma_semaphore, #tpu.memory_space<semaphore_mem>> -> memref<!tpu.dma_semaphore, #tpu.memory_space<semaphore_mem>>
      tpu.enqueue_dma source(%918 : memref<384xf32, #tpu.memory_space<any>>) target(%920 : memref<384xf32, #tpu.memory_space<vmem>>) target_semaphore(%922 : memref<!tpu.dma_semaphore, #tpu.memory_space<semaphore_mem>>)
      %c8_i32_549 = arith.constant 8 : i32
      %923 = arith.muli %861, %c8_i32_549 : i32
      %c6_i32_550 = arith.constant 6 : i32
      %924 = arith.addi %923, %c6_i32_550 : i32
      %925 = arith.index_cast %924 : i32 to index
      %926 = memref.load %arg0[%925] : memref<64xi32, #tpu.memory_space<smem>>
      %c6_i32_551 = arith.constant 6 : i32
      %c0_i32_552 = arith.constant 0 : i32
      %927 = tpu.memref_slice %arg1[%926, %c0_i32_552] : memref<50x384xf32, #tpu.memory_space<any>> -> memref<1x384xf32, #tpu.memory_space<any>>
      %928 = tpu.memref_squeeze %927 : memref<1x384xf32, #tpu.memory_space<any>> -> memref<384xf32, #tpu.memory_space<any>>
      %c0_i32_553 = arith.constant 0 : i32
      %929 = tpu.memref_slice %arg7[%862, %c6_i32_551, %c0_i32_553] : memref<2x8x384xf32, #tpu.memory_space<vmem>> -> memref<1x1x384xf32, #tpu.memory_space<vmem>>
      %930 = tpu.memref_squeeze %929 : memref<1x1x384xf32, #tpu.memory_space<vmem>> -> memref<384xf32, #tpu.memory_space<vmem>>
      %931 = tpu.memref_slice %arg8[%862] : memref<2x!tpu.dma_semaphore, #tpu.memory_space<semaphore_mem>> -> memref<1x!tpu.dma_semaphore, #tpu.memory_space<semaphore_mem>>
      %932 = tpu.memref_squeeze %931 : memref<1x!tpu.dma_semaphore, #tpu.memory_space<semaphore_mem>> -> memref<!tpu.dma_semaphore, #tpu.memory_space<semaphore_mem>>
      tpu.enqueue_dma source(%928 : memref<384xf32, #tpu.memory_space<any>>) target(%930 : memref<384xf32, #tpu.memory_space<vmem>>) target_semaphore(%932 : memref<!tpu.dma_semaphore, #tpu.memory_space<semaphore_mem>>)
      %c8_i32_554 = arith.constant 8 : i32
      %933 = arith.muli %861, %c8_i32_554 : i32
      %c7_i32_555 = arith.constant 7 : i32
      %934 = arith.addi %933, %c7_i32_555 : i32
      %935 = arith.index_cast %934 : i32 to index
      %936 = memref.load %arg0[%935] : memref<64xi32, #tpu.memory_space<smem>>
      %c7_i32_556 = arith.constant 7 : i32
      %c0_i32_557 = arith.constant 0 : i32
      %937 = tpu.memref_slice %arg1[%936, %c0_i32_557] : memref<50x384xf32, #tpu.memory_space<any>> -> memref<1x384xf32, #tpu.memory_space<any>>
      %938 = tpu.memref_squeeze %937 : memref<1x384xf32, #tpu.memory_space<any>> -> memref<384xf32, #tpu.memory_space<any>>
      %c0_i32_558 = arith.constant 0 : i32
      %939 = tpu.memref_slice %arg7[%862, %c7_i32_556, %c0_i32_558] : memref<2x8x384xf32, #tpu.memory_space<vmem>> -> memref<1x1x384xf32, #tpu.memory_space<vmem>>
      %940 = tpu.memref_squeeze %939 : memref<1x1x384xf32, #tpu.memory_space<vmem>> -> memref<384xf32, #tpu.memory_space<vmem>>
      %941 = tpu.memref_slice %arg8[%862] : memref<2x!tpu.dma_semaphore, #tpu.memory_space<semaphore_mem>> -> memref<1x!tpu.dma_semaphore, #tpu.memory_space<semaphore_mem>>
      %942 = tpu.memref_squeeze %941 : memref<1x!tpu.dma_semaphore, #tpu.memory_space<semaphore_mem>> -> memref<!tpu.dma_semaphore, #tpu.memory_space<semaphore_mem>>
      tpu.enqueue_dma source(%938 : memref<384xf32, #tpu.memory_space<any>>) target(%940 : memref<384xf32, #tpu.memory_space<vmem>>) target_semaphore(%942 : memref<!tpu.dma_semaphore, #tpu.memory_space<semaphore_mem>>)
    } else {
    }
    %322 = arith.index_cast %269 : i32 to index
    %c0_204 = arith.constant 0 : index
    %c0_205 = arith.constant 0 : index
    %323 = vector.load %arg7[%322, %c0_204, %c0_205] : memref<2x8x384xf32, #tpu.memory_space<vmem>>, vector<1x8x384xf32>
    %324 = vector.shape_cast %323 : vector<1x8x384xf32> to vector<8x384xf32>
    %325 = vector.extract_strided_slice %255 {offsets = [0, 0], sizes = [8, 32], strides = [1, 1]} : vector<8x128xf32> to vector<8x32xf32>
    %326 = arith.truncf %325 : vector<8x32xf32> to vector<8x32xbf16>
    %c0_206 = arith.constant 0 : index
    %c0_207 = arith.constant 0 : index
    %327 = vector.load %arg2[%c0_206, %c0_207] : memref<32x384xbf16, #tpu.memory_space<vmem>>, vector<32x384xbf16>
    %cst_208 = arith.constant dense<0.000000e+00> : vector<8x384xf32>
    %328 = tpu.matmul %326, %327, %cst_208 {dimension_numbers = #tpu.dot_dimension_numbers<[1], [0], [0], [1], [0, 0, 1, 1], [], []>} : vector<8x32xbf16>, vector<32x384xbf16>, vector<8x384xf32> -> vector<8x384xf32>
    %329 = vector.extract_strided_slice %324 {offsets = [0, 0], sizes = [8, 128], strides = [1, 1]} : vector<8x384xf32> to vector<8x128xf32>
    %330 = vector.extract_strided_slice %328 {offsets = [0, 0], sizes = [8, 128], strides = [1, 1]} : vector<8x384xf32> to vector<8x128xf32>
    %331 = arith.addf %329, %330 : vector<8x128xf32>
    %332 = arith.negf %331 : vector<8x128xf32>
    %333 = math.exp %332 : vector<8x128xf32>
    %cst_209 = arith.constant 1.000000e+00 : f32
    %334 = vector.broadcast %cst_209 : f32 to vector<8x128xf32>
    %335 = arith.addf %334, %333 : vector<8x128xf32>
    %336 = arith.divf %334, %335 : vector<8x128xf32>
    %337 = vector.extract_strided_slice %324 {offsets = [0, 128], sizes = [8, 128], strides = [1, 1]} : vector<8x384xf32> to vector<8x128xf32>
    %338 = vector.extract_strided_slice %328 {offsets = [0, 128], sizes = [8, 128], strides = [1, 1]} : vector<8x384xf32> to vector<8x128xf32>
    %339 = arith.addf %337, %338 : vector<8x128xf32>
    %340 = arith.negf %339 : vector<8x128xf32>
    %341 = math.exp %340 : vector<8x128xf32>
    %cst_210 = arith.constant 1.000000e+00 : f32
    %342 = vector.broadcast %cst_210 : f32 to vector<8x128xf32>
    %343 = arith.addf %342, %341 : vector<8x128xf32>
    %344 = arith.divf %342, %343 : vector<8x128xf32>
    %345 = vector.extract_strided_slice %324 {offsets = [0, 256], sizes = [8, 128], strides = [1, 1]} : vector<8x384xf32> to vector<8x128xf32>
    %346 = vector.extract_strided_slice %328 {offsets = [0, 256], sizes = [8, 128], strides = [1, 1]} : vector<8x384xf32> to vector<8x128xf32>
    %347 = arith.addf %346, %58 : vector<8x128xf32>
    %348 = arith.mulf %336, %347 : vector<8x128xf32>
    %349 = arith.addf %345, %348 : vector<8x128xf32>
    %350 = math.tanh %349 : vector<8x128xf32>
    %cst_211 = arith.constant 1.000000e+00 : f32
    %351 = vector.broadcast %cst_211 : f32 to vector<8x128xf32>
    %352 = arith.subf %351, %344 : vector<8x128xf32>
    %353 = arith.mulf %352, %350 : vector<8x128xf32>
    %354 = arith.mulf %344, %255 : vector<8x128xf32>
    %355 = arith.addf %353, %354 : vector<8x128xf32>
    %356 = arith.index_cast %c2_i32_154 : i32 to index
    %c0_212 = arith.constant 0 : index
    %c0_213 = arith.constant 0 : index
    %357 = vector.load %arg5[%356, %c0_212, %c0_213] : memref<8x8x128xf32, #tpu.memory_space<vmem>>, vector<1x8x128xf32>
    %358 = vector.shape_cast %357 : vector<1x8x128xf32> to vector<8x128xf32>
    %359 = vector.shape_cast %355 : vector<8x128xf32> to vector<1x8x128xf32>
    tpu.vector_store %arg5[%356, %c0_212, %c0_213], %359 {strides = array<i32>} : memref<8x8x128xf32, #tpu.memory_space<vmem>>, vector<1x8x128xf32>,
    %c3_i32_214 = arith.constant 3 : i32
    %c2_i32_215 = arith.constant 2 : i32
    %c0_i32_216 = arith.constant 0 : i32
    %360 = arith.cmpi eq, %c2_i32_215, %c0_i32_216 : i32
    %c1_i32_217 = arith.constant 1 : i32
    %361 = arith.select %360, %c1_i32_217, %c2_i32_215 : i32
    %362 = arith.remsi %c3_i32_214, %361 : i32
    %c0_i32_218 = arith.constant 0 : i32
    %363 = arith.cmpi ne, %362, %c0_i32_218 : i32
    %c0_i32_219 = arith.constant 0 : i32
    %364 = arith.cmpi slt, %362, %c0_i32_219 : i32
    %c0_i32_220 = arith.constant 0 : i32
    %365 = arith.cmpi slt, %361, %c0_i32_220 : i32
    %366 = arith.xori %364, %365 : i1
    %367 = arith.andi %366, %363 : i1
    %368 = arith.addi %362, %361 : i32
    %369 = arith.select %367, %368, %362 : i32
    %c0_i32_221 = arith.constant 0 : i32
    %c0_i32_222 = arith.constant 0 : i32
    %c0_i32_223 = arith.constant 0 : i32
    %c0_i32_224 = arith.constant 0 : i32
    %370 = tpu.memref_slice %arg1[%c0_i32_221, %c0_i32_224] : memref<50x384xf32, #tpu.memory_space<any>> -> memref<1x384xf32, #tpu.memory_space<any>>
    %371 = tpu.memref_squeeze %370 : memref<1x384xf32, #tpu.memory_space<any>> -> memref<384xf32, #tpu.memory_space<any>>
    %c0_i32_225 = arith.constant 0 : i32
    %372 = tpu.memref_slice %arg7[%c0_i32_222, %c0_i32_223, %c0_i32_225] : memref<2x8x384xf32, #tpu.memory_space<vmem>> -> memref<1x1x384xf32, #tpu.memory_space<vmem>>
    %373 = tpu.memref_squeeze %372 : memref<1x1x384xf32, #tpu.memory_space<vmem>> -> memref<384xf32, #tpu.memory_space<vmem>>
    %374 = tpu.memref_slice %arg8[%369] : memref<2x!tpu.dma_semaphore, #tpu.memory_space<semaphore_mem>> -> memref<1x!tpu.dma_semaphore, #tpu.memory_space<semaphore_mem>>
    %375 = tpu.memref_squeeze %374 : memref<1x!tpu.dma_semaphore, #tpu.memory_space<semaphore_mem>> -> memref<!tpu.dma_semaphore, #tpu.memory_space<semaphore_mem>>
    tpu.wait_dma2 semaphore(%375 : memref<!tpu.dma_semaphore, #tpu.memory_space<semaphore_mem>>) src(%371 : memref<384xf32, #tpu.memory_space<any>>) dst(%373 : memref<384xf32, #tpu.memory_space<vmem>>)
    %c0_i32_226 = arith.constant 0 : i32
    %c0_i32_227 = arith.constant 0 : i32
    %c0_i32_228 = arith.constant 0 : i32
    %c0_i32_229 = arith.constant 0 : i32
    %376 = tpu.memref_slice %arg1[%c0_i32_226, %c0_i32_229] : memref<50x384xf32, #tpu.memory_space<any>> -> memref<1x384xf32, #tpu.memory_space<any>>
    %377 = tpu.memref_squeeze %376 : memref<1x384xf32, #tpu.memory_space<any>> -> memref<384xf32, #tpu.memory_space<any>>
    %c0_i32_230 = arith.constant 0 : i32
    %378 = tpu.memref_slice %arg7[%c0_i32_227, %c0_i32_228, %c0_i32_230] : memref<2x8x384xf32, #tpu.memory_space<vmem>> -> memref<1x1x384xf32, #tpu.memory_space<vmem>>
    %379 = tpu.memref_squeeze %378 : memref<1x1x384xf32, #tpu.memory_space<vmem>> -> memref<384xf32, #tpu.memory_space<vmem>>
    %380 = tpu.memref_slice %arg8[%369] : memref<2x!tpu.dma_semaphore, #tpu.memory_space<semaphore_mem>> -> memref<1x!tpu.dma_semaphore, #tpu.memory_space<semaphore_mem>>
    %381 = tpu.memref_squeeze %380 : memref<1x!tpu.dma_semaphore, #tpu.memory_space<semaphore_mem>> -> memref<!tpu.dma_semaphore, #tpu.memory_space<semaphore_mem>>
    tpu.wait_dma2 semaphore(%381 : memref<!tpu.dma_semaphore, #tpu.memory_space<semaphore_mem>>) src(%377 : memref<384xf32, #tpu.memory_space<any>>) dst(%379 : memref<384xf32, #tpu.memory_space<vmem>>)
    %c0_i32_231 = arith.constant 0 : i32
    %c0_i32_232 = arith.constant 0 : i32
    %c0_i32_233 = arith.constant 0 : i32
    %c0_i32_234 = arith.constant 0 : i32
    %382 = tpu.memref_slice %arg1[%c0_i32_231, %c0_i32_234] : memref<50x384xf32, #tpu.memory_space<any>> -> memref<1x384xf32, #tpu.memory_space<any>>
    %383 = tpu.memref_squeeze %382 : memref<1x384xf32, #tpu.memory_space<any>> -> memref<384xf32, #tpu.memory_space<any>>
    %c0_i32_235 = arith.constant 0 : i32
    %384 = tpu.memref_slice %arg7[%c0_i32_232, %c0_i32_233, %c0_i32_235] : memref<2x8x384xf32, #tpu.memory_space<vmem>> -> memref<1x1x384xf32, #tpu.memory_space<vmem>>
    %385 = tpu.memref_squeeze %384 : memref<1x1x384xf32, #tpu.memory_space<vmem>> -> memref<384xf32, #tpu.memory_space<vmem>>
    %386 = tpu.memref_slice %arg8[%369] : memref<2x!tpu.dma_semaphore, #tpu.memory_space<semaphore_mem>> -> memref<1x!tpu.dma_semaphore, #tpu.memory_space<semaphore_mem>>
    %387 = tpu.memref_squeeze %386 : memref<1x!tpu.dma_semaphore, #tpu.memory_space<semaphore_mem>> -> memref<!tpu.dma_semaphore, #tpu.memory_space<semaphore_mem>>
    tpu.wait_dma2 semaphore(%387 : memref<!tpu.dma_semaphore, #tpu.memory_space<semaphore_mem>>) src(%383 : memref<384xf32, #tpu.memory_space<any>>) dst(%385 : memref<384xf32, #tpu.memory_space<vmem>>)
    %c0_i32_236 = arith.constant 0 : i32
    %c0_i32_237 = arith.constant 0 : i32
    %c0_i32_238 = arith.constant 0 : i32
    %c0_i32_239 = arith.constant 0 : i32
    %388 = tpu.memref_slice %arg1[%c0_i32_236, %c0_i32_239] : memref<50x384xf32, #tpu.memory_space<any>> -> memref<1x384xf32, #tpu.memory_space<any>>
    %389 = tpu.memref_squeeze %388 : memref<1x384xf32, #tpu.memory_space<any>> -> memref<384xf32, #tpu.memory_space<any>>
    %c0_i32_240 = arith.constant 0 : i32
    %390 = tpu.memref_slice %arg7[%c0_i32_237, %c0_i32_238, %c0_i32_240] : memref<2x8x384xf32, #tpu.memory_space<vmem>> -> memref<1x1x384xf32, #tpu.memory_space<vmem>>
    %391 = tpu.memref_squeeze %390 : memref<1x1x384xf32, #tpu.memory_space<vmem>> -> memref<384xf32, #tpu.memory_space<vmem>>
    %392 = tpu.memref_slice %arg8[%369] : memref<2x!tpu.dma_semaphore, #tpu.memory_space<semaphore_mem>> -> memref<1x!tpu.dma_semaphore, #tpu.memory_space<semaphore_mem>>
    %393 = tpu.memref_squeeze %392 : memref<1x!tpu.dma_semaphore, #tpu.memory_space<semaphore_mem>> -> memref<!tpu.dma_semaphore, #tpu.memory_space<semaphore_mem>>
    tpu.wait_dma2 semaphore(%393 : memref<!tpu.dma_semaphore, #tpu.memory_space<semaphore_mem>>) src(%389 : memref<384xf32, #tpu.memory_space<any>>) dst(%391 : memref<384xf32, #tpu.memory_space<vmem>>)
    %c0_i32_241 = arith.constant 0 : i32
    %c0_i32_242 = arith.constant 0 : i32
    %c0_i32_243 = arith.constant 0 : i32
    %c0_i32_244 = arith.constant 0 : i32
    %394 = tpu.memref_slice %arg1[%c0_i32_241, %c0_i32_244] : memref<50x384xf32, #tpu.memory_space<any>> -> memref<1x384xf32, #tpu.memory_space<any>>
    %395 = tpu.memref_squeeze %394 : memref<1x384xf32, #tpu.memory_space<any>> -> memref<384xf32, #tpu.memory_space<any>>
    %c0_i32_245 = arith.constant 0 : i32
    %396 = tpu.memref_slice %arg7[%c0_i32_242, %c0_i32_243, %c0_i32_245] : memref<2x8x384xf32, #tpu.memory_space<vmem>> -> memref<1x1x384xf32, #tpu.memory_space<vmem>>
    %397 = tpu.memref_squeeze %396 : memref<1x1x384xf32, #tpu.memory_space<vmem>> -> memref<384xf32, #tpu.memory_space<vmem>>
    %398 = tpu.memref_slice %arg8[%369] : memref<2x!tpu.dma_semaphore, #tpu.memory_space<semaphore_mem>> -> memref<1x!tpu.dma_semaphore, #tpu.memory_space<semaphore_mem>>
    %399 = tpu.memref_squeeze %398 : memref<1x!tpu.dma_semaphore, #tpu.memory_space<semaphore_mem>> -> memref<!tpu.dma_semaphore, #tpu.memory_space<semaphore_mem>>
    tpu.wait_dma2 semaphore(%399 : memref<!tpu.dma_semaphore, #tpu.memory_space<semaphore_mem>>) src(%395 : memref<384xf32, #tpu.memory_space<any>>) dst(%397 : memref<384xf32, #tpu.memory_space<vmem>>)
    %c0_i32_246 = arith.constant 0 : i32
    %c0_i32_247 = arith.constant 0 : i32
    %c0_i32_248 = arith.constant 0 : i32
    %c0_i32_249 = arith.constant 0 : i32
    %400 = tpu.memref_slice %arg1[%c0_i32_246, %c0_i32_249] : memref<50x384xf32, #tpu.memory_space<any>> -> memref<1x384xf32, #tpu.memory_space<any>>
    %401 = tpu.memref_squeeze %400 : memref<1x384xf32, #tpu.memory_space<any>> -> memref<384xf32, #tpu.memory_space<any>>
    %c0_i32_250 = arith.constant 0 : i32
    %402 = tpu.memref_slice %arg7[%c0_i32_247, %c0_i32_248, %c0_i32_250] : memref<2x8x384xf32, #tpu.memory_space<vmem>> -> memref<1x1x384xf32, #tpu.memory_space<vmem>>
    %403 = tpu.memref_squeeze %402 : memref<1x1x384xf32, #tpu.memory_space<vmem>> -> memref<384xf32, #tpu.memory_space<vmem>>
    %404 = tpu.memref_slice %arg8[%369] : memref<2x!tpu.dma_semaphore, #tpu.memory_space<semaphore_mem>> -> memref<1x!tpu.dma_semaphore, #tpu.memory_space<semaphore_mem>>
    %405 = tpu.memref_squeeze %404 : memref<1x!tpu.dma_semaphore, #tpu.memory_space<semaphore_mem>> -> memref<!tpu.dma_semaphore, #tpu.memory_space<semaphore_mem>>
    tpu.wait_dma2 semaphore(%405 : memref<!tpu.dma_semaphore, #tpu.memory_space<semaphore_mem>>) src(%401 : memref<384xf32, #tpu.memory_space<any>>) dst(%403 : memref<384xf32, #tpu.memory_space<vmem>>)
    %c0_i32_251 = arith.constant 0 : i32
    %c0_i32_252 = arith.constant 0 : i32
    %c0_i32_253 = arith.constant 0 : i32
    %c0_i32_254 = arith.constant 0 : i32
    %406 = tpu.memref_slice %arg1[%c0_i32_251, %c0_i32_254] : memref<50x384xf32, #tpu.memory_space<any>> -> memref<1x384xf32, #tpu.memory_space<any>>
    %407 = tpu.memref_squeeze %406 : memref<1x384xf32, #tpu.memory_space<any>> -> memref<384xf32, #tpu.memory_space<any>>
    %c0_i32_255 = arith.constant 0 : i32
    %408 = tpu.memref_slice %arg7[%c0_i32_252, %c0_i32_253, %c0_i32_255] : memref<2x8x384xf32, #tpu.memory_space<vmem>> -> memref<1x1x384xf32, #tpu.memory_space<vmem>>
    %409 = tpu.memref_squeeze %408 : memref<1x1x384xf32, #tpu.memory_space<vmem>> -> memref<384xf32, #tpu.memory_space<vmem>>
    %410 = tpu.memref_slice %arg8[%369] : memref<2x!tpu.dma_semaphore, #tpu.memory_space<semaphore_mem>> -> memref<1x!tpu.dma_semaphore, #tpu.memory_space<semaphore_mem>>
    %411 = tpu.memref_squeeze %410 : memref<1x!tpu.dma_semaphore, #tpu.memory_space<semaphore_mem>> -> memref<!tpu.dma_semaphore, #tpu.memory_space<semaphore_mem>>
    tpu.wait_dma2 semaphore(%411 : memref<!tpu.dma_semaphore, #tpu.memory_space<semaphore_mem>>) src(%407 : memref<384xf32, #tpu.memory_space<any>>) dst(%409 : memref<384xf32, #tpu.memory_space<vmem>>)
    %c0_i32_256 = arith.constant 0 : i32
    %c0_i32_257 = arith.constant 0 : i32
    %c0_i32_258 = arith.constant 0 : i32
    %c0_i32_259 = arith.constant 0 : i32
    %412 = tpu.memref_slice %arg1[%c0_i32_256, %c0_i32_259] : memref<50x384xf32, #tpu.memory_space<any>> -> memref<1x384xf32, #tpu.memory_space<any>>
    %413 = tpu.memref_squeeze %412 : memref<1x384xf32, #tpu.memory_space<any>> -> memref<384xf32, #tpu.memory_space<any>>
    %c0_i32_260 = arith.constant 0 : i32
    %414 = tpu.memref_slice %arg7[%c0_i32_257, %c0_i32_258, %c0_i32_260] : memref<2x8x384xf32, #tpu.memory_space<vmem>> -> memref<1x1x384xf32, #tpu.memory_space<vmem>>
    %415 = tpu.memref_squeeze %414 : memref<1x1x384xf32, #tpu.memory_space<vmem>> -> memref<384xf32, #tpu.memory_space<vmem>>
    %416 = tpu.memref_slice %arg8[%369] : memref<2x!tpu.dma_semaphore, #tpu.memory_space<semaphore_mem>> -> memref<1x!tpu.dma_semaphore, #tpu.memory_space<semaphore_mem>>
    %417 = tpu.memref_squeeze %416 : memref<1x!tpu.dma_semaphore, #tpu.memory_space<semaphore_mem>> -> memref<!tpu.dma_semaphore, #tpu.memory_space<semaphore_mem>>
    tpu.wait_dma2 semaphore(%417 : memref<!tpu.dma_semaphore, #tpu.memory_space<semaphore_mem>>) src(%413 : memref<384xf32, #tpu.memory_space<any>>) dst(%415 : memref<384xf32, #tpu.memory_space<vmem>>)
    %c1_i32_261 = arith.constant 1 : i32
    %418 = arith.addi %c3_i32_214, %c1_i32_261 : i32
    %c8_i32_262 = arith.constant 8 : i32
    %419 = arith.cmpi slt, %418, %c8_i32_262 : i32
    %420 = arith.extui %419 : i1 to i32
    %c0_i32_263 = arith.constant 0 : i32
    %421 = arith.cmpi ne, %420, %c0_i32_263 : i32
    scf.if %421 {
      %c1_i32_517 = arith.constant 1 : i32
      %861 = arith.addi %c3_i32_214, %c1_i32_517 : i32
      %c1_i32_518 = arith.constant 1 : i32
      %862 = arith.subi %c1_i32_518, %369 : i32
      %c8_i32_519 = arith.constant 8 : i32
      %863 = arith.muli %861, %c8_i32_519 : i32
      %c0_i32_520 = arith.constant 0 : i32
      %864 = arith.addi %863, %c0_i32_520 : i32
      %865 = arith.index_cast %864 : i32 to index
      %866 = memref.load %arg0[%865] : memref<64xi32, #tpu.memory_space<smem>>
      %c0_i32_521 = arith.constant 0 : i32
      %c0_i32_522 = arith.constant 0 : i32
      %867 = tpu.memref_slice %arg1[%866, %c0_i32_522] : memref<50x384xf32, #tpu.memory_space<any>> -> memref<1x384xf32, #tpu.memory_space<any>>
      %868 = tpu.memref_squeeze %867 : memref<1x384xf32, #tpu.memory_space<any>> -> memref<384xf32, #tpu.memory_space<any>>
      %c0_i32_523 = arith.constant 0 : i32
      %869 = tpu.memref_slice %arg7[%862, %c0_i32_521, %c0_i32_523] : memref<2x8x384xf32, #tpu.memory_space<vmem>> -> memref<1x1x384xf32, #tpu.memory_space<vmem>>
      %870 = tpu.memref_squeeze %869 : memref<1x1x384xf32, #tpu.memory_space<vmem>> -> memref<384xf32, #tpu.memory_space<vmem>>
      %871 = tpu.memref_slice %arg8[%862] : memref<2x!tpu.dma_semaphore, #tpu.memory_space<semaphore_mem>> -> memref<1x!tpu.dma_semaphore, #tpu.memory_space<semaphore_mem>>
      %872 = tpu.memref_squeeze %871 : memref<1x!tpu.dma_semaphore, #tpu.memory_space<semaphore_mem>> -> memref<!tpu.dma_semaphore, #tpu.memory_space<semaphore_mem>>
      tpu.enqueue_dma source(%868 : memref<384xf32, #tpu.memory_space<any>>) target(%870 : memref<384xf32, #tpu.memory_space<vmem>>) target_semaphore(%872 : memref<!tpu.dma_semaphore, #tpu.memory_space<semaphore_mem>>)
      %c8_i32_524 = arith.constant 8 : i32
      %873 = arith.muli %861, %c8_i32_524 : i32
      %c1_i32_525 = arith.constant 1 : i32
      %874 = arith.addi %873, %c1_i32_525 : i32
      %875 = arith.index_cast %874 : i32 to index
      %876 = memref.load %arg0[%875] : memref<64xi32, #tpu.memory_space<smem>>
      %c1_i32_526 = arith.constant 1 : i32
      %c0_i32_527 = arith.constant 0 : i32
      %877 = tpu.memref_slice %arg1[%876, %c0_i32_527] : memref<50x384xf32, #tpu.memory_space<any>> -> memref<1x384xf32, #tpu.memory_space<any>>
      %878 = tpu.memref_squeeze %877 : memref<1x384xf32, #tpu.memory_space<any>> -> memref<384xf32, #tpu.memory_space<any>>
      %c0_i32_528 = arith.constant 0 : i32
      %879 = tpu.memref_slice %arg7[%862, %c1_i32_526, %c0_i32_528] : memref<2x8x384xf32, #tpu.memory_space<vmem>> -> memref<1x1x384xf32, #tpu.memory_space<vmem>>
      %880 = tpu.memref_squeeze %879 : memref<1x1x384xf32, #tpu.memory_space<vmem>> -> memref<384xf32, #tpu.memory_space<vmem>>
      %881 = tpu.memref_slice %arg8[%862] : memref<2x!tpu.dma_semaphore, #tpu.memory_space<semaphore_mem>> -> memref<1x!tpu.dma_semaphore, #tpu.memory_space<semaphore_mem>>
      %882 = tpu.memref_squeeze %881 : memref<1x!tpu.dma_semaphore, #tpu.memory_space<semaphore_mem>> -> memref<!tpu.dma_semaphore, #tpu.memory_space<semaphore_mem>>
      tpu.enqueue_dma source(%878 : memref<384xf32, #tpu.memory_space<any>>) target(%880 : memref<384xf32, #tpu.memory_space<vmem>>) target_semaphore(%882 : memref<!tpu.dma_semaphore, #tpu.memory_space<semaphore_mem>>)
      %c8_i32_529 = arith.constant 8 : i32
      %883 = arith.muli %861, %c8_i32_529 : i32
      %c2_i32_530 = arith.constant 2 : i32
      %884 = arith.addi %883, %c2_i32_530 : i32
      %885 = arith.index_cast %884 : i32 to index
      %886 = memref.load %arg0[%885] : memref<64xi32, #tpu.memory_space<smem>>
      %c2_i32_531 = arith.constant 2 : i32
      %c0_i32_532 = arith.constant 0 : i32
      %887 = tpu.memref_slice %arg1[%886, %c0_i32_532] : memref<50x384xf32, #tpu.memory_space<any>> -> memref<1x384xf32, #tpu.memory_space<any>>
      %888 = tpu.memref_squeeze %887 : memref<1x384xf32, #tpu.memory_space<any>> -> memref<384xf32, #tpu.memory_space<any>>
      %c0_i32_533 = arith.constant 0 : i32
      %889 = tpu.memref_slice %arg7[%862, %c2_i32_531, %c0_i32_533] : memref<2x8x384xf32, #tpu.memory_space<vmem>> -> memref<1x1x384xf32, #tpu.memory_space<vmem>>
      %890 = tpu.memref_squeeze %889 : memref<1x1x384xf32, #tpu.memory_space<vmem>> -> memref<384xf32, #tpu.memory_space<vmem>>
      %891 = tpu.memref_slice %arg8[%862] : memref<2x!tpu.dma_semaphore, #tpu.memory_space<semaphore_mem>> -> memref<1x!tpu.dma_semaphore, #tpu.memory_space<semaphore_mem>>
      %892 = tpu.memref_squeeze %891 : memref<1x!tpu.dma_semaphore, #tpu.memory_space<semaphore_mem>> -> memref<!tpu.dma_semaphore, #tpu.memory_space<semaphore_mem>>
      tpu.enqueue_dma source(%888 : memref<384xf32, #tpu.memory_space<any>>) target(%890 : memref<384xf32, #tpu.memory_space<vmem>>) target_semaphore(%892 : memref<!tpu.dma_semaphore, #tpu.memory_space<semaphore_mem>>)
      %c8_i32_534 = arith.constant 8 : i32
      %893 = arith.muli %861, %c8_i32_534 : i32
      %c3_i32_535 = arith.constant 3 : i32
      %894 = arith.addi %893, %c3_i32_535 : i32
      %895 = arith.index_cast %894 : i32 to index
      %896 = memref.load %arg0[%895] : memref<64xi32, #tpu.memory_space<smem>>
      %c3_i32_536 = arith.constant 3 : i32
      %c0_i32_537 = arith.constant 0 : i32
      %897 = tpu.memref_slice %arg1[%896, %c0_i32_537] : memref<50x384xf32, #tpu.memory_space<any>> -> memref<1x384xf32, #tpu.memory_space<any>>
      %898 = tpu.memref_squeeze %897 : memref<1x384xf32, #tpu.memory_space<any>> -> memref<384xf32, #tpu.memory_space<any>>
      %c0_i32_538 = arith.constant 0 : i32
      %899 = tpu.memref_slice %arg7[%862, %c3_i32_536, %c0_i32_538] : memref<2x8x384xf32, #tpu.memory_space<vmem>> -> memref<1x1x384xf32, #tpu.memory_space<vmem>>
      %900 = tpu.memref_squeeze %899 : memref<1x1x384xf32, #tpu.memory_space<vmem>> -> memref<384xf32, #tpu.memory_space<vmem>>
      %901 = tpu.memref_slice %arg8[%862] : memref<2x!tpu.dma_semaphore, #tpu.memory_space<semaphore_mem>> -> memref<1x!tpu.dma_semaphore, #tpu.memory_space<semaphore_mem>>
      %902 = tpu.memref_squeeze %901 : memref<1x!tpu.dma_semaphore, #tpu.memory_space<semaphore_mem>> -> memref<!tpu.dma_semaphore, #tpu.memory_space<semaphore_mem>>
      tpu.enqueue_dma source(%898 : memref<384xf32, #tpu.memory_space<any>>) target(%900 : memref<384xf32, #tpu.memory_space<vmem>>) target_semaphore(%902 : memref<!tpu.dma_semaphore, #tpu.memory_space<semaphore_mem>>)
      %c8_i32_539 = arith.constant 8 : i32
      %903 = arith.muli %861, %c8_i32_539 : i32
      %c4_i32_540 = arith.constant 4 : i32
      %904 = arith.addi %903, %c4_i32_540 : i32
      %905 = arith.index_cast %904 : i32 to index
      %906 = memref.load %arg0[%905] : memref<64xi32, #tpu.memory_space<smem>>
      %c4_i32_541 = arith.constant 4 : i32
      %c0_i32_542 = arith.constant 0 : i32
      %907 = tpu.memref_slice %arg1[%906, %c0_i32_542] : memref<50x384xf32, #tpu.memory_space<any>> -> memref<1x384xf32, #tpu.memory_space<any>>
      %908 = tpu.memref_squeeze %907 : memref<1x384xf32, #tpu.memory_space<any>> -> memref<384xf32, #tpu.memory_space<any>>
      %c0_i32_543 = arith.constant 0 : i32
      %909 = tpu.memref_slice %arg7[%862, %c4_i32_541, %c0_i32_543] : memref<2x8x384xf32, #tpu.memory_space<vmem>> -> memref<1x1x384xf32, #tpu.memory_space<vmem>>
      %910 = tpu.memref_squeeze %909 : memref<1x1x384xf32, #tpu.memory_space<vmem>> -> memref<384xf32, #tpu.memory_space<vmem>>
      %911 = tpu.memref_slice %arg8[%862] : memref<2x!tpu.dma_semaphore, #tpu.memory_space<semaphore_mem>> -> memref<1x!tpu.dma_semaphore, #tpu.memory_space<semaphore_mem>>
      %912 = tpu.memref_squeeze %911 : memref<1x!tpu.dma_semaphore, #tpu.memory_space<semaphore_mem>> -> memref<!tpu.dma_semaphore, #tpu.memory_space<semaphore_mem>>
      tpu.enqueue_dma source(%908 : memref<384xf32, #tpu.memory_space<any>>) target(%910 : memref<384xf32, #tpu.memory_space<vmem>>) target_semaphore(%912 : memref<!tpu.dma_semaphore, #tpu.memory_space<semaphore_mem>>)
      %c8_i32_544 = arith.constant 8 : i32
      %913 = arith.muli %861, %c8_i32_544 : i32
      %c5_i32_545 = arith.constant 5 : i32
      %914 = arith.addi %913, %c5_i32_545 : i32
      %915 = arith.index_cast %914 : i32 to index
      %916 = memref.load %arg0[%915] : memref<64xi32, #tpu.memory_space<smem>>
      %c5_i32_546 = arith.constant 5 : i32
      %c0_i32_547 = arith.constant 0 : i32
      %917 = tpu.memref_slice %arg1[%916, %c0_i32_547] : memref<50x384xf32, #tpu.memory_space<any>> -> memref<1x384xf32, #tpu.memory_space<any>>
      %918 = tpu.memref_squeeze %917 : memref<1x384xf32, #tpu.memory_space<any>> -> memref<384xf32, #tpu.memory_space<any>>
      %c0_i32_548 = arith.constant 0 : i32
      %919 = tpu.memref_slice %arg7[%862, %c5_i32_546, %c0_i32_548] : memref<2x8x384xf32, #tpu.memory_space<vmem>> -> memref<1x1x384xf32, #tpu.memory_space<vmem>>
      %920 = tpu.memref_squeeze %919 : memref<1x1x384xf32, #tpu.memory_space<vmem>> -> memref<384xf32, #tpu.memory_space<vmem>>
      %921 = tpu.memref_slice %arg8[%862] : memref<2x!tpu.dma_semaphore, #tpu.memory_space<semaphore_mem>> -> memref<1x!tpu.dma_semaphore, #tpu.memory_space<semaphore_mem>>
      %922 = tpu.memref_squeeze %921 : memref<1x!tpu.dma_semaphore, #tpu.memory_space<semaphore_mem>> -> memref<!tpu.dma_semaphore, #tpu.memory_space<semaphore_mem>>
      tpu.enqueue_dma source(%918 : memref<384xf32, #tpu.memory_space<any>>) target(%920 : memref<384xf32, #tpu.memory_space<vmem>>) target_semaphore(%922 : memref<!tpu.dma_semaphore, #tpu.memory_space<semaphore_mem>>)
      %c8_i32_549 = arith.constant 8 : i32
      %923 = arith.muli %861, %c8_i32_549 : i32
      %c6_i32_550 = arith.constant 6 : i32
      %924 = arith.addi %923, %c6_i32_550 : i32
      %925 = arith.index_cast %924 : i32 to index
      %926 = memref.load %arg0[%925] : memref<64xi32, #tpu.memory_space<smem>>
      %c6_i32_551 = arith.constant 6 : i32
      %c0_i32_552 = arith.constant 0 : i32
      %927 = tpu.memref_slice %arg1[%926, %c0_i32_552] : memref<50x384xf32, #tpu.memory_space<any>> -> memref<1x384xf32, #tpu.memory_space<any>>
      %928 = tpu.memref_squeeze %927 : memref<1x384xf32, #tpu.memory_space<any>> -> memref<384xf32, #tpu.memory_space<any>>
      %c0_i32_553 = arith.constant 0 : i32
      %929 = tpu.memref_slice %arg7[%862, %c6_i32_551, %c0_i32_553] : memref<2x8x384xf32, #tpu.memory_space<vmem>> -> memref<1x1x384xf32, #tpu.memory_space<vmem>>
      %930 = tpu.memref_squeeze %929 : memref<1x1x384xf32, #tpu.memory_space<vmem>> -> memref<384xf32, #tpu.memory_space<vmem>>
      %931 = tpu.memref_slice %arg8[%862] : memref<2x!tpu.dma_semaphore, #tpu.memory_space<semaphore_mem>> -> memref<1x!tpu.dma_semaphore, #tpu.memory_space<semaphore_mem>>
      %932 = tpu.memref_squeeze %931 : memref<1x!tpu.dma_semaphore, #tpu.memory_space<semaphore_mem>> -> memref<!tpu.dma_semaphore, #tpu.memory_space<semaphore_mem>>
      tpu.enqueue_dma source(%928 : memref<384xf32, #tpu.memory_space<any>>) target(%930 : memref<384xf32, #tpu.memory_space<vmem>>) target_semaphore(%932 : memref<!tpu.dma_semaphore, #tpu.memory_space<semaphore_mem>>)
      %c8_i32_554 = arith.constant 8 : i32
      %933 = arith.muli %861, %c8_i32_554 : i32
      %c7_i32_555 = arith.constant 7 : i32
      %934 = arith.addi %933, %c7_i32_555 : i32
      %935 = arith.index_cast %934 : i32 to index
      %936 = memref.load %arg0[%935] : memref<64xi32, #tpu.memory_space<smem>>
      %c7_i32_556 = arith.constant 7 : i32
      %c0_i32_557 = arith.constant 0 : i32
      %937 = tpu.memref_slice %arg1[%936, %c0_i32_557] : memref<50x384xf32, #tpu.memory_space<any>> -> memref<1x384xf32, #tpu.memory_space<any>>
      %938 = tpu.memref_squeeze %937 : memref<1x384xf32, #tpu.memory_space<any>> -> memref<384xf32, #tpu.memory_space<any>>
      %c0_i32_558 = arith.constant 0 : i32
      %939 = tpu.memref_slice %arg7[%862, %c7_i32_556, %c0_i32_558] : memref<2x8x384xf32, #tpu.memory_space<vmem>> -> memref<1x1x384xf32, #tpu.memory_space<vmem>>
      %940 = tpu.memref_squeeze %939 : memref<1x1x384xf32, #tpu.memory_space<vmem>> -> memref<384xf32, #tpu.memory_space<vmem>>
      %941 = tpu.memref_slice %arg8[%862] : memref<2x!tpu.dma_semaphore, #tpu.memory_space<semaphore_mem>> -> memref<1x!tpu.dma_semaphore, #tpu.memory_space<semaphore_mem>>
      %942 = tpu.memref_squeeze %941 : memref<1x!tpu.dma_semaphore, #tpu.memory_space<semaphore_mem>> -> memref<!tpu.dma_semaphore, #tpu.memory_space<semaphore_mem>>
      tpu.enqueue_dma source(%938 : memref<384xf32, #tpu.memory_space<any>>) target(%940 : memref<384xf32, #tpu.memory_space<vmem>>) target_semaphore(%942 : memref<!tpu.dma_semaphore, #tpu.memory_space<semaphore_mem>>)
    } else {
    }
    %422 = arith.index_cast %369 : i32 to index
    %c0_264 = arith.constant 0 : index
    %c0_265 = arith.constant 0 : index
    %423 = vector.load %arg7[%422, %c0_264, %c0_265] : memref<2x8x384xf32, #tpu.memory_space<vmem>>, vector<1x8x384xf32>
    %424 = vector.shape_cast %423 : vector<1x8x384xf32> to vector<8x384xf32>
    %425 = vector.extract_strided_slice %355 {offsets = [0, 0], sizes = [8, 32], strides = [1, 1]} : vector<8x128xf32> to vector<8x32xf32>
    %426 = arith.truncf %425 : vector<8x32xf32> to vector<8x32xbf16>
    %c0_266 = arith.constant 0 : index
    %c0_267 = arith.constant 0 : index
    %427 = vector.load %arg2[%c0_266, %c0_267] : memref<32x384xbf16, #tpu.memory_space<vmem>>, vector<32x384xbf16>
    %cst_268 = arith.constant dense<0.000000e+00> : vector<8x384xf32>
    %428 = tpu.matmul %426, %427, %cst_268 {dimension_numbers = #tpu.dot_dimension_numbers<[1], [0], [0], [1], [0, 0, 1, 1], [], []>} : vector<8x32xbf16>, vector<32x384xbf16>, vector<8x384xf32> -> vector<8x384xf32>
    %429 = vector.extract_strided_slice %424 {offsets = [0, 0], sizes = [8, 128], strides = [1, 1]} : vector<8x384xf32> to vector<8x128xf32>
    %430 = vector.extract_strided_slice %428 {offsets = [0, 0], sizes = [8, 128], strides = [1, 1]} : vector<8x384xf32> to vector<8x128xf32>
    %431 = arith.addf %429, %430 : vector<8x128xf32>
    %432 = arith.negf %431 : vector<8x128xf32>
    %433 = math.exp %432 : vector<8x128xf32>
    %cst_269 = arith.constant 1.000000e+00 : f32
    %434 = vector.broadcast %cst_269 : f32 to vector<8x128xf32>
    %435 = arith.addf %434, %433 : vector<8x128xf32>
    %436 = arith.divf %434, %435 : vector<8x128xf32>
    %437 = vector.extract_strided_slice %424 {offsets = [0, 128], sizes = [8, 128], strides = [1, 1]} : vector<8x384xf32> to vector<8x128xf32>
    %438 = vector.extract_strided_slice %428 {offsets = [0, 128], sizes = [8, 128], strides = [1, 1]} : vector<8x384xf32> to vector<8x128xf32>
    %439 = arith.addf %437, %438 : vector<8x128xf32>
    %440 = arith.negf %439 : vector<8x128xf32>
    %441 = math.exp %440 : vector<8x128xf32>
    %cst_270 = arith.constant 1.000000e+00 : f32
    %442 = vector.broadcast %cst_270 : f32 to vector<8x128xf32>
    %443 = arith.addf %442, %441 : vector<8x128xf32>
    %444 = arith.divf %442, %443 : vector<8x128xf32>
    %445 = vector.extract_strided_slice %424 {offsets = [0, 256], sizes = [8, 128], strides = [1, 1]} : vector<8x384xf32> to vector<8x128xf32>
    %446 = vector.extract_strided_slice %428 {offsets = [0, 256], sizes = [8, 128], strides = [1, 1]} : vector<8x384xf32> to vector<8x128xf32>
    %447 = arith.addf %446, %58 : vector<8x128xf32>
    %448 = arith.mulf %436, %447 : vector<8x128xf32>
    %449 = arith.addf %445, %448 : vector<8x128xf32>
    %450 = math.tanh %449 : vector<8x128xf32>
    %cst_271 = arith.constant 1.000000e+00 : f32
    %451 = vector.broadcast %cst_271 : f32 to vector<8x128xf32>
    %452 = arith.subf %451, %444 : vector<8x128xf32>
    %453 = arith.mulf %452, %450 : vector<8x128xf32>
    %454 = arith.mulf %444, %355 : vector<8x128xf32>
    %455 = arith.addf %453, %454 : vector<8x128xf32>
    %456 = arith.index_cast %c3_i32_214 : i32 to index
    %c0_272 = arith.constant 0 : index
    %c0_273 = arith.constant 0 : index
    %457 = vector.load %arg5[%456, %c0_272, %c0_273] : memref<8x8x128xf32, #tpu.memory_space<vmem>>, vector<1x8x128xf32>
    %458 = vector.shape_cast %457 : vector<1x8x128xf32> to vector<8x128xf32>
    %459 = vector.shape_cast %455 : vector<8x128xf32> to vector<1x8x128xf32>
    tpu.vector_store %arg5[%456, %c0_272, %c0_273], %459 {strides = array<i32>} : memref<8x8x128xf32, #tpu.memory_space<vmem>>, vector<1x8x128xf32>,
    %c4_i32_274 = arith.constant 4 : i32
    %c2_i32_275 = arith.constant 2 : i32
    %c0_i32_276 = arith.constant 0 : i32
    %460 = arith.cmpi eq, %c2_i32_275, %c0_i32_276 : i32
    %c1_i32_277 = arith.constant 1 : i32
    %461 = arith.select %460, %c1_i32_277, %c2_i32_275 : i32
    %462 = arith.remsi %c4_i32_274, %461 : i32
    %c0_i32_278 = arith.constant 0 : i32
    %463 = arith.cmpi ne, %462, %c0_i32_278 : i32
    %c0_i32_279 = arith.constant 0 : i32
    %464 = arith.cmpi slt, %462, %c0_i32_279 : i32
    %c0_i32_280 = arith.constant 0 : i32
    %465 = arith.cmpi slt, %461, %c0_i32_280 : i32
    %466 = arith.xori %464, %465 : i1
    %467 = arith.andi %466, %463 : i1
    %468 = arith.addi %462, %461 : i32
    %469 = arith.select %467, %468, %462 : i32
    %c0_i32_281 = arith.constant 0 : i32
    %c0_i32_282 = arith.constant 0 : i32
    %c0_i32_283 = arith.constant 0 : i32
    %c0_i32_284 = arith.constant 0 : i32
    %470 = tpu.memref_slice %arg1[%c0_i32_281, %c0_i32_284] : memref<50x384xf32, #tpu.memory_space<any>> -> memref<1x384xf32, #tpu.memory_space<any>>
    %471 = tpu.memref_squeeze %470 : memref<1x384xf32, #tpu.memory_space<any>> -> memref<384xf32, #tpu.memory_space<any>>
    %c0_i32_285 = arith.constant 0 : i32
    %472 = tpu.memref_slice %arg7[%c0_i32_282, %c0_i32_283, %c0_i32_285] : memref<2x8x384xf32, #tpu.memory_space<vmem>> -> memref<1x1x384xf32, #tpu.memory_space<vmem>>
    %473 = tpu.memref_squeeze %472 : memref<1x1x384xf32, #tpu.memory_space<vmem>> -> memref<384xf32, #tpu.memory_space<vmem>>
    %474 = tpu.memref_slice %arg8[%469] : memref<2x!tpu.dma_semaphore, #tpu.memory_space<semaphore_mem>> -> memref<1x!tpu.dma_semaphore, #tpu.memory_space<semaphore_mem>>
    %475 = tpu.memref_squeeze %474 : memref<1x!tpu.dma_semaphore, #tpu.memory_space<semaphore_mem>> -> memref<!tpu.dma_semaphore, #tpu.memory_space<semaphore_mem>>
    tpu.wait_dma2 semaphore(%475 : memref<!tpu.dma_semaphore, #tpu.memory_space<semaphore_mem>>) src(%471 : memref<384xf32, #tpu.memory_space<any>>) dst(%473 : memref<384xf32, #tpu.memory_space<vmem>>)
    %c0_i32_286 = arith.constant 0 : i32
    %c0_i32_287 = arith.constant 0 : i32
    %c0_i32_288 = arith.constant 0 : i32
    %c0_i32_289 = arith.constant 0 : i32
    %476 = tpu.memref_slice %arg1[%c0_i32_286, %c0_i32_289] : memref<50x384xf32, #tpu.memory_space<any>> -> memref<1x384xf32, #tpu.memory_space<any>>
    %477 = tpu.memref_squeeze %476 : memref<1x384xf32, #tpu.memory_space<any>> -> memref<384xf32, #tpu.memory_space<any>>
    %c0_i32_290 = arith.constant 0 : i32
    %478 = tpu.memref_slice %arg7[%c0_i32_287, %c0_i32_288, %c0_i32_290] : memref<2x8x384xf32, #tpu.memory_space<vmem>> -> memref<1x1x384xf32, #tpu.memory_space<vmem>>
    %479 = tpu.memref_squeeze %478 : memref<1x1x384xf32, #tpu.memory_space<vmem>> -> memref<384xf32, #tpu.memory_space<vmem>>
    %480 = tpu.memref_slice %arg8[%469] : memref<2x!tpu.dma_semaphore, #tpu.memory_space<semaphore_mem>> -> memref<1x!tpu.dma_semaphore, #tpu.memory_space<semaphore_mem>>
    %481 = tpu.memref_squeeze %480 : memref<1x!tpu.dma_semaphore, #tpu.memory_space<semaphore_mem>> -> memref<!tpu.dma_semaphore, #tpu.memory_space<semaphore_mem>>
    tpu.wait_dma2 semaphore(%481 : memref<!tpu.dma_semaphore, #tpu.memory_space<semaphore_mem>>) src(%477 : memref<384xf32, #tpu.memory_space<any>>) dst(%479 : memref<384xf32, #tpu.memory_space<vmem>>)
    %c0_i32_291 = arith.constant 0 : i32
    %c0_i32_292 = arith.constant 0 : i32
    %c0_i32_293 = arith.constant 0 : i32
    %c0_i32_294 = arith.constant 0 : i32
    %482 = tpu.memref_slice %arg1[%c0_i32_291, %c0_i32_294] : memref<50x384xf32, #tpu.memory_space<any>> -> memref<1x384xf32, #tpu.memory_space<any>>
    %483 = tpu.memref_squeeze %482 : memref<1x384xf32, #tpu.memory_space<any>> -> memref<384xf32, #tpu.memory_space<any>>
    %c0_i32_295 = arith.constant 0 : i32
    %484 = tpu.memref_slice %arg7[%c0_i32_292, %c0_i32_293, %c0_i32_295] : memref<2x8x384xf32, #tpu.memory_space<vmem>> -> memref<1x1x384xf32, #tpu.memory_space<vmem>>
    %485 = tpu.memref_squeeze %484 : memref<1x1x384xf32, #tpu.memory_space<vmem>> -> memref<384xf32, #tpu.memory_space<vmem>>
    %486 = tpu.memref_slice %arg8[%469] : memref<2x!tpu.dma_semaphore, #tpu.memory_space<semaphore_mem>> -> memref<1x!tpu.dma_semaphore, #tpu.memory_space<semaphore_mem>>
    %487 = tpu.memref_squeeze %486 : memref<1x!tpu.dma_semaphore, #tpu.memory_space<semaphore_mem>> -> memref<!tpu.dma_semaphore, #tpu.memory_space<semaphore_mem>>
    tpu.wait_dma2 semaphore(%487 : memref<!tpu.dma_semaphore, #tpu.memory_space<semaphore_mem>>) src(%483 : memref<384xf32, #tpu.memory_space<any>>) dst(%485 : memref<384xf32, #tpu.memory_space<vmem>>)
    %c0_i32_296 = arith.constant 0 : i32
    %c0_i32_297 = arith.constant 0 : i32
    %c0_i32_298 = arith.constant 0 : i32
    %c0_i32_299 = arith.constant 0 : i32
    %488 = tpu.memref_slice %arg1[%c0_i32_296, %c0_i32_299] : memref<50x384xf32, #tpu.memory_space<any>> -> memref<1x384xf32, #tpu.memory_space<any>>
    %489 = tpu.memref_squeeze %488 : memref<1x384xf32, #tpu.memory_space<any>> -> memref<384xf32, #tpu.memory_space<any>>
    %c0_i32_300 = arith.constant 0 : i32
    %490 = tpu.memref_slice %arg7[%c0_i32_297, %c0_i32_298, %c0_i32_300] : memref<2x8x384xf32, #tpu.memory_space<vmem>> -> memref<1x1x384xf32, #tpu.memory_space<vmem>>
    %491 = tpu.memref_squeeze %490 : memref<1x1x384xf32, #tpu.memory_space<vmem>> -> memref<384xf32, #tpu.memory_space<vmem>>
    %492 = tpu.memref_slice %arg8[%469] : memref<2x!tpu.dma_semaphore, #tpu.memory_space<semaphore_mem>> -> memref<1x!tpu.dma_semaphore, #tpu.memory_space<semaphore_mem>>
    %493 = tpu.memref_squeeze %492 : memref<1x!tpu.dma_semaphore, #tpu.memory_space<semaphore_mem>> -> memref<!tpu.dma_semaphore, #tpu.memory_space<semaphore_mem>>
    tpu.wait_dma2 semaphore(%493 : memref<!tpu.dma_semaphore, #tpu.memory_space<semaphore_mem>>) src(%489 : memref<384xf32, #tpu.memory_space<any>>) dst(%491 : memref<384xf32, #tpu.memory_space<vmem>>)
    %c0_i32_301 = arith.constant 0 : i32
    %c0_i32_302 = arith.constant 0 : i32
    %c0_i32_303 = arith.constant 0 : i32
    %c0_i32_304 = arith.constant 0 : i32
    %494 = tpu.memref_slice %arg1[%c0_i32_301, %c0_i32_304] : memref<50x384xf32, #tpu.memory_space<any>> -> memref<1x384xf32, #tpu.memory_space<any>>
    %495 = tpu.memref_squeeze %494 : memref<1x384xf32, #tpu.memory_space<any>> -> memref<384xf32, #tpu.memory_space<any>>
    %c0_i32_305 = arith.constant 0 : i32
    %496 = tpu.memref_slice %arg7[%c0_i32_302, %c0_i32_303, %c0_i32_305] : memref<2x8x384xf32, #tpu.memory_space<vmem>> -> memref<1x1x384xf32, #tpu.memory_space<vmem>>
    %497 = tpu.memref_squeeze %496 : memref<1x1x384xf32, #tpu.memory_space<vmem>> -> memref<384xf32, #tpu.memory_space<vmem>>
    %498 = tpu.memref_slice %arg8[%469] : memref<2x!tpu.dma_semaphore, #tpu.memory_space<semaphore_mem>> -> memref<1x!tpu.dma_semaphore, #tpu.memory_space<semaphore_mem>>
    %499 = tpu.memref_squeeze %498 : memref<1x!tpu.dma_semaphore, #tpu.memory_space<semaphore_mem>> -> memref<!tpu.dma_semaphore, #tpu.memory_space<semaphore_mem>>
    tpu.wait_dma2 semaphore(%499 : memref<!tpu.dma_semaphore, #tpu.memory_space<semaphore_mem>>) src(%495 : memref<384xf32, #tpu.memory_space<any>>) dst(%497 : memref<384xf32, #tpu.memory_space<vmem>>)
    %c0_i32_306 = arith.constant 0 : i32
    %c0_i32_307 = arith.constant 0 : i32
    %c0_i32_308 = arith.constant 0 : i32
    %c0_i32_309 = arith.constant 0 : i32
    %500 = tpu.memref_slice %arg1[%c0_i32_306, %c0_i32_309] : memref<50x384xf32, #tpu.memory_space<any>> -> memref<1x384xf32, #tpu.memory_space<any>>
    %501 = tpu.memref_squeeze %500 : memref<1x384xf32, #tpu.memory_space<any>> -> memref<384xf32, #tpu.memory_space<any>>
    %c0_i32_310 = arith.constant 0 : i32
    %502 = tpu.memref_slice %arg7[%c0_i32_307, %c0_i32_308, %c0_i32_310] : memref<2x8x384xf32, #tpu.memory_space<vmem>> -> memref<1x1x384xf32, #tpu.memory_space<vmem>>
    %503 = tpu.memref_squeeze %502 : memref<1x1x384xf32, #tpu.memory_space<vmem>> -> memref<384xf32, #tpu.memory_space<vmem>>
    %504 = tpu.memref_slice %arg8[%469] : memref<2x!tpu.dma_semaphore, #tpu.memory_space<semaphore_mem>> -> memref<1x!tpu.dma_semaphore, #tpu.memory_space<semaphore_mem>>
    %505 = tpu.memref_squeeze %504 : memref<1x!tpu.dma_semaphore, #tpu.memory_space<semaphore_mem>> -> memref<!tpu.dma_semaphore, #tpu.memory_space<semaphore_mem>>
    tpu.wait_dma2 semaphore(%505 : memref<!tpu.dma_semaphore, #tpu.memory_space<semaphore_mem>>) src(%501 : memref<384xf32, #tpu.memory_space<any>>) dst(%503 : memref<384xf32, #tpu.memory_space<vmem>>)
    %c0_i32_311 = arith.constant 0 : i32
    %c0_i32_312 = arith.constant 0 : i32
    %c0_i32_313 = arith.constant 0 : i32
    %c0_i32_314 = arith.constant 0 : i32
    %506 = tpu.memref_slice %arg1[%c0_i32_311, %c0_i32_314] : memref<50x384xf32, #tpu.memory_space<any>> -> memref<1x384xf32, #tpu.memory_space<any>>
    %507 = tpu.memref_squeeze %506 : memref<1x384xf32, #tpu.memory_space<any>> -> memref<384xf32, #tpu.memory_space<any>>
    %c0_i32_315 = arith.constant 0 : i32
    %508 = tpu.memref_slice %arg7[%c0_i32_312, %c0_i32_313, %c0_i32_315] : memref<2x8x384xf32, #tpu.memory_space<vmem>> -> memref<1x1x384xf32, #tpu.memory_space<vmem>>
    %509 = tpu.memref_squeeze %508 : memref<1x1x384xf32, #tpu.memory_space<vmem>> -> memref<384xf32, #tpu.memory_space<vmem>>
    %510 = tpu.memref_slice %arg8[%469] : memref<2x!tpu.dma_semaphore, #tpu.memory_space<semaphore_mem>> -> memref<1x!tpu.dma_semaphore, #tpu.memory_space<semaphore_mem>>
    %511 = tpu.memref_squeeze %510 : memref<1x!tpu.dma_semaphore, #tpu.memory_space<semaphore_mem>> -> memref<!tpu.dma_semaphore, #tpu.memory_space<semaphore_mem>>
    tpu.wait_dma2 semaphore(%511 : memref<!tpu.dma_semaphore, #tpu.memory_space<semaphore_mem>>) src(%507 : memref<384xf32, #tpu.memory_space<any>>) dst(%509 : memref<384xf32, #tpu.memory_space<vmem>>)
    %c0_i32_316 = arith.constant 0 : i32
    %c0_i32_317 = arith.constant 0 : i32
    %c0_i32_318 = arith.constant 0 : i32
    %c0_i32_319 = arith.constant 0 : i32
    %512 = tpu.memref_slice %arg1[%c0_i32_316, %c0_i32_319] : memref<50x384xf32, #tpu.memory_space<any>> -> memref<1x384xf32, #tpu.memory_space<any>>
    %513 = tpu.memref_squeeze %512 : memref<1x384xf32, #tpu.memory_space<any>> -> memref<384xf32, #tpu.memory_space<any>>
    %c0_i32_320 = arith.constant 0 : i32
    %514 = tpu.memref_slice %arg7[%c0_i32_317, %c0_i32_318, %c0_i32_320] : memref<2x8x384xf32, #tpu.memory_space<vmem>> -> memref<1x1x384xf32, #tpu.memory_space<vmem>>
    %515 = tpu.memref_squeeze %514 : memref<1x1x384xf32, #tpu.memory_space<vmem>> -> memref<384xf32, #tpu.memory_space<vmem>>
    %516 = tpu.memref_slice %arg8[%469] : memref<2x!tpu.dma_semaphore, #tpu.memory_space<semaphore_mem>> -> memref<1x!tpu.dma_semaphore, #tpu.memory_space<semaphore_mem>>
    %517 = tpu.memref_squeeze %516 : memref<1x!tpu.dma_semaphore, #tpu.memory_space<semaphore_mem>> -> memref<!tpu.dma_semaphore, #tpu.memory_space<semaphore_mem>>
    tpu.wait_dma2 semaphore(%517 : memref<!tpu.dma_semaphore, #tpu.memory_space<semaphore_mem>>) src(%513 : memref<384xf32, #tpu.memory_space<any>>) dst(%515 : memref<384xf32, #tpu.memory_space<vmem>>)
    %c1_i32_321 = arith.constant 1 : i32
    %518 = arith.addi %c4_i32_274, %c1_i32_321 : i32
    %c8_i32_322 = arith.constant 8 : i32
    %519 = arith.cmpi slt, %518, %c8_i32_322 : i32
    %520 = arith.extui %519 : i1 to i32
    %c0_i32_323 = arith.constant 0 : i32
    %521 = arith.cmpi ne, %520, %c0_i32_323 : i32
    scf.if %521 {
      %c1_i32_517 = arith.constant 1 : i32
      %861 = arith.addi %c4_i32_274, %c1_i32_517 : i32
      %c1_i32_518 = arith.constant 1 : i32
      %862 = arith.subi %c1_i32_518, %469 : i32
      %c8_i32_519 = arith.constant 8 : i32
      %863 = arith.muli %861, %c8_i32_519 : i32
      %c0_i32_520 = arith.constant 0 : i32
      %864 = arith.addi %863, %c0_i32_520 : i32
      %865 = arith.index_cast %864 : i32 to index
      %866 = memref.load %arg0[%865] : memref<64xi32, #tpu.memory_space<smem>>
      %c0_i32_521 = arith.constant 0 : i32
      %c0_i32_522 = arith.constant 0 : i32
      %867 = tpu.memref_slice %arg1[%866, %c0_i32_522] : memref<50x384xf32, #tpu.memory_space<any>> -> memref<1x384xf32, #tpu.memory_space<any>>
      %868 = tpu.memref_squeeze %867 : memref<1x384xf32, #tpu.memory_space<any>> -> memref<384xf32, #tpu.memory_space<any>>
      %c0_i32_523 = arith.constant 0 : i32
      %869 = tpu.memref_slice %arg7[%862, %c0_i32_521, %c0_i32_523] : memref<2x8x384xf32, #tpu.memory_space<vmem>> -> memref<1x1x384xf32, #tpu.memory_space<vmem>>
      %870 = tpu.memref_squeeze %869 : memref<1x1x384xf32, #tpu.memory_space<vmem>> -> memref<384xf32, #tpu.memory_space<vmem>>
      %871 = tpu.memref_slice %arg8[%862] : memref<2x!tpu.dma_semaphore, #tpu.memory_space<semaphore_mem>> -> memref<1x!tpu.dma_semaphore, #tpu.memory_space<semaphore_mem>>
      %872 = tpu.memref_squeeze %871 : memref<1x!tpu.dma_semaphore, #tpu.memory_space<semaphore_mem>> -> memref<!tpu.dma_semaphore, #tpu.memory_space<semaphore_mem>>
      tpu.enqueue_dma source(%868 : memref<384xf32, #tpu.memory_space<any>>) target(%870 : memref<384xf32, #tpu.memory_space<vmem>>) target_semaphore(%872 : memref<!tpu.dma_semaphore, #tpu.memory_space<semaphore_mem>>)
      %c8_i32_524 = arith.constant 8 : i32
      %873 = arith.muli %861, %c8_i32_524 : i32
      %c1_i32_525 = arith.constant 1 : i32
      %874 = arith.addi %873, %c1_i32_525 : i32
      %875 = arith.index_cast %874 : i32 to index
      %876 = memref.load %arg0[%875] : memref<64xi32, #tpu.memory_space<smem>>
      %c1_i32_526 = arith.constant 1 : i32
      %c0_i32_527 = arith.constant 0 : i32
      %877 = tpu.memref_slice %arg1[%876, %c0_i32_527] : memref<50x384xf32, #tpu.memory_space<any>> -> memref<1x384xf32, #tpu.memory_space<any>>
      %878 = tpu.memref_squeeze %877 : memref<1x384xf32, #tpu.memory_space<any>> -> memref<384xf32, #tpu.memory_space<any>>
      %c0_i32_528 = arith.constant 0 : i32
      %879 = tpu.memref_slice %arg7[%862, %c1_i32_526, %c0_i32_528] : memref<2x8x384xf32, #tpu.memory_space<vmem>> -> memref<1x1x384xf32, #tpu.memory_space<vmem>>
      %880 = tpu.memref_squeeze %879 : memref<1x1x384xf32, #tpu.memory_space<vmem>> -> memref<384xf32, #tpu.memory_space<vmem>>
      %881 = tpu.memref_slice %arg8[%862] : memref<2x!tpu.dma_semaphore, #tpu.memory_space<semaphore_mem>> -> memref<1x!tpu.dma_semaphore, #tpu.memory_space<semaphore_mem>>
      %882 = tpu.memref_squeeze %881 : memref<1x!tpu.dma_semaphore, #tpu.memory_space<semaphore_mem>> -> memref<!tpu.dma_semaphore, #tpu.memory_space<semaphore_mem>>
      tpu.enqueue_dma source(%878 : memref<384xf32, #tpu.memory_space<any>>) target(%880 : memref<384xf32, #tpu.memory_space<vmem>>) target_semaphore(%882 : memref<!tpu.dma_semaphore, #tpu.memory_space<semaphore_mem>>)
      %c8_i32_529 = arith.constant 8 : i32
      %883 = arith.muli %861, %c8_i32_529 : i32
      %c2_i32_530 = arith.constant 2 : i32
      %884 = arith.addi %883, %c2_i32_530 : i32
      %885 = arith.index_cast %884 : i32 to index
      %886 = memref.load %arg0[%885] : memref<64xi32, #tpu.memory_space<smem>>
      %c2_i32_531 = arith.constant 2 : i32
      %c0_i32_532 = arith.constant 0 : i32
      %887 = tpu.memref_slice %arg1[%886, %c0_i32_532] : memref<50x384xf32, #tpu.memory_space<any>> -> memref<1x384xf32, #tpu.memory_space<any>>
      %888 = tpu.memref_squeeze %887 : memref<1x384xf32, #tpu.memory_space<any>> -> memref<384xf32, #tpu.memory_space<any>>
      %c0_i32_533 = arith.constant 0 : i32
      %889 = tpu.memref_slice %arg7[%862, %c2_i32_531, %c0_i32_533] : memref<2x8x384xf32, #tpu.memory_space<vmem>> -> memref<1x1x384xf32, #tpu.memory_space<vmem>>
      %890 = tpu.memref_squeeze %889 : memref<1x1x384xf32, #tpu.memory_space<vmem>> -> memref<384xf32, #tpu.memory_space<vmem>>
      %891 = tpu.memref_slice %arg8[%862] : memref<2x!tpu.dma_semaphore, #tpu.memory_space<semaphore_mem>> -> memref<1x!tpu.dma_semaphore, #tpu.memory_space<semaphore_mem>>
      %892 = tpu.memref_squeeze %891 : memref<1x!tpu.dma_semaphore, #tpu.memory_space<semaphore_mem>> -> memref<!tpu.dma_semaphore, #tpu.memory_space<semaphore_mem>>
      tpu.enqueue_dma source(%888 : memref<384xf32, #tpu.memory_space<any>>) target(%890 : memref<384xf32, #tpu.memory_space<vmem>>) target_semaphore(%892 : memref<!tpu.dma_semaphore, #tpu.memory_space<semaphore_mem>>)
      %c8_i32_534 = arith.constant 8 : i32
      %893 = arith.muli %861, %c8_i32_534 : i32
      %c3_i32_535 = arith.constant 3 : i32
      %894 = arith.addi %893, %c3_i32_535 : i32
      %895 = arith.index_cast %894 : i32 to index
      %896 = memref.load %arg0[%895] : memref<64xi32, #tpu.memory_space<smem>>
      %c3_i32_536 = arith.constant 3 : i32
      %c0_i32_537 = arith.constant 0 : i32
      %897 = tpu.memref_slice %arg1[%896, %c0_i32_537] : memref<50x384xf32, #tpu.memory_space<any>> -> memref<1x384xf32, #tpu.memory_space<any>>
      %898 = tpu.memref_squeeze %897 : memref<1x384xf32, #tpu.memory_space<any>> -> memref<384xf32, #tpu.memory_space<any>>
      %c0_i32_538 = arith.constant 0 : i32
      %899 = tpu.memref_slice %arg7[%862, %c3_i32_536, %c0_i32_538] : memref<2x8x384xf32, #tpu.memory_space<vmem>> -> memref<1x1x384xf32, #tpu.memory_space<vmem>>
      %900 = tpu.memref_squeeze %899 : memref<1x1x384xf32, #tpu.memory_space<vmem>> -> memref<384xf32, #tpu.memory_space<vmem>>
      %901 = tpu.memref_slice %arg8[%862] : memref<2x!tpu.dma_semaphore, #tpu.memory_space<semaphore_mem>> -> memref<1x!tpu.dma_semaphore, #tpu.memory_space<semaphore_mem>>
      %902 = tpu.memref_squeeze %901 : memref<1x!tpu.dma_semaphore, #tpu.memory_space<semaphore_mem>> -> memref<!tpu.dma_semaphore, #tpu.memory_space<semaphore_mem>>
      tpu.enqueue_dma source(%898 : memref<384xf32, #tpu.memory_space<any>>) target(%900 : memref<384xf32, #tpu.memory_space<vmem>>) target_semaphore(%902 : memref<!tpu.dma_semaphore, #tpu.memory_space<semaphore_mem>>)
      %c8_i32_539 = arith.constant 8 : i32
      %903 = arith.muli %861, %c8_i32_539 : i32
      %c4_i32_540 = arith.constant 4 : i32
      %904 = arith.addi %903, %c4_i32_540 : i32
      %905 = arith.index_cast %904 : i32 to index
      %906 = memref.load %arg0[%905] : memref<64xi32, #tpu.memory_space<smem>>
      %c4_i32_541 = arith.constant 4 : i32
      %c0_i32_542 = arith.constant 0 : i32
      %907 = tpu.memref_slice %arg1[%906, %c0_i32_542] : memref<50x384xf32, #tpu.memory_space<any>> -> memref<1x384xf32, #tpu.memory_space<any>>
      %908 = tpu.memref_squeeze %907 : memref<1x384xf32, #tpu.memory_space<any>> -> memref<384xf32, #tpu.memory_space<any>>
      %c0_i32_543 = arith.constant 0 : i32
      %909 = tpu.memref_slice %arg7[%862, %c4_i32_541, %c0_i32_543] : memref<2x8x384xf32, #tpu.memory_space<vmem>> -> memref<1x1x384xf32, #tpu.memory_space<vmem>>
      %910 = tpu.memref_squeeze %909 : memref<1x1x384xf32, #tpu.memory_space<vmem>> -> memref<384xf32, #tpu.memory_space<vmem>>
      %911 = tpu.memref_slice %arg8[%862] : memref<2x!tpu.dma_semaphore, #tpu.memory_space<semaphore_mem>> -> memref<1x!tpu.dma_semaphore, #tpu.memory_space<semaphore_mem>>
      %912 = tpu.memref_squeeze %911 : memref<1x!tpu.dma_semaphore, #tpu.memory_space<semaphore_mem>> -> memref<!tpu.dma_semaphore, #tpu.memory_space<semaphore_mem>>
      tpu.enqueue_dma source(%908 : memref<384xf32, #tpu.memory_space<any>>) target(%910 : memref<384xf32, #tpu.memory_space<vmem>>) target_semaphore(%912 : memref<!tpu.dma_semaphore, #tpu.memory_space<semaphore_mem>>)
      %c8_i32_544 = arith.constant 8 : i32
      %913 = arith.muli %861, %c8_i32_544 : i32
      %c5_i32_545 = arith.constant 5 : i32
      %914 = arith.addi %913, %c5_i32_545 : i32
      %915 = arith.index_cast %914 : i32 to index
      %916 = memref.load %arg0[%915] : memref<64xi32, #tpu.memory_space<smem>>
      %c5_i32_546 = arith.constant 5 : i32
      %c0_i32_547 = arith.constant 0 : i32
      %917 = tpu.memref_slice %arg1[%916, %c0_i32_547] : memref<50x384xf32, #tpu.memory_space<any>> -> memref<1x384xf32, #tpu.memory_space<any>>
      %918 = tpu.memref_squeeze %917 : memref<1x384xf32, #tpu.memory_space<any>> -> memref<384xf32, #tpu.memory_space<any>>
      %c0_i32_548 = arith.constant 0 : i32
      %919 = tpu.memref_slice %arg7[%862, %c5_i32_546, %c0_i32_548] : memref<2x8x384xf32, #tpu.memory_space<vmem>> -> memref<1x1x384xf32, #tpu.memory_space<vmem>>
      %920 = tpu.memref_squeeze %919 : memref<1x1x384xf32, #tpu.memory_space<vmem>> -> memref<384xf32, #tpu.memory_space<vmem>>
      %921 = tpu.memref_slice %arg8[%862] : memref<2x!tpu.dma_semaphore, #tpu.memory_space<semaphore_mem>> -> memref<1x!tpu.dma_semaphore, #tpu.memory_space<semaphore_mem>>
      %922 = tpu.memref_squeeze %921 : memref<1x!tpu.dma_semaphore, #tpu.memory_space<semaphore_mem>> -> memref<!tpu.dma_semaphore, #tpu.memory_space<semaphore_mem>>
      tpu.enqueue_dma source(%918 : memref<384xf32, #tpu.memory_space<any>>) target(%920 : memref<384xf32, #tpu.memory_space<vmem>>) target_semaphore(%922 : memref<!tpu.dma_semaphore, #tpu.memory_space<semaphore_mem>>)
      %c8_i32_549 = arith.constant 8 : i32
      %923 = arith.muli %861, %c8_i32_549 : i32
      %c6_i32_550 = arith.constant 6 : i32
      %924 = arith.addi %923, %c6_i32_550 : i32
      %925 = arith.index_cast %924 : i32 to index
      %926 = memref.load %arg0[%925] : memref<64xi32, #tpu.memory_space<smem>>
      %c6_i32_551 = arith.constant 6 : i32
      %c0_i32_552 = arith.constant 0 : i32
      %927 = tpu.memref_slice %arg1[%926, %c0_i32_552] : memref<50x384xf32, #tpu.memory_space<any>> -> memref<1x384xf32, #tpu.memory_space<any>>
      %928 = tpu.memref_squeeze %927 : memref<1x384xf32, #tpu.memory_space<any>> -> memref<384xf32, #tpu.memory_space<any>>
      %c0_i32_553 = arith.constant 0 : i32
      %929 = tpu.memref_slice %arg7[%862, %c6_i32_551, %c0_i32_553] : memref<2x8x384xf32, #tpu.memory_space<vmem>> -> memref<1x1x384xf32, #tpu.memory_space<vmem>>
      %930 = tpu.memref_squeeze %929 : memref<1x1x384xf32, #tpu.memory_space<vmem>> -> memref<384xf32, #tpu.memory_space<vmem>>
      %931 = tpu.memref_slice %arg8[%862] : memref<2x!tpu.dma_semaphore, #tpu.memory_space<semaphore_mem>> -> memref<1x!tpu.dma_semaphore, #tpu.memory_space<semaphore_mem>>
      %932 = tpu.memref_squeeze %931 : memref<1x!tpu.dma_semaphore, #tpu.memory_space<semaphore_mem>> -> memref<!tpu.dma_semaphore, #tpu.memory_space<semaphore_mem>>
      tpu.enqueue_dma source(%928 : memref<384xf32, #tpu.memory_space<any>>) target(%930 : memref<384xf32, #tpu.memory_space<vmem>>) target_semaphore(%932 : memref<!tpu.dma_semaphore, #tpu.memory_space<semaphore_mem>>)
      %c8_i32_554 = arith.constant 8 : i32
      %933 = arith.muli %861, %c8_i32_554 : i32
      %c7_i32_555 = arith.constant 7 : i32
      %934 = arith.addi %933, %c7_i32_555 : i32
      %935 = arith.index_cast %934 : i32 to index
      %936 = memref.load %arg0[%935] : memref<64xi32, #tpu.memory_space<smem>>
      %c7_i32_556 = arith.constant 7 : i32
      %c0_i32_557 = arith.constant 0 : i32
      %937 = tpu.memref_slice %arg1[%936, %c0_i32_557] : memref<50x384xf32, #tpu.memory_space<any>> -> memref<1x384xf32, #tpu.memory_space<any>>
      %938 = tpu.memref_squeeze %937 : memref<1x384xf32, #tpu.memory_space<any>> -> memref<384xf32, #tpu.memory_space<any>>
      %c0_i32_558 = arith.constant 0 : i32
      %939 = tpu.memref_slice %arg7[%862, %c7_i32_556, %c0_i32_558] : memref<2x8x384xf32, #tpu.memory_space<vmem>> -> memref<1x1x384xf32, #tpu.memory_space<vmem>>
      %940 = tpu.memref_squeeze %939 : memref<1x1x384xf32, #tpu.memory_space<vmem>> -> memref<384xf32, #tpu.memory_space<vmem>>
      %941 = tpu.memref_slice %arg8[%862] : memref<2x!tpu.dma_semaphore, #tpu.memory_space<semaphore_mem>> -> memref<1x!tpu.dma_semaphore, #tpu.memory_space<semaphore_mem>>
      %942 = tpu.memref_squeeze %941 : memref<1x!tpu.dma_semaphore, #tpu.memory_space<semaphore_mem>> -> memref<!tpu.dma_semaphore, #tpu.memory_space<semaphore_mem>>
      tpu.enqueue_dma source(%938 : memref<384xf32, #tpu.memory_space<any>>) target(%940 : memref<384xf32, #tpu.memory_space<vmem>>) target_semaphore(%942 : memref<!tpu.dma_semaphore, #tpu.memory_space<semaphore_mem>>)
    } else {
    }
    %522 = arith.index_cast %469 : i32 to index
    %c0_324 = arith.constant 0 : index
    %c0_325 = arith.constant 0 : index
    %523 = vector.load %arg7[%522, %c0_324, %c0_325] : memref<2x8x384xf32, #tpu.memory_space<vmem>>, vector<1x8x384xf32>
    %524 = vector.shape_cast %523 : vector<1x8x384xf32> to vector<8x384xf32>
    %525 = vector.extract_strided_slice %455 {offsets = [0, 0], sizes = [8, 32], strides = [1, 1]} : vector<8x128xf32> to vector<8x32xf32>
    %526 = arith.truncf %525 : vector<8x32xf32> to vector<8x32xbf16>
    %c0_326 = arith.constant 0 : index
    %c0_327 = arith.constant 0 : index
    %527 = vector.load %arg2[%c0_326, %c0_327] : memref<32x384xbf16, #tpu.memory_space<vmem>>, vector<32x384xbf16>
    %cst_328 = arith.constant dense<0.000000e+00> : vector<8x384xf32>
    %528 = tpu.matmul %526, %527, %cst_328 {dimension_numbers = #tpu.dot_dimension_numbers<[1], [0], [0], [1], [0, 0, 1, 1], [], []>} : vector<8x32xbf16>, vector<32x384xbf16>, vector<8x384xf32> -> vector<8x384xf32>
    %529 = vector.extract_strided_slice %524 {offsets = [0, 0], sizes = [8, 128], strides = [1, 1]} : vector<8x384xf32> to vector<8x128xf32>
    %530 = vector.extract_strided_slice %528 {offsets = [0, 0], sizes = [8, 128], strides = [1, 1]} : vector<8x384xf32> to vector<8x128xf32>
    %531 = arith.addf %529, %530 : vector<8x128xf32>
    %532 = arith.negf %531 : vector<8x128xf32>
    %533 = math.exp %532 : vector<8x128xf32>
    %cst_329 = arith.constant 1.000000e+00 : f32
    %534 = vector.broadcast %cst_329 : f32 to vector<8x128xf32>
    %535 = arith.addf %534, %533 : vector<8x128xf32>
    %536 = arith.divf %534, %535 : vector<8x128xf32>
    %537 = vector.extract_strided_slice %524 {offsets = [0, 128], sizes = [8, 128], strides = [1, 1]} : vector<8x384xf32> to vector<8x128xf32>
    %538 = vector.extract_strided_slice %528 {offsets = [0, 128], sizes = [8, 128], strides = [1, 1]} : vector<8x384xf32> to vector<8x128xf32>
    %539 = arith.addf %537, %538 : vector<8x128xf32>
    %540 = arith.negf %539 : vector<8x128xf32>
    %541 = math.exp %540 : vector<8x128xf32>
    %cst_330 = arith.constant 1.000000e+00 : f32
    %542 = vector.broadcast %cst_330 : f32 to vector<8x128xf32>
    %543 = arith.addf %542, %541 : vector<8x128xf32>
    %544 = arith.divf %542, %543 : vector<8x128xf32>
    %545 = vector.extract_strided_slice %524 {offsets = [0, 256], sizes = [8, 128], strides = [1, 1]} : vector<8x384xf32> to vector<8x128xf32>
    %546 = vector.extract_strided_slice %528 {offsets = [0, 256], sizes = [8, 128], strides = [1, 1]} : vector<8x384xf32> to vector<8x128xf32>
    %547 = arith.addf %546, %58 : vector<8x128xf32>
    %548 = arith.mulf %536, %547 : vector<8x128xf32>
    %549 = arith.addf %545, %548 : vector<8x128xf32>
    %550 = math.tanh %549 : vector<8x128xf32>
    %cst_331 = arith.constant 1.000000e+00 : f32
    %551 = vector.broadcast %cst_331 : f32 to vector<8x128xf32>
    %552 = arith.subf %551, %544 : vector<8x128xf32>
    %553 = arith.mulf %552, %550 : vector<8x128xf32>
    %554 = arith.mulf %544, %455 : vector<8x128xf32>
    %555 = arith.addf %553, %554 : vector<8x128xf32>
    %556 = arith.index_cast %c4_i32_274 : i32 to index
    %c0_332 = arith.constant 0 : index
    %c0_333 = arith.constant 0 : index
    %557 = vector.load %arg5[%556, %c0_332, %c0_333] : memref<8x8x128xf32, #tpu.memory_space<vmem>>, vector<1x8x128xf32>
    %558 = vector.shape_cast %557 : vector<1x8x128xf32> to vector<8x128xf32>
    %559 = vector.shape_cast %555 : vector<8x128xf32> to vector<1x8x128xf32>
    tpu.vector_store %arg5[%556, %c0_332, %c0_333], %559 {strides = array<i32>} : memref<8x8x128xf32, #tpu.memory_space<vmem>>, vector<1x8x128xf32>,
    %c5_i32_334 = arith.constant 5 : i32
    %c2_i32_335 = arith.constant 2 : i32
    %c0_i32_336 = arith.constant 0 : i32
    %560 = arith.cmpi eq, %c2_i32_335, %c0_i32_336 : i32
    %c1_i32_337 = arith.constant 1 : i32
    %561 = arith.select %560, %c1_i32_337, %c2_i32_335 : i32
    %562 = arith.remsi %c5_i32_334, %561 : i32
    %c0_i32_338 = arith.constant 0 : i32
    %563 = arith.cmpi ne, %562, %c0_i32_338 : i32
    %c0_i32_339 = arith.constant 0 : i32
    %564 = arith.cmpi slt, %562, %c0_i32_339 : i32
    %c0_i32_340 = arith.constant 0 : i32
    %565 = arith.cmpi slt, %561, %c0_i32_340 : i32
    %566 = arith.xori %564, %565 : i1
    %567 = arith.andi %566, %563 : i1
    %568 = arith.addi %562, %561 : i32
    %569 = arith.select %567, %568, %562 : i32
    %c0_i32_341 = arith.constant 0 : i32
    %c0_i32_342 = arith.constant 0 : i32
    %c0_i32_343 = arith.constant 0 : i32
    %c0_i32_344 = arith.constant 0 : i32
    %570 = tpu.memref_slice %arg1[%c0_i32_341, %c0_i32_344] : memref<50x384xf32, #tpu.memory_space<any>> -> memref<1x384xf32, #tpu.memory_space<any>>
    %571 = tpu.memref_squeeze %570 : memref<1x384xf32, #tpu.memory_space<any>> -> memref<384xf32, #tpu.memory_space<any>>
    %c0_i32_345 = arith.constant 0 : i32
    %572 = tpu.memref_slice %arg7[%c0_i32_342, %c0_i32_343, %c0_i32_345] : memref<2x8x384xf32, #tpu.memory_space<vmem>> -> memref<1x1x384xf32, #tpu.memory_space<vmem>>
    %573 = tpu.memref_squeeze %572 : memref<1x1x384xf32, #tpu.memory_space<vmem>> -> memref<384xf32, #tpu.memory_space<vmem>>
    %574 = tpu.memref_slice %arg8[%569] : memref<2x!tpu.dma_semaphore, #tpu.memory_space<semaphore_mem>> -> memref<1x!tpu.dma_semaphore, #tpu.memory_space<semaphore_mem>>
    %575 = tpu.memref_squeeze %574 : memref<1x!tpu.dma_semaphore, #tpu.memory_space<semaphore_mem>> -> memref<!tpu.dma_semaphore, #tpu.memory_space<semaphore_mem>>
    tpu.wait_dma2 semaphore(%575 : memref<!tpu.dma_semaphore, #tpu.memory_space<semaphore_mem>>) src(%571 : memref<384xf32, #tpu.memory_space<any>>) dst(%573 : memref<384xf32, #tpu.memory_space<vmem>>)
    %c0_i32_346 = arith.constant 0 : i32
    %c0_i32_347 = arith.constant 0 : i32
    %c0_i32_348 = arith.constant 0 : i32
    %c0_i32_349 = arith.constant 0 : i32
    %576 = tpu.memref_slice %arg1[%c0_i32_346, %c0_i32_349] : memref<50x384xf32, #tpu.memory_space<any>> -> memref<1x384xf32, #tpu.memory_space<any>>
    %577 = tpu.memref_squeeze %576 : memref<1x384xf32, #tpu.memory_space<any>> -> memref<384xf32, #tpu.memory_space<any>>
    %c0_i32_350 = arith.constant 0 : i32
    %578 = tpu.memref_slice %arg7[%c0_i32_347, %c0_i32_348, %c0_i32_350] : memref<2x8x384xf32, #tpu.memory_space<vmem>> -> memref<1x1x384xf32, #tpu.memory_space<vmem>>
    %579 = tpu.memref_squeeze %578 : memref<1x1x384xf32, #tpu.memory_space<vmem>> -> memref<384xf32, #tpu.memory_space<vmem>>
    %580 = tpu.memref_slice %arg8[%569] : memref<2x!tpu.dma_semaphore, #tpu.memory_space<semaphore_mem>> -> memref<1x!tpu.dma_semaphore, #tpu.memory_space<semaphore_mem>>
    %581 = tpu.memref_squeeze %580 : memref<1x!tpu.dma_semaphore, #tpu.memory_space<semaphore_mem>> -> memref<!tpu.dma_semaphore, #tpu.memory_space<semaphore_mem>>
    tpu.wait_dma2 semaphore(%581 : memref<!tpu.dma_semaphore, #tpu.memory_space<semaphore_mem>>) src(%577 : memref<384xf32, #tpu.memory_space<any>>) dst(%579 : memref<384xf32, #tpu.memory_space<vmem>>)
    %c0_i32_351 = arith.constant 0 : i32
    %c0_i32_352 = arith.constant 0 : i32
    %c0_i32_353 = arith.constant 0 : i32
    %c0_i32_354 = arith.constant 0 : i32
    %582 = tpu.memref_slice %arg1[%c0_i32_351, %c0_i32_354] : memref<50x384xf32, #tpu.memory_space<any>> -> memref<1x384xf32, #tpu.memory_space<any>>
    %583 = tpu.memref_squeeze %582 : memref<1x384xf32, #tpu.memory_space<any>> -> memref<384xf32, #tpu.memory_space<any>>
    %c0_i32_355 = arith.constant 0 : i32
    %584 = tpu.memref_slice %arg7[%c0_i32_352, %c0_i32_353, %c0_i32_355] : memref<2x8x384xf32, #tpu.memory_space<vmem>> -> memref<1x1x384xf32, #tpu.memory_space<vmem>>
    %585 = tpu.memref_squeeze %584 : memref<1x1x384xf32, #tpu.memory_space<vmem>> -> memref<384xf32, #tpu.memory_space<vmem>>
    %586 = tpu.memref_slice %arg8[%569] : memref<2x!tpu.dma_semaphore, #tpu.memory_space<semaphore_mem>> -> memref<1x!tpu.dma_semaphore, #tpu.memory_space<semaphore_mem>>
    %587 = tpu.memref_squeeze %586 : memref<1x!tpu.dma_semaphore, #tpu.memory_space<semaphore_mem>> -> memref<!tpu.dma_semaphore, #tpu.memory_space<semaphore_mem>>
    tpu.wait_dma2 semaphore(%587 : memref<!tpu.dma_semaphore, #tpu.memory_space<semaphore_mem>>) src(%583 : memref<384xf32, #tpu.memory_space<any>>) dst(%585 : memref<384xf32, #tpu.memory_space<vmem>>)
    %c0_i32_356 = arith.constant 0 : i32
    %c0_i32_357 = arith.constant 0 : i32
    %c0_i32_358 = arith.constant 0 : i32
    %c0_i32_359 = arith.constant 0 : i32
    %588 = tpu.memref_slice %arg1[%c0_i32_356, %c0_i32_359] : memref<50x384xf32, #tpu.memory_space<any>> -> memref<1x384xf32, #tpu.memory_space<any>>
    %589 = tpu.memref_squeeze %588 : memref<1x384xf32, #tpu.memory_space<any>> -> memref<384xf32, #tpu.memory_space<any>>
    %c0_i32_360 = arith.constant 0 : i32
    %590 = tpu.memref_slice %arg7[%c0_i32_357, %c0_i32_358, %c0_i32_360] : memref<2x8x384xf32, #tpu.memory_space<vmem>> -> memref<1x1x384xf32, #tpu.memory_space<vmem>>
    %591 = tpu.memref_squeeze %590 : memref<1x1x384xf32, #tpu.memory_space<vmem>> -> memref<384xf32, #tpu.memory_space<vmem>>
    %592 = tpu.memref_slice %arg8[%569] : memref<2x!tpu.dma_semaphore, #tpu.memory_space<semaphore_mem>> -> memref<1x!tpu.dma_semaphore, #tpu.memory_space<semaphore_mem>>
    %593 = tpu.memref_squeeze %592 : memref<1x!tpu.dma_semaphore, #tpu.memory_space<semaphore_mem>> -> memref<!tpu.dma_semaphore, #tpu.memory_space<semaphore_mem>>
    tpu.wait_dma2 semaphore(%593 : memref<!tpu.dma_semaphore, #tpu.memory_space<semaphore_mem>>) src(%589 : memref<384xf32, #tpu.memory_space<any>>) dst(%591 : memref<384xf32, #tpu.memory_space<vmem>>)
    %c0_i32_361 = arith.constant 0 : i32
    %c0_i32_362 = arith.constant 0 : i32
    %c0_i32_363 = arith.constant 0 : i32
    %c0_i32_364 = arith.constant 0 : i32
    %594 = tpu.memref_slice %arg1[%c0_i32_361, %c0_i32_364] : memref<50x384xf32, #tpu.memory_space<any>> -> memref<1x384xf32, #tpu.memory_space<any>>
    %595 = tpu.memref_squeeze %594 : memref<1x384xf32, #tpu.memory_space<any>> -> memref<384xf32, #tpu.memory_space<any>>
    %c0_i32_365 = arith.constant 0 : i32
    %596 = tpu.memref_slice %arg7[%c0_i32_362, %c0_i32_363, %c0_i32_365] : memref<2x8x384xf32, #tpu.memory_space<vmem>> -> memref<1x1x384xf32, #tpu.memory_space<vmem>>
    %597 = tpu.memref_squeeze %596 : memref<1x1x384xf32, #tpu.memory_space<vmem>> -> memref<384xf32, #tpu.memory_space<vmem>>
    %598 = tpu.memref_slice %arg8[%569] : memref<2x!tpu.dma_semaphore, #tpu.memory_space<semaphore_mem>> -> memref<1x!tpu.dma_semaphore, #tpu.memory_space<semaphore_mem>>
    %599 = tpu.memref_squeeze %598 : memref<1x!tpu.dma_semaphore, #tpu.memory_space<semaphore_mem>> -> memref<!tpu.dma_semaphore, #tpu.memory_space<semaphore_mem>>
    tpu.wait_dma2 semaphore(%599 : memref<!tpu.dma_semaphore, #tpu.memory_space<semaphore_mem>>) src(%595 : memref<384xf32, #tpu.memory_space<any>>) dst(%597 : memref<384xf32, #tpu.memory_space<vmem>>)
    %c0_i32_366 = arith.constant 0 : i32
    %c0_i32_367 = arith.constant 0 : i32
    %c0_i32_368 = arith.constant 0 : i32
    %c0_i32_369 = arith.constant 0 : i32
    %600 = tpu.memref_slice %arg1[%c0_i32_366, %c0_i32_369] : memref<50x384xf32, #tpu.memory_space<any>> -> memref<1x384xf32, #tpu.memory_space<any>>
    %601 = tpu.memref_squeeze %600 : memref<1x384xf32, #tpu.memory_space<any>> -> memref<384xf32, #tpu.memory_space<any>>
    %c0_i32_370 = arith.constant 0 : i32
    %602 = tpu.memref_slice %arg7[%c0_i32_367, %c0_i32_368, %c0_i32_370] : memref<2x8x384xf32, #tpu.memory_space<vmem>> -> memref<1x1x384xf32, #tpu.memory_space<vmem>>
    %603 = tpu.memref_squeeze %602 : memref<1x1x384xf32, #tpu.memory_space<vmem>> -> memref<384xf32, #tpu.memory_space<vmem>>
    %604 = tpu.memref_slice %arg8[%569] : memref<2x!tpu.dma_semaphore, #tpu.memory_space<semaphore_mem>> -> memref<1x!tpu.dma_semaphore, #tpu.memory_space<semaphore_mem>>
    %605 = tpu.memref_squeeze %604 : memref<1x!tpu.dma_semaphore, #tpu.memory_space<semaphore_mem>> -> memref<!tpu.dma_semaphore, #tpu.memory_space<semaphore_mem>>
    tpu.wait_dma2 semaphore(%605 : memref<!tpu.dma_semaphore, #tpu.memory_space<semaphore_mem>>) src(%601 : memref<384xf32, #tpu.memory_space<any>>) dst(%603 : memref<384xf32, #tpu.memory_space<vmem>>)
    %c0_i32_371 = arith.constant 0 : i32
    %c0_i32_372 = arith.constant 0 : i32
    %c0_i32_373 = arith.constant 0 : i32
    %c0_i32_374 = arith.constant 0 : i32
    %606 = tpu.memref_slice %arg1[%c0_i32_371, %c0_i32_374] : memref<50x384xf32, #tpu.memory_space<any>> -> memref<1x384xf32, #tpu.memory_space<any>>
    %607 = tpu.memref_squeeze %606 : memref<1x384xf32, #tpu.memory_space<any>> -> memref<384xf32, #tpu.memory_space<any>>
    %c0_i32_375 = arith.constant 0 : i32
    %608 = tpu.memref_slice %arg7[%c0_i32_372, %c0_i32_373, %c0_i32_375] : memref<2x8x384xf32, #tpu.memory_space<vmem>> -> memref<1x1x384xf32, #tpu.memory_space<vmem>>
    %609 = tpu.memref_squeeze %608 : memref<1x1x384xf32, #tpu.memory_space<vmem>> -> memref<384xf32, #tpu.memory_space<vmem>>
    %610 = tpu.memref_slice %arg8[%569] : memref<2x!tpu.dma_semaphore, #tpu.memory_space<semaphore_mem>> -> memref<1x!tpu.dma_semaphore, #tpu.memory_space<semaphore_mem>>
    %611 = tpu.memref_squeeze %610 : memref<1x!tpu.dma_semaphore, #tpu.memory_space<semaphore_mem>> -> memref<!tpu.dma_semaphore, #tpu.memory_space<semaphore_mem>>
    tpu.wait_dma2 semaphore(%611 : memref<!tpu.dma_semaphore, #tpu.memory_space<semaphore_mem>>) src(%607 : memref<384xf32, #tpu.memory_space<any>>) dst(%609 : memref<384xf32, #tpu.memory_space<vmem>>)
    %c0_i32_376 = arith.constant 0 : i32
    %c0_i32_377 = arith.constant 0 : i32
    %c0_i32_378 = arith.constant 0 : i32
    %c0_i32_379 = arith.constant 0 : i32
    %612 = tpu.memref_slice %arg1[%c0_i32_376, %c0_i32_379] : memref<50x384xf32, #tpu.memory_space<any>> -> memref<1x384xf32, #tpu.memory_space<any>>
    %613 = tpu.memref_squeeze %612 : memref<1x384xf32, #tpu.memory_space<any>> -> memref<384xf32, #tpu.memory_space<any>>
    %c0_i32_380 = arith.constant 0 : i32
    %614 = tpu.memref_slice %arg7[%c0_i32_377, %c0_i32_378, %c0_i32_380] : memref<2x8x384xf32, #tpu.memory_space<vmem>> -> memref<1x1x384xf32, #tpu.memory_space<vmem>>
    %615 = tpu.memref_squeeze %614 : memref<1x1x384xf32, #tpu.memory_space<vmem>> -> memref<384xf32, #tpu.memory_space<vmem>>
    %616 = tpu.memref_slice %arg8[%569] : memref<2x!tpu.dma_semaphore, #tpu.memory_space<semaphore_mem>> -> memref<1x!tpu.dma_semaphore, #tpu.memory_space<semaphore_mem>>
    %617 = tpu.memref_squeeze %616 : memref<1x!tpu.dma_semaphore, #tpu.memory_space<semaphore_mem>> -> memref<!tpu.dma_semaphore, #tpu.memory_space<semaphore_mem>>
    tpu.wait_dma2 semaphore(%617 : memref<!tpu.dma_semaphore, #tpu.memory_space<semaphore_mem>>) src(%613 : memref<384xf32, #tpu.memory_space<any>>) dst(%615 : memref<384xf32, #tpu.memory_space<vmem>>)
    %c1_i32_381 = arith.constant 1 : i32
    %618 = arith.addi %c5_i32_334, %c1_i32_381 : i32
    %c8_i32_382 = arith.constant 8 : i32
    %619 = arith.cmpi slt, %618, %c8_i32_382 : i32
    %620 = arith.extui %619 : i1 to i32
    %c0_i32_383 = arith.constant 0 : i32
    %621 = arith.cmpi ne, %620, %c0_i32_383 : i32
    scf.if %621 {
      %c1_i32_517 = arith.constant 1 : i32
      %861 = arith.addi %c5_i32_334, %c1_i32_517 : i32
      %c1_i32_518 = arith.constant 1 : i32
      %862 = arith.subi %c1_i32_518, %569 : i32
      %c8_i32_519 = arith.constant 8 : i32
      %863 = arith.muli %861, %c8_i32_519 : i32
      %c0_i32_520 = arith.constant 0 : i32
      %864 = arith.addi %863, %c0_i32_520 : i32
      %865 = arith.index_cast %864 : i32 to index
      %866 = memref.load %arg0[%865] : memref<64xi32, #tpu.memory_space<smem>>
      %c0_i32_521 = arith.constant 0 : i32
      %c0_i32_522 = arith.constant 0 : i32
      %867 = tpu.memref_slice %arg1[%866, %c0_i32_522] : memref<50x384xf32, #tpu.memory_space<any>> -> memref<1x384xf32, #tpu.memory_space<any>>
      %868 = tpu.memref_squeeze %867 : memref<1x384xf32, #tpu.memory_space<any>> -> memref<384xf32, #tpu.memory_space<any>>
      %c0_i32_523 = arith.constant 0 : i32
      %869 = tpu.memref_slice %arg7[%862, %c0_i32_521, %c0_i32_523] : memref<2x8x384xf32, #tpu.memory_space<vmem>> -> memref<1x1x384xf32, #tpu.memory_space<vmem>>
      %870 = tpu.memref_squeeze %869 : memref<1x1x384xf32, #tpu.memory_space<vmem>> -> memref<384xf32, #tpu.memory_space<vmem>>
      %871 = tpu.memref_slice %arg8[%862] : memref<2x!tpu.dma_semaphore, #tpu.memory_space<semaphore_mem>> -> memref<1x!tpu.dma_semaphore, #tpu.memory_space<semaphore_mem>>
      %872 = tpu.memref_squeeze %871 : memref<1x!tpu.dma_semaphore, #tpu.memory_space<semaphore_mem>> -> memref<!tpu.dma_semaphore, #tpu.memory_space<semaphore_mem>>
      tpu.enqueue_dma source(%868 : memref<384xf32, #tpu.memory_space<any>>) target(%870 : memref<384xf32, #tpu.memory_space<vmem>>) target_semaphore(%872 : memref<!tpu.dma_semaphore, #tpu.memory_space<semaphore_mem>>)
      %c8_i32_524 = arith.constant 8 : i32
      %873 = arith.muli %861, %c8_i32_524 : i32
      %c1_i32_525 = arith.constant 1 : i32
      %874 = arith.addi %873, %c1_i32_525 : i32
      %875 = arith.index_cast %874 : i32 to index
      %876 = memref.load %arg0[%875] : memref<64xi32, #tpu.memory_space<smem>>
      %c1_i32_526 = arith.constant 1 : i32
      %c0_i32_527 = arith.constant 0 : i32
      %877 = tpu.memref_slice %arg1[%876, %c0_i32_527] : memref<50x384xf32, #tpu.memory_space<any>> -> memref<1x384xf32, #tpu.memory_space<any>>
      %878 = tpu.memref_squeeze %877 : memref<1x384xf32, #tpu.memory_space<any>> -> memref<384xf32, #tpu.memory_space<any>>
      %c0_i32_528 = arith.constant 0 : i32
      %879 = tpu.memref_slice %arg7[%862, %c1_i32_526, %c0_i32_528] : memref<2x8x384xf32, #tpu.memory_space<vmem>> -> memref<1x1x384xf32, #tpu.memory_space<vmem>>
      %880 = tpu.memref_squeeze %879 : memref<1x1x384xf32, #tpu.memory_space<vmem>> -> memref<384xf32, #tpu.memory_space<vmem>>
      %881 = tpu.memref_slice %arg8[%862] : memref<2x!tpu.dma_semaphore, #tpu.memory_space<semaphore_mem>> -> memref<1x!tpu.dma_semaphore, #tpu.memory_space<semaphore_mem>>
      %882 = tpu.memref_squeeze %881 : memref<1x!tpu.dma_semaphore, #tpu.memory_space<semaphore_mem>> -> memref<!tpu.dma_semaphore, #tpu.memory_space<semaphore_mem>>
      tpu.enqueue_dma source(%878 : memref<384xf32, #tpu.memory_space<any>>) target(%880 : memref<384xf32, #tpu.memory_space<vmem>>) target_semaphore(%882 : memref<!tpu.dma_semaphore, #tpu.memory_space<semaphore_mem>>)
      %c8_i32_529 = arith.constant 8 : i32
      %883 = arith.muli %861, %c8_i32_529 : i32
      %c2_i32_530 = arith.constant 2 : i32
      %884 = arith.addi %883, %c2_i32_530 : i32
      %885 = arith.index_cast %884 : i32 to index
      %886 = memref.load %arg0[%885] : memref<64xi32, #tpu.memory_space<smem>>
      %c2_i32_531 = arith.constant 2 : i32
      %c0_i32_532 = arith.constant 0 : i32
      %887 = tpu.memref_slice %arg1[%886, %c0_i32_532] : memref<50x384xf32, #tpu.memory_space<any>> -> memref<1x384xf32, #tpu.memory_space<any>>
      %888 = tpu.memref_squeeze %887 : memref<1x384xf32, #tpu.memory_space<any>> -> memref<384xf32, #tpu.memory_space<any>>
      %c0_i32_533 = arith.constant 0 : i32
      %889 = tpu.memref_slice %arg7[%862, %c2_i32_531, %c0_i32_533] : memref<2x8x384xf32, #tpu.memory_space<vmem>> -> memref<1x1x384xf32, #tpu.memory_space<vmem>>
      %890 = tpu.memref_squeeze %889 : memref<1x1x384xf32, #tpu.memory_space<vmem>> -> memref<384xf32, #tpu.memory_space<vmem>>
      %891 = tpu.memref_slice %arg8[%862] : memref<2x!tpu.dma_semaphore, #tpu.memory_space<semaphore_mem>> -> memref<1x!tpu.dma_semaphore, #tpu.memory_space<semaphore_mem>>
      %892 = tpu.memref_squeeze %891 : memref<1x!tpu.dma_semaphore, #tpu.memory_space<semaphore_mem>> -> memref<!tpu.dma_semaphore, #tpu.memory_space<semaphore_mem>>
      tpu.enqueue_dma source(%888 : memref<384xf32, #tpu.memory_space<any>>) target(%890 : memref<384xf32, #tpu.memory_space<vmem>>) target_semaphore(%892 : memref<!tpu.dma_semaphore, #tpu.memory_space<semaphore_mem>>)
      %c8_i32_534 = arith.constant 8 : i32
      %893 = arith.muli %861, %c8_i32_534 : i32
      %c3_i32_535 = arith.constant 3 : i32
      %894 = arith.addi %893, %c3_i32_535 : i32
      %895 = arith.index_cast %894 : i32 to index
      %896 = memref.load %arg0[%895] : memref<64xi32, #tpu.memory_space<smem>>
      %c3_i32_536 = arith.constant 3 : i32
      %c0_i32_537 = arith.constant 0 : i32
      %897 = tpu.memref_slice %arg1[%896, %c0_i32_537] : memref<50x384xf32, #tpu.memory_space<any>> -> memref<1x384xf32, #tpu.memory_space<any>>
      %898 = tpu.memref_squeeze %897 : memref<1x384xf32, #tpu.memory_space<any>> -> memref<384xf32, #tpu.memory_space<any>>
      %c0_i32_538 = arith.constant 0 : i32
      %899 = tpu.memref_slice %arg7[%862, %c3_i32_536, %c0_i32_538] : memref<2x8x384xf32, #tpu.memory_space<vmem>> -> memref<1x1x384xf32, #tpu.memory_space<vmem>>
      %900 = tpu.memref_squeeze %899 : memref<1x1x384xf32, #tpu.memory_space<vmem>> -> memref<384xf32, #tpu.memory_space<vmem>>
      %901 = tpu.memref_slice %arg8[%862] : memref<2x!tpu.dma_semaphore, #tpu.memory_space<semaphore_mem>> -> memref<1x!tpu.dma_semaphore, #tpu.memory_space<semaphore_mem>>
      %902 = tpu.memref_squeeze %901 : memref<1x!tpu.dma_semaphore, #tpu.memory_space<semaphore_mem>> -> memref<!tpu.dma_semaphore, #tpu.memory_space<semaphore_mem>>
      tpu.enqueue_dma source(%898 : memref<384xf32, #tpu.memory_space<any>>) target(%900 : memref<384xf32, #tpu.memory_space<vmem>>) target_semaphore(%902 : memref<!tpu.dma_semaphore, #tpu.memory_space<semaphore_mem>>)
      %c8_i32_539 = arith.constant 8 : i32
      %903 = arith.muli %861, %c8_i32_539 : i32
      %c4_i32_540 = arith.constant 4 : i32
      %904 = arith.addi %903, %c4_i32_540 : i32
      %905 = arith.index_cast %904 : i32 to index
      %906 = memref.load %arg0[%905] : memref<64xi32, #tpu.memory_space<smem>>
      %c4_i32_541 = arith.constant 4 : i32
      %c0_i32_542 = arith.constant 0 : i32
      %907 = tpu.memref_slice %arg1[%906, %c0_i32_542] : memref<50x384xf32, #tpu.memory_space<any>> -> memref<1x384xf32, #tpu.memory_space<any>>
      %908 = tpu.memref_squeeze %907 : memref<1x384xf32, #tpu.memory_space<any>> -> memref<384xf32, #tpu.memory_space<any>>
      %c0_i32_543 = arith.constant 0 : i32
      %909 = tpu.memref_slice %arg7[%862, %c4_i32_541, %c0_i32_543] : memref<2x8x384xf32, #tpu.memory_space<vmem>> -> memref<1x1x384xf32, #tpu.memory_space<vmem>>
      %910 = tpu.memref_squeeze %909 : memref<1x1x384xf32, #tpu.memory_space<vmem>> -> memref<384xf32, #tpu.memory_space<vmem>>
      %911 = tpu.memref_slice %arg8[%862] : memref<2x!tpu.dma_semaphore, #tpu.memory_space<semaphore_mem>> -> memref<1x!tpu.dma_semaphore, #tpu.memory_space<semaphore_mem>>
      %912 = tpu.memref_squeeze %911 : memref<1x!tpu.dma_semaphore, #tpu.memory_space<semaphore_mem>> -> memref<!tpu.dma_semaphore, #tpu.memory_space<semaphore_mem>>
      tpu.enqueue_dma source(%908 : memref<384xf32, #tpu.memory_space<any>>) target(%910 : memref<384xf32, #tpu.memory_space<vmem>>) target_semaphore(%912 : memref<!tpu.dma_semaphore, #tpu.memory_space<semaphore_mem>>)
      %c8_i32_544 = arith.constant 8 : i32
      %913 = arith.muli %861, %c8_i32_544 : i32
      %c5_i32_545 = arith.constant 5 : i32
      %914 = arith.addi %913, %c5_i32_545 : i32
      %915 = arith.index_cast %914 : i32 to index
      %916 = memref.load %arg0[%915] : memref<64xi32, #tpu.memory_space<smem>>
      %c5_i32_546 = arith.constant 5 : i32
      %c0_i32_547 = arith.constant 0 : i32
      %917 = tpu.memref_slice %arg1[%916, %c0_i32_547] : memref<50x384xf32, #tpu.memory_space<any>> -> memref<1x384xf32, #tpu.memory_space<any>>
      %918 = tpu.memref_squeeze %917 : memref<1x384xf32, #tpu.memory_space<any>> -> memref<384xf32, #tpu.memory_space<any>>
      %c0_i32_548 = arith.constant 0 : i32
      %919 = tpu.memref_slice %arg7[%862, %c5_i32_546, %c0_i32_548] : memref<2x8x384xf32, #tpu.memory_space<vmem>> -> memref<1x1x384xf32, #tpu.memory_space<vmem>>
      %920 = tpu.memref_squeeze %919 : memref<1x1x384xf32, #tpu.memory_space<vmem>> -> memref<384xf32, #tpu.memory_space<vmem>>
      %921 = tpu.memref_slice %arg8[%862] : memref<2x!tpu.dma_semaphore, #tpu.memory_space<semaphore_mem>> -> memref<1x!tpu.dma_semaphore, #tpu.memory_space<semaphore_mem>>
      %922 = tpu.memref_squeeze %921 : memref<1x!tpu.dma_semaphore, #tpu.memory_space<semaphore_mem>> -> memref<!tpu.dma_semaphore, #tpu.memory_space<semaphore_mem>>
      tpu.enqueue_dma source(%918 : memref<384xf32, #tpu.memory_space<any>>) target(%920 : memref<384xf32, #tpu.memory_space<vmem>>) target_semaphore(%922 : memref<!tpu.dma_semaphore, #tpu.memory_space<semaphore_mem>>)
      %c8_i32_549 = arith.constant 8 : i32
      %923 = arith.muli %861, %c8_i32_549 : i32
      %c6_i32_550 = arith.constant 6 : i32
      %924 = arith.addi %923, %c6_i32_550 : i32
      %925 = arith.index_cast %924 : i32 to index
      %926 = memref.load %arg0[%925] : memref<64xi32, #tpu.memory_space<smem>>
      %c6_i32_551 = arith.constant 6 : i32
      %c0_i32_552 = arith.constant 0 : i32
      %927 = tpu.memref_slice %arg1[%926, %c0_i32_552] : memref<50x384xf32, #tpu.memory_space<any>> -> memref<1x384xf32, #tpu.memory_space<any>>
      %928 = tpu.memref_squeeze %927 : memref<1x384xf32, #tpu.memory_space<any>> -> memref<384xf32, #tpu.memory_space<any>>
      %c0_i32_553 = arith.constant 0 : i32
      %929 = tpu.memref_slice %arg7[%862, %c6_i32_551, %c0_i32_553] : memref<2x8x384xf32, #tpu.memory_space<vmem>> -> memref<1x1x384xf32, #tpu.memory_space<vmem>>
      %930 = tpu.memref_squeeze %929 : memref<1x1x384xf32, #tpu.memory_space<vmem>> -> memref<384xf32, #tpu.memory_space<vmem>>
      %931 = tpu.memref_slice %arg8[%862] : memref<2x!tpu.dma_semaphore, #tpu.memory_space<semaphore_mem>> -> memref<1x!tpu.dma_semaphore, #tpu.memory_space<semaphore_mem>>
      %932 = tpu.memref_squeeze %931 : memref<1x!tpu.dma_semaphore, #tpu.memory_space<semaphore_mem>> -> memref<!tpu.dma_semaphore, #tpu.memory_space<semaphore_mem>>
      tpu.enqueue_dma source(%928 : memref<384xf32, #tpu.memory_space<any>>) target(%930 : memref<384xf32, #tpu.memory_space<vmem>>) target_semaphore(%932 : memref<!tpu.dma_semaphore, #tpu.memory_space<semaphore_mem>>)
      %c8_i32_554 = arith.constant 8 : i32
      %933 = arith.muli %861, %c8_i32_554 : i32
      %c7_i32_555 = arith.constant 7 : i32
      %934 = arith.addi %933, %c7_i32_555 : i32
      %935 = arith.index_cast %934 : i32 to index
      %936 = memref.load %arg0[%935] : memref<64xi32, #tpu.memory_space<smem>>
      %c7_i32_556 = arith.constant 7 : i32
      %c0_i32_557 = arith.constant 0 : i32
      %937 = tpu.memref_slice %arg1[%936, %c0_i32_557] : memref<50x384xf32, #tpu.memory_space<any>> -> memref<1x384xf32, #tpu.memory_space<any>>
      %938 = tpu.memref_squeeze %937 : memref<1x384xf32, #tpu.memory_space<any>> -> memref<384xf32, #tpu.memory_space<any>>
      %c0_i32_558 = arith.constant 0 : i32
      %939 = tpu.memref_slice %arg7[%862, %c7_i32_556, %c0_i32_558] : memref<2x8x384xf32, #tpu.memory_space<vmem>> -> memref<1x1x384xf32, #tpu.memory_space<vmem>>
      %940 = tpu.memref_squeeze %939 : memref<1x1x384xf32, #tpu.memory_space<vmem>> -> memref<384xf32, #tpu.memory_space<vmem>>
      %941 = tpu.memref_slice %arg8[%862] : memref<2x!tpu.dma_semaphore, #tpu.memory_space<semaphore_mem>> -> memref<1x!tpu.dma_semaphore, #tpu.memory_space<semaphore_mem>>
      %942 = tpu.memref_squeeze %941 : memref<1x!tpu.dma_semaphore, #tpu.memory_space<semaphore_mem>> -> memref<!tpu.dma_semaphore, #tpu.memory_space<semaphore_mem>>
      tpu.enqueue_dma source(%938 : memref<384xf32, #tpu.memory_space<any>>) target(%940 : memref<384xf32, #tpu.memory_space<vmem>>) target_semaphore(%942 : memref<!tpu.dma_semaphore, #tpu.memory_space<semaphore_mem>>)
    } else {
    }
    %622 = arith.index_cast %569 : i32 to index
    %c0_384 = arith.constant 0 : index
    %c0_385 = arith.constant 0 : index
    %623 = vector.load %arg7[%622, %c0_384, %c0_385] : memref<2x8x384xf32, #tpu.memory_space<vmem>>, vector<1x8x384xf32>
    %624 = vector.shape_cast %623 : vector<1x8x384xf32> to vector<8x384xf32>
    %625 = vector.extract_strided_slice %555 {offsets = [0, 0], sizes = [8, 32], strides = [1, 1]} : vector<8x128xf32> to vector<8x32xf32>
    %626 = arith.truncf %625 : vector<8x32xf32> to vector<8x32xbf16>
    %c0_386 = arith.constant 0 : index
    %c0_387 = arith.constant 0 : index
    %627 = vector.load %arg2[%c0_386, %c0_387] : memref<32x384xbf16, #tpu.memory_space<vmem>>, vector<32x384xbf16>
    %cst_388 = arith.constant dense<0.000000e+00> : vector<8x384xf32>
    %628 = tpu.matmul %626, %627, %cst_388 {dimension_numbers = #tpu.dot_dimension_numbers<[1], [0], [0], [1], [0, 0, 1, 1], [], []>} : vector<8x32xbf16>, vector<32x384xbf16>, vector<8x384xf32> -> vector<8x384xf32>
    %629 = vector.extract_strided_slice %624 {offsets = [0, 0], sizes = [8, 128], strides = [1, 1]} : vector<8x384xf32> to vector<8x128xf32>
    %630 = vector.extract_strided_slice %628 {offsets = [0, 0], sizes = [8, 128], strides = [1, 1]} : vector<8x384xf32> to vector<8x128xf32>
    %631 = arith.addf %629, %630 : vector<8x128xf32>
    %632 = arith.negf %631 : vector<8x128xf32>
    %633 = math.exp %632 : vector<8x128xf32>
    %cst_389 = arith.constant 1.000000e+00 : f32
    %634 = vector.broadcast %cst_389 : f32 to vector<8x128xf32>
    %635 = arith.addf %634, %633 : vector<8x128xf32>
    %636 = arith.divf %634, %635 : vector<8x128xf32>
    %637 = vector.extract_strided_slice %624 {offsets = [0, 128], sizes = [8, 128], strides = [1, 1]} : vector<8x384xf32> to vector<8x128xf32>
    %638 = vector.extract_strided_slice %628 {offsets = [0, 128], sizes = [8, 128], strides = [1, 1]} : vector<8x384xf32> to vector<8x128xf32>
    %639 = arith.addf %637, %638 : vector<8x128xf32>
    %640 = arith.negf %639 : vector<8x128xf32>
    %641 = math.exp %640 : vector<8x128xf32>
    %cst_390 = arith.constant 1.000000e+00 : f32
    %642 = vector.broadcast %cst_390 : f32 to vector<8x128xf32>
    %643 = arith.addf %642, %641 : vector<8x128xf32>
    %644 = arith.divf %642, %643 : vector<8x128xf32>
    %645 = vector.extract_strided_slice %624 {offsets = [0, 256], sizes = [8, 128], strides = [1, 1]} : vector<8x384xf32> to vector<8x128xf32>
    %646 = vector.extract_strided_slice %628 {offsets = [0, 256], sizes = [8, 128], strides = [1, 1]} : vector<8x384xf32> to vector<8x128xf32>
    %647 = arith.addf %646, %58 : vector<8x128xf32>
    %648 = arith.mulf %636, %647 : vector<8x128xf32>
    %649 = arith.addf %645, %648 : vector<8x128xf32>
    %650 = math.tanh %649 : vector<8x128xf32>
    %cst_391 = arith.constant 1.000000e+00 : f32
    %651 = vector.broadcast %cst_391 : f32 to vector<8x128xf32>
    %652 = arith.subf %651, %644 : vector<8x128xf32>
    %653 = arith.mulf %652, %650 : vector<8x128xf32>
    %654 = arith.mulf %644, %555 : vector<8x128xf32>
    %655 = arith.addf %653, %654 : vector<8x128xf32>
    %656 = arith.index_cast %c5_i32_334 : i32 to index
    %c0_392 = arith.constant 0 : index
    %c0_393 = arith.constant 0 : index
    %657 = vector.load %arg5[%656, %c0_392, %c0_393] : memref<8x8x128xf32, #tpu.memory_space<vmem>>, vector<1x8x128xf32>
    %658 = vector.shape_cast %657 : vector<1x8x128xf32> to vector<8x128xf32>
    %659 = vector.shape_cast %655 : vector<8x128xf32> to vector<1x8x128xf32>
    tpu.vector_store %arg5[%656, %c0_392, %c0_393], %659 {strides = array<i32>} : memref<8x8x128xf32, #tpu.memory_space<vmem>>, vector<1x8x128xf32>,
    %c6_i32_394 = arith.constant 6 : i32
    %c2_i32_395 = arith.constant 2 : i32
    %c0_i32_396 = arith.constant 0 : i32
    %660 = arith.cmpi eq, %c2_i32_395, %c0_i32_396 : i32
    %c1_i32_397 = arith.constant 1 : i32
    %661 = arith.select %660, %c1_i32_397, %c2_i32_395 : i32
    %662 = arith.remsi %c6_i32_394, %661 : i32
    %c0_i32_398 = arith.constant 0 : i32
    %663 = arith.cmpi ne, %662, %c0_i32_398 : i32
    %c0_i32_399 = arith.constant 0 : i32
    %664 = arith.cmpi slt, %662, %c0_i32_399 : i32
    %c0_i32_400 = arith.constant 0 : i32
    %665 = arith.cmpi slt, %661, %c0_i32_400 : i32
    %666 = arith.xori %664, %665 : i1
    %667 = arith.andi %666, %663 : i1
    %668 = arith.addi %662, %661 : i32
    %669 = arith.select %667, %668, %662 : i32
    %c0_i32_401 = arith.constant 0 : i32
    %c0_i32_402 = arith.constant 0 : i32
    %c0_i32_403 = arith.constant 0 : i32
    %c0_i32_404 = arith.constant 0 : i32
    %670 = tpu.memref_slice %arg1[%c0_i32_401, %c0_i32_404] : memref<50x384xf32, #tpu.memory_space<any>> -> memref<1x384xf32, #tpu.memory_space<any>>
    %671 = tpu.memref_squeeze %670 : memref<1x384xf32, #tpu.memory_space<any>> -> memref<384xf32, #tpu.memory_space<any>>
    %c0_i32_405 = arith.constant 0 : i32
    %672 = tpu.memref_slice %arg7[%c0_i32_402, %c0_i32_403, %c0_i32_405] : memref<2x8x384xf32, #tpu.memory_space<vmem>> -> memref<1x1x384xf32, #tpu.memory_space<vmem>>
    %673 = tpu.memref_squeeze %672 : memref<1x1x384xf32, #tpu.memory_space<vmem>> -> memref<384xf32, #tpu.memory_space<vmem>>
    %674 = tpu.memref_slice %arg8[%669] : memref<2x!tpu.dma_semaphore, #tpu.memory_space<semaphore_mem>> -> memref<1x!tpu.dma_semaphore, #tpu.memory_space<semaphore_mem>>
    %675 = tpu.memref_squeeze %674 : memref<1x!tpu.dma_semaphore, #tpu.memory_space<semaphore_mem>> -> memref<!tpu.dma_semaphore, #tpu.memory_space<semaphore_mem>>
    tpu.wait_dma2 semaphore(%675 : memref<!tpu.dma_semaphore, #tpu.memory_space<semaphore_mem>>) src(%671 : memref<384xf32, #tpu.memory_space<any>>) dst(%673 : memref<384xf32, #tpu.memory_space<vmem>>)
    %c0_i32_406 = arith.constant 0 : i32
    %c0_i32_407 = arith.constant 0 : i32
    %c0_i32_408 = arith.constant 0 : i32
    %c0_i32_409 = arith.constant 0 : i32
    %676 = tpu.memref_slice %arg1[%c0_i32_406, %c0_i32_409] : memref<50x384xf32, #tpu.memory_space<any>> -> memref<1x384xf32, #tpu.memory_space<any>>
    %677 = tpu.memref_squeeze %676 : memref<1x384xf32, #tpu.memory_space<any>> -> memref<384xf32, #tpu.memory_space<any>>
    %c0_i32_410 = arith.constant 0 : i32
    %678 = tpu.memref_slice %arg7[%c0_i32_407, %c0_i32_408, %c0_i32_410] : memref<2x8x384xf32, #tpu.memory_space<vmem>> -> memref<1x1x384xf32, #tpu.memory_space<vmem>>
    %679 = tpu.memref_squeeze %678 : memref<1x1x384xf32, #tpu.memory_space<vmem>> -> memref<384xf32, #tpu.memory_space<vmem>>
    %680 = tpu.memref_slice %arg8[%669] : memref<2x!tpu.dma_semaphore, #tpu.memory_space<semaphore_mem>> -> memref<1x!tpu.dma_semaphore, #tpu.memory_space<semaphore_mem>>
    %681 = tpu.memref_squeeze %680 : memref<1x!tpu.dma_semaphore, #tpu.memory_space<semaphore_mem>> -> memref<!tpu.dma_semaphore, #tpu.memory_space<semaphore_mem>>
    tpu.wait_dma2 semaphore(%681 : memref<!tpu.dma_semaphore, #tpu.memory_space<semaphore_mem>>) src(%677 : memref<384xf32, #tpu.memory_space<any>>) dst(%679 : memref<384xf32, #tpu.memory_space<vmem>>)
    %c0_i32_411 = arith.constant 0 : i32
    %c0_i32_412 = arith.constant 0 : i32
    %c0_i32_413 = arith.constant 0 : i32
    %c0_i32_414 = arith.constant 0 : i32
    %682 = tpu.memref_slice %arg1[%c0_i32_411, %c0_i32_414] : memref<50x384xf32, #tpu.memory_space<any>> -> memref<1x384xf32, #tpu.memory_space<any>>
    %683 = tpu.memref_squeeze %682 : memref<1x384xf32, #tpu.memory_space<any>> -> memref<384xf32, #tpu.memory_space<any>>
    %c0_i32_415 = arith.constant 0 : i32
    %684 = tpu.memref_slice %arg7[%c0_i32_412, %c0_i32_413, %c0_i32_415] : memref<2x8x384xf32, #tpu.memory_space<vmem>> -> memref<1x1x384xf32, #tpu.memory_space<vmem>>
    %685 = tpu.memref_squeeze %684 : memref<1x1x384xf32, #tpu.memory_space<vmem>> -> memref<384xf32, #tpu.memory_space<vmem>>
    %686 = tpu.memref_slice %arg8[%669] : memref<2x!tpu.dma_semaphore, #tpu.memory_space<semaphore_mem>> -> memref<1x!tpu.dma_semaphore, #tpu.memory_space<semaphore_mem>>
    %687 = tpu.memref_squeeze %686 : memref<1x!tpu.dma_semaphore, #tpu.memory_space<semaphore_mem>> -> memref<!tpu.dma_semaphore, #tpu.memory_space<semaphore_mem>>
    tpu.wait_dma2 semaphore(%687 : memref<!tpu.dma_semaphore, #tpu.memory_space<semaphore_mem>>) src(%683 : memref<384xf32, #tpu.memory_space<any>>) dst(%685 : memref<384xf32, #tpu.memory_space<vmem>>)
    %c0_i32_416 = arith.constant 0 : i32
    %c0_i32_417 = arith.constant 0 : i32
    %c0_i32_418 = arith.constant 0 : i32
    %c0_i32_419 = arith.constant 0 : i32
    %688 = tpu.memref_slice %arg1[%c0_i32_416, %c0_i32_419] : memref<50x384xf32, #tpu.memory_space<any>> -> memref<1x384xf32, #tpu.memory_space<any>>
    %689 = tpu.memref_squeeze %688 : memref<1x384xf32, #tpu.memory_space<any>> -> memref<384xf32, #tpu.memory_space<any>>
    %c0_i32_420 = arith.constant 0 : i32
    %690 = tpu.memref_slice %arg7[%c0_i32_417, %c0_i32_418, %c0_i32_420] : memref<2x8x384xf32, #tpu.memory_space<vmem>> -> memref<1x1x384xf32, #tpu.memory_space<vmem>>
    %691 = tpu.memref_squeeze %690 : memref<1x1x384xf32, #tpu.memory_space<vmem>> -> memref<384xf32, #tpu.memory_space<vmem>>
    %692 = tpu.memref_slice %arg8[%669] : memref<2x!tpu.dma_semaphore, #tpu.memory_space<semaphore_mem>> -> memref<1x!tpu.dma_semaphore, #tpu.memory_space<semaphore_mem>>
    %693 = tpu.memref_squeeze %692 : memref<1x!tpu.dma_semaphore, #tpu.memory_space<semaphore_mem>> -> memref<!tpu.dma_semaphore, #tpu.memory_space<semaphore_mem>>
    tpu.wait_dma2 semaphore(%693 : memref<!tpu.dma_semaphore, #tpu.memory_space<semaphore_mem>>) src(%689 : memref<384xf32, #tpu.memory_space<any>>) dst(%691 : memref<384xf32, #tpu.memory_space<vmem>>)
    %c0_i32_421 = arith.constant 0 : i32
    %c0_i32_422 = arith.constant 0 : i32
    %c0_i32_423 = arith.constant 0 : i32
    %c0_i32_424 = arith.constant 0 : i32
    %694 = tpu.memref_slice %arg1[%c0_i32_421, %c0_i32_424] : memref<50x384xf32, #tpu.memory_space<any>> -> memref<1x384xf32, #tpu.memory_space<any>>
    %695 = tpu.memref_squeeze %694 : memref<1x384xf32, #tpu.memory_space<any>> -> memref<384xf32, #tpu.memory_space<any>>
    %c0_i32_425 = arith.constant 0 : i32
    %696 = tpu.memref_slice %arg7[%c0_i32_422, %c0_i32_423, %c0_i32_425] : memref<2x8x384xf32, #tpu.memory_space<vmem>> -> memref<1x1x384xf32, #tpu.memory_space<vmem>>
    %697 = tpu.memref_squeeze %696 : memref<1x1x384xf32, #tpu.memory_space<vmem>> -> memref<384xf32, #tpu.memory_space<vmem>>
    %698 = tpu.memref_slice %arg8[%669] : memref<2x!tpu.dma_semaphore, #tpu.memory_space<semaphore_mem>> -> memref<1x!tpu.dma_semaphore, #tpu.memory_space<semaphore_mem>>
    %699 = tpu.memref_squeeze %698 : memref<1x!tpu.dma_semaphore, #tpu.memory_space<semaphore_mem>> -> memref<!tpu.dma_semaphore, #tpu.memory_space<semaphore_mem>>
    tpu.wait_dma2 semaphore(%699 : memref<!tpu.dma_semaphore, #tpu.memory_space<semaphore_mem>>) src(%695 : memref<384xf32, #tpu.memory_space<any>>) dst(%697 : memref<384xf32, #tpu.memory_space<vmem>>)
    %c0_i32_426 = arith.constant 0 : i32
    %c0_i32_427 = arith.constant 0 : i32
    %c0_i32_428 = arith.constant 0 : i32
    %c0_i32_429 = arith.constant 0 : i32
    %700 = tpu.memref_slice %arg1[%c0_i32_426, %c0_i32_429] : memref<50x384xf32, #tpu.memory_space<any>> -> memref<1x384xf32, #tpu.memory_space<any>>
    %701 = tpu.memref_squeeze %700 : memref<1x384xf32, #tpu.memory_space<any>> -> memref<384xf32, #tpu.memory_space<any>>
    %c0_i32_430 = arith.constant 0 : i32
    %702 = tpu.memref_slice %arg7[%c0_i32_427, %c0_i32_428, %c0_i32_430] : memref<2x8x384xf32, #tpu.memory_space<vmem>> -> memref<1x1x384xf32, #tpu.memory_space<vmem>>
    %703 = tpu.memref_squeeze %702 : memref<1x1x384xf32, #tpu.memory_space<vmem>> -> memref<384xf32, #tpu.memory_space<vmem>>
    %704 = tpu.memref_slice %arg8[%669] : memref<2x!tpu.dma_semaphore, #tpu.memory_space<semaphore_mem>> -> memref<1x!tpu.dma_semaphore, #tpu.memory_space<semaphore_mem>>
    %705 = tpu.memref_squeeze %704 : memref<1x!tpu.dma_semaphore, #tpu.memory_space<semaphore_mem>> -> memref<!tpu.dma_semaphore, #tpu.memory_space<semaphore_mem>>
    tpu.wait_dma2 semaphore(%705 : memref<!tpu.dma_semaphore, #tpu.memory_space<semaphore_mem>>) src(%701 : memref<384xf32, #tpu.memory_space<any>>) dst(%703 : memref<384xf32, #tpu.memory_space<vmem>>)
    %c0_i32_431 = arith.constant 0 : i32
    %c0_i32_432 = arith.constant 0 : i32
    %c0_i32_433 = arith.constant 0 : i32
    %c0_i32_434 = arith.constant 0 : i32
    %706 = tpu.memref_slice %arg1[%c0_i32_431, %c0_i32_434] : memref<50x384xf32, #tpu.memory_space<any>> -> memref<1x384xf32, #tpu.memory_space<any>>
    %707 = tpu.memref_squeeze %706 : memref<1x384xf32, #tpu.memory_space<any>> -> memref<384xf32, #tpu.memory_space<any>>
    %c0_i32_435 = arith.constant 0 : i32
    %708 = tpu.memref_slice %arg7[%c0_i32_432, %c0_i32_433, %c0_i32_435] : memref<2x8x384xf32, #tpu.memory_space<vmem>> -> memref<1x1x384xf32, #tpu.memory_space<vmem>>
    %709 = tpu.memref_squeeze %708 : memref<1x1x384xf32, #tpu.memory_space<vmem>> -> memref<384xf32, #tpu.memory_space<vmem>>
    %710 = tpu.memref_slice %arg8[%669] : memref<2x!tpu.dma_semaphore, #tpu.memory_space<semaphore_mem>> -> memref<1x!tpu.dma_semaphore, #tpu.memory_space<semaphore_mem>>
    %711 = tpu.memref_squeeze %710 : memref<1x!tpu.dma_semaphore, #tpu.memory_space<semaphore_mem>> -> memref<!tpu.dma_semaphore, #tpu.memory_space<semaphore_mem>>
    tpu.wait_dma2 semaphore(%711 : memref<!tpu.dma_semaphore, #tpu.memory_space<semaphore_mem>>) src(%707 : memref<384xf32, #tpu.memory_space<any>>) dst(%709 : memref<384xf32, #tpu.memory_space<vmem>>)
    %c0_i32_436 = arith.constant 0 : i32
    %c0_i32_437 = arith.constant 0 : i32
    %c0_i32_438 = arith.constant 0 : i32
    %c0_i32_439 = arith.constant 0 : i32
    %712 = tpu.memref_slice %arg1[%c0_i32_436, %c0_i32_439] : memref<50x384xf32, #tpu.memory_space<any>> -> memref<1x384xf32, #tpu.memory_space<any>>
    %713 = tpu.memref_squeeze %712 : memref<1x384xf32, #tpu.memory_space<any>> -> memref<384xf32, #tpu.memory_space<any>>
    %c0_i32_440 = arith.constant 0 : i32
    %714 = tpu.memref_slice %arg7[%c0_i32_437, %c0_i32_438, %c0_i32_440] : memref<2x8x384xf32, #tpu.memory_space<vmem>> -> memref<1x1x384xf32, #tpu.memory_space<vmem>>
    %715 = tpu.memref_squeeze %714 : memref<1x1x384xf32, #tpu.memory_space<vmem>> -> memref<384xf32, #tpu.memory_space<vmem>>
    %716 = tpu.memref_slice %arg8[%669] : memref<2x!tpu.dma_semaphore, #tpu.memory_space<semaphore_mem>> -> memref<1x!tpu.dma_semaphore, #tpu.memory_space<semaphore_mem>>
    %717 = tpu.memref_squeeze %716 : memref<1x!tpu.dma_semaphore, #tpu.memory_space<semaphore_mem>> -> memref<!tpu.dma_semaphore, #tpu.memory_space<semaphore_mem>>
    tpu.wait_dma2 semaphore(%717 : memref<!tpu.dma_semaphore, #tpu.memory_space<semaphore_mem>>) src(%713 : memref<384xf32, #tpu.memory_space<any>>) dst(%715 : memref<384xf32, #tpu.memory_space<vmem>>)
    %c1_i32_441 = arith.constant 1 : i32
    %718 = arith.addi %c6_i32_394, %c1_i32_441 : i32
    %c8_i32_442 = arith.constant 8 : i32
    %719 = arith.cmpi slt, %718, %c8_i32_442 : i32
    %720 = arith.extui %719 : i1 to i32
    %c0_i32_443 = arith.constant 0 : i32
    %721 = arith.cmpi ne, %720, %c0_i32_443 : i32
    scf.if %721 {
      %c1_i32_517 = arith.constant 1 : i32
      %861 = arith.addi %c6_i32_394, %c1_i32_517 : i32
      %c1_i32_518 = arith.constant 1 : i32
      %862 = arith.subi %c1_i32_518, %669 : i32
      %c8_i32_519 = arith.constant 8 : i32
      %863 = arith.muli %861, %c8_i32_519 : i32
      %c0_i32_520 = arith.constant 0 : i32
      %864 = arith.addi %863, %c0_i32_520 : i32
      %865 = arith.index_cast %864 : i32 to index
      %866 = memref.load %arg0[%865] : memref<64xi32, #tpu.memory_space<smem>>
      %c0_i32_521 = arith.constant 0 : i32
      %c0_i32_522 = arith.constant 0 : i32
      %867 = tpu.memref_slice %arg1[%866, %c0_i32_522] : memref<50x384xf32, #tpu.memory_space<any>> -> memref<1x384xf32, #tpu.memory_space<any>>
      %868 = tpu.memref_squeeze %867 : memref<1x384xf32, #tpu.memory_space<any>> -> memref<384xf32, #tpu.memory_space<any>>
      %c0_i32_523 = arith.constant 0 : i32
      %869 = tpu.memref_slice %arg7[%862, %c0_i32_521, %c0_i32_523] : memref<2x8x384xf32, #tpu.memory_space<vmem>> -> memref<1x1x384xf32, #tpu.memory_space<vmem>>
      %870 = tpu.memref_squeeze %869 : memref<1x1x384xf32, #tpu.memory_space<vmem>> -> memref<384xf32, #tpu.memory_space<vmem>>
      %871 = tpu.memref_slice %arg8[%862] : memref<2x!tpu.dma_semaphore, #tpu.memory_space<semaphore_mem>> -> memref<1x!tpu.dma_semaphore, #tpu.memory_space<semaphore_mem>>
      %872 = tpu.memref_squeeze %871 : memref<1x!tpu.dma_semaphore, #tpu.memory_space<semaphore_mem>> -> memref<!tpu.dma_semaphore, #tpu.memory_space<semaphore_mem>>
      tpu.enqueue_dma source(%868 : memref<384xf32, #tpu.memory_space<any>>) target(%870 : memref<384xf32, #tpu.memory_space<vmem>>) target_semaphore(%872 : memref<!tpu.dma_semaphore, #tpu.memory_space<semaphore_mem>>)
      %c8_i32_524 = arith.constant 8 : i32
      %873 = arith.muli %861, %c8_i32_524 : i32
      %c1_i32_525 = arith.constant 1 : i32
      %874 = arith.addi %873, %c1_i32_525 : i32
      %875 = arith.index_cast %874 : i32 to index
      %876 = memref.load %arg0[%875] : memref<64xi32, #tpu.memory_space<smem>>
      %c1_i32_526 = arith.constant 1 : i32
      %c0_i32_527 = arith.constant 0 : i32
      %877 = tpu.memref_slice %arg1[%876, %c0_i32_527] : memref<50x384xf32, #tpu.memory_space<any>> -> memref<1x384xf32, #tpu.memory_space<any>>
      %878 = tpu.memref_squeeze %877 : memref<1x384xf32, #tpu.memory_space<any>> -> memref<384xf32, #tpu.memory_space<any>>
      %c0_i32_528 = arith.constant 0 : i32
      %879 = tpu.memref_slice %arg7[%862, %c1_i32_526, %c0_i32_528] : memref<2x8x384xf32, #tpu.memory_space<vmem>> -> memref<1x1x384xf32, #tpu.memory_space<vmem>>
      %880 = tpu.memref_squeeze %879 : memref<1x1x384xf32, #tpu.memory_space<vmem>> -> memref<384xf32, #tpu.memory_space<vmem>>
      %881 = tpu.memref_slice %arg8[%862] : memref<2x!tpu.dma_semaphore, #tpu.memory_space<semaphore_mem>> -> memref<1x!tpu.dma_semaphore, #tpu.memory_space<semaphore_mem>>
      %882 = tpu.memref_squeeze %881 : memref<1x!tpu.dma_semaphore, #tpu.memory_space<semaphore_mem>> -> memref<!tpu.dma_semaphore, #tpu.memory_space<semaphore_mem>>
      tpu.enqueue_dma source(%878 : memref<384xf32, #tpu.memory_space<any>>) target(%880 : memref<384xf32, #tpu.memory_space<vmem>>) target_semaphore(%882 : memref<!tpu.dma_semaphore, #tpu.memory_space<semaphore_mem>>)
      %c8_i32_529 = arith.constant 8 : i32
      %883 = arith.muli %861, %c8_i32_529 : i32
      %c2_i32_530 = arith.constant 2 : i32
      %884 = arith.addi %883, %c2_i32_530 : i32
      %885 = arith.index_cast %884 : i32 to index
      %886 = memref.load %arg0[%885] : memref<64xi32, #tpu.memory_space<smem>>
      %c2_i32_531 = arith.constant 2 : i32
      %c0_i32_532 = arith.constant 0 : i32
      %887 = tpu.memref_slice %arg1[%886, %c0_i32_532] : memref<50x384xf32, #tpu.memory_space<any>> -> memref<1x384xf32, #tpu.memory_space<any>>
      %888 = tpu.memref_squeeze %887 : memref<1x384xf32, #tpu.memory_space<any>> -> memref<384xf32, #tpu.memory_space<any>>
      %c0_i32_533 = arith.constant 0 : i32
      %889 = tpu.memref_slice %arg7[%862, %c2_i32_531, %c0_i32_533] : memref<2x8x384xf32, #tpu.memory_space<vmem>> -> memref<1x1x384xf32, #tpu.memory_space<vmem>>
      %890 = tpu.memref_squeeze %889 : memref<1x1x384xf32, #tpu.memory_space<vmem>> -> memref<384xf32, #tpu.memory_space<vmem>>
      %891 = tpu.memref_slice %arg8[%862] : memref<2x!tpu.dma_semaphore, #tpu.memory_space<semaphore_mem>> -> memref<1x!tpu.dma_semaphore, #tpu.memory_space<semaphore_mem>>
      %892 = tpu.memref_squeeze %891 : memref<1x!tpu.dma_semaphore, #tpu.memory_space<semaphore_mem>> -> memref<!tpu.dma_semaphore, #tpu.memory_space<semaphore_mem>>
      tpu.enqueue_dma source(%888 : memref<384xf32, #tpu.memory_space<any>>) target(%890 : memref<384xf32, #tpu.memory_space<vmem>>) target_semaphore(%892 : memref<!tpu.dma_semaphore, #tpu.memory_space<semaphore_mem>>)
      %c8_i32_534 = arith.constant 8 : i32
      %893 = arith.muli %861, %c8_i32_534 : i32
      %c3_i32_535 = arith.constant 3 : i32
      %894 = arith.addi %893, %c3_i32_535 : i32
      %895 = arith.index_cast %894 : i32 to index
      %896 = memref.load %arg0[%895] : memref<64xi32, #tpu.memory_space<smem>>
      %c3_i32_536 = arith.constant 3 : i32
      %c0_i32_537 = arith.constant 0 : i32
      %897 = tpu.memref_slice %arg1[%896, %c0_i32_537] : memref<50x384xf32, #tpu.memory_space<any>> -> memref<1x384xf32, #tpu.memory_space<any>>
      %898 = tpu.memref_squeeze %897 : memref<1x384xf32, #tpu.memory_space<any>> -> memref<384xf32, #tpu.memory_space<any>>
      %c0_i32_538 = arith.constant 0 : i32
      %899 = tpu.memref_slice %arg7[%862, %c3_i32_536, %c0_i32_538] : memref<2x8x384xf32, #tpu.memory_space<vmem>> -> memref<1x1x384xf32, #tpu.memory_space<vmem>>
      %900 = tpu.memref_squeeze %899 : memref<1x1x384xf32, #tpu.memory_space<vmem>> -> memref<384xf32, #tpu.memory_space<vmem>>
      %901 = tpu.memref_slice %arg8[%862] : memref<2x!tpu.dma_semaphore, #tpu.memory_space<semaphore_mem>> -> memref<1x!tpu.dma_semaphore, #tpu.memory_space<semaphore_mem>>
      %902 = tpu.memref_squeeze %901 : memref<1x!tpu.dma_semaphore, #tpu.memory_space<semaphore_mem>> -> memref<!tpu.dma_semaphore, #tpu.memory_space<semaphore_mem>>
      tpu.enqueue_dma source(%898 : memref<384xf32, #tpu.memory_space<any>>) target(%900 : memref<384xf32, #tpu.memory_space<vmem>>) target_semaphore(%902 : memref<!tpu.dma_semaphore, #tpu.memory_space<semaphore_mem>>)
      %c8_i32_539 = arith.constant 8 : i32
      %903 = arith.muli %861, %c8_i32_539 : i32
      %c4_i32_540 = arith.constant 4 : i32
      %904 = arith.addi %903, %c4_i32_540 : i32
      %905 = arith.index_cast %904 : i32 to index
      %906 = memref.load %arg0[%905] : memref<64xi32, #tpu.memory_space<smem>>
      %c4_i32_541 = arith.constant 4 : i32
      %c0_i32_542 = arith.constant 0 : i32
      %907 = tpu.memref_slice %arg1[%906, %c0_i32_542] : memref<50x384xf32, #tpu.memory_space<any>> -> memref<1x384xf32, #tpu.memory_space<any>>
      %908 = tpu.memref_squeeze %907 : memref<1x384xf32, #tpu.memory_space<any>> -> memref<384xf32, #tpu.memory_space<any>>
      %c0_i32_543 = arith.constant 0 : i32
      %909 = tpu.memref_slice %arg7[%862, %c4_i32_541, %c0_i32_543] : memref<2x8x384xf32, #tpu.memory_space<vmem>> -> memref<1x1x384xf32, #tpu.memory_space<vmem>>
      %910 = tpu.memref_squeeze %909 : memref<1x1x384xf32, #tpu.memory_space<vmem>> -> memref<384xf32, #tpu.memory_space<vmem>>
      %911 = tpu.memref_slice %arg8[%862] : memref<2x!tpu.dma_semaphore, #tpu.memory_space<semaphore_mem>> -> memref<1x!tpu.dma_semaphore, #tpu.memory_space<semaphore_mem>>
      %912 = tpu.memref_squeeze %911 : memref<1x!tpu.dma_semaphore, #tpu.memory_space<semaphore_mem>> -> memref<!tpu.dma_semaphore, #tpu.memory_space<semaphore_mem>>
      tpu.enqueue_dma source(%908 : memref<384xf32, #tpu.memory_space<any>>) target(%910 : memref<384xf32, #tpu.memory_space<vmem>>) target_semaphore(%912 : memref<!tpu.dma_semaphore, #tpu.memory_space<semaphore_mem>>)
      %c8_i32_544 = arith.constant 8 : i32
      %913 = arith.muli %861, %c8_i32_544 : i32
      %c5_i32_545 = arith.constant 5 : i32
      %914 = arith.addi %913, %c5_i32_545 : i32
      %915 = arith.index_cast %914 : i32 to index
      %916 = memref.load %arg0[%915] : memref<64xi32, #tpu.memory_space<smem>>
      %c5_i32_546 = arith.constant 5 : i32
      %c0_i32_547 = arith.constant 0 : i32
      %917 = tpu.memref_slice %arg1[%916, %c0_i32_547] : memref<50x384xf32, #tpu.memory_space<any>> -> memref<1x384xf32, #tpu.memory_space<any>>
      %918 = tpu.memref_squeeze %917 : memref<1x384xf32, #tpu.memory_space<any>> -> memref<384xf32, #tpu.memory_space<any>>
      %c0_i32_548 = arith.constant 0 : i32
      %919 = tpu.memref_slice %arg7[%862, %c5_i32_546, %c0_i32_548] : memref<2x8x384xf32, #tpu.memory_space<vmem>> -> memref<1x1x384xf32, #tpu.memory_space<vmem>>
      %920 = tpu.memref_squeeze %919 : memref<1x1x384xf32, #tpu.memory_space<vmem>> -> memref<384xf32, #tpu.memory_space<vmem>>
      %921 = tpu.memref_slice %arg8[%862] : memref<2x!tpu.dma_semaphore, #tpu.memory_space<semaphore_mem>> -> memref<1x!tpu.dma_semaphore, #tpu.memory_space<semaphore_mem>>
      %922 = tpu.memref_squeeze %921 : memref<1x!tpu.dma_semaphore, #tpu.memory_space<semaphore_mem>> -> memref<!tpu.dma_semaphore, #tpu.memory_space<semaphore_mem>>
      tpu.enqueue_dma source(%918 : memref<384xf32, #tpu.memory_space<any>>) target(%920 : memref<384xf32, #tpu.memory_space<vmem>>) target_semaphore(%922 : memref<!tpu.dma_semaphore, #tpu.memory_space<semaphore_mem>>)
      %c8_i32_549 = arith.constant 8 : i32
      %923 = arith.muli %861, %c8_i32_549 : i32
      %c6_i32_550 = arith.constant 6 : i32
      %924 = arith.addi %923, %c6_i32_550 : i32
      %925 = arith.index_cast %924 : i32 to index
      %926 = memref.load %arg0[%925] : memref<64xi32, #tpu.memory_space<smem>>
      %c6_i32_551 = arith.constant 6 : i32
      %c0_i32_552 = arith.constant 0 : i32
      %927 = tpu.memref_slice %arg1[%926, %c0_i32_552] : memref<50x384xf32, #tpu.memory_space<any>> -> memref<1x384xf32, #tpu.memory_space<any>>
      %928 = tpu.memref_squeeze %927 : memref<1x384xf32, #tpu.memory_space<any>> -> memref<384xf32, #tpu.memory_space<any>>
      %c0_i32_553 = arith.constant 0 : i32
      %929 = tpu.memref_slice %arg7[%862, %c6_i32_551, %c0_i32_553] : memref<2x8x384xf32, #tpu.memory_space<vmem>> -> memref<1x1x384xf32, #tpu.memory_space<vmem>>
      %930 = tpu.memref_squeeze %929 : memref<1x1x384xf32, #tpu.memory_space<vmem>> -> memref<384xf32, #tpu.memory_space<vmem>>
      %931 = tpu.memref_slice %arg8[%862] : memref<2x!tpu.dma_semaphore, #tpu.memory_space<semaphore_mem>> -> memref<1x!tpu.dma_semaphore, #tpu.memory_space<semaphore_mem>>
      %932 = tpu.memref_squeeze %931 : memref<1x!tpu.dma_semaphore, #tpu.memory_space<semaphore_mem>> -> memref<!tpu.dma_semaphore, #tpu.memory_space<semaphore_mem>>
      tpu.enqueue_dma source(%928 : memref<384xf32, #tpu.memory_space<any>>) target(%930 : memref<384xf32, #tpu.memory_space<vmem>>) target_semaphore(%932 : memref<!tpu.dma_semaphore, #tpu.memory_space<semaphore_mem>>)
      %c8_i32_554 = arith.constant 8 : i32
      %933 = arith.muli %861, %c8_i32_554 : i32
      %c7_i32_555 = arith.constant 7 : i32
      %934 = arith.addi %933, %c7_i32_555 : i32
      %935 = arith.index_cast %934 : i32 to index
      %936 = memref.load %arg0[%935] : memref<64xi32, #tpu.memory_space<smem>>
      %c7_i32_556 = arith.constant 7 : i32
      %c0_i32_557 = arith.constant 0 : i32
      %937 = tpu.memref_slice %arg1[%936, %c0_i32_557] : memref<50x384xf32, #tpu.memory_space<any>> -> memref<1x384xf32, #tpu.memory_space<any>>
      %938 = tpu.memref_squeeze %937 : memref<1x384xf32, #tpu.memory_space<any>> -> memref<384xf32, #tpu.memory_space<any>>
      %c0_i32_558 = arith.constant 0 : i32
      %939 = tpu.memref_slice %arg7[%862, %c7_i32_556, %c0_i32_558] : memref<2x8x384xf32, #tpu.memory_space<vmem>> -> memref<1x1x384xf32, #tpu.memory_space<vmem>>
      %940 = tpu.memref_squeeze %939 : memref<1x1x384xf32, #tpu.memory_space<vmem>> -> memref<384xf32, #tpu.memory_space<vmem>>
      %941 = tpu.memref_slice %arg8[%862] : memref<2x!tpu.dma_semaphore, #tpu.memory_space<semaphore_mem>> -> memref<1x!tpu.dma_semaphore, #tpu.memory_space<semaphore_mem>>
      %942 = tpu.memref_squeeze %941 : memref<1x!tpu.dma_semaphore, #tpu.memory_space<semaphore_mem>> -> memref<!tpu.dma_semaphore, #tpu.memory_space<semaphore_mem>>
      tpu.enqueue_dma source(%938 : memref<384xf32, #tpu.memory_space<any>>) target(%940 : memref<384xf32, #tpu.memory_space<vmem>>) target_semaphore(%942 : memref<!tpu.dma_semaphore, #tpu.memory_space<semaphore_mem>>)
    } else {
    }
    %722 = arith.index_cast %669 : i32 to index
    %c0_444 = arith.constant 0 : index
    %c0_445 = arith.constant 0 : index
    %723 = vector.load %arg7[%722, %c0_444, %c0_445] : memref<2x8x384xf32, #tpu.memory_space<vmem>>, vector<1x8x384xf32>
    %724 = vector.shape_cast %723 : vector<1x8x384xf32> to vector<8x384xf32>
    %725 = vector.extract_strided_slice %655 {offsets = [0, 0], sizes = [8, 32], strides = [1, 1]} : vector<8x128xf32> to vector<8x32xf32>
    %726 = arith.truncf %725 : vector<8x32xf32> to vector<8x32xbf16>
    %c0_446 = arith.constant 0 : index
    %c0_447 = arith.constant 0 : index
    %727 = vector.load %arg2[%c0_446, %c0_447] : memref<32x384xbf16, #tpu.memory_space<vmem>>, vector<32x384xbf16>
    %cst_448 = arith.constant dense<0.000000e+00> : vector<8x384xf32>
    %728 = tpu.matmul %726, %727, %cst_448 {dimension_numbers = #tpu.dot_dimension_numbers<[1], [0], [0], [1], [0, 0, 1, 1], [], []>} : vector<8x32xbf16>, vector<32x384xbf16>, vector<8x384xf32> -> vector<8x384xf32>
    %729 = vector.extract_strided_slice %724 {offsets = [0, 0], sizes = [8, 128], strides = [1, 1]} : vector<8x384xf32> to vector<8x128xf32>
    %730 = vector.extract_strided_slice %728 {offsets = [0, 0], sizes = [8, 128], strides = [1, 1]} : vector<8x384xf32> to vector<8x128xf32>
    %731 = arith.addf %729, %730 : vector<8x128xf32>
    %732 = arith.negf %731 : vector<8x128xf32>
    %733 = math.exp %732 : vector<8x128xf32>
    %cst_449 = arith.constant 1.000000e+00 : f32
    %734 = vector.broadcast %cst_449 : f32 to vector<8x128xf32>
    %735 = arith.addf %734, %733 : vector<8x128xf32>
    %736 = arith.divf %734, %735 : vector<8x128xf32>
    %737 = vector.extract_strided_slice %724 {offsets = [0, 128], sizes = [8, 128], strides = [1, 1]} : vector<8x384xf32> to vector<8x128xf32>
    %738 = vector.extract_strided_slice %728 {offsets = [0, 128], sizes = [8, 128], strides = [1, 1]} : vector<8x384xf32> to vector<8x128xf32>
    %739 = arith.addf %737, %738 : vector<8x128xf32>
    %740 = arith.negf %739 : vector<8x128xf32>
    %741 = math.exp %740 : vector<8x128xf32>
    %cst_450 = arith.constant 1.000000e+00 : f32
    %742 = vector.broadcast %cst_450 : f32 to vector<8x128xf32>
    %743 = arith.addf %742, %741 : vector<8x128xf32>
    %744 = arith.divf %742, %743 : vector<8x128xf32>
    %745 = vector.extract_strided_slice %724 {offsets = [0, 256], sizes = [8, 128], strides = [1, 1]} : vector<8x384xf32> to vector<8x128xf32>
    %746 = vector.extract_strided_slice %728 {offsets = [0, 256], sizes = [8, 128], strides = [1, 1]} : vector<8x384xf32> to vector<8x128xf32>
    %747 = arith.addf %746, %58 : vector<8x128xf32>
    %748 = arith.mulf %736, %747 : vector<8x128xf32>
    %749 = arith.addf %745, %748 : vector<8x128xf32>
    %750 = math.tanh %749 : vector<8x128xf32>
    %cst_451 = arith.constant 1.000000e+00 : f32
    %751 = vector.broadcast %cst_451 : f32 to vector<8x128xf32>
    %752 = arith.subf %751, %744 : vector<8x128xf32>
    %753 = arith.mulf %752, %750 : vector<8x128xf32>
    %754 = arith.mulf %744, %655 : vector<8x128xf32>
    %755 = arith.addf %753, %754 : vector<8x128xf32>
    %756 = arith.index_cast %c6_i32_394 : i32 to index
    %c0_452 = arith.constant 0 : index
    %c0_453 = arith.constant 0 : index
    %757 = vector.load %arg5[%756, %c0_452, %c0_453] : memref<8x8x128xf32, #tpu.memory_space<vmem>>, vector<1x8x128xf32>
    %758 = vector.shape_cast %757 : vector<1x8x128xf32> to vector<8x128xf32>
    %759 = vector.shape_cast %755 : vector<8x128xf32> to vector<1x8x128xf32>
    tpu.vector_store %arg5[%756, %c0_452, %c0_453], %759 {strides = array<i32>} : memref<8x8x128xf32, #tpu.memory_space<vmem>>, vector<1x8x128xf32>,
    %c7_i32_454 = arith.constant 7 : i32
    %c2_i32_455 = arith.constant 2 : i32
    %c0_i32_456 = arith.constant 0 : i32
    %760 = arith.cmpi eq, %c2_i32_455, %c0_i32_456 : i32
    %c1_i32_457 = arith.constant 1 : i32
    %761 = arith.select %760, %c1_i32_457, %c2_i32_455 : i32
    %762 = arith.remsi %c7_i32_454, %761 : i32
    %c0_i32_458 = arith.constant 0 : i32
    %763 = arith.cmpi ne, %762, %c0_i32_458 : i32
    %c0_i32_459 = arith.constant 0 : i32
    %764 = arith.cmpi slt, %762, %c0_i32_459 : i32
    %c0_i32_460 = arith.constant 0 : i32
    %765 = arith.cmpi slt, %761, %c0_i32_460 : i32
    %766 = arith.xori %764, %765 : i1
    %767 = arith.andi %766, %763 : i1
    %768 = arith.addi %762, %761 : i32
    %769 = arith.select %767, %768, %762 : i32
    %c0_i32_461 = arith.constant 0 : i32
    %c0_i32_462 = arith.constant 0 : i32
    %c0_i32_463 = arith.constant 0 : i32
    %c0_i32_464 = arith.constant 0 : i32
    %770 = tpu.memref_slice %arg1[%c0_i32_461, %c0_i32_464] : memref<50x384xf32, #tpu.memory_space<any>> -> memref<1x384xf32, #tpu.memory_space<any>>
    %771 = tpu.memref_squeeze %770 : memref<1x384xf32, #tpu.memory_space<any>> -> memref<384xf32, #tpu.memory_space<any>>
    %c0_i32_465 = arith.constant 0 : i32
    %772 = tpu.memref_slice %arg7[%c0_i32_462, %c0_i32_463, %c0_i32_465] : memref<2x8x384xf32, #tpu.memory_space<vmem>> -> memref<1x1x384xf32, #tpu.memory_space<vmem>>
    %773 = tpu.memref_squeeze %772 : memref<1x1x384xf32, #tpu.memory_space<vmem>> -> memref<384xf32, #tpu.memory_space<vmem>>
    %774 = tpu.memref_slice %arg8[%769] : memref<2x!tpu.dma_semaphore, #tpu.memory_space<semaphore_mem>> -> memref<1x!tpu.dma_semaphore, #tpu.memory_space<semaphore_mem>>
    %775 = tpu.memref_squeeze %774 : memref<1x!tpu.dma_semaphore, #tpu.memory_space<semaphore_mem>> -> memref<!tpu.dma_semaphore, #tpu.memory_space<semaphore_mem>>
    tpu.wait_dma2 semaphore(%775 : memref<!tpu.dma_semaphore, #tpu.memory_space<semaphore_mem>>) src(%771 : memref<384xf32, #tpu.memory_space<any>>) dst(%773 : memref<384xf32, #tpu.memory_space<vmem>>)
    %c0_i32_466 = arith.constant 0 : i32
    %c0_i32_467 = arith.constant 0 : i32
    %c0_i32_468 = arith.constant 0 : i32
    %c0_i32_469 = arith.constant 0 : i32
    %776 = tpu.memref_slice %arg1[%c0_i32_466, %c0_i32_469] : memref<50x384xf32, #tpu.memory_space<any>> -> memref<1x384xf32, #tpu.memory_space<any>>
    %777 = tpu.memref_squeeze %776 : memref<1x384xf32, #tpu.memory_space<any>> -> memref<384xf32, #tpu.memory_space<any>>
    %c0_i32_470 = arith.constant 0 : i32
    %778 = tpu.memref_slice %arg7[%c0_i32_467, %c0_i32_468, %c0_i32_470] : memref<2x8x384xf32, #tpu.memory_space<vmem>> -> memref<1x1x384xf32, #tpu.memory_space<vmem>>
    %779 = tpu.memref_squeeze %778 : memref<1x1x384xf32, #tpu.memory_space<vmem>> -> memref<384xf32, #tpu.memory_space<vmem>>
    %780 = tpu.memref_slice %arg8[%769] : memref<2x!tpu.dma_semaphore, #tpu.memory_space<semaphore_mem>> -> memref<1x!tpu.dma_semaphore, #tpu.memory_space<semaphore_mem>>
    %781 = tpu.memref_squeeze %780 : memref<1x!tpu.dma_semaphore, #tpu.memory_space<semaphore_mem>> -> memref<!tpu.dma_semaphore, #tpu.memory_space<semaphore_mem>>
    tpu.wait_dma2 semaphore(%781 : memref<!tpu.dma_semaphore, #tpu.memory_space<semaphore_mem>>) src(%777 : memref<384xf32, #tpu.memory_space<any>>) dst(%779 : memref<384xf32, #tpu.memory_space<vmem>>)
    %c0_i32_471 = arith.constant 0 : i32
    %c0_i32_472 = arith.constant 0 : i32
    %c0_i32_473 = arith.constant 0 : i32
    %c0_i32_474 = arith.constant 0 : i32
    %782 = tpu.memref_slice %arg1[%c0_i32_471, %c0_i32_474] : memref<50x384xf32, #tpu.memory_space<any>> -> memref<1x384xf32, #tpu.memory_space<any>>
    %783 = tpu.memref_squeeze %782 : memref<1x384xf32, #tpu.memory_space<any>> -> memref<384xf32, #tpu.memory_space<any>>
    %c0_i32_475 = arith.constant 0 : i32
    %784 = tpu.memref_slice %arg7[%c0_i32_472, %c0_i32_473, %c0_i32_475] : memref<2x8x384xf32, #tpu.memory_space<vmem>> -> memref<1x1x384xf32, #tpu.memory_space<vmem>>
    %785 = tpu.memref_squeeze %784 : memref<1x1x384xf32, #tpu.memory_space<vmem>> -> memref<384xf32, #tpu.memory_space<vmem>>
    %786 = tpu.memref_slice %arg8[%769] : memref<2x!tpu.dma_semaphore, #tpu.memory_space<semaphore_mem>> -> memref<1x!tpu.dma_semaphore, #tpu.memory_space<semaphore_mem>>
    %787 = tpu.memref_squeeze %786 : memref<1x!tpu.dma_semaphore, #tpu.memory_space<semaphore_mem>> -> memref<!tpu.dma_semaphore, #tpu.memory_space<semaphore_mem>>
    tpu.wait_dma2 semaphore(%787 : memref<!tpu.dma_semaphore, #tpu.memory_space<semaphore_mem>>) src(%783 : memref<384xf32, #tpu.memory_space<any>>) dst(%785 : memref<384xf32, #tpu.memory_space<vmem>>)
    %c0_i32_476 = arith.constant 0 : i32
    %c0_i32_477 = arith.constant 0 : i32
    %c0_i32_478 = arith.constant 0 : i32
    %c0_i32_479 = arith.constant 0 : i32
    %788 = tpu.memref_slice %arg1[%c0_i32_476, %c0_i32_479] : memref<50x384xf32, #tpu.memory_space<any>> -> memref<1x384xf32, #tpu.memory_space<any>>
    %789 = tpu.memref_squeeze %788 : memref<1x384xf32, #tpu.memory_space<any>> -> memref<384xf32, #tpu.memory_space<any>>
    %c0_i32_480 = arith.constant 0 : i32
    %790 = tpu.memref_slice %arg7[%c0_i32_477, %c0_i32_478, %c0_i32_480] : memref<2x8x384xf32, #tpu.memory_space<vmem>> -> memref<1x1x384xf32, #tpu.memory_space<vmem>>
    %791 = tpu.memref_squeeze %790 : memref<1x1x384xf32, #tpu.memory_space<vmem>> -> memref<384xf32, #tpu.memory_space<vmem>>
    %792 = tpu.memref_slice %arg8[%769] : memref<2x!tpu.dma_semaphore, #tpu.memory_space<semaphore_mem>> -> memref<1x!tpu.dma_semaphore, #tpu.memory_space<semaphore_mem>>
    %793 = tpu.memref_squeeze %792 : memref<1x!tpu.dma_semaphore, #tpu.memory_space<semaphore_mem>> -> memref<!tpu.dma_semaphore, #tpu.memory_space<semaphore_mem>>
    tpu.wait_dma2 semaphore(%793 : memref<!tpu.dma_semaphore, #tpu.memory_space<semaphore_mem>>) src(%789 : memref<384xf32, #tpu.memory_space<any>>) dst(%791 : memref<384xf32, #tpu.memory_space<vmem>>)
    %c0_i32_481 = arith.constant 0 : i32
    %c0_i32_482 = arith.constant 0 : i32
    %c0_i32_483 = arith.constant 0 : i32
    %c0_i32_484 = arith.constant 0 : i32
    %794 = tpu.memref_slice %arg1[%c0_i32_481, %c0_i32_484] : memref<50x384xf32, #tpu.memory_space<any>> -> memref<1x384xf32, #tpu.memory_space<any>>
    %795 = tpu.memref_squeeze %794 : memref<1x384xf32, #tpu.memory_space<any>> -> memref<384xf32, #tpu.memory_space<any>>
    %c0_i32_485 = arith.constant 0 : i32
    %796 = tpu.memref_slice %arg7[%c0_i32_482, %c0_i32_483, %c0_i32_485] : memref<2x8x384xf32, #tpu.memory_space<vmem>> -> memref<1x1x384xf32, #tpu.memory_space<vmem>>
    %797 = tpu.memref_squeeze %796 : memref<1x1x384xf32, #tpu.memory_space<vmem>> -> memref<384xf32, #tpu.memory_space<vmem>>
    %798 = tpu.memref_slice %arg8[%769] : memref<2x!tpu.dma_semaphore, #tpu.memory_space<semaphore_mem>> -> memref<1x!tpu.dma_semaphore, #tpu.memory_space<semaphore_mem>>
    %799 = tpu.memref_squeeze %798 : memref<1x!tpu.dma_semaphore, #tpu.memory_space<semaphore_mem>> -> memref<!tpu.dma_semaphore, #tpu.memory_space<semaphore_mem>>
    tpu.wait_dma2 semaphore(%799 : memref<!tpu.dma_semaphore, #tpu.memory_space<semaphore_mem>>) src(%795 : memref<384xf32, #tpu.memory_space<any>>) dst(%797 : memref<384xf32, #tpu.memory_space<vmem>>)
    %c0_i32_486 = arith.constant 0 : i32
    %c0_i32_487 = arith.constant 0 : i32
    %c0_i32_488 = arith.constant 0 : i32
    %c0_i32_489 = arith.constant 0 : i32
    %800 = tpu.memref_slice %arg1[%c0_i32_486, %c0_i32_489] : memref<50x384xf32, #tpu.memory_space<any>> -> memref<1x384xf32, #tpu.memory_space<any>>
    %801 = tpu.memref_squeeze %800 : memref<1x384xf32, #tpu.memory_space<any>> -> memref<384xf32, #tpu.memory_space<any>>
    %c0_i32_490 = arith.constant 0 : i32
    %802 = tpu.memref_slice %arg7[%c0_i32_487, %c0_i32_488, %c0_i32_490] : memref<2x8x384xf32, #tpu.memory_space<vmem>> -> memref<1x1x384xf32, #tpu.memory_space<vmem>>
    %803 = tpu.memref_squeeze %802 : memref<1x1x384xf32, #tpu.memory_space<vmem>> -> memref<384xf32, #tpu.memory_space<vmem>>
    %804 = tpu.memref_slice %arg8[%769] : memref<2x!tpu.dma_semaphore, #tpu.memory_space<semaphore_mem>> -> memref<1x!tpu.dma_semaphore, #tpu.memory_space<semaphore_mem>>
    %805 = tpu.memref_squeeze %804 : memref<1x!tpu.dma_semaphore, #tpu.memory_space<semaphore_mem>> -> memref<!tpu.dma_semaphore, #tpu.memory_space<semaphore_mem>>
    tpu.wait_dma2 semaphore(%805 : memref<!tpu.dma_semaphore, #tpu.memory_space<semaphore_mem>>) src(%801 : memref<384xf32, #tpu.memory_space<any>>) dst(%803 : memref<384xf32, #tpu.memory_space<vmem>>)
    %c0_i32_491 = arith.constant 0 : i32
    %c0_i32_492 = arith.constant 0 : i32
    %c0_i32_493 = arith.constant 0 : i32
    %c0_i32_494 = arith.constant 0 : i32
    %806 = tpu.memref_slice %arg1[%c0_i32_491, %c0_i32_494] : memref<50x384xf32, #tpu.memory_space<any>> -> memref<1x384xf32, #tpu.memory_space<any>>
    %807 = tpu.memref_squeeze %806 : memref<1x384xf32, #tpu.memory_space<any>> -> memref<384xf32, #tpu.memory_space<any>>
    %c0_i32_495 = arith.constant 0 : i32
    %808 = tpu.memref_slice %arg7[%c0_i32_492, %c0_i32_493, %c0_i32_495] : memref<2x8x384xf32, #tpu.memory_space<vmem>> -> memref<1x1x384xf32, #tpu.memory_space<vmem>>
    %809 = tpu.memref_squeeze %808 : memref<1x1x384xf32, #tpu.memory_space<vmem>> -> memref<384xf32, #tpu.memory_space<vmem>>
    %810 = tpu.memref_slice %arg8[%769] : memref<2x!tpu.dma_semaphore, #tpu.memory_space<semaphore_mem>> -> memref<1x!tpu.dma_semaphore, #tpu.memory_space<semaphore_mem>>
    %811 = tpu.memref_squeeze %810 : memref<1x!tpu.dma_semaphore, #tpu.memory_space<semaphore_mem>> -> memref<!tpu.dma_semaphore, #tpu.memory_space<semaphore_mem>>
    tpu.wait_dma2 semaphore(%811 : memref<!tpu.dma_semaphore, #tpu.memory_space<semaphore_mem>>) src(%807 : memref<384xf32, #tpu.memory_space<any>>) dst(%809 : memref<384xf32, #tpu.memory_space<vmem>>)
    %c0_i32_496 = arith.constant 0 : i32
    %c0_i32_497 = arith.constant 0 : i32
    %c0_i32_498 = arith.constant 0 : i32
    %c0_i32_499 = arith.constant 0 : i32
    %812 = tpu.memref_slice %arg1[%c0_i32_496, %c0_i32_499] : memref<50x384xf32, #tpu.memory_space<any>> -> memref<1x384xf32, #tpu.memory_space<any>>
    %813 = tpu.memref_squeeze %812 : memref<1x384xf32, #tpu.memory_space<any>> -> memref<384xf32, #tpu.memory_space<any>>
    %c0_i32_500 = arith.constant 0 : i32
    %814 = tpu.memref_slice %arg7[%c0_i32_497, %c0_i32_498, %c0_i32_500] : memref<2x8x384xf32, #tpu.memory_space<vmem>> -> memref<1x1x384xf32, #tpu.memory_space<vmem>>
    %815 = tpu.memref_squeeze %814 : memref<1x1x384xf32, #tpu.memory_space<vmem>> -> memref<384xf32, #tpu.memory_space<vmem>>
    %816 = tpu.memref_slice %arg8[%769] : memref<2x!tpu.dma_semaphore, #tpu.memory_space<semaphore_mem>> -> memref<1x!tpu.dma_semaphore, #tpu.memory_space<semaphore_mem>>
    %817 = tpu.memref_squeeze %816 : memref<1x!tpu.dma_semaphore, #tpu.memory_space<semaphore_mem>> -> memref<!tpu.dma_semaphore, #tpu.memory_space<semaphore_mem>>
    tpu.wait_dma2 semaphore(%817 : memref<!tpu.dma_semaphore, #tpu.memory_space<semaphore_mem>>) src(%813 : memref<384xf32, #tpu.memory_space<any>>) dst(%815 : memref<384xf32, #tpu.memory_space<vmem>>)
    %c1_i32_501 = arith.constant 1 : i32
    %818 = arith.addi %c7_i32_454, %c1_i32_501 : i32
    %c8_i32_502 = arith.constant 8 : i32
    %819 = arith.cmpi slt, %818, %c8_i32_502 : i32
    %820 = arith.extui %819 : i1 to i32
    %c0_i32_503 = arith.constant 0 : i32
    %821 = arith.cmpi ne, %820, %c0_i32_503 : i32
    scf.if %821 {
      %c1_i32_517 = arith.constant 1 : i32
      %861 = arith.addi %c7_i32_454, %c1_i32_517 : i32
      %c1_i32_518 = arith.constant 1 : i32
      %862 = arith.subi %c1_i32_518, %769 : i32
      %c8_i32_519 = arith.constant 8 : i32
      %863 = arith.muli %861, %c8_i32_519 : i32
      %c0_i32_520 = arith.constant 0 : i32
      %864 = arith.addi %863, %c0_i32_520 : i32
      %865 = arith.index_cast %864 : i32 to index
      %866 = memref.load %arg0[%865] : memref<64xi32, #tpu.memory_space<smem>>
      %c0_i32_521 = arith.constant 0 : i32
      %c0_i32_522 = arith.constant 0 : i32
      %867 = tpu.memref_slice %arg1[%866, %c0_i32_522] : memref<50x384xf32, #tpu.memory_space<any>> -> memref<1x384xf32, #tpu.memory_space<any>>
      %868 = tpu.memref_squeeze %867 : memref<1x384xf32, #tpu.memory_space<any>> -> memref<384xf32, #tpu.memory_space<any>>
      %c0_i32_523 = arith.constant 0 : i32
      %869 = tpu.memref_slice %arg7[%862, %c0_i32_521, %c0_i32_523] : memref<2x8x384xf32, #tpu.memory_space<vmem>> -> memref<1x1x384xf32, #tpu.memory_space<vmem>>
      %870 = tpu.memref_squeeze %869 : memref<1x1x384xf32, #tpu.memory_space<vmem>> -> memref<384xf32, #tpu.memory_space<vmem>>
      %871 = tpu.memref_slice %arg8[%862] : memref<2x!tpu.dma_semaphore, #tpu.memory_space<semaphore_mem>> -> memref<1x!tpu.dma_semaphore, #tpu.memory_space<semaphore_mem>>
      %872 = tpu.memref_squeeze %871 : memref<1x!tpu.dma_semaphore, #tpu.memory_space<semaphore_mem>> -> memref<!tpu.dma_semaphore, #tpu.memory_space<semaphore_mem>>
      tpu.enqueue_dma source(%868 : memref<384xf32, #tpu.memory_space<any>>) target(%870 : memref<384xf32, #tpu.memory_space<vmem>>) target_semaphore(%872 : memref<!tpu.dma_semaphore, #tpu.memory_space<semaphore_mem>>)
      %c8_i32_524 = arith.constant 8 : i32
      %873 = arith.muli %861, %c8_i32_524 : i32
      %c1_i32_525 = arith.constant 1 : i32
      %874 = arith.addi %873, %c1_i32_525 : i32
      %875 = arith.index_cast %874 : i32 to index
      %876 = memref.load %arg0[%875] : memref<64xi32, #tpu.memory_space<smem>>
      %c1_i32_526 = arith.constant 1 : i32
      %c0_i32_527 = arith.constant 0 : i32
      %877 = tpu.memref_slice %arg1[%876, %c0_i32_527] : memref<50x384xf32, #tpu.memory_space<any>> -> memref<1x384xf32, #tpu.memory_space<any>>
      %878 = tpu.memref_squeeze %877 : memref<1x384xf32, #tpu.memory_space<any>> -> memref<384xf32, #tpu.memory_space<any>>
      %c0_i32_528 = arith.constant 0 : i32
      %879 = tpu.memref_slice %arg7[%862, %c1_i32_526, %c0_i32_528] : memref<2x8x384xf32, #tpu.memory_space<vmem>> -> memref<1x1x384xf32, #tpu.memory_space<vmem>>
      %880 = tpu.memref_squeeze %879 : memref<1x1x384xf32, #tpu.memory_space<vmem>> -> memref<384xf32, #tpu.memory_space<vmem>>
      %881 = tpu.memref_slice %arg8[%862] : memref<2x!tpu.dma_semaphore, #tpu.memory_space<semaphore_mem>> -> memref<1x!tpu.dma_semaphore, #tpu.memory_space<semaphore_mem>>
      %882 = tpu.memref_squeeze %881 : memref<1x!tpu.dma_semaphore, #tpu.memory_space<semaphore_mem>> -> memref<!tpu.dma_semaphore, #tpu.memory_space<semaphore_mem>>
      tpu.enqueue_dma source(%878 : memref<384xf32, #tpu.memory_space<any>>) target(%880 : memref<384xf32, #tpu.memory_space<vmem>>) target_semaphore(%882 : memref<!tpu.dma_semaphore, #tpu.memory_space<semaphore_mem>>)
      %c8_i32_529 = arith.constant 8 : i32
      %883 = arith.muli %861, %c8_i32_529 : i32
      %c2_i32_530 = arith.constant 2 : i32
      %884 = arith.addi %883, %c2_i32_530 : i32
      %885 = arith.index_cast %884 : i32 to index
      %886 = memref.load %arg0[%885] : memref<64xi32, #tpu.memory_space<smem>>
      %c2_i32_531 = arith.constant 2 : i32
      %c0_i32_532 = arith.constant 0 : i32
      %887 = tpu.memref_slice %arg1[%886, %c0_i32_532] : memref<50x384xf32, #tpu.memory_space<any>> -> memref<1x384xf32, #tpu.memory_space<any>>
      %888 = tpu.memref_squeeze %887 : memref<1x384xf32, #tpu.memory_space<any>> -> memref<384xf32, #tpu.memory_space<any>>
      %c0_i32_533 = arith.constant 0 : i32
      %889 = tpu.memref_slice %arg7[%862, %c2_i32_531, %c0_i32_533] : memref<2x8x384xf32, #tpu.memory_space<vmem>> -> memref<1x1x384xf32, #tpu.memory_space<vmem>>
      %890 = tpu.memref_squeeze %889 : memref<1x1x384xf32, #tpu.memory_space<vmem>> -> memref<384xf32, #tpu.memory_space<vmem>>
      %891 = tpu.memref_slice %arg8[%862] : memref<2x!tpu.dma_semaphore, #tpu.memory_space<semaphore_mem>> -> memref<1x!tpu.dma_semaphore, #tpu.memory_space<semaphore_mem>>
      %892 = tpu.memref_squeeze %891 : memref<1x!tpu.dma_semaphore, #tpu.memory_space<semaphore_mem>> -> memref<!tpu.dma_semaphore, #tpu.memory_space<semaphore_mem>>
      tpu.enqueue_dma source(%888 : memref<384xf32, #tpu.memory_space<any>>) target(%890 : memref<384xf32, #tpu.memory_space<vmem>>) target_semaphore(%892 : memref<!tpu.dma_semaphore, #tpu.memory_space<semaphore_mem>>)
      %c8_i32_534 = arith.constant 8 : i32
      %893 = arith.muli %861, %c8_i32_534 : i32
      %c3_i32_535 = arith.constant 3 : i32
      %894 = arith.addi %893, %c3_i32_535 : i32
      %895 = arith.index_cast %894 : i32 to index
      %896 = memref.load %arg0[%895] : memref<64xi32, #tpu.memory_space<smem>>
      %c3_i32_536 = arith.constant 3 : i32
      %c0_i32_537 = arith.constant 0 : i32
      %897 = tpu.memref_slice %arg1[%896, %c0_i32_537] : memref<50x384xf32, #tpu.memory_space<any>> -> memref<1x384xf32, #tpu.memory_space<any>>
      %898 = tpu.memref_squeeze %897 : memref<1x384xf32, #tpu.memory_space<any>> -> memref<384xf32, #tpu.memory_space<any>>
      %c0_i32_538 = arith.constant 0 : i32
      %899 = tpu.memref_slice %arg7[%862, %c3_i32_536, %c0_i32_538] : memref<2x8x384xf32, #tpu.memory_space<vmem>> -> memref<1x1x384xf32, #tpu.memory_space<vmem>>
      %900 = tpu.memref_squeeze %899 : memref<1x1x384xf32, #tpu.memory_space<vmem>> -> memref<384xf32, #tpu.memory_space<vmem>>
      %901 = tpu.memref_slice %arg8[%862] : memref<2x!tpu.dma_semaphore, #tpu.memory_space<semaphore_mem>> -> memref<1x!tpu.dma_semaphore, #tpu.memory_space<semaphore_mem>>
      %902 = tpu.memref_squeeze %901 : memref<1x!tpu.dma_semaphore, #tpu.memory_space<semaphore_mem>> -> memref<!tpu.dma_semaphore, #tpu.memory_space<semaphore_mem>>
      tpu.enqueue_dma source(%898 : memref<384xf32, #tpu.memory_space<any>>) target(%900 : memref<384xf32, #tpu.memory_space<vmem>>) target_semaphore(%902 : memref<!tpu.dma_semaphore, #tpu.memory_space<semaphore_mem>>)
      %c8_i32_539 = arith.constant 8 : i32
      %903 = arith.muli %861, %c8_i32_539 : i32
      %c4_i32_540 = arith.constant 4 : i32
      %904 = arith.addi %903, %c4_i32_540 : i32
      %905 = arith.index_cast %904 : i32 to index
      %906 = memref.load %arg0[%905] : memref<64xi32, #tpu.memory_space<smem>>
      %c4_i32_541 = arith.constant 4 : i32
      %c0_i32_542 = arith.constant 0 : i32
      %907 = tpu.memref_slice %arg1[%906, %c0_i32_542] : memref<50x384xf32, #tpu.memory_space<any>> -> memref<1x384xf32, #tpu.memory_space<any>>
      %908 = tpu.memref_squeeze %907 : memref<1x384xf32, #tpu.memory_space<any>> -> memref<384xf32, #tpu.memory_space<any>>
      %c0_i32_543 = arith.constant 0 : i32
      %909 = tpu.memref_slice %arg7[%862, %c4_i32_541, %c0_i32_543] : memref<2x8x384xf32, #tpu.memory_space<vmem>> -> memref<1x1x384xf32, #tpu.memory_space<vmem>>
      %910 = tpu.memref_squeeze %909 : memref<1x1x384xf32, #tpu.memory_space<vmem>> -> memref<384xf32, #tpu.memory_space<vmem>>
      %911 = tpu.memref_slice %arg8[%862] : memref<2x!tpu.dma_semaphore, #tpu.memory_space<semaphore_mem>> -> memref<1x!tpu.dma_semaphore, #tpu.memory_space<semaphore_mem>>
      %912 = tpu.memref_squeeze %911 : memref<1x!tpu.dma_semaphore, #tpu.memory_space<semaphore_mem>> -> memref<!tpu.dma_semaphore, #tpu.memory_space<semaphore_mem>>
      tpu.enqueue_dma source(%908 : memref<384xf32, #tpu.memory_space<any>>) target(%910 : memref<384xf32, #tpu.memory_space<vmem>>) target_semaphore(%912 : memref<!tpu.dma_semaphore, #tpu.memory_space<semaphore_mem>>)
      %c8_i32_544 = arith.constant 8 : i32
      %913 = arith.muli %861, %c8_i32_544 : i32
      %c5_i32_545 = arith.constant 5 : i32
      %914 = arith.addi %913, %c5_i32_545 : i32
      %915 = arith.index_cast %914 : i32 to index
      %916 = memref.load %arg0[%915] : memref<64xi32, #tpu.memory_space<smem>>
      %c5_i32_546 = arith.constant 5 : i32
      %c0_i32_547 = arith.constant 0 : i32
      %917 = tpu.memref_slice %arg1[%916, %c0_i32_547] : memref<50x384xf32, #tpu.memory_space<any>> -> memref<1x384xf32, #tpu.memory_space<any>>
      %918 = tpu.memref_squeeze %917 : memref<1x384xf32, #tpu.memory_space<any>> -> memref<384xf32, #tpu.memory_space<any>>
      %c0_i32_548 = arith.constant 0 : i32
      %919 = tpu.memref_slice %arg7[%862, %c5_i32_546, %c0_i32_548] : memref<2x8x384xf32, #tpu.memory_space<vmem>> -> memref<1x1x384xf32, #tpu.memory_space<vmem>>
      %920 = tpu.memref_squeeze %919 : memref<1x1x384xf32, #tpu.memory_space<vmem>> -> memref<384xf32, #tpu.memory_space<vmem>>
      %921 = tpu.memref_slice %arg8[%862] : memref<2x!tpu.dma_semaphore, #tpu.memory_space<semaphore_mem>> -> memref<1x!tpu.dma_semaphore, #tpu.memory_space<semaphore_mem>>
      %922 = tpu.memref_squeeze %921 : memref<1x!tpu.dma_semaphore, #tpu.memory_space<semaphore_mem>> -> memref<!tpu.dma_semaphore, #tpu.memory_space<semaphore_mem>>
      tpu.enqueue_dma source(%918 : memref<384xf32, #tpu.memory_space<any>>) target(%920 : memref<384xf32, #tpu.memory_space<vmem>>) target_semaphore(%922 : memref<!tpu.dma_semaphore, #tpu.memory_space<semaphore_mem>>)
      %c8_i32_549 = arith.constant 8 : i32
      %923 = arith.muli %861, %c8_i32_549 : i32
      %c6_i32_550 = arith.constant 6 : i32
      %924 = arith.addi %923, %c6_i32_550 : i32
      %925 = arith.index_cast %924 : i32 to index
      %926 = memref.load %arg0[%925] : memref<64xi32, #tpu.memory_space<smem>>
      %c6_i32_551 = arith.constant 6 : i32
      %c0_i32_552 = arith.constant 0 : i32
      %927 = tpu.memref_slice %arg1[%926, %c0_i32_552] : memref<50x384xf32, #tpu.memory_space<any>> -> memref<1x384xf32, #tpu.memory_space<any>>
      %928 = tpu.memref_squeeze %927 : memref<1x384xf32, #tpu.memory_space<any>> -> memref<384xf32, #tpu.memory_space<any>>
      %c0_i32_553 = arith.constant 0 : i32
      %929 = tpu.memref_slice %arg7[%862, %c6_i32_551, %c0_i32_553] : memref<2x8x384xf32, #tpu.memory_space<vmem>> -> memref<1x1x384xf32, #tpu.memory_space<vmem>>
      %930 = tpu.memref_squeeze %929 : memref<1x1x384xf32, #tpu.memory_space<vmem>> -> memref<384xf32, #tpu.memory_space<vmem>>
      %931 = tpu.memref_slice %arg8[%862] : memref<2x!tpu.dma_semaphore, #tpu.memory_space<semaphore_mem>> -> memref<1x!tpu.dma_semaphore, #tpu.memory_space<semaphore_mem>>
      %932 = tpu.memref_squeeze %931 : memref<1x!tpu.dma_semaphore, #tpu.memory_space<semaphore_mem>> -> memref<!tpu.dma_semaphore, #tpu.memory_space<semaphore_mem>>
      tpu.enqueue_dma source(%928 : memref<384xf32, #tpu.memory_space<any>>) target(%930 : memref<384xf32, #tpu.memory_space<vmem>>) target_semaphore(%932 : memref<!tpu.dma_semaphore, #tpu.memory_space<semaphore_mem>>)
      %c8_i32_554 = arith.constant 8 : i32
      %933 = arith.muli %861, %c8_i32_554 : i32
      %c7_i32_555 = arith.constant 7 : i32
      %934 = arith.addi %933, %c7_i32_555 : i32
      %935 = arith.index_cast %934 : i32 to index
      %936 = memref.load %arg0[%935] : memref<64xi32, #tpu.memory_space<smem>>
      %c7_i32_556 = arith.constant 7 : i32
      %c0_i32_557 = arith.constant 0 : i32
      %937 = tpu.memref_slice %arg1[%936, %c0_i32_557] : memref<50x384xf32, #tpu.memory_space<any>> -> memref<1x384xf32, #tpu.memory_space<any>>
      %938 = tpu.memref_squeeze %937 : memref<1x384xf32, #tpu.memory_space<any>> -> memref<384xf32, #tpu.memory_space<any>>
      %c0_i32_558 = arith.constant 0 : i32
      %939 = tpu.memref_slice %arg7[%862, %c7_i32_556, %c0_i32_558] : memref<2x8x384xf32, #tpu.memory_space<vmem>> -> memref<1x1x384xf32, #tpu.memory_space<vmem>>
      %940 = tpu.memref_squeeze %939 : memref<1x1x384xf32, #tpu.memory_space<vmem>> -> memref<384xf32, #tpu.memory_space<vmem>>
      %941 = tpu.memref_slice %arg8[%862] : memref<2x!tpu.dma_semaphore, #tpu.memory_space<semaphore_mem>> -> memref<1x!tpu.dma_semaphore, #tpu.memory_space<semaphore_mem>>
      %942 = tpu.memref_squeeze %941 : memref<1x!tpu.dma_semaphore, #tpu.memory_space<semaphore_mem>> -> memref<!tpu.dma_semaphore, #tpu.memory_space<semaphore_mem>>
      tpu.enqueue_dma source(%938 : memref<384xf32, #tpu.memory_space<any>>) target(%940 : memref<384xf32, #tpu.memory_space<vmem>>) target_semaphore(%942 : memref<!tpu.dma_semaphore, #tpu.memory_space<semaphore_mem>>)
    } else {
    }
    %822 = arith.index_cast %769 : i32 to index
    %c0_504 = arith.constant 0 : index
    %c0_505 = arith.constant 0 : index
    %823 = vector.load %arg7[%822, %c0_504, %c0_505] : memref<2x8x384xf32, #tpu.memory_space<vmem>>, vector<1x8x384xf32>
    %824 = vector.shape_cast %823 : vector<1x8x384xf32> to vector<8x384xf32>
    %825 = vector.extract_strided_slice %755 {offsets = [0, 0], sizes = [8, 32], strides = [1, 1]} : vector<8x128xf32> to vector<8x32xf32>
    %826 = arith.truncf %825 : vector<8x32xf32> to vector<8x32xbf16>
    %c0_506 = arith.constant 0 : index
    %c0_507 = arith.constant 0 : index
    %827 = vector.load %arg2[%c0_506, %c0_507] : memref<32x384xbf16, #tpu.memory_space<vmem>>, vector<32x384xbf16>
    %cst_508 = arith.constant dense<0.000000e+00> : vector<8x384xf32>
    %828 = tpu.matmul %826, %827, %cst_508 {dimension_numbers = #tpu.dot_dimension_numbers<[1], [0], [0], [1], [0, 0, 1, 1], [], []>} : vector<8x32xbf16>, vector<32x384xbf16>, vector<8x384xf32> -> vector<8x384xf32>
    %829 = vector.extract_strided_slice %824 {offsets = [0, 0], sizes = [8, 128], strides = [1, 1]} : vector<8x384xf32> to vector<8x128xf32>
    %830 = vector.extract_strided_slice %828 {offsets = [0, 0], sizes = [8, 128], strides = [1, 1]} : vector<8x384xf32> to vector<8x128xf32>
    %831 = arith.addf %829, %830 : vector<8x128xf32>
    %832 = arith.negf %831 : vector<8x128xf32>
    %833 = math.exp %832 : vector<8x128xf32>
    %cst_509 = arith.constant 1.000000e+00 : f32
    %834 = vector.broadcast %cst_509 : f32 to vector<8x128xf32>
    %835 = arith.addf %834, %833 : vector<8x128xf32>
    %836 = arith.divf %834, %835 : vector<8x128xf32>
    %837 = vector.extract_strided_slice %824 {offsets = [0, 128], sizes = [8, 128], strides = [1, 1]} : vector<8x384xf32> to vector<8x128xf32>
    %838 = vector.extract_strided_slice %828 {offsets = [0, 128], sizes = [8, 128], strides = [1, 1]} : vector<8x384xf32> to vector<8x128xf32>
    %839 = arith.addf %837, %838 : vector<8x128xf32>
    %840 = arith.negf %839 : vector<8x128xf32>
    %841 = math.exp %840 : vector<8x128xf32>
    %cst_510 = arith.constant 1.000000e+00 : f32
    %842 = vector.broadcast %cst_510 : f32 to vector<8x128xf32>
    %843 = arith.addf %842, %841 : vector<8x128xf32>
    %844 = arith.divf %842, %843 : vector<8x128xf32>
    %845 = vector.extract_strided_slice %824 {offsets = [0, 256], sizes = [8, 128], strides = [1, 1]} : vector<8x384xf32> to vector<8x128xf32>
    %846 = vector.extract_strided_slice %828 {offsets = [0, 256], sizes = [8, 128], strides = [1, 1]} : vector<8x384xf32> to vector<8x128xf32>
    %847 = arith.addf %846, %58 : vector<8x128xf32>
    %848 = arith.mulf %836, %847 : vector<8x128xf32>
    %849 = arith.addf %845, %848 : vector<8x128xf32>
    %850 = math.tanh %849 : vector<8x128xf32>
    %cst_511 = arith.constant 1.000000e+00 : f32
    %851 = vector.broadcast %cst_511 : f32 to vector<8x128xf32>
    %852 = arith.subf %851, %844 : vector<8x128xf32>
    %853 = arith.mulf %852, %850 : vector<8x128xf32>
    %854 = arith.mulf %844, %755 : vector<8x128xf32>
    %855 = arith.addf %853, %854 : vector<8x128xf32>
    %856 = arith.index_cast %c7_i32_454 : i32 to index
    %c0_512 = arith.constant 0 : index
    %c0_513 = arith.constant 0 : index
    %857 = vector.load %arg5[%856, %c0_512, %c0_513] : memref<8x8x128xf32, #tpu.memory_space<vmem>>, vector<1x8x128xf32>
    %858 = vector.shape_cast %857 : vector<1x8x128xf32> to vector<8x128xf32>
    %859 = vector.shape_cast %855 : vector<8x128xf32> to vector<1x8x128xf32>
    tpu.vector_store %arg5[%856, %c0_512, %c0_513], %859 {strides = array<i32>} : memref<8x8x128xf32, #tpu.memory_space<vmem>>, vector<1x8x128xf32>,
    %c8_i32_514 = arith.constant 8 : i32
    %c0_515 = arith.constant 0 : index
    %c0_516 = arith.constant 0 : index
    %860 = vector.load %arg6[%c0_515, %c0_516] : memref<8x128xf32, #tpu.memory_space<vmem>>, vector<8x128xf32>
    tpu.vector_store %arg6[%c0_515, %c0_516], %855 {strides = array<i32>} : memref<8x128xf32, #tpu.memory_space<vmem>>, vector<8x128xf32>,
    return
  }
}

</mosaic_0001>

<llo_original>
// kernel: tpu_custom_call.1
$region0: #{tpu_custom_call.1}
  #allocation0 [shape = 'u32[]', space=smem, size = 0x4, offset = 0x4, fixed_abs, tag = 'smem constant byte address 0x4 - core index']
  #allocation1 [shape = 'u32[144,128]{1,0:T(1,128)}', space=vmem, size = 0x12000, scoped, tag = 'internal scratch']
  #allocation2 [shape = 'f32[2,8,384]{2,1,0:T(8,128)}', space=vmem, size = 0x6000, scoped, tag = 'scratch operand']
  #allocation3 [shape = 's32[2]{0}', space=sflag, size = 0x8, scoped, tag = 'scratch operand']
  #allocation14 [shape = 's32[]', space=sflag, size = 0x4, offset = 0, fixed_abs, tag = 'sflag constant byte address 0x0 - dummy sync flag']
  #allocation15 [shape = 's32[]', space=sflag, size = 0x4, offset = 0, fixed_abs, tag = 'sflag constant byte address 0x0 - dummy sync flag']
  #allocation16 [shape = 's32[]', space=sflag, size = 0x4, offset = 0, fixed_abs, tag = 'sflag constant byte address 0x0 - dummy sync flag']
  #allocation17 [shape = 's32[]', space=sflag, size = 0x4, offset = 0, fixed_abs, tag = 'sflag constant byte address 0x0 - dummy sync flag']
  #allocation18 [shape = 's32[]', space=sflag, size = 0x4, offset = 0, fixed_abs, tag = 'sflag constant byte address 0x0 - dummy sync flag']
  #allocation19 [shape = 's32[]', space=sflag, size = 0x4, offset = 0, fixed_abs, tag = 'sflag constant byte address 0x0 - dummy sync flag']
  #allocation20 [shape = 's32[]', space=sflag, size = 0x4, offset = 0, fixed_abs, tag = 'sflag constant byte address 0x0 - dummy sync flag']
  #allocation21 [shape = 's32[]', space=sflag, size = 0x4, offset = 0, fixed_abs, tag = 'sflag constant byte address 0x0 - dummy sync flag']
  #allocation22 [shape = 's32[]', space=sflag, size = 0x4, offset = 0, fixed_abs, tag = 'sflag constant byte address 0x0 - dummy sync flag']
  #allocation23 [shape = 's32[]', space=sflag, size = 0x4, offset = 0, fixed_abs, tag = 'sflag constant byte address 0x0 - dummy sync flag']
  #allocation24 [shape = 's32[]', space=sflag, size = 0x4, offset = 0, fixed_abs, tag = 'sflag constant byte address 0x0 - dummy sync flag']
  #allocation25 [shape = 's32[]', space=sflag, size = 0x4, offset = 0, fixed_abs, tag = 'sflag constant byte address 0x0 - dummy sync flag']
  #allocation26 [shape = 's32[]', space=sflag, size = 0x4, offset = 0, fixed_abs, tag = 'sflag constant byte address 0x0 - dummy sync flag']
  #allocation27 [shape = 's32[]', space=sflag, size = 0x4, offset = 0, fixed_abs, tag = 'sflag constant byte address 0x0 - dummy sync flag']
  #allocation28 [shape = 's32[]', space=sflag, size = 0x4, offset = 0, fixed_abs, tag = 'sflag constant byte address 0x0 - dummy sync flag']
  #allocation29 [shape = 's32[]', space=sflag, size = 0x4, offset = 0, fixed_abs, tag = 'sflag constant byte address 0x0 - dummy sync flag']
  #allocation30 [shape = 's32[]', space=sflag, size = 0x4, offset = 0, fixed_abs, tag = 'sflag constant byte address 0x0 - dummy sync flag']
  #allocation31 [shape = 's32[]', space=sflag, size = 0x4, offset = 0, fixed_abs, tag = 'sflag constant byte address 0x0 - dummy sync flag']
  #allocation32 [shape = 's32[]', space=sflag, size = 0x4, offset = 0, fixed_abs, tag = 'sflag constant byte address 0x0 - dummy sync flag']
  #allocation33 [shape = 's32[]', space=sflag, size = 0x4, offset = 0, fixed_abs, tag = 'sflag constant byte address 0x0 - dummy sync flag']
  #allocation34 [shape = 's32[]', space=sflag, size = 0x4, offset = 0, fixed_abs, tag = 'sflag constant byte address 0x0 - dummy sync flag']
  #allocation35 [shape = 's32[]', space=sflag, size = 0x4, offset = 0, fixed_abs, tag = 'sflag constant byte address 0x0 - dummy sync flag']
  #allocation36 [shape = 's32[]', space=sflag, size = 0x4, offset = 0, fixed_abs, tag = 'sflag constant byte address 0x0 - dummy sync flag']
  #allocation37 [shape = 's32[]', space=sflag, size = 0x4, offset = 0, fixed_abs, tag = 'sflag constant byte address 0x0 - dummy sync flag']
  #allocation38 [shape = 's32[]', space=sflag, size = 0x4, offset = 0, fixed_abs, tag = 'sflag constant byte address 0x0 - dummy sync flag']
  #allocation39 [shape = 's32[]', space=sflag, size = 0x4, offset = 0, fixed_abs, tag = 'sflag constant byte address 0x0 - dummy sync flag']
  #allocation40 [shape = 's32[]', space=sflag, size = 0x4, offset = 0, fixed_abs, tag = 'sflag constant byte address 0x0 - dummy sync flag']
  #allocation41 [shape = 's32[]', space=sflag, size = 0x4, offset = 0, fixed_abs, tag = 'sflag constant byte address 0x0 - dummy sync flag']
  #allocation42 [shape = 's32[]', space=sflag, size = 0x4, offset = 0, fixed_abs, tag = 'sflag constant byte address 0x0 - dummy sync flag']
  #allocation43 [shape = 's32[]', space=sflag, size = 0x4, offset = 0, fixed_abs, tag = 'sflag constant byte address 0x0 - dummy sync flag']
  #allocation44 [shape = 's32[]', space=sflag, size = 0x4, offset = 0, fixed_abs, tag = 'sflag constant byte address 0x0 - dummy sync flag']
  #allocation45 [shape = 's32[]', space=sflag, size = 0x4, offset = 0, fixed_abs, tag = 'sflag constant byte address 0x0 - dummy sync flag']
  #allocation46 [shape = 's32[]', space=sflag, size = 0x4, offset = 0, fixed_abs, tag = 'sflag constant byte address 0x0 - dummy sync flag']
  #allocation47 [shape = 's32[]', space=sflag, size = 0x4, offset = 0, fixed_abs, tag = 'sflag constant byte address 0x0 - dummy sync flag']
  #allocation48 [shape = 's32[]', space=sflag, size = 0x4, offset = 0, fixed_abs, tag = 'sflag constant byte address 0x0 - dummy sync flag']
  #allocation49 [shape = 's32[]', space=sflag, size = 0x4, offset = 0, fixed_abs, tag = 'sflag constant byte address 0x0 - dummy sync flag']
  #allocation50 [shape = 's32[]', space=sflag, size = 0x4, offset = 0, fixed_abs, tag = 'sflag constant byte address 0x0 - dummy sync flag']
  #allocation51 [shape = 's32[]', space=sflag, size = 0x4, offset = 0, fixed_abs, tag = 'sflag constant byte address 0x0 - dummy sync flag']
  #allocation52 [shape = 's32[]', space=sflag, size = 0x4, offset = 0, fixed_abs, tag = 'sflag constant byte address 0x0 - dummy sync flag']
  #allocation53 [shape = 's32[]', space=sflag, size = 0x4, offset = 0, fixed_abs, tag = 'sflag constant byte address 0x0 - dummy sync flag']
  #allocation54 [shape = 's32[]', space=sflag, size = 0x4, offset = 0, fixed_abs, tag = 'sflag constant byte address 0x0 - dummy sync flag']
  #allocation55 [shape = 's32[]', space=sflag, size = 0x4, offset = 0, fixed_abs, tag = 'sflag constant byte address 0x0 - dummy sync flag']
  #allocation56 [shape = 's32[]', space=sflag, size = 0x4, offset = 0, fixed_abs, tag = 'sflag constant byte address 0x0 - dummy sync flag']
  #allocation57 [shape = 's32[]', space=sflag, size = 0x4, offset = 0, fixed_abs, tag = 'sflag constant byte address 0x0 - dummy sync flag']
  #allocation58 [shape = 's32[]', space=sflag, size = 0x4, offset = 0, fixed_abs, tag = 'sflag constant byte address 0x0 - dummy sync flag']
  #allocation59 [shape = 's32[]', space=sflag, size = 0x4, offset = 0, fixed_abs, tag = 'sflag constant byte address 0x0 - dummy sync flag']
  #allocation60 [shape = 's32[]', space=sflag, size = 0x4, offset = 0, fixed_abs, tag = 'sflag constant byte address 0x0 - dummy sync flag']
  #allocation61 [shape = 's32[]', space=sflag, size = 0x4, offset = 0, fixed_abs, tag = 'sflag constant byte address 0x0 - dummy sync flag']
  #allocation62 [shape = 's32[]', space=sflag, size = 0x4, offset = 0, fixed_abs, tag = 'sflag constant byte address 0x0 - dummy sync flag']
  #allocation63 [shape = 's32[]', space=sflag, size = 0x4, offset = 0, fixed_abs, tag = 'sflag constant byte address 0x0 - dummy sync flag']
  #allocation64 [shape = 's32[]', space=sflag, size = 0x4, offset = 0, fixed_abs, tag = 'sflag constant byte address 0x0 - dummy sync flag']
  #allocation65 [shape = 's32[]', space=sflag, size = 0x4, offset = 0, fixed_abs, tag = 'sflag constant byte address 0x0 - dummy sync flag']
  #allocation66 [shape = 's32[]', space=sflag, size = 0x4, offset = 0, fixed_abs, tag = 'sflag constant byte address 0x0 - dummy sync flag']
  #allocation67 [shape = 's32[]', space=sflag, size = 0x4, offset = 0, fixed_abs, tag = 'sflag constant byte address 0x0 - dummy sync flag']
  #allocation68 [shape = 's32[]', space=sflag, size = 0x4, offset = 0, fixed_abs, tag = 'sflag constant byte address 0x0 - dummy sync flag']
  #allocation69 [shape = 's32[]', space=sflag, size = 0x4, offset = 0, fixed_abs, tag = 'sflag constant byte address 0x0 - dummy sync flag']
  #allocation70 [shape = 's32[]', space=sflag, size = 0x4, offset = 0, fixed_abs, tag = 'sflag constant byte address 0x0 - dummy sync flag']
  #allocation71 [shape = 's32[]', space=sflag, size = 0x4, offset = 0, fixed_abs, tag = 'sflag constant byte address 0x0 - dummy sync flag']
  #allocation72 [shape = 's32[]', space=sflag, size = 0x4, offset = 0, fixed_abs, tag = 'sflag constant byte address 0x0 - dummy sync flag']
  #allocation73 [shape = 's32[]', space=sflag, size = 0x4, offset = 0, fixed_abs, tag = 'sflag constant byte address 0x0 - dummy sync flag']
  #allocation74 [shape = 's32[]', space=sflag, size = 0x4, offset = 0, fixed_abs, tag = 'sflag constant byte address 0x0 - dummy sync flag']
  #allocation75 [shape = 's32[]', space=sflag, size = 0x4, offset = 0, fixed_abs, tag = 'sflag constant byte address 0x0 - dummy sync flag']
  #allocation76 [shape = 's32[]', space=sflag, size = 0x4, offset = 0, fixed_abs, tag = 'sflag constant byte address 0x0 - dummy sync flag']
  #allocation77 [shape = 's32[]', space=sflag, size = 0x4, offset = 0, fixed_abs, tag = 'sflag constant byte address 0x0 - dummy sync flag']
  %s0 = inlined_call_operand.hbm [shape: s32[64], index: 0, kind: input, shape index: {}]
  %s1 = inlined_call_operand.hbm [shape: f32[50,384], index: 1, kind: input, shape index: {}]
  %s2 = inlined_call_operand.hbm [shape: bf16[32,384], index: 2, kind: input, shape index: {}]
  %s3 = inlined_call_operand.vmem [shape: f32[1,128], index: 3, kind: input, shape index: {}]
  %s4 = inlined_call_operand.hbm [shape: f32[8,128], index: 4, kind: input, shape index: {}]
  %s5 = inlined_call_operand.hbm [shape: f32[8,8,128], index: 5, kind: output, shape index: {0}]
  %s6 = inlined_call_operand.hbm [shape: f32[8,128], index: 6, kind: output, shape index: {1}]
  %7 = xla_tuple %s5, %s6
  %s8 = sld [smem:[#allocation0]]
  $region46: #{tpu_custom_call.1} parent=0
    _
  %s10 = ssub.s32 1, %s8
  %s11 = scalar_select 0, %s10, %s8
  $region1: #{tpu_custom_call.1} parent=0
    #allocation4 [shape = 'u8[512]{0}', space=smem, size = 0x200, scoped, tag = 'input window, operand 0, single buffered']
    #allocation5 [shape = 's32[1]{0}', space=sflag, size = 0x4, scoped, tag = 'scoped memory for tpu_custom_call.1']
    #allocation6 [shape = 's32[1]{0}', space=sflag, size = 0x4, scoped, tag = 'scoped memory for tpu_custom_call.1']
    #allocation7 [shape = 's32[1]{0}', space=sflag, size = 0x4, scoped, tag = 'scoped memory for tpu_custom_call.1']
    #allocation8 [shape = 'u8[24576]{0}', space=vmem, size = 0x6000, scoped, tag = 'input window, operand 2, single buffered']
    #allocation9 [shape = 'u8[4096]{0}', space=vmem, size = 0x1000, scoped, tag = 'input window, operand 4, single buffered']
    #allocation10 [shape = 's32[1]{0}', space=sflag, size = 0x4, scoped, tag = 'scoped memory for tpu_custom_call.1']
    #allocation11 [shape = 'u8[32768]{0}', space=vmem, size = 0x8000, scoped, tag = 'output window, operand 0, single buffered']
    #allocation12 [shape = 'u8[4096]{0}', space=vmem, size = 0x1000, scoped, tag = 'output window, operand 1, single buffered']
    #allocation13 [shape = 's32[1]{0}', space=sflag, size = 0x4, scoped, tag = 'scoped memory for tpu_custom_call.1']
    %12 = vsyncpa [#allocation7], 0
    %13 = vsyncpa [#allocation5], 0
    %14 = vsyncpa [#allocation10], 0
    %15 = vsyncpa [#allocation6], 0
    %16 = vsyncpa [#allocation13], 0
    // Predicated region
    $region2: #{tpu_custom_call.1} parent=1 // pred_check
      _
    $region3: #{tpu_custom_call.1} parent=1 // pred_check_branch
      %18 = sbr.rel (0) target = $region5
    $region4: #{tpu_custom_call.1} parent=1 // pred_region
      %s20 = ssub.s32 16, 16
      %21 = vsyncadd [#allocation7], %s20
      %24 = dma.hbm_to_smem %s0, 16, [#allocation4], [#allocation7]
    $region5: #{tpu_custom_call.1} parent=1 // pred_fallthru
      _
    // Predicated region
    $region6: #{tpu_custom_call.1} parent=1 // pred_check
      _
    $region7: #{tpu_custom_call.1} parent=1 // pred_check_branch
      %26 = sbr.rel (0) target = $region9
    $region8: #{tpu_custom_call.1} parent=1 // pred_region
      %s28 = ssub.s32 768, 768
      %29 = vsyncadd [#allocation5], %s28
      %s30 = sshll.u32 [#allocation8], 4
      %s31 = int_to_ptr.vmem [resolvable:$true] %s30
      %36 = dma.hbm_to_vmem [thread:$0]  %s2, 768, %s31, [#allocation5], 192, 192, 12
    $region9: #{tpu_custom_call.1} parent=1 // pred_fallthru
      _
    // Predicated region
    $region10: #{tpu_custom_call.1} parent=1 // pred_check
      _
    $region11: #{tpu_custom_call.1} parent=1 // pred_check_branch
      %38 = sbr.rel (0) target = $region13
    $region12: #{tpu_custom_call.1} parent=1 // pred_region
      _
    $region13: #{tpu_custom_call.1} parent=1 // pred_fallthru
      _
    // Predicated region
    $region14: #{tpu_custom_call.1} parent=1 // pred_check
      _
    $region15: #{tpu_custom_call.1} parent=1 // pred_check_branch
      %40 = sbr.rel (0) target = $region17
    $region16: #{tpu_custom_call.1} parent=1 // pred_region
      %s42 = ssub.s32 128, 128
      %43 = vsyncadd [#allocation10], %s42
      %s45 = sshll.u32 [#allocation9], 4
      %s46 = int_to_ptr.vmem [resolvable:$true] %s45
      %48 = dma.hbm_to_vmem [thread:$0]  %s4, 128, %s46, [#allocation10]
    $region17: #{tpu_custom_call.1} parent=1 // pred_fallthru
      _
    // Predicated region
    $region18: #{tpu_custom_call.1} parent=1 // pred_check
      _
    $region19: #{tpu_custom_call.1} parent=1 // pred_check_branch
      %50 = sbr.rel (0) target = $region21
    $region20: #{tpu_custom_call.1} parent=1 // pred_region
      %51 = dma.done [#allocation7], 16
    $region21: #{tpu_custom_call.1} parent=1 // pred_fallthru
      _
    // Predicated region
    $region22: #{tpu_custom_call.1} parent=1 // pred_check
      _
    $region23: #{tpu_custom_call.1} parent=1 // pred_check_branch
      %53 = sbr.rel (0) target = $region25
    $region24: #{tpu_custom_call.1} parent=1 // pred_region
      %54 = dma.done [#allocation5], 768
    $region25: #{tpu_custom_call.1} parent=1 // pred_fallthru
      _
    // Predicated region
    $region26: #{tpu_custom_call.1} parent=1 // pred_check
      _
    $region27: #{tpu_custom_call.1} parent=1 // pred_check_branch
      %56 = sbr.rel (0) target = $region29
    $region28: #{tpu_custom_call.1} parent=1 // pred_region
      %57 = dma.done [#allocation10], 128
    $region29: #{tpu_custom_call.1} parent=1 // pred_fallthru
      _
    %58 = sfence
    %s60 = sld [smem:[#allocation4]]
    %s61 = sshrl.u32 %s60, 3
    %s62 = sand.u32 %s60, 7
    %s63 = smul.u32 %s61, 24
    %s64 = sadd.s32 %s62, %s63
    %s65 = smul.addr %s64, 16
    %s66 = scalar_lea.hbm %s1, %s65
    %s68 = sshll.u32 [#allocation2], 4
    %s69 = int_to_ptr.vmem [resolvable:$true] %s68
    %71 = dma.hbm_to_vmem [thread:$0]  %s66, 48, %s69, [#allocation3], 128, 128, 1
    %s72 = sld [smem:[#allocation4 + $0x1]]
    %s73 = sshrl.u32 %s72, 3
    %s74 = sand.u32 %s72, 7
    %s75 = smul.u32 %s73, 24
    %s76 = sadd.s32 %s74, %s75
    %s77 = smul.addr %s76, 16
    %s78 = scalar_lea.hbm %s1, %s77
    %s79 = scalar_lea.vmem [#allocation2], 1
    %s81 = sshll.u32 %s79, 4
    %s82 = int_to_ptr.vmem [resolvable:$true] %s81
    %84 = dma.hbm_to_vmem [thread:$0]  %s78, 48, %s82, [#allocation3], 128, 128, 1
    %s85 = sld [smem:[#allocation4 + $0x2]]
    %s86 = sshrl.u32 %s85, 3
    %s87 = sand.u32 %s85, 7
    %s88 = smul.u32 %s86, 24
    %s89 = sadd.s32 %s87, %s88
    %s90 = smul.addr %s89, 16
    %s91 = scalar_lea.hbm %s1, %s90
    %s92 = scalar_lea.vmem [#allocation2], 2
    %s94 = sshll.u32 %s92, 4
    %s95 = int_to_ptr.vmem [resolvable:$true] %s94
    %97 = dma.hbm_to_vmem [thread:$0]  %s91, 48, %s95, [#allocation3], 128, 128, 1
    %s98 = sld [smem:[#allocation4 + $0x3]]
    %s99 = sshrl.u32 %s98, 3
    %s100 = sand.u32 %s98, 7
    %s101 = smul.u32 %s99, 24
    %s102 = sadd.s32 %s100, %s101
    %s103 = smul.addr %s102, 16
    %s104 = scalar_lea.hbm %s1, %s103
    %s105 = scalar_lea.vmem [#allocation2], 3
    %s107 = sshll.u32 %s105, 4
    %s108 = int_to_ptr.vmem [resolvable:$true] %s107
    %110 = dma.hbm_to_vmem [thread:$0]  %s104, 48, %s108, [#allocation3], 128, 128, 1
    %s111 = sld [smem:[#allocation4 + $0x4]]
    %s112 = sshrl.u32 %s111, 3
    %s113 = sand.u32 %s111, 7
    %s114 = smul.u32 %s112, 24
    %s115 = sadd.s32 %s113, %s114
    %s116 = smul.addr %s115, 16
    %s117 = scalar_lea.hbm %s1, %s116
    %s118 = scalar_lea.vmem [#allocation2], 4
    %s120 = sshll.u32 %s118, 4
    %s121 = int_to_ptr.vmem [resolvable:$true] %s120
    %123 = dma.hbm_to_vmem [thread:$0]  %s117, 48, %s121, [#allocation3], 128, 128, 1
    %s124 = sld [smem:[#allocation4 + $0x5]]
    %s125 = sshrl.u32 %s124, 3
    %s126 = sand.u32 %s124, 7
    %s127 = smul.u32 %s125, 24
    %s128 = sadd.s32 %s126, %s127
    %s129 = smul.addr %s128, 16
    %s130 = scalar_lea.hbm %s1, %s129
    %s131 = scalar_lea.vmem [#allocation2], 5
    %s133 = sshll.u32 %s131, 4
    %s134 = int_to_ptr.vmem [resolvable:$true] %s133
    %136 = dma.hbm_to_vmem [thread:$0]  %s130, 48, %s134, [#allocation3], 128, 128, 1
    %s137 = sld [smem:[#allocation4 + $0x6]]
    %s138 = sshrl.u32 %s137, 3
    %s139 = sand.u32 %s137, 7
    %s140 = smul.u32 %s138, 24
    %s141 = sadd.s32 %s139, %s140
    %s142 = smul.addr %s141, 16
    %s143 = scalar_lea.hbm %s1, %s142
    %s144 = scalar_lea.vmem [#allocation2], 6
    %s146 = sshll.u32 %s144, 4
    %s147 = int_to_ptr.vmem [resolvable:$true] %s146
    %149 = dma.hbm_to_vmem [thread:$0]  %s143, 48, %s147, [#allocation3], 128, 128, 1
    %s150 = sld [smem:[#allocation4 + $0x7]]
    %s151 = sshrl.u32 %s150, 3
    %s152 = sand.u32 %s150, 7
    %s153 = smul.u32 %s151, 24
    %s154 = sadd.s32 %s152, %s153
    %s155 = smul.addr %s154, 16
    %s156 = scalar_lea.hbm %s1, %s155
    %s157 = scalar_lea.vmem [#allocation2], 7
    %s159 = sshll.u32 %s157, 4
    %s160 = int_to_ptr.vmem [resolvable:$true] %s159
    %162 = dma.hbm_to_vmem [thread:$0]  %s156, 48, %s160, [#allocation3], 128, 128, 1
    %v163 = vld [vmem:[%s3] sm:$0x1]
    %v165 = vlaneseq
    %v166 = vshrl.u32 %v165, 7
    %v167 = vsub.s32 0, %v166
    %v168 = vrot.slane %v163, %v167
    %v170 = vld [vmem:[#allocation9] sm:$0xff]
    %172 = dma.done [#allocation3], 48
    %174 = dma.done [#allocation3], 48
    %176 = dma.done [#allocation3], 48
    %178 = dma.done [#allocation3], 48
    %180 = dma.done [#allocation3], 48
    %182 = dma.done [#allocation3], 48
    %184 = dma.done [#allocation3], 48
    %186 = dma.done [#allocation3], 48
    %s187 = sld [smem:[#allocation4 + $0x8]]
    %s188 = sshrl.u32 %s187, 3
    %s189 = sand.u32 %s187, 7
    %s190 = smul.u32 %s188, 24
    %s191 = sadd.s32 %s189, %s190
    %s192 = smul.addr %s191, 16
    %s193 = scalar_lea.hbm %s1, %s192
    %s194 = scalar_lea.vmem [#allocation2], 24
    %s195 = scalar_lea.sflag [#allocation3], 1
    %s197 = sshll.u32 %s194, 4
    %s198 = int_to_ptr.vmem [resolvable:$true] %s197
    %200 = dma.hbm_to_vmem [thread:$0]  %s193, 48, %s198, %s195, 128, 128, 1
    %s201 = sld [smem:[#allocation4 + $0x9]]
    %s202 = sshrl.u32 %s201, 3
    %s203 = sand.u32 %s201, 7
    %s204 = smul.u32 %s202, 24
    %s205 = sadd.s32 %s203, %s204
    %s206 = smul.addr %s205, 16
    %s207 = scalar_lea.hbm %s1, %s206
    %s208 = scalar_lea.vmem [#allocation2], 25
    %s210 = sshll.u32 %s208, 4
    %s211 = int_to_ptr.vmem [resolvable:$true] %s210
    %213 = dma.hbm_to_vmem [thread:$0]  %s207, 48, %s211, %s195, 128, 128, 1
    %s214 = sld [smem:[#allocation4 + $0xa]]
    %s215 = sshrl.u32 %s214, 3
    %s216 = sand.u32 %s214, 7
    %s217 = smul.u32 %s215, 24
    %s218 = sadd.s32 %s216, %s217
    %s219 = smul.addr %s218, 16
    %s220 = scalar_lea.hbm %s1, %s219
    %s221 = scalar_lea.vmem [#allocation2], 26
    %s223 = sshll.u32 %s221, 4
    %s224 = int_to_ptr.vmem [resolvable:$true] %s223
    %226 = dma.hbm_to_vmem [thread:$0]  %s220, 48, %s224, %s195, 128, 128, 1
    %s227 = sld [smem:[#allocation4 + $0xb]]
    %s228 = sshrl.u32 %s227, 3
    %s229 = sand.u32 %s227, 7
    %s230 = smul.u32 %s228, 24
    %s231 = sadd.s32 %s229, %s230
    %s232 = smul.addr %s231, 16
    %s233 = scalar_lea.hbm %s1, %s232
    %s234 = scalar_lea.vmem [#allocation2], 27
    %s236 = sshll.u32 %s234, 4
    %s237 = int_to_ptr.vmem [resolvable:$true] %s236
    %239 = dma.hbm_to_vmem [thread:$0]  %s233, 48, %s237, %s195, 128, 128, 1
    %s240 = sld [smem:[#allocation4 + $0xc]]
    %s241 = sshrl.u32 %s240, 3
    %s242 = sand.u32 %s240, 7
    %s243 = smul.u32 %s241, 24
    %s244 = sadd.s32 %s242, %s243
    %s245 = smul.addr %s244, 16
    %s246 = scalar_lea.hbm %s1, %s245
    %s247 = scalar_lea.vmem [#allocation2], 28
    %s249 = sshll.u32 %s247, 4
    %s250 = int_to_ptr.vmem [resolvable:$true] %s249
    %252 = dma.hbm_to_vmem [thread:$0]  %s246, 48, %s250, %s195, 128, 128, 1
    %s253 = sld [smem:[#allocation4 + $0xd]]
    %s254 = sshrl.u32 %s253, 3
    %s255 = sand.u32 %s253, 7
    %s256 = smul.u32 %s254, 24
    %s257 = sadd.s32 %s255, %s256
    %s258 = smul.addr %s257, 16
    %s259 = scalar_lea.hbm %s1, %s258
    %s260 = scalar_lea.vmem [#allocation2], 29
    %s262 = sshll.u32 %s260, 4
    %s263 = int_to_ptr.vmem [resolvable:$true] %s262
    %265 = dma.hbm_to_vmem [thread:$0]  %s259, 48, %s263, %s195, 128, 128, 1
    %s266 = sld [smem:[#allocation4 + $0xe]]
    %s267 = sshrl.u32 %s266, 3
    %s268 = sand.u32 %s266, 7
    %s269 = smul.u32 %s267, 24
    %s270 = sadd.s32 %s268, %s269
    %s271 = smul.addr %s270, 16
    %s272 = scalar_lea.hbm %s1, %s271
    %s273 = scalar_lea.vmem [#allocation2], 30
    %s275 = sshll.u32 %s273, 4
    %s276 = int_to_ptr.vmem [resolvable:$true] %s275
    %278 = dma.hbm_to_vmem [thread:$0]  %s272, 48, %s276, %s195, 128, 128, 1
    %s279 = sld [smem:[#allocation4 + $0xf]]
    %s280 = sshrl.u32 %s279, 3
    %s281 = sand.u32 %s279, 7
    %s282 = smul.u32 %s280, 24
    %s283 = sadd.s32 %s281, %s282
    %s284 = smul.addr %s283, 16
    %s285 = scalar_lea.hbm %s1, %s284
    %s286 = scalar_lea.vmem [#allocation2], 31
    %s288 = sshll.u32 %s286, 4
    %s289 = int_to_ptr.vmem [resolvable:$true] %s288
    %291 = dma.hbm_to_vmem [thread:$0]  %s285, 48, %s289, %s195, 128, 128, 1
    %v292 = vld [vmem:[#allocation2] sm:$0xff]
    %v293 = vld [vmem:[#allocation2 + $0x8] sm:$0xff]
    %v294 = vld [vmem:[#allocation2 + $0x10] sm:$0xff]
    %v295 = vpack.c.bf16 %v170, %v170
    %v296 = vld [vmem:[#allocation8] sm:$0xff]
    %v297 = vld [vmem:[#allocation8 + $0x8] sm:$0xf]
    %v298 = vld [vmem:[#allocation8 + $0xc] sm:$0xff]
    %v299 = vld [vmem:[#allocation8 + $0x14] sm:$0xf]
    %v300 = vld [vmem:[#allocation8 + $0x18] sm:$0xff]
    %v301 = vld [vmem:[#allocation8 + $0x20] sm:$0xf]
    %v302 = vld [vmem:[#allocation8 + $0x24] sm:$0xff]
    %v303 = vld [vmem:[#allocation8 + $0x2c] sm:$0xf]
    %v312 = vunpack.c.l.b16 %v296
    %v313 = vunpack.c.h.b16 %v296
    %v314 = vunpack.c.l.b16 %v297
    %v315 = vunpack.c.l.b16 %v298
    %v316 = vunpack.c.h.b16 %v298
    %v317 = vunpack.c.l.b16 %v299
    %v318 = vunpack.c.l.b16 %v300
    %v319 = vunpack.c.h.b16 %v300
    %v320 = vunpack.c.l.b16 %v301
    %v321 = vunpack.c.l.b16 %v302
    %v322 = vunpack.c.h.b16 %v302
    %v323 = vunpack.c.l.b16 %v303
    %v324 = vpack.c.b16 %v315, %v312
    %v325 = vpack.c.b16 %v316, %v313
    %v326 = vpack.c.b16 %v317, %v314
    %v327 = vpack.c.b16 %v321, %v318
    %v328 = vpack.c.b16 %v322, %v319
    %v329 = vpack.c.b16 %v323, %v320
    %vm336 = vcmask 261120
    %v338 = vsel %vm336, %v295, 0
    %340 = vmatprep.subr.bf16.mxu0 0
    %341 = vmatpush1.bf16.msra.mxu0 0
    %342 = vmatprep.subr.bf16.mxu0 0
    %343 = vmatpush1.bf16.msra.mxu0 0
    %344 = vmatprep.subr.bf16.mxu0 0
    %345 = vmatpush1.bf16.msra.mxu0 0
    %346 = vmatprep.subr.bf16.mxu0 0
    %347 = vmatpush1.bf16.msra.mxu0 0
    %348 = vmatprep.subr.bf16.mxu0 0
    %349 = vmatpush1.bf16.msra.mxu0 0
    %350 = vmatprep.subr.bf16.mxu0 0
    %351 = vmatpush1.bf16.msra.mxu0 0
    %352 = vmatprep.subr.bf16.mxu0 %v328
    %353 = vmatpush1.bf16.msra.mxu0 %v327
    %354 = vmatprep.subr.bf16.mxu0 %v325
    %355 = vmatpush1.bf16.msra.mxu0 %v324
    %356 = vmatprep.subr.bf16.mxu0 0
    %357 = vmatpush2.bf16.msra.mxu0 0
    %358 = vmatprep.subr.bf16.mxu0 0
    %359 = vmatpush2.bf16.msra.mxu0 0
    %360 = vmatprep.subr.bf16.mxu0 0
    %361 = vmatpush2.bf16.msra.mxu0 0
    %362 = vmatprep.subr.bf16.mxu0 0
    %363 = vmatpush2.bf16.msra.mxu0 0
    %364 = vmatprep.subr.bf16.mxu0 0
    %365 = vmatpush2.bf16.msra.mxu0 0
    %366 = vmatprep.subr.bf16.mxu0 0
    %367 = vmatpush2.bf16.msra.mxu0 0
    %368 = vmatprep.subr.bf16.mxu0 0
    %369 = vmatpush2.bf16.msra.mxu0 0
    %370 = vmatprep.subr.bf16.mxu0 0
    %371 = vmatpush2.bf16.msra.mxu0 0
    %372 = vmatprep.mubr.bf16.mxu0 0
    %373 = vmatmul.mubr.bf16.gmra.mxu0 %v338
    %v374 = vpop.f32.mrf.mxu0
    %v375 = vadd.f32 0.0, %v374
    %v376 = vpop.f32.mrf.mxu0
    %v377 = vadd.f32 0.0, %v376
    %v378 = vpop.f32.mrf.mxu0
    %v379 = vpop.f32.mrf.mxu0
    %380 = vdwg.mxu0
    %381 = vmatprep.subr.bf16.mxu0 0
    %382 = vmatpush1.bf16.msra.mxu0 0
    %383 = vmatprep.subr.bf16.mxu0 0
    %384 = vmatpush1.bf16.msra.mxu0 0
    %385 = vmatprep.subr.bf16.mxu0 0
    %386 = vmatpush1.bf16.msra.mxu0 0
    %387 = vmatprep.subr.bf16.mxu0 0
    %388 = vmatpush1.bf16.msra.mxu0 0
    %389 = vmatprep.subr.bf16.mxu0 0
    %390 = vmatpush1.bf16.msra.mxu0 0
    %391 = vmatprep.subr.bf16.mxu0 0
    %392 = vmatpush1.bf16.msra.mxu0 0
    %393 = vmatprep.subr.bf16.mxu0 0
    %394 = vmatpush1.bf16.msra.mxu0 %v329
    %395 = vmatprep.subr.bf16.mxu0 0
    %396 = vmatpush1.bf16.msra.mxu0 %v326
    %397 = vmatprep.subr.bf16.mxu0 0
    %398 = vmatpush2.bf16.msra.mxu0 0
    %399 = vmatprep.subr.bf16.mxu0 0
    %400 = vmatpush2.bf16.msra.mxu0 0
    %401 = vmatprep.subr.bf16.mxu0 0
    %402 = vmatpush2.bf16.msra.mxu0 0
    %403 = vmatprep.subr.bf16.mxu0 0
    %404 = vmatpush2.bf16.msra.mxu0 0
    %405 = vmatprep.subr.bf16.mxu0 0
    %406 = vmatpush2.bf16.msra.mxu0 0
    %407 = vmatprep.subr.bf16.mxu0 0
    %408 = vmatpush2.bf16.msra.mxu0 0
    %409 = vmatprep.subr.bf16.mxu0 0
    %410 = vmatpush2.bf16.msra.mxu0 0
    %411 = vmatprep.subr.bf16.mxu0 0
    %412 = vmatpush2.bf16.msra.mxu0 0
    %413 = vmatprep.mubr.bf16.mxu0 0
    %414 = vmatmul.mubr.bf16.gmra.mxu0 %v338
    %v415 = vpop.f32.mrf.mxu0
    %v416 = vadd.f32 0.0, %v415
    %v417 = vpop.f32.mrf.mxu0
    %v418 = vpop.f32.mrf.mxu0
    %v419 = vpop.f32.mrf.mxu0
    %420 = vdwg.mxu0
    %v421 = vadd.f32 %v292, %v375
    %v422 = vxor.u32 %v421, 2147483648
    %v423 = vmul.f32 %v422, 1.442695
    %v424 = vpow.pop %v423
    %v425 = vadd.f32 %v424, 1.0
    %v426 = vrcp.pop %v425
    %v427 = vmul.f32 1.0, %v426
    %v428 = vadd.f32 %v293, %v377
    %v429 = vxor.u32 %v428, 2147483648
    %v430 = vmul.f32 %v429, 1.442695
    %v431 = vpow.pop %v430
    %v432 = vadd.f32 %v431, 1.0
    %v433 = vrcp.pop %v432
    %v434 = vmul.f32 1.0, %v433
    %v435 = vadd.f32 %v416, %v168
    %v436 = vmul.f32 %v427, %v435
    %v437 = vadd.f32 %v294, %v436
    %v438 = vtanh.pop %v437
    %v439 = vsub.f32 1.0, %v434
    %v440 = vmul.f32 %v439, %v438
    %v441 = vmul.f32 %v434, %v170
    %v442 = vadd.f32 %v440, %v441
    %443 = vst [vmem:[#allocation11] sm:$0xff] %v442
    %445 = dma.done %s195, 48
    %447 = dma.done %s195, 48
    %449 = dma.done %s195, 48
    %451 = dma.done %s195, 48
    %453 = dma.done %s195, 48
    %455 = dma.done %s195, 48
    %457 = dma.done %s195, 48
    %459 = dma.done %s195, 48
    %s460 = sld [smem:[#allocation4 + $0x10]]
    %s461 = sshrl.u32 %s460, 3
    %s462 = sand.u32 %s460, 7
    %s463 = smul.u32 %s461, 24
    %s464 = sadd.s32 %s462, %s463
    %s465 = smul.addr %s464, 16
    %s466 = scalar_lea.hbm %s1, %s465
    %s468 = sshll.u32 [#allocation2], 4
    %s469 = int_to_ptr.vmem [resolvable:$true] %s468
    %471 = dma.hbm_to_vmem [thread:$0]  %s466, 48, %s469, [#allocation3], 128, 128, 1
    %s472 = sld [smem:[#allocation4 + $0x11]]
    %s473 = sshrl.u32 %s472, 3
    %s474 = sand.u32 %s472, 7
    %s475 = smul.u32 %s473, 24
    %s476 = sadd.s32 %s474, %s475
    %s477 = smul.addr %s476, 16
    %s478 = scalar_lea.hbm %s1, %s477
    %s480 = sshll.u32 %s79, 4
    %s481 = int_to_ptr.vmem [resolvable:$true] %s480
    %483 = dma.hbm_to_vmem [thread:$0]  %s478, 48, %s481, [#allocation3], 128, 128, 1
    %s484 = sld [smem:[#allocation4 + $0x12]]
    %s485 = sshrl.u32 %s484, 3
    %s486 = sand.u32 %s484, 7
    %s487 = smul.u32 %s485, 24
    %s488 = sadd.s32 %s486, %s487
    %s489 = smul.addr %s488, 16
    %s490 = scalar_lea.hbm %s1, %s489
    %s492 = sshll.u32 %s92, 4
    %s493 = int_to_ptr.vmem [resolvable:$true] %s492
    %495 = dma.hbm_to_vmem [thread:$0]  %s490, 48, %s493, [#allocation3], 128, 128, 1
    %s496 = sld [smem:[#allocation4 + $0x13]]
    %s497 = sshrl.u32 %s496, 3
    %s498 = sand.u32 %s496, 7
    %s499 = smul.u32 %s497, 24
    %s500 = sadd.s32 %s498, %s499
    %s501 = smul.addr %s500, 16
    %s502 = scalar_lea.hbm %s1, %s501
    %s504 = sshll.u32 %s105, 4
    %s505 = int_to_ptr.vmem [resolvable:$true] %s504
    %507 = dma.hbm_to_vmem [thread:$0]  %s502, 48, %s505, [#allocation3], 128, 128, 1
    %s508 = sld [smem:[#allocation4 + $0x14]]
    %s509 = sshrl.u32 %s508, 3
    %s510 = sand.u32 %s508, 7
    %s511 = smul.u32 %s509, 24
    %s512 = sadd.s32 %s510, %s511
    %s513 = smul.addr %s512, 16
    %s514 = scalar_lea.hbm %s1, %s513
    %s516 = sshll.u32 %s118, 4
    %s517 = int_to_ptr.vmem [resolvable:$true] %s516
    %519 = dma.hbm_to_vmem [thread:$0]  %s514, 48, %s517, [#allocation3], 128, 128, 1
    %s520 = sld [smem:[#allocation4 + $0x15]]
    %s521 = sshrl.u32 %s520, 3
    %s522 = sand.u32 %s520, 7
    %s523 = smul.u32 %s521, 24
    %s524 = sadd.s32 %s522, %s523
    %s525 = smul.addr %s524, 16
    %s526 = scalar_lea.hbm %s1, %s525
    %s528 = sshll.u32 %s131, 4
    %s529 = int_to_ptr.vmem [resolvable:$true] %s528
    %531 = dma.hbm_to_vmem [thread:$0]  %s526, 48, %s529, [#allocation3], 128, 128, 1
    %s532 = sld [smem:[#allocation4 + $0x16]]
    %s533 = sshrl.u32 %s532, 3
    %s534 = sand.u32 %s532, 7
    %s535 = smul.u32 %s533, 24
    %s536 = sadd.s32 %s534, %s535
    %s537 = smul.addr %s536, 16
    %s538 = scalar_lea.hbm %s1, %s537
    %s540 = sshll.u32 %s144, 4
    %s541 = int_to_ptr.vmem [resolvable:$true] %s540
    %543 = dma.hbm_to_vmem [thread:$0]  %s538, 48, %s541, [#allocation3], 128, 128, 1
    %s544 = sld [smem:[#allocation4 + $0x17]]
    %s545 = sshrl.u32 %s544, 3
    %s546 = sand.u32 %s544, 7
    %s547 = smul.u32 %s545, 24
    %s548 = sadd.s32 %s546, %s547
    %s549 = smul.addr %s548, 16
    %s550 = scalar_lea.hbm %s1, %s549
    %s552 = sshll.u32 %s157, 4
    %s553 = int_to_ptr.vmem [resolvable:$true] %s552
    %555 = dma.hbm_to_vmem [thread:$0]  %s550, 48, %s553, [#allocation3], 128, 128, 1
    %s556 = scalar_lea.vmem [#allocation2], 24
    %v557 = vld [vmem:[%s556] sm:$0xff]
    %v558 = vld [vmem:[%s556 + $0x8] sm:$0xff]
    %v559 = vld [vmem:[%s556 + $0x10] sm:$0xff]
    %v560 = vpack.c.bf16 %v442, %v442
    %v561 = vld [vmem:[#allocation8] sm:$0xff]
    %v562 = vld [vmem:[#allocation8 + $0x8] sm:$0xf]
    %v563 = vld [vmem:[#allocation8 + $0xc] sm:$0xff]
    %v564 = vld [vmem:[#allocation8 + $0x14] sm:$0xf]
    %v565 = vld [vmem:[#allocation8 + $0x18] sm:$0xff]
    %v566 = vld [vmem:[#allocation8 + $0x20] sm:$0xf]
    %v567 = vld [vmem:[#allocation8 + $0x24] sm:$0xff]
    %v568 = vld [vmem:[#allocation8 + $0x2c] sm:$0xf]
    %v577 = vunpack.c.l.b16 %v561
    %v578 = vunpack.c.h.b16 %v561
    %v579 = vunpack.c.l.b16 %v562
    %v580 = vunpack.c.l.b16 %v563
    %v581 = vunpack.c.h.b16 %v563
    %v582 = vunpack.c.l.b16 %v564
    %v583 = vunpack.c.l.b16 %v565
    %v584 = vunpack.c.h.b16 %v565
    %v585 = vunpack.c.l.b16 %v566
    %v586 = vunpack.c.l.b16 %v567
    %v587 = vunpack.c.h.b16 %v567
    %v588 = vunpack.c.l.b16 %v568
    %v589 = vpack.c.b16 %v580, %v577
    %v590 = vpack.c.b16 %v581, %v578
    %v591 = vpack.c.b16 %v582, %v579
    %v592 = vpack.c.b16 %v586, %v583
    %v593 = vpack.c.b16 %v587, %v584
    %v594 = vpack.c.b16 %v588, %v585
    %v602 = vsel %vm336, %v560, 0
    %604 = vmatprep.subr.bf16.mxu0 0
    %605 = vmatpush1.bf16.msra.mxu0 0
    %606 = vmatprep.subr.bf16.mxu0 0
    %607 = vmatpush1.bf16.msra.mxu0 0
    %608 = vmatprep.subr.bf16.mxu0 0
    %609 = vmatpush1.bf16.msra.mxu0 0
    %610 = vmatprep.subr.bf16.mxu0 0
    %611 = vmatpush1.bf16.msra.mxu0 0
    %612 = vmatprep.subr.bf16.mxu0 0
    %613 = vmatpush1.bf16.msra.mxu0 0
    %614 = vmatprep.subr.bf16.mxu0 0
    %615 = vmatpush1.bf16.msra.mxu0 0
    %616 = vmatprep.subr.bf16.mxu0 %v593
    %617 = vmatpush1.bf16.msra.mxu0 %v592
    %618 = vmatprep.subr.bf16.mxu0 %v590
    %619 = vmatpush1.bf16.msra.mxu0 %v589
    %620 = vmatprep.subr.bf16.mxu0 0
    %621 = vmatpush2.bf16.msra.mxu0 0
    %622 = vmatprep.subr.bf16.mxu0 0
    %623 = vmatpush2.bf16.msra.mxu0 0
    %624 = vmatprep.subr.bf16.mxu0 0
    %625 = vmatpush2.bf16.msra.mxu0 0
    %626 = vmatprep.subr.bf16.mxu0 0
    %627 = vmatpush2.bf16.msra.mxu0 0
    %628 = vmatprep.subr.bf16.mxu0 0
    %629 = vmatpush2.bf16.msra.mxu0 0
    %630 = vmatprep.subr.bf16.mxu0 0
    %631 = vmatpush2.bf16.msra.mxu0 0
    %632 = vmatprep.subr.bf16.mxu0 0
    %633 = vmatpush2.bf16.msra.mxu0 0
    %634 = vmatprep.subr.bf16.mxu0 0
    %635 = vmatpush2.bf16.msra.mxu0 0
    %636 = vmatprep.mubr.bf16.mxu0 0
    %637 = vmatmul.mubr.bf16.gmra.mxu0 %v602
    %v638 = vpop.f32.mrf.mxu0
    %v639 = vadd.f32 0.0, %v638
    %v640 = vpop.f32.mrf.mxu0
    %v641 = vadd.f32 0.0, %v640
    %v642 = vpop.f32.mrf.mxu0
    %v643 = vpop.f32.mrf.mxu0
    %644 = vdwg.mxu0
    %645 = vmatprep.subr.bf16.mxu0 0
    %646 = vmatpush1.bf16.msra.mxu0 0
    %647 = vmatprep.subr.bf16.mxu0 0
    %648 = vmatpush1.bf16.msra.mxu0 0
    %649 = vmatprep.subr.bf16.mxu0 0
    %650 = vmatpush1.bf16.msra.mxu0 0
    %651 = vmatprep.subr.bf16.mxu0 0
    %652 = vmatpush1.bf16.msra.mxu0 0
    %653 = vmatprep.subr.bf16.mxu0 0
    %654 = vmatpush1.bf16.msra.mxu0 0
    %655 = vmatprep.subr.bf16.mxu0 0
    %656 = vmatpush1.bf16.msra.mxu0 0
    %657 = vmatprep.subr.bf16.mxu0 0
    %658 = vmatpush1.bf16.msra.mxu0 %v594
    %659 = vmatprep.subr.bf16.mxu0 0
    %660 = vmatpush1.bf16.msra.mxu0 %v591
    %661 = vmatprep.subr.bf16.mxu0 0
    %662 = vmatpush2.bf16.msra.mxu0 0
    %663 = vmatprep.subr.bf16.mxu0 0
    %664 = vmatpush2.bf16.msra.mxu0 0
    %665 = vmatprep.subr.bf16.mxu0 0
    %666 = vmatpush2.bf16.msra.mxu0 0
    %667 = vmatprep.subr.bf16.mxu0 0
    %668 = vmatpush2.bf16.msra.mxu0 0
    %669 = vmatprep.subr.bf16.mxu0 0
    %670 = vmatpush2.bf16.msra.mxu0 0
    %671 = vmatprep.subr.bf16.mxu0 0
    %672 = vmatpush2.bf16.msra.mxu0 0
    %673 = vmatprep.subr.bf16.mxu0 0
    %674 = vmatpush2.bf16.msra.mxu0 0
    %675 = vmatprep.subr.bf16.mxu0 0
    %676 = vmatpush2.bf16.msra.mxu0 0
    %677 = vmatprep.mubr.bf16.mxu0 0
    %678 = vmatmul.mubr.bf16.gmra.mxu0 %v602
    %v679 = vpop.f32.mrf.mxu0
    %v680 = vadd.f32 0.0, %v679
    %v681 = vpop.f32.mrf.mxu0
    %v682 = vpop.f32.mrf.mxu0
    %v683 = vpop.f32.mrf.mxu0
    %684 = vdwg.mxu0
    %v685 = vadd.f32 %v557, %v639
    %v686 = vxor.u32 %v685, 2147483648
    %v687 = vmul.f32 %v686, 1.442695
    %v688 = vpow.pop %v687
    %v689 = vadd.f32 %v688, 1.0
    %v690 = vrcp.pop %v689
    %v691 = vmul.f32 1.0, %v690
    %v692 = vadd.f32 %v558, %v641
    %v693 = vxor.u32 %v692, 2147483648
    %v694 = vmul.f32 %v693, 1.442695
    %v695 = vpow.pop %v694
    %v696 = vadd.f32 %v695, 1.0
    %v697 = vrcp.pop %v696
    %v698 = vmul.f32 1.0, %v697
    %v699 = vadd.f32 %v680, %v168
    %v700 = vmul.f32 %v691, %v699
    %v701 = vadd.f32 %v559, %v700
    %v702 = vtanh.pop %v701
    %v703 = vsub.f32 1.0, %v698
    %v704 = vmul.f32 %v703, %v702
    %v705 = vmul.f32 %v698, %v442
    %v706 = vadd.f32 %v704, %v705
    %s707 = scalar_lea.vmem [#allocation11], 8
    %708 = vst [vmem:[%s707] sm:$0xff] %v706
    %710 = dma.done [#allocation3], 48
    %712 = dma.done [#allocation3], 48
    %714 = dma.done [#allocation3], 48
    %716 = dma.done [#allocation3], 48
    %718 = dma.done [#allocation3], 48
    %720 = dma.done [#allocation3], 48
    %722 = dma.done [#allocation3], 48
    %724 = dma.done [#allocation3], 48
    %s725 = sld [smem:[#allocation4 + $0x18]]
    %s726 = sshrl.u32 %s725, 3
    %s727 = sand.u32 %s725, 7
    %s728 = smul.u32 %s726, 24
    %s729 = sadd.s32 %s727, %s728
    %s730 = smul.addr %s729, 16
    %s731 = scalar_lea.hbm %s1, %s730
    %s733 = sshll.u32 %s194, 4
    %s734 = int_to_ptr.vmem [resolvable:$true] %s733
    %736 = dma.hbm_to_vmem [thread:$0]  %s731, 48, %s734, %s195, 128, 128, 1
    %s737 = sld [smem:[#allocation4 + $0x19]]
    %s738 = sshrl.u32 %s737, 3
    %s739 = sand.u32 %s737, 7
    %s740 = smul.u32 %s738, 24
    %s741 = sadd.s32 %s739, %s740
    %s742 = smul.addr %s741, 16
    %s743 = scalar_lea.hbm %s1, %s742
    %s745 = sshll.u32 %s208, 4
    %s746 = int_to_ptr.vmem [resolvable:$true] %s745
    %748 = dma.hbm_to_vmem [thread:$0]  %s743, 48, %s746, %s195, 128, 128, 1
    %s749 = sld [smem:[#allocation4 + $0x1a]]
    %s750 = sshrl.u32 %s749, 3
    %s751 = sand.u32 %s749, 7
    %s752 = smul.u32 %s750, 24
    %s753 = sadd.s32 %s751, %s752
    %s754 = smul.addr %s753, 16
    %s755 = scalar_lea.hbm %s1, %s754
    %s757 = sshll.u32 %s221, 4
    %s758 = int_to_ptr.vmem [resolvable:$true] %s757
    %760 = dma.hbm_to_vmem [thread:$0]  %s755, 48, %s758, %s195, 128, 128, 1
    %s761 = sld [smem:[#allocation4 + $0x1b]]
    %s762 = sshrl.u32 %s761, 3
    %s763 = sand.u32 %s761, 7
    %s764 = smul.u32 %s762, 24
    %s765 = sadd.s32 %s763, %s764
    %s766 = smul.addr %s765, 16
    %s767 = scalar_lea.hbm %s1, %s766
    %s769 = sshll.u32 %s234, 4
    %s770 = int_to_ptr.vmem [resolvable:$true] %s769
    %772 = dma.hbm_to_vmem [thread:$0]  %s767, 48, %s770, %s195, 128, 128, 1
    %s773 = sld [smem:[#allocation4 + $0x1c]]
    %s774 = sshrl.u32 %s773, 3
    %s775 = sand.u32 %s773, 7
    %s776 = smul.u32 %s774, 24
    %s777 = sadd.s32 %s775, %s776
    %s778 = smul.addr %s777, 16
    %s779 = scalar_lea.hbm %s1, %s778
    %s781 = sshll.u32 %s247, 4
    %s782 = int_to_ptr.vmem [resolvable:$true] %s781
    %784 = dma.hbm_to_vmem [thread:$0]  %s779, 48, %s782, %s195, 128, 128, 1
    %s785 = sld [smem:[#allocation4 + $0x1d]]
    %s786 = sshrl.u32 %s785, 3
    %s787 = sand.u32 %s785, 7
    %s788 = smul.u32 %s786, 24
    %s789 = sadd.s32 %s787, %s788
    %s790 = smul.addr %s789, 16
    %s791 = scalar_lea.hbm %s1, %s790
    %s793 = sshll.u32 %s260, 4
    %s794 = int_to_ptr.vmem [resolvable:$true] %s793
    %796 = dma.hbm_to_vmem [thread:$0]  %s791, 48, %s794, %s195, 128, 128, 1
    %s797 = sld [smem:[#allocation4 + $0x1e]]
    %s798 = sshrl.u32 %s797, 3
    %s799 = sand.u32 %s797, 7
    %s800 = smul.u32 %s798, 24
    %s801 = sadd.s32 %s799, %s800
    %s802 = smul.addr %s801, 16
    %s803 = scalar_lea.hbm %s1, %s802
    %s805 = sshll.u32 %s273, 4
    %s806 = int_to_ptr.vmem [resolvable:$true] %s805
    %808 = dma.hbm_to_vmem [thread:$0]  %s803, 48, %s806, %s195, 128, 128, 1
    %s809 = sld [smem:[#allocation4 + $0x1f]]
    %s810 = sshrl.u32 %s809, 3
    %s811 = sand.u32 %s809, 7
    %s812 = smul.u32 %s810, 24
    %s813 = sadd.s32 %s811, %s812
    %s814 = smul.addr %s813, 16
    %s815 = scalar_lea.hbm %s1, %s814
    %s817 = sshll.u32 %s286, 4
    %s818 = int_to_ptr.vmem [resolvable:$true] %s817
    %820 = dma.hbm_to_vmem [thread:$0]  %s815, 48, %s818, %s195, 128, 128, 1
    %v821 = vld [vmem:[#allocation2] sm:$0xff]
    %v822 = vld [vmem:[#allocation2 + $0x8] sm:$0xff]
    %v823 = vld [vmem:[#allocation2 + $0x10] sm:$0xff]
    %v824 = vpack.c.bf16 %v706, %v706
    %v825 = vld [vmem:[#allocation8] sm:$0xff]
    %v826 = vld [vmem:[#allocation8 + $0x8] sm:$0xf]
    %v827 = vld [vmem:[#allocation8 + $0xc] sm:$0xff]
    %v828 = vld [vmem:[#allocation8 + $0x14] sm:$0xf]
    %v829 = vld [vmem:[#allocation8 + $0x18] sm:$0xff]
    %v830 = vld [vmem:[#allocation8 + $0x20] sm:$0xf]
    %v831 = vld [vmem:[#allocation8 + $0x24] sm:$0xff]
    %v832 = vld [vmem:[#allocation8 + $0x2c] sm:$0xf]
    %v841 = vunpack.c.l.b16 %v825
    %v842 = vunpack.c.h.b16 %v825
    %v843 = vunpack.c.l.b16 %v826
    %v844 = vunpack.c.l.b16 %v827
    %v845 = vunpack.c.h.b16 %v827
    %v846 = vunpack.c.l.b16 %v828
    %v847 = vunpack.c.l.b16 %v829
    %v848 = vunpack.c.h.b16 %v829
    %v849 = vunpack.c.l.b16 %v830
    %v850 = vunpack.c.l.b16 %v831
    %v851 = vunpack.c.h.b16 %v831
    %v852 = vunpack.c.l.b16 %v832
    %v853 = vpack.c.b16 %v844, %v841
    %v854 = vpack.c.b16 %v845, %v842
    %v855 = vpack.c.b16 %v846, %v843
    %v856 = vpack.c.b16 %v850, %v847
    %v857 = vpack.c.b16 %v851, %v848
    %v858 = vpack.c.b16 %v852, %v849
    %v866 = vsel %vm336, %v824, 0
    %868 = vmatprep.subr.bf16.mxu0 0
    %869 = vmatpush1.bf16.msra.mxu0 0
    %870 = vmatprep.subr.bf16.mxu0 0
    %871 = vmatpush1.bf16.msra.mxu0 0
    %872 = vmatprep.subr.bf16.mxu0 0
    %873 = vmatpush1.bf16.msra.mxu0 0
    %874 = vmatprep.subr.bf16.mxu0 0
    %875 = vmatpush1.bf16.msra.mxu0 0
    %876 = vmatprep.subr.bf16.mxu0 0
    %877 = vmatpush1.bf16.msra.mxu0 0
    %878 = vmatprep.subr.bf16.mxu0 0
    %879 = vmatpush1.bf16.msra.mxu0 0
    %880 = vmatprep.subr.bf16.mxu0 %v857
    %881 = vmatpush1.bf16.msra.mxu0 %v856
    %882 = vmatprep.subr.bf16.mxu0 %v854
    %883 = vmatpush1.bf16.msra.mxu0 %v853
    %884 = vmatprep.subr.bf16.mxu0 0
    %885 = vmatpush2.bf16.msra.mxu0 0
    %886 = vmatprep.subr.bf16.mxu0 0
    %887 = vmatpush2.bf16.msra.mxu0 0
    %888 = vmatprep.subr.bf16.mxu0 0
    %889 = vmatpush2.bf16.msra.mxu0 0
    %890 = vmatprep.subr.bf16.mxu0 0
    %891 = vmatpush2.bf16.msra.mxu0 0
    %892 = vmatprep.subr.bf16.mxu0 0
    %893 = vmatpush2.bf16.msra.mxu0 0
    %894 = vmatprep.subr.bf16.mxu0 0
    %895 = vmatpush2.bf16.msra.mxu0 0
    %896 = vmatprep.subr.bf16.mxu0 0
    %897 = vmatpush2.bf16.msra.mxu0 0
    %898 = vmatprep.subr.bf16.mxu0 0
    %899 = vmatpush2.bf16.msra.mxu0 0
    %900 = vmatprep.mubr.bf16.mxu0 0
    %901 = vmatmul.mubr.bf16.gmra.mxu0 %v866
    %v902 = vpop.f32.mrf.mxu0
    %v903 = vadd.f32 0.0, %v902
    %v904 = vpop.f32.mrf.mxu0
    %v905 = vadd.f32 0.0, %v904
    %v906 = vpop.f32.mrf.mxu0
    %v907 = vpop.f32.mrf.mxu0
    %908 = vdwg.mxu0
    %909 = vmatprep.subr.bf16.mxu0 0
    %910 = vmatpush1.bf16.msra.mxu0 0
    %911 = vmatprep.subr.bf16.mxu0 0
    %912 = vmatpush1.bf16.msra.mxu0 0
    %913 = vmatprep.subr.bf16.mxu0 0
    %914 = vmatpush1.bf16.msra.mxu0 0
    %915 = vmatprep.subr.bf16.mxu0 0
    %916 = vmatpush1.bf16.msra.mxu0 0
    %917 = vmatprep.subr.bf16.mxu0 0
    %918 = vmatpush1.bf16.msra.mxu0 0
    %919 = vmatprep.subr.bf16.mxu0 0
    %920 = vmatpush1.bf16.msra.mxu0 0
    %921 = vmatprep.subr.bf16.mxu0 0
    %922 = vmatpush1.bf16.msra.mxu0 %v858
    %923 = vmatprep.subr.bf16.mxu0 0
    %924 = vmatpush1.bf16.msra.mxu0 %v855
    %925 = vmatprep.subr.bf16.mxu0 0
    %926 = vmatpush2.bf16.msra.mxu0 0
    %927 = vmatprep.subr.bf16.mxu0 0
    %928 = vmatpush2.bf16.msra.mxu0 0
    %929 = vmatprep.subr.bf16.mxu0 0
    %930 = vmatpush2.bf16.msra.mxu0 0
    %931 = vmatprep.subr.bf16.mxu0 0
    %932 = vmatpush2.bf16.msra.mxu0 0
    %933 = vmatprep.subr.bf16.mxu0 0
    %934 = vmatpush2.bf16.msra.mxu0 0
    %935 = vmatprep.subr.bf16.mxu0 0
    %936 = vmatpush2.bf16.msra.mxu0 0
    %937 = vmatprep.subr.bf16.mxu0 0
    %938 = vmatpush2.bf16.msra.mxu0 0
    %939 = vmatprep.subr.bf16.mxu0 0
    %940 = vmatpush2.bf16.msra.mxu0 0
    %941 = vmatprep.mubr.bf16.mxu0 0
    %942 = vmatmul.mubr.bf16.gmra.mxu0 %v866
    %v943 = vpop.f32.mrf.mxu0
    %v944 = vadd.f32 0.0, %v943
    %v945 = vpop.f32.mrf.mxu0
    %v946 = vpop.f32.mrf.mxu0
    %v947 = vpop.f32.mrf.mxu0
    %948 = vdwg.mxu0
    %v949 = vadd.f32 %v821, %v903
    %v950 = vxor.u32 %v949, 2147483648
    %v951 = vmul.f32 %v950, 1.442695
    %v952 = vpow.pop %v951
    %v953 = vadd.f32 %v952, 1.0
    %v954 = vrcp.pop %v953
    %v955 = vmul.f32 1.0, %v954
    %v956 = vadd.f32 %v822, %v905
    %v957 = vxor.u32 %v956, 2147483648
    %v958 = vmul.f32 %v957, 1.442695
    %v959 = vpow.pop %v958
    %v960 = vadd.f32 %v959, 1.0
    %v961 = vrcp.pop %v960
    %v962 = vmul.f32 1.0, %v961
    %v963 = vadd.f32 %v944, %v168
    %v964 = vmul.f32 %v955, %v963
    %v965 = vadd.f32 %v823, %v964
    %v966 = vtanh.pop %v965
    %v967 = vsub.f32 1.0, %v962
    %v968 = vmul.f32 %v967, %v966
    %v969 = vmul.f32 %v962, %v706
    %v970 = vadd.f32 %v968, %v969
    %s971 = scalar_lea.vmem [#allocation11], 16
    %972 = vst [vmem:[%s971] sm:$0xff] %v970
    %974 = dma.done %s195, 48
    %976 = dma.done %s195, 48
    %978 = dma.done %s195, 48
    %980 = dma.done %s195, 48
    %982 = dma.done %s195, 48
    %984 = dma.done %s195, 48
    %986 = dma.done %s195, 48
    %988 = dma.done %s195, 48
    %s989 = sld [smem:[#allocation4 + $0x20]]
    %s990 = sshrl.u32 %s989, 3
    %s991 = sand.u32 %s989, 7
    %s992 = smul.u32 %s990, 24
    %s993 = sadd.s32 %s991, %s992
    %s994 = smul.addr %s993, 16
    %s995 = scalar_lea.hbm %s1, %s994
    %s997 = sshll.u32 [#allocation2], 4
    %s998 = int_to_ptr.vmem [resolvable:$true] %s997
    %1000 = dma.hbm_to_vmem [thread:$0]  %s995, 48, %s998, [#allocation3], 128, 128, 1
    %s1001 = sld [smem:[#allocation4 + $0x21]]
    %s1002 = sshrl.u32 %s1001, 3
    %s1003 = sand.u32 %s1001, 7
    %s1004 = smul.u32 %s1002, 24
    %s1005 = sadd.s32 %s1003, %s1004
    %s1006 = smul.addr %s1005, 16
    %s1007 = scalar_lea.hbm %s1, %s1006
    %s1009 = sshll.u32 %s79, 4
    %s1010 = int_to_ptr.vmem [resolvable:$true] %s1009
    %1012 = dma.hbm_to_vmem [thread:$0]  %s1007, 48, %s1010, [#allocation3], 128, 128, 1
    %s1013 = sld [smem:[#allocation4 + $0x22]]
    %s1014 = sshrl.u32 %s1013, 3
    %s1015 = sand.u32 %s1013, 7
    %s1016 = smul.u32 %s1014, 24
    %s1017 = sadd.s32 %s1015, %s1016
    %s1018 = smul.addr %s1017, 16
    %s1019 = scalar_lea.hbm %s1, %s1018
    %s1021 = sshll.u32 %s92, 4
    %s1022 = int_to_ptr.vmem [resolvable:$true] %s1021
    %1024 = dma.hbm_to_vmem [thread:$0]  %s1019, 48, %s1022, [#allocation3], 128, 128, 1
    %s1025 = sld [smem:[#allocation4 + $0x23]]
    %s1026 = sshrl.u32 %s1025, 3
    %s1027 = sand.u32 %s1025, 7
    %s1028 = smul.u32 %s1026, 24
    %s1029 = sadd.s32 %s1027, %s1028
    %s1030 = smul.addr %s1029, 16
    %s1031 = scalar_lea.hbm %s1, %s1030
    %s1033 = sshll.u32 %s105, 4
    %s1034 = int_to_ptr.vmem [resolvable:$true] %s1033
    %1036 = dma.hbm_to_vmem [thread:$0]  %s1031, 48, %s1034, [#allocation3], 128, 128, 1
    %s1037 = sld [smem:[#allocation4 + $0x24]]
    %s1038 = sshrl.u32 %s1037, 3
    %s1039 = sand.u32 %s1037, 7
    %s1040 = smul.u32 %s1038, 24
    %s1041 = sadd.s32 %s1039, %s1040
    %s1042 = smul.addr %s1041, 16
    %s1043 = scalar_lea.hbm %s1, %s1042
    %s1045 = sshll.u32 %s118, 4
    %s1046 = int_to_ptr.vmem [resolvable:$true] %s1045
    %1048 = dma.hbm_to_vmem [thread:$0]  %s1043, 48, %s1046, [#allocation3], 128, 128, 1
    %s1049 = sld [smem:[#allocation4 + $0x25]]
    %s1050 = sshrl.u32 %s1049, 3
    %s1051 = sand.u32 %s1049, 7
    %s1052 = smul.u32 %s1050, 24
    %s1053 = sadd.s32 %s1051, %s1052
    %s1054 = smul.addr %s1053, 16
    %s1055 = scalar_lea.hbm %s1, %s1054
    %s1057 = sshll.u32 %s131, 4
    %s1058 = int_to_ptr.vmem [resolvable:$true] %s1057
    %1060 = dma.hbm_to_vmem [thread:$0]  %s1055, 48, %s1058, [#allocation3], 128, 128, 1
    %s1061 = sld [smem:[#allocation4 + $0x26]]
    %s1062 = sshrl.u32 %s1061, 3
    %s1063 = sand.u32 %s1061, 7
    %s1064 = smul.u32 %s1062, 24
    %s1065 = sadd.s32 %s1063, %s1064
    %s1066 = smul.addr %s1065, 16
    %s1067 = scalar_lea.hbm %s1, %s1066
    %s1069 = sshll.u32 %s144, 4
    %s1070 = int_to_ptr.vmem [resolvable:$true] %s1069
    %1072 = dma.hbm_to_vmem [thread:$0]  %s1067, 48, %s1070, [#allocation3], 128, 128, 1
    %s1073 = sld [smem:[#allocation4 + $0x27]]
    %s1074 = sshrl.u32 %s1073, 3
    %s1075 = sand.u32 %s1073, 7
    %s1076 = smul.u32 %s1074, 24
    %s1077 = sadd.s32 %s1075, %s1076
    %s1078 = smul.addr %s1077, 16
    %s1079 = scalar_lea.hbm %s1, %s1078
    %s1081 = sshll.u32 %s157, 4
    %s1082 = int_to_ptr.vmem [resolvable:$true] %s1081
    %1084 = dma.hbm_to_vmem [thread:$0]  %s1079, 48, %s1082, [#allocation3], 128, 128, 1
    %v1085 = vld [vmem:[%s556] sm:$0xff]
    %v1086 = vld [vmem:[%s556 + $0x8] sm:$0xff]
    %v1087 = vld [vmem:[%s556 + $0x10] sm:$0xff]
    %v1088 = vpack.c.bf16 %v970, %v970
    %v1089 = vld [vmem:[#allocation8] sm:$0xff]
    %v1090 = vld [vmem:[#allocation8 + $0x8] sm:$0xf]
    %v1091 = vld [vmem:[#allocation8 + $0xc] sm:$0xff]
    %v1092 = vld [vmem:[#allocation8 + $0x14] sm:$0xf]
    %v1093 = vld [vmem:[#allocation8 + $0x18] sm:$0xff]
    %v1094 = vld [vmem:[#allocation8 + $0x20] sm:$0xf]
    %v1095 = vld [vmem:[#allocation8 + $0x24] sm:$0xff]
    %v1096 = vld [vmem:[#allocation8 + $0x2c] sm:$0xf]
    %v1105 = vunpack.c.l.b16 %v1089
    %v1106 = vunpack.c.h.b16 %v1089
    %v1107 = vunpack.c.l.b16 %v1090
    %v1108 = vunpack.c.l.b16 %v1091
    %v1109 = vunpack.c.h.b16 %v1091
    %v1110 = vunpack.c.l.b16 %v1092
    %v1111 = vunpack.c.l.b16 %v1093
    %v1112 = vunpack.c.h.b16 %v1093
    %v1113 = vunpack.c.l.b16 %v1094
    %v1114 = vunpack.c.l.b16 %v1095
    %v1115 = vunpack.c.h.b16 %v1095
    %v1116 = vunpack.c.l.b16 %v1096
    %v1117 = vpack.c.b16 %v1108, %v1105
    %v1118 = vpack.c.b16 %v1109, %v1106
    %v1119 = vpack.c.b16 %v1110, %v1107
    %v1120 = vpack.c.b16 %v1114, %v1111
    %v1121 = vpack.c.b16 %v1115, %v1112
    %v1122 = vpack.c.b16 %v1116, %v1113
    %v1130 = vsel %vm336, %v1088, 0
    %1132 = vmatprep.subr.bf16.mxu0 0
    %1133 = vmatpush1.bf16.msra.mxu0 0
    %1134 = vmatprep.subr.bf16.mxu0 0
    %1135 = vmatpush1.bf16.msra.mxu0 0
    %1136 = vmatprep.subr.bf16.mxu0 0
    %1137 = vmatpush1.bf16.msra.mxu0 0
    %1138 = vmatprep.subr.bf16.mxu0 0
    %1139 = vmatpush1.bf16.msra.mxu0 0
    %1140 = vmatprep.subr.bf16.mxu0 0
    %1141 = vmatpush1.bf16.msra.mxu0 0
    %1142 = vmatprep.subr.bf16.mxu0 0
    %1143 = vmatpush1.bf16.msra.mxu0 0
    %1144 = vmatprep.subr.bf16.mxu0 %v1121
    %1145 = vmatpush1.bf16.msra.mxu0 %v1120
    %1146 = vmatprep.subr.bf16.mxu0 %v1118
    %1147 = vmatpush1.bf16.msra.mxu0 %v1117
    %1148 = vmatprep.subr.bf16.mxu0 0
    %1149 = vmatpush2.bf16.msra.mxu0 0
    %1150 = vmatprep.subr.bf16.mxu0 0
    %1151 = vmatpush2.bf16.msra.mxu0 0
    %1152 = vmatprep.subr.bf16.mxu0 0
    %1153 = vmatpush2.bf16.msra.mxu0 0
    %1154 = vmatprep.subr.bf16.mxu0 0
    %1155 = vmatpush2.bf16.msra.mxu0 0
    %1156 = vmatprep.subr.bf16.mxu0 0
    %1157 = vmatpush2.bf16.msra.mxu0 0
    %1158 = vmatprep.subr.bf16.mxu0 0
    %1159 = vmatpush2.bf16.msra.mxu0 0
    %1160 = vmatprep.subr.bf16.mxu0 0
    %1161 = vmatpush2.bf16.msra.mxu0 0
    %1162 = vmatprep.subr.bf16.mxu0 0
    %1163 = vmatpush2.bf16.msra.mxu0 0
    %1164 = vmatprep.mubr.bf16.mxu0 0
    %1165 = vmatmul.mubr.bf16.gmra.mxu0 %v1130
    %v1166 = vpop.f32.mrf.mxu0
    %v1167 = vadd.f32 0.0, %v1166
    %v1168 = vpop.f32.mrf.mxu0
    %v1169 = vadd.f32 0.0, %v1168
    %v1170 = vpop.f32.mrf.mxu0
    %v1171 = vpop.f32.mrf.mxu0
    %1172 = vdwg.mxu0
    %1173 = vmatprep.subr.bf16.mxu0 0
    %1174 = vmatpush1.bf16.msra.mxu0 0
    %1175 = vmatprep.subr.bf16.mxu0 0
    %1176 = vmatpush1.bf16.msra.mxu0 0
    %1177 = vmatprep.subr.bf16.mxu0 0
    %1178 = vmatpush1.bf16.msra.mxu0 0
    %1179 = vmatprep.subr.bf16.mxu0 0
    %1180 = vmatpush1.bf16.msra.mxu0 0
    %1181 = vmatprep.subr.bf16.mxu0 0
    %1182 = vmatpush1.bf16.msra.mxu0 0
    %1183 = vmatprep.subr.bf16.mxu0 0
    %1184 = vmatpush1.bf16.msra.mxu0 0
    %1185 = vmatprep.subr.bf16.mxu0 0
    %1186 = vmatpush1.bf16.msra.mxu0 %v1122
    %1187 = vmatprep.subr.bf16.mxu0 0
    %1188 = vmatpush1.bf16.msra.mxu0 %v1119
    %1189 = vmatprep.subr.bf16.mxu0 0
    %1190 = vmatpush2.bf16.msra.mxu0 0
    %1191 = vmatprep.subr.bf16.mxu0 0
    %1192 = vmatpush2.bf16.msra.mxu0 0
    %1193 = vmatprep.subr.bf16.mxu0 0
    %1194 = vmatpush2.bf16.msra.mxu0 0
    %1195 = vmatprep.subr.bf16.mxu0 0
    %1196 = vmatpush2.bf16.msra.mxu0 0
    %1197 = vmatprep.subr.bf16.mxu0 0
    %1198 = vmatpush2.bf16.msra.mxu0 0
    %1199 = vmatprep.subr.bf16.mxu0 0
    %1200 = vmatpush2.bf16.msra.mxu0 0
    %1201 = vmatprep.subr.bf16.mxu0 0
    %1202 = vmatpush2.bf16.msra.mxu0 0
    %1203 = vmatprep.subr.bf16.mxu0 0
    %1204 = vmatpush2.bf16.msra.mxu0 0
    %1205 = vmatprep.mubr.bf16.mxu0 0
    %1206 = vmatmul.mubr.bf16.gmra.mxu0 %v1130
    %v1207 = vpop.f32.mrf.mxu0
    %v1208 = vadd.f32 0.0, %v1207
    %v1209 = vpop.f32.mrf.mxu0
    %v1210 = vpop.f32.mrf.mxu0
    %v1211 = vpop.f32.mrf.mxu0
    %1212 = vdwg.mxu0
    %v1213 = vadd.f32 %v1085, %v1167
    %v1214 = vxor.u32 %v1213, 2147483648
    %v1215 = vmul.f32 %v1214, 1.442695
    %v1216 = vpow.pop %v1215
    %v1217 = vadd.f32 %v1216, 1.0
    %v1218 = vrcp.pop %v1217
    %v1219 = vmul.f32 1.0, %v1218
    %v1220 = vadd.f32 %v1086, %v1169
    %v1221 = vxor.u32 %v1220, 2147483648
    %v1222 = vmul.f32 %v1221, 1.442695
    %v1223 = vpow.pop %v1222
    %v1224 = vadd.f32 %v1223, 1.0
    %v1225 = vrcp.pop %v1224
    %v1226 = vmul.f32 1.0, %v1225
    %v1227 = vadd.f32 %v1208, %v168
    %v1228 = vmul.f32 %v1219, %v1227
    %v1229 = vadd.f32 %v1087, %v1228
    %v1230 = vtanh.pop %v1229
    %v1231 = vsub.f32 1.0, %v1226
    %v1232 = vmul.f32 %v1231, %v1230
    %v1233 = vmul.f32 %v1226, %v970
    %v1234 = vadd.f32 %v1232, %v1233
    %s1235 = scalar_lea.vmem [#allocation11], 24
    %1236 = vst [vmem:[%s1235] sm:$0xff] %v1234
    %1238 = dma.done [#allocation3], 48
    %1240 = dma.done [#allocation3], 48
    %1242 = dma.done [#allocation3], 48
    %1244 = dma.done [#allocation3], 48
    %1246 = dma.done [#allocation3], 48
    %1248 = dma.done [#allocation3], 48
    %1250 = dma.done [#allocation3], 48
    %1252 = dma.done [#allocation3], 48
    %s1253 = sld [smem:[#allocation4 + $0x28]]
    %s1254 = sshrl.u32 %s1253, 3
    %s1255 = sand.u32 %s1253, 7
    %s1256 = smul.u32 %s1254, 24
    %s1257 = sadd.s32 %s1255, %s1256
    %s1258 = smul.addr %s1257, 16
    %s1259 = scalar_lea.hbm %s1, %s1258
    %s1261 = sshll.u32 %s194, 4
    %s1262 = int_to_ptr.vmem [resolvable:$true] %s1261
    %1264 = dma.hbm_to_vmem [thread:$0]  %s1259, 48, %s1262, %s195, 128, 128, 1
    %s1265 = sld [smem:[#allocation4 + $0x29]]
    %s1266 = sshrl.u32 %s1265, 3
    %s1267 = sand.u32 %s1265, 7
    %s1268 = smul.u32 %s1266, 24
    %s1269 = sadd.s32 %s1267, %s1268
    %s1270 = smul.addr %s1269, 16
    %s1271 = scalar_lea.hbm %s1, %s1270
    %s1273 = sshll.u32 %s208, 4
    %s1274 = int_to_ptr.vmem [resolvable:$true] %s1273
    %1276 = dma.hbm_to_vmem [thread:$0]  %s1271, 48, %s1274, %s195, 128, 128, 1
    %s1277 = sld [smem:[#allocation4 + $0x2a]]
    %s1278 = sshrl.u32 %s1277, 3
    %s1279 = sand.u32 %s1277, 7
    %s1280 = smul.u32 %s1278, 24
    %s1281 = sadd.s32 %s1279, %s1280
    %s1282 = smul.addr %s1281, 16
    %s1283 = scalar_lea.hbm %s1, %s1282
    %s1285 = sshll.u32 %s221, 4
    %s1286 = int_to_ptr.vmem [resolvable:$true] %s1285
    %1288 = dma.hbm_to_vmem [thread:$0]  %s1283, 48, %s1286, %s195, 128, 128, 1
    %s1289 = sld [smem:[#allocation4 + $0x2b]]
    %s1290 = sshrl.u32 %s1289, 3
    %s1291 = sand.u32 %s1289, 7
    %s1292 = smul.u32 %s1290, 24
    %s1293 = sadd.s32 %s1291, %s1292
    %s1294 = smul.addr %s1293, 16
    %s1295 = scalar_lea.hbm %s1, %s1294
    %s1297 = sshll.u32 %s234, 4
    %s1298 = int_to_ptr.vmem [resolvable:$true] %s1297
    %1300 = dma.hbm_to_vmem [thread:$0]  %s1295, 48, %s1298, %s195, 128, 128, 1
    %s1301 = sld [smem:[#allocation4 + $0x2c]]
    %s1302 = sshrl.u32 %s1301, 3
    %s1303 = sand.u32 %s1301, 7
    %s1304 = smul.u32 %s1302, 24
    %s1305 = sadd.s32 %s1303, %s1304
    %s1306 = smul.addr %s1305, 16
    %s1307 = scalar_lea.hbm %s1, %s1306
    %s1309 = sshll.u32 %s247, 4
    %s1310 = int_to_ptr.vmem [resolvable:$true] %s1309
    %1312 = dma.hbm_to_vmem [thread:$0]  %s1307, 48, %s1310, %s195, 128, 128, 1
    %s1313 = sld [smem:[#allocation4 + $0x2d]]
    %s1314 = sshrl.u32 %s1313, 3
    %s1315 = sand.u32 %s1313, 7
    %s1316 = smul.u32 %s1314, 24
    %s1317 = sadd.s32 %s1315, %s1316
    %s1318 = smul.addr %s1317, 16
    %s1319 = scalar_lea.hbm %s1, %s1318
    %s1321 = sshll.u32 %s260, 4
    %s1322 = int_to_ptr.vmem [resolvable:$true] %s1321
    %1324 = dma.hbm_to_vmem [thread:$0]  %s1319, 48, %s1322, %s195, 128, 128, 1
    %s1325 = sld [smem:[#allocation4 + $0x2e]]
    %s1326 = sshrl.u32 %s1325, 3
    %s1327 = sand.u32 %s1325, 7
    %s1328 = smul.u32 %s1326, 24
    %s1329 = sadd.s32 %s1327, %s1328
    %s1330 = smul.addr %s1329, 16
    %s1331 = scalar_lea.hbm %s1, %s1330
    %s1333 = sshll.u32 %s273, 4
    %s1334 = int_to_ptr.vmem [resolvable:$true] %s1333
    %1336 = dma.hbm_to_vmem [thread:$0]  %s1331, 48, %s1334, %s195, 128, 128, 1
    %s1337 = sld [smem:[#allocation4 + $0x2f]]
    %s1338 = sshrl.u32 %s1337, 3
    %s1339 = sand.u32 %s1337, 7
    %s1340 = smul.u32 %s1338, 24
    %s1341 = sadd.s32 %s1339, %s1340
    %s1342 = smul.addr %s1341, 16
    %s1343 = scalar_lea.hbm %s1, %s1342
    %s1345 = sshll.u32 %s286, 4
    %s1346 = int_to_ptr.vmem [resolvable:$true] %s1345
    %1348 = dma.hbm_to_vmem [thread:$0]  %s1343, 48, %s1346, %s195, 128, 128, 1
    %v1349 = vld [vmem:[#allocation2] sm:$0xff]
    %v1350 = vld [vmem:[#allocation2 + $0x8] sm:$0xff]
    %v1351 = vld [vmem:[#allocation2 + $0x10] sm:$0xff]
    %v1352 = vpack.c.bf16 %v1234, %v1234
    %v1353 = vld [vmem:[#allocation8] sm:$0xff]
    %v1354 = vld [vmem:[#allocation8 + $0x8] sm:$0xf]
    %v1355 = vld [vmem:[#allocation8 + $0xc] sm:$0xff]
    %v1356 = vld [vmem:[#allocation8 + $0x14] sm:$0xf]
    %v1357 = vld [vmem:[#allocation8 + $0x18] sm:$0xff]
    %v1358 = vld [vmem:[#allocation8 + $0x20] sm:$0xf]
    %v1359 = vld [vmem:[#allocation8 + $0x24] sm:$0xff]
    %v1360 = vld [vmem:[#allocation8 + $0x2c] sm:$0xf]
    %v1369 = vunpack.c.l.b16 %v1353
    %v1370 = vunpack.c.h.b16 %v1353
    %v1371 = vunpack.c.l.b16 %v1354
    %v1372 = vunpack.c.l.b16 %v1355
    %v1373 = vunpack.c.h.b16 %v1355
    %v1374 = vunpack.c.l.b16 %v1356
    %v1375 = vunpack.c.l.b16 %v1357
    %v1376 = vunpack.c.h.b16 %v1357
    %v1377 = vunpack.c.l.b16 %v1358
    %v1378 = vunpack.c.l.b16 %v1359
    %v1379 = vunpack.c.h.b16 %v1359
    %v1380 = vunpack.c.l.b16 %v1360
    %v1381 = vpack.c.b16 %v1372, %v1369
    %v1382 = vpack.c.b16 %v1373, %v1370
    %v1383 = vpack.c.b16 %v1374, %v1371
    %v1384 = vpack.c.b16 %v1378, %v1375
    %v1385 = vpack.c.b16 %v1379, %v1376
    %v1386 = vpack.c.b16 %v1380, %v1377
    %v1394 = vsel %vm336, %v1352, 0
    %1396 = vmatprep.subr.bf16.mxu0 0
    %1397 = vmatpush1.bf16.msra.mxu0 0
    %1398 = vmatprep.subr.bf16.mxu0 0
    %1399 = vmatpush1.bf16.msra.mxu0 0
    %1400 = vmatprep.subr.bf16.mxu0 0
    %1401 = vmatpush1.bf16.msra.mxu0 0
    %1402 = vmatprep.subr.bf16.mxu0 0
    %1403 = vmatpush1.bf16.msra.mxu0 0
    %1404 = vmatprep.subr.bf16.mxu0 0
    %1405 = vmatpush1.bf16.msra.mxu0 0
    %1406 = vmatprep.subr.bf16.mxu0 0
    %1407 = vmatpush1.bf16.msra.mxu0 0
    %1408 = vmatprep.subr.bf16.mxu0 %v1385
    %1409 = vmatpush1.bf16.msra.mxu0 %v1384
    %1410 = vmatprep.subr.bf16.mxu0 %v1382
    %1411 = vmatpush1.bf16.msra.mxu0 %v1381
    %1412 = vmatprep.subr.bf16.mxu0 0
    %1413 = vmatpush2.bf16.msra.mxu0 0
    %1414 = vmatprep.subr.bf16.mxu0 0
    %1415 = vmatpush2.bf16.msra.mxu0 0
    %1416 = vmatprep.subr.bf16.mxu0 0
    %1417 = vmatpush2.bf16.msra.mxu0 0
    %1418 = vmatprep.subr.bf16.mxu0 0
    %1419 = vmatpush2.bf16.msra.mxu0 0
    %1420 = vmatprep.subr.bf16.mxu0 0
    %1421 = vmatpush2.bf16.msra.mxu0 0
    %1422 = vmatprep.subr.bf16.mxu0 0
    %1423 = vmatpush2.bf16.msra.mxu0 0
    %1424 = vmatprep.subr.bf16.mxu0 0
    %1425 = vmatpush2.bf16.msra.mxu0 0
    %1426 = vmatprep.subr.bf16.mxu0 0
    %1427 = vmatpush2.bf16.msra.mxu0 0
    %1428 = vmatprep.mubr.bf16.mxu0 0
    %1429 = vmatmul.mubr.bf16.gmra.mxu0 %v1394
    %v1430 = vpop.f32.mrf.mxu0
    %v1431 = vadd.f32 0.0, %v1430
    %v1432 = vpop.f32.mrf.mxu0
    %v1433 = vadd.f32 0.0, %v1432
    %v1434 = vpop.f32.mrf.mxu0
    %v1435 = vpop.f32.mrf.mxu0
    %1436 = vdwg.mxu0
    %1437 = vmatprep.subr.bf16.mxu0 0
    %1438 = vmatpush1.bf16.msra.mxu0 0
    %1439 = vmatprep.subr.bf16.mxu0 0
    %1440 = vmatpush1.bf16.msra.mxu0 0
    %1441 = vmatprep.subr.bf16.mxu0 0
    %1442 = vmatpush1.bf16.msra.mxu0 0
    %1443 = vmatprep.subr.bf16.mxu0 0
    %1444 = vmatpush1.bf16.msra.mxu0 0
    %1445 = vmatprep.subr.bf16.mxu0 0
    %1446 = vmatpush1.bf16.msra.mxu0 0
    %1447 = vmatprep.subr.bf16.mxu0 0
    %1448 = vmatpush1.bf16.msra.mxu0 0
    %1449 = vmatprep.subr.bf16.mxu0 0
    %1450 = vmatpush1.bf16.msra.mxu0 %v1386
    %1451 = vmatprep.subr.bf16.mxu0 0
    %1452 = vmatpush1.bf16.msra.mxu0 %v1383
    %1453 = vmatprep.subr.bf16.mxu0 0
    %1454 = vmatpush2.bf16.msra.mxu0 0
    %1455 = vmatprep.subr.bf16.mxu0 0
    %1456 = vmatpush2.bf16.msra.mxu0 0
    %1457 = vmatprep.subr.bf16.mxu0 0
    %1458 = vmatpush2.bf16.msra.mxu0 0
    %1459 = vmatprep.subr.bf16.mxu0 0
    %1460 = vmatpush2.bf16.msra.mxu0 0
    %1461 = vmatprep.subr.bf16.mxu0 0
    %1462 = vmatpush2.bf16.msra.mxu0 0
    %1463 = vmatprep.subr.bf16.mxu0 0
    %1464 = vmatpush2.bf16.msra.mxu0 0
    %1465 = vmatprep.subr.bf16.mxu0 0
    %1466 = vmatpush2.bf16.msra.mxu0 0
    %1467 = vmatprep.subr.bf16.mxu0 0
    %1468 = vmatpush2.bf16.msra.mxu0 0
    %1469 = vmatprep.mubr.bf16.mxu0 0
    %1470 = vmatmul.mubr.bf16.gmra.mxu0 %v1394
    %v1471 = vpop.f32.mrf.mxu0
    %v1472 = vadd.f32 0.0, %v1471
    %v1473 = vpop.f32.mrf.mxu0
    %v1474 = vpop.f32.mrf.mxu0
    %v1475 = vpop.f32.mrf.mxu0
    %1476 = vdwg.mxu0
    %v1477 = vadd.f32 %v1349, %v1431
    %v1478 = vxor.u32 %v1477, 2147483648
    %v1479 = vmul.f32 %v1478, 1.442695
    %v1480 = vpow.pop %v1479
    %v1481 = vadd.f32 %v1480, 1.0
    %v1482 = vrcp.pop %v1481
    %v1483 = vmul.f32 1.0, %v1482
    %v1484 = vadd.f32 %v1350, %v1433
    %v1485 = vxor.u32 %v1484, 2147483648
    %v1486 = vmul.f32 %v1485, 1.442695
    %v1487 = vpow.pop %v1486
    %v1488 = vadd.f32 %v1487, 1.0
    %v1489 = vrcp.pop %v1488
    %v1490 = vmul.f32 1.0, %v1489
    %v1491 = vadd.f32 %v1472, %v168
    %v1492 = vmul.f32 %v1483, %v1491
    %v1493 = vadd.f32 %v1351, %v1492
    %v1494 = vtanh.pop %v1493
    %v1495 = vsub.f32 1.0, %v1490
    %v1496 = vmul.f32 %v1495, %v1494
    %v1497 = vmul.f32 %v1490, %v1234
    %v1498 = vadd.f32 %v1496, %v1497
    %s1499 = scalar_lea.vmem [#allocation11], 32
    %1500 = vst [vmem:[%s1499] sm:$0xff] %v1498
    %1502 = dma.done %s195, 48
    %1504 = dma.done %s195, 48
    %1506 = dma.done %s195, 48
    %1508 = dma.done %s195, 48
    %1510 = dma.done %s195, 48
    %1512 = dma.done %s195, 48
    %1514 = dma.done %s195, 48
    %1516 = dma.done %s195, 48
    %s1517 = sld [smem:[#allocation4 + $0x30]]
    %s1518 = sshrl.u32 %s1517, 3
    %s1519 = sand.u32 %s1517, 7
    %s1520 = smul.u32 %s1518, 24
    %s1521 = sadd.s32 %s1519, %s1520
    %s1522 = smul.addr %s1521, 16
    %s1523 = scalar_lea.hbm %s1, %s1522
    %s1525 = sshll.u32 [#allocation2], 4
    %s1526 = int_to_ptr.vmem [resolvable:$true] %s1525
    %1528 = dma.hbm_to_vmem [thread:$0]  %s1523, 48, %s1526, [#allocation3], 128, 128, 1
    %s1529 = sld [smem:[#allocation4 + $0x31]]
    %s1530 = sshrl.u32 %s1529, 3
    %s1531 = sand.u32 %s1529, 7
    %s1532 = smul.u32 %s1530, 24
    %s1533 = sadd.s32 %s1531, %s1532
    %s1534 = smul.addr %s1533, 16
    %s1535 = scalar_lea.hbm %s1, %s1534
    %s1537 = sshll.u32 %s79, 4
    %s1538 = int_to_ptr.vmem [resolvable:$true] %s1537
    %1540 = dma.hbm_to_vmem [thread:$0]  %s1535, 48, %s1538, [#allocation3], 128, 128, 1
    %s1541 = sld [smem:[#allocation4 + $0x32]]
    %s1542 = sshrl.u32 %s1541, 3
    %s1543 = sand.u32 %s1541, 7
    %s1544 = smul.u32 %s1542, 24
    %s1545 = sadd.s32 %s1543, %s1544
    %s1546 = smul.addr %s1545, 16
    %s1547 = scalar_lea.hbm %s1, %s1546
    %s1549 = sshll.u32 %s92, 4
    %s1550 = int_to_ptr.vmem [resolvable:$true] %s1549
    %1552 = dma.hbm_to_vmem [thread:$0]  %s1547, 48, %s1550, [#allocation3], 128, 128, 1
    %s1553 = sld [smem:[#allocation4 + $0x33]]
    %s1554 = sshrl.u32 %s1553, 3
    %s1555 = sand.u32 %s1553, 7
    %s1556 = smul.u32 %s1554, 24
    %s1557 = sadd.s32 %s1555, %s1556
    %s1558 = smul.addr %s1557, 16
    %s1559 = scalar_lea.hbm %s1, %s1558
    %s1561 = sshll.u32 %s105, 4
    %s1562 = int_to_ptr.vmem [resolvable:$true] %s1561
    %1564 = dma.hbm_to_vmem [thread:$0]  %s1559, 48, %s1562, [#allocation3], 128, 128, 1
    %s1565 = sld [smem:[#allocation4 + $0x34]]
    %s1566 = sshrl.u32 %s1565, 3
    %s1567 = sand.u32 %s1565, 7
    %s1568 = smul.u32 %s1566, 24
    %s1569 = sadd.s32 %s1567, %s1568
    %s1570 = smul.addr %s1569, 16
    %s1571 = scalar_lea.hbm %s1, %s1570
    %s1573 = sshll.u32 %s118, 4
    %s1574 = int_to_ptr.vmem [resolvable:$true] %s1573
    %1576 = dma.hbm_to_vmem [thread:$0]  %s1571, 48, %s1574, [#allocation3], 128, 128, 1
    %s1577 = sld [smem:[#allocation4 + $0x35]]
    %s1578 = sshrl.u32 %s1577, 3
    %s1579 = sand.u32 %s1577, 7
    %s1580 = smul.u32 %s1578, 24
    %s1581 = sadd.s32 %s1579, %s1580
    %s1582 = smul.addr %s1581, 16
    %s1583 = scalar_lea.hbm %s1, %s1582
    %s1585 = sshll.u32 %s131, 4
    %s1586 = int_to_ptr.vmem [resolvable:$true] %s1585
    %1588 = dma.hbm_to_vmem [thread:$0]  %s1583, 48, %s1586, [#allocation3], 128, 128, 1
    %s1589 = sld [smem:[#allocation4 + $0x36]]
    %s1590 = sshrl.u32 %s1589, 3
    %s1591 = sand.u32 %s1589, 7
    %s1592 = smul.u32 %s1590, 24
    %s1593 = sadd.s32 %s1591, %s1592
    %s1594 = smul.addr %s1593, 16
    %s1595 = scalar_lea.hbm %s1, %s1594
    %s1597 = sshll.u32 %s144, 4
    %s1598 = int_to_ptr.vmem [resolvable:$true] %s1597
    %1600 = dma.hbm_to_vmem [thread:$0]  %s1595, 48, %s1598, [#allocation3], 128, 128, 1
    %s1601 = sld [smem:[#allocation4 + $0x37]]
    %s1602 = sshrl.u32 %s1601, 3
    %s1603 = sand.u32 %s1601, 7
    %s1604 = smul.u32 %s1602, 24
    %s1605 = sadd.s32 %s1603, %s1604
    %s1606 = smul.addr %s1605, 16
    %s1607 = scalar_lea.hbm %s1, %s1606
    %s1609 = sshll.u32 %s157, 4
    %s1610 = int_to_ptr.vmem [resolvable:$true] %s1609
    %1612 = dma.hbm_to_vmem [thread:$0]  %s1607, 48, %s1610, [#allocation3], 128, 128, 1
    %v1613 = vld [vmem:[%s556] sm:$0xff]
    %v1614 = vld [vmem:[%s556 + $0x8] sm:$0xff]
    %v1615 = vld [vmem:[%s556 + $0x10] sm:$0xff]
    %v1616 = vpack.c.bf16 %v1498, %v1498
    %v1617 = vld [vmem:[#allocation8] sm:$0xff]
    %v1618 = vld [vmem:[#allocation8 + $0x8] sm:$0xf]
    %v1619 = vld [vmem:[#allocation8 + $0xc] sm:$0xff]
    %v1620 = vld [vmem:[#allocation8 + $0x14] sm:$0xf]
    %v1621 = vld [vmem:[#allocation8 + $0x18] sm:$0xff]
    %v1622 = vld [vmem:[#allocation8 + $0x20] sm:$0xf]
    %v1623 = vld [vmem:[#allocation8 + $0x24] sm:$0xff]
    %v1624 = vld [vmem:[#allocation8 + $0x2c] sm:$0xf]
    %v1633 = vunpack.c.l.b16 %v1617
    %v1634 = vunpack.c.h.b16 %v1617
    %v1635 = vunpack.c.l.b16 %v1618
    %v1636 = vunpack.c.l.b16 %v1619
    %v1637 = vunpack.c.h.b16 %v1619
    %v1638 = vunpack.c.l.b16 %v1620
    %v1639 = vunpack.c.l.b16 %v1621
    %v1640 = vunpack.c.h.b16 %v1621
    %v1641 = vunpack.c.l.b16 %v1622
    %v1642 = vunpack.c.l.b16 %v1623
    %v1643 = vunpack.c.h.b16 %v1623
    %v1644 = vunpack.c.l.b16 %v1624
    %v1645 = vpack.c.b16 %v1636, %v1633
    %v1646 = vpack.c.b16 %v1637, %v1634
    %v1647 = vpack.c.b16 %v1638, %v1635
    %v1648 = vpack.c.b16 %v1642, %v1639
    %v1649 = vpack.c.b16 %v1643, %v1640
    %v1650 = vpack.c.b16 %v1644, %v1641
    %v1658 = vsel %vm336, %v1616, 0
    %1660 = vmatprep.subr.bf16.mxu0 0
    %1661 = vmatpush1.bf16.msra.mxu0 0
    %1662 = vmatprep.subr.bf16.mxu0 0
    %1663 = vmatpush1.bf16.msra.mxu0 0
    %1664 = vmatprep.subr.bf16.mxu0 0
    %1665 = vmatpush1.bf16.msra.mxu0 0
    %1666 = vmatprep.subr.bf16.mxu0 0
    %1667 = vmatpush1.bf16.msra.mxu0 0
    %1668 = vmatprep.subr.bf16.mxu0 0
    %1669 = vmatpush1.bf16.msra.mxu0 0
    %1670 = vmatprep.subr.bf16.mxu0 0
    %1671 = vmatpush1.bf16.msra.mxu0 0
    %1672 = vmatprep.subr.bf16.mxu0 %v1649
    %1673 = vmatpush1.bf16.msra.mxu0 %v1648
    %1674 = vmatprep.subr.bf16.mxu0 %v1646
    %1675 = vmatpush1.bf16.msra.mxu0 %v1645
    %1676 = vmatprep.subr.bf16.mxu0 0
    %1677 = vmatpush2.bf16.msra.mxu0 0
    %1678 = vmatprep.subr.bf16.mxu0 0
    %1679 = vmatpush2.bf16.msra.mxu0 0
    %1680 = vmatprep.subr.bf16.mxu0 0
    %1681 = vmatpush2.bf16.msra.mxu0 0
    %1682 = vmatprep.subr.bf16.mxu0 0
    %1683 = vmatpush2.bf16.msra.mxu0 0
    %1684 = vmatprep.subr.bf16.mxu0 0
    %1685 = vmatpush2.bf16.msra.mxu0 0
    %1686 = vmatprep.subr.bf16.mxu0 0
    %1687 = vmatpush2.bf16.msra.mxu0 0
    %1688 = vmatprep.subr.bf16.mxu0 0
    %1689 = vmatpush2.bf16.msra.mxu0 0
    %1690 = vmatprep.subr.bf16.mxu0 0
    %1691 = vmatpush2.bf16.msra.mxu0 0
    %1692 = vmatprep.mubr.bf16.mxu0 0
    %1693 = vmatmul.mubr.bf16.gmra.mxu0 %v1658
    %v1694 = vpop.f32.mrf.mxu0
    %v1695 = vadd.f32 0.0, %v1694
    %v1696 = vpop.f32.mrf.mxu0
    %v1697 = vadd.f32 0.0, %v1696
    %v1698 = vpop.f32.mrf.mxu0
    %v1699 = vpop.f32.mrf.mxu0
    %1700 = vdwg.mxu0
    %1701 = vmatprep.subr.bf16.mxu0 0
    %1702 = vmatpush1.bf16.msra.mxu0 0
    %1703 = vmatprep.subr.bf16.mxu0 0
    %1704 = vmatpush1.bf16.msra.mxu0 0
    %1705 = vmatprep.subr.bf16.mxu0 0
    %1706 = vmatpush1.bf16.msra.mxu0 0
    %1707 = vmatprep.subr.bf16.mxu0 0
    %1708 = vmatpush1.bf16.msra.mxu0 0
    %1709 = vmatprep.subr.bf16.mxu0 0
    %1710 = vmatpush1.bf16.msra.mxu0 0
    %1711 = vmatprep.subr.bf16.mxu0 0
    %1712 = vmatpush1.bf16.msra.mxu0 0
    %1713 = vmatprep.subr.bf16.mxu0 0
    %1714 = vmatpush1.bf16.msra.mxu0 %v1650
    %1715 = vmatprep.subr.bf16.mxu0 0
    %1716 = vmatpush1.bf16.msra.mxu0 %v1647
    %1717 = vmatprep.subr.bf16.mxu0 0
    %1718 = vmatpush2.bf16.msra.mxu0 0
    %1719 = vmatprep.subr.bf16.mxu0 0
    %1720 = vmatpush2.bf16.msra.mxu0 0
    %1721 = vmatprep.subr.bf16.mxu0 0
    %1722 = vmatpush2.bf16.msra.mxu0 0
    %1723 = vmatprep.subr.bf16.mxu0 0
    %1724 = vmatpush2.bf16.msra.mxu0 0
    %1725 = vmatprep.subr.bf16.mxu0 0
    %1726 = vmatpush2.bf16.msra.mxu0 0
    %1727 = vmatprep.subr.bf16.mxu0 0
    %1728 = vmatpush2.bf16.msra.mxu0 0
    %1729 = vmatprep.subr.bf16.mxu0 0
    %1730 = vmatpush2.bf16.msra.mxu0 0
    %1731 = vmatprep.subr.bf16.mxu0 0
    %1732 = vmatpush2.bf16.msra.mxu0 0
    %1733 = vmatprep.mubr.bf16.mxu0 0
    %1734 = vmatmul.mubr.bf16.gmra.mxu0 %v1658
    %v1735 = vpop.f32.mrf.mxu0
    %v1736 = vadd.f32 0.0, %v1735
    %v1737 = vpop.f32.mrf.mxu0
    %v1738 = vpop.f32.mrf.mxu0
    %v1739 = vpop.f32.mrf.mxu0
    %1740 = vdwg.mxu0
    %v1741 = vadd.f32 %v1613, %v1695
    %v1742 = vxor.u32 %v1741, 2147483648
    %v1743 = vmul.f32 %v1742, 1.442695
    %v1744 = vpow.pop %v1743
    %v1745 = vadd.f32 %v1744, 1.0
    %v1746 = vrcp.pop %v1745
    %v1747 = vmul.f32 1.0, %v1746
    %v1748 = vadd.f32 %v1614, %v1697
    %v1749 = vxor.u32 %v1748, 2147483648
    %v1750 = vmul.f32 %v1749, 1.442695
    %v1751 = vpow.pop %v1750
    %v1752 = vadd.f32 %v1751, 1.0
    %v1753 = vrcp.pop %v1752
    %v1754 = vmul.f32 1.0, %v1753
    %v1755 = vadd.f32 %v1736, %v168
    %v1756 = vmul.f32 %v1747, %v1755
    %v1757 = vadd.f32 %v1615, %v1756
    %v1758 = vtanh.pop %v1757
    %v1759 = vsub.f32 1.0, %v1754
    %v1760 = vmul.f32 %v1759, %v1758
    %v1761 = vmul.f32 %v1754, %v1498
    %v1762 = vadd.f32 %v1760, %v1761
    %s1763 = scalar_lea.vmem [#allocation11], 40
    %1764 = vst [vmem:[%s1763] sm:$0xff] %v1762
    %1766 = dma.done [#allocation3], 48
    %1768 = dma.done [#allocation3], 48
    %1770 = dma.done [#allocation3], 48
    %1772 = dma.done [#allocation3], 48
    %1774 = dma.done [#allocation3], 48
    %1776 = dma.done [#allocation3], 48
    %1778 = dma.done [#allocation3], 48
    %1780 = dma.done [#allocation3], 48
    %s1781 = sld [smem:[#allocation4 + $0x38]]
    %s1782 = sshrl.u32 %s1781, 3
    %s1783 = sand.u32 %s1781, 7
    %s1784 = smul.u32 %s1782, 24
    %s1785 = sadd.s32 %s1783, %s1784
    %s1786 = smul.addr %s1785, 16
    %s1787 = scalar_lea.hbm %s1, %s1786
    %s1789 = sshll.u32 %s194, 4
    %s1790 = int_to_ptr.vmem [resolvable:$true] %s1789
    %1792 = dma.hbm_to_vmem [thread:$0]  %s1787, 48, %s1790, %s195, 128, 128, 1
    %s1793 = sld [smem:[#allocation4 + $0x39]]
    %s1794 = sshrl.u32 %s1793, 3
    %s1795 = sand.u32 %s1793, 7
    %s1796 = smul.u32 %s1794, 24
    %s1797 = sadd.s32 %s1795, %s1796
    %s1798 = smul.addr %s1797, 16
    %s1799 = scalar_lea.hbm %s1, %s1798
    %s1801 = sshll.u32 %s208, 4
    %s1802 = int_to_ptr.vmem [resolvable:$true] %s1801
    %1804 = dma.hbm_to_vmem [thread:$0]  %s1799, 48, %s1802, %s195, 128, 128, 1
    %s1805 = sld [smem:[#allocation4 + $0x3a]]
    %s1806 = sshrl.u32 %s1805, 3
    %s1807 = sand.u32 %s1805, 7
    %s1808 = smul.u32 %s1806, 24
    %s1809 = sadd.s32 %s1807, %s1808
    %s1810 = smul.addr %s1809, 16
    %s1811 = scalar_lea.hbm %s1, %s1810
    %s1813 = sshll.u32 %s221, 4
    %s1814 = int_to_ptr.vmem [resolvable:$true] %s1813
    %1816 = dma.hbm_to_vmem [thread:$0]  %s1811, 48, %s1814, %s195, 128, 128, 1
    %s1817 = sld [smem:[#allocation4 + $0x3b]]
    %s1818 = sshrl.u32 %s1817, 3
    %s1819 = sand.u32 %s1817, 7
    %s1820 = smul.u32 %s1818, 24
    %s1821 = sadd.s32 %s1819, %s1820
    %s1822 = smul.addr %s1821, 16
    %s1823 = scalar_lea.hbm %s1, %s1822
    %s1825 = sshll.u32 %s234, 4
    %s1826 = int_to_ptr.vmem [resolvable:$true] %s1825
    %1828 = dma.hbm_to_vmem [thread:$0]  %s1823, 48, %s1826, %s195, 128, 128, 1
    %s1829 = sld [smem:[#allocation4 + $0x3c]]
    %s1830 = sshrl.u32 %s1829, 3
    %s1831 = sand.u32 %s1829, 7
    %s1832 = smul.u32 %s1830, 24
    %s1833 = sadd.s32 %s1831, %s1832
    %s1834 = smul.addr %s1833, 16
    %s1835 = scalar_lea.hbm %s1, %s1834
    %s1837 = sshll.u32 %s247, 4
    %s1838 = int_to_ptr.vmem [resolvable:$true] %s1837
    %1840 = dma.hbm_to_vmem [thread:$0]  %s1835, 48, %s1838, %s195, 128, 128, 1
    %s1841 = sld [smem:[#allocation4 + $0x3d]]
    %s1842 = sshrl.u32 %s1841, 3
    %s1843 = sand.u32 %s1841, 7
    %s1844 = smul.u32 %s1842, 24
    %s1845 = sadd.s32 %s1843, %s1844
    %s1846 = smul.addr %s1845, 16
    %s1847 = scalar_lea.hbm %s1, %s1846
    %s1849 = sshll.u32 %s260, 4
    %s1850 = int_to_ptr.vmem [resolvable:$true] %s1849
    %1852 = dma.hbm_to_vmem [thread:$0]  %s1847, 48, %s1850, %s195, 128, 128, 1
    %s1853 = sld [smem:[#allocation4 + $0x3e]]
    %s1854 = sshrl.u32 %s1853, 3
    %s1855 = sand.u32 %s1853, 7
    %s1856 = smul.u32 %s1854, 24
    %s1857 = sadd.s32 %s1855, %s1856
    %s1858 = smul.addr %s1857, 16
    %s1859 = scalar_lea.hbm %s1, %s1858
    %s1861 = sshll.u32 %s273, 4
    %s1862 = int_to_ptr.vmem [resolvable:$true] %s1861
    %1864 = dma.hbm_to_vmem [thread:$0]  %s1859, 48, %s1862, %s195, 128, 128, 1
    %s1865 = sld [smem:[#allocation4 + $0x3f]]
    %s1866 = sshrl.u32 %s1865, 3
    %s1867 = sand.u32 %s1865, 7
    %s1868 = smul.u32 %s1866, 24
    %s1869 = sadd.s32 %s1867, %s1868
    %s1870 = smul.addr %s1869, 16
    %s1871 = scalar_lea.hbm %s1, %s1870
    %s1873 = sshll.u32 %s286, 4
    %s1874 = int_to_ptr.vmem [resolvable:$true] %s1873
    %1876 = dma.hbm_to_vmem [thread:$0]  %s1871, 48, %s1874, %s195, 128, 128, 1
    %v1877 = vld [vmem:[#allocation2] sm:$0xff]
    %v1878 = vld [vmem:[#allocation2 + $0x8] sm:$0xff]
    %v1879 = vld [vmem:[#allocation2 + $0x10] sm:$0xff]
    %v1880 = vpack.c.bf16 %v1762, %v1762
    %v1881 = vld [vmem:[#allocation8] sm:$0xff]
    %v1882 = vld [vmem:[#allocation8 + $0x8] sm:$0xf]
    %v1883 = vld [vmem:[#allocation8 + $0xc] sm:$0xff]
    %v1884 = vld [vmem:[#allocation8 + $0x14] sm:$0xf]
    %v1885 = vld [vmem:[#allocation8 + $0x18] sm:$0xff]
    %v1886 = vld [vmem:[#allocation8 + $0x20] sm:$0xf]
    %v1887 = vld [vmem:[#allocation8 + $0x24] sm:$0xff]
    %v1888 = vld [vmem:[#allocation8 + $0x2c] sm:$0xf]
    %v1897 = vunpack.c.l.b16 %v1881
    %v1898 = vunpack.c.h.b16 %v1881
    %v1899 = vunpack.c.l.b16 %v1882
    %v1900 = vunpack.c.l.b16 %v1883
    %v1901 = vunpack.c.h.b16 %v1883
    %v1902 = vunpack.c.l.b16 %v1884
    %v1903 = vunpack.c.l.b16 %v1885
    %v1904 = vunpack.c.h.b16 %v1885
    %v1905 = vunpack.c.l.b16 %v1886
    %v1906 = vunpack.c.l.b16 %v1887
    %v1907 = vunpack.c.h.b16 %v1887
    %v1908 = vunpack.c.l.b16 %v1888
    %v1909 = vpack.c.b16 %v1900, %v1897
    %v1910 = vpack.c.b16 %v1901, %v1898
    %v1911 = vpack.c.b16 %v1902, %v1899
    %v1912 = vpack.c.b16 %v1906, %v1903
    %v1913 = vpack.c.b16 %v1907, %v1904
    %v1914 = vpack.c.b16 %v1908, %v1905
    %v1922 = vsel %vm336, %v1880, 0
    %1924 = vmatprep.subr.bf16.mxu0 0
    %1925 = vmatpush1.bf16.msra.mxu0 0
    %1926 = vmatprep.subr.bf16.mxu0 0
    %1927 = vmatpush1.bf16.msra.mxu0 0
    %1928 = vmatprep.subr.bf16.mxu0 0
    %1929 = vmatpush1.bf16.msra.mxu0 0
    %1930 = vmatprep.subr.bf16.mxu0 0
    %1931 = vmatpush1.bf16.msra.mxu0 0
    %1932 = vmatprep.subr.bf16.mxu0 0
    %1933 = vmatpush1.bf16.msra.mxu0 0
    %1934 = vmatprep.subr.bf16.mxu0 0
    %1935 = vmatpush1.bf16.msra.mxu0 0
    %1936 = vmatprep.subr.bf16.mxu0 %v1913
    %1937 = vmatpush1.bf16.msra.mxu0 %v1912
    %1938 = vmatprep.subr.bf16.mxu0 %v1910
    %1939 = vmatpush1.bf16.msra.mxu0 %v1909
    %1940 = vmatprep.subr.bf16.mxu0 0
    %1941 = vmatpush2.bf16.msra.mxu0 0
    %1942 = vmatprep.subr.bf16.mxu0 0
    %1943 = vmatpush2.bf16.msra.mxu0 0
    %1944 = vmatprep.subr.bf16.mxu0 0
    %1945 = vmatpush2.bf16.msra.mxu0 0
    %1946 = vmatprep.subr.bf16.mxu0 0
    %1947 = vmatpush2.bf16.msra.mxu0 0
    %1948 = vmatprep.subr.bf16.mxu0 0
    %1949 = vmatpush2.bf16.msra.mxu0 0
    %1950 = vmatprep.subr.bf16.mxu0 0
    %1951 = vmatpush2.bf16.msra.mxu0 0
    %1952 = vmatprep.subr.bf16.mxu0 0
    %1953 = vmatpush2.bf16.msra.mxu0 0
    %1954 = vmatprep.subr.bf16.mxu0 0
    %1955 = vmatpush2.bf16.msra.mxu0 0
    %1956 = vmatprep.mubr.bf16.mxu0 0
    %1957 = vmatmul.mubr.bf16.gmra.mxu0 %v1922
    %v1958 = vpop.f32.mrf.mxu0
    %v1959 = vadd.f32 0.0, %v1958
    %v1960 = vpop.f32.mrf.mxu0
    %v1961 = vadd.f32 0.0, %v1960
    %v1962 = vpop.f32.mrf.mxu0
    %v1963 = vpop.f32.mrf.mxu0
    %1964 = vdwg.mxu0
    %1965 = vmatprep.subr.bf16.mxu0 0
    %1966 = vmatpush1.bf16.msra.mxu0 0
    %1967 = vmatprep.subr.bf16.mxu0 0
    %1968 = vmatpush1.bf16.msra.mxu0 0
    %1969 = vmatprep.subr.bf16.mxu0 0
    %1970 = vmatpush1.bf16.msra.mxu0 0
    %1971 = vmatprep.subr.bf16.mxu0 0
    %1972 = vmatpush1.bf16.msra.mxu0 0
    %1973 = vmatprep.subr.bf16.mxu0 0
    %1974 = vmatpush1.bf16.msra.mxu0 0
    %1975 = vmatprep.subr.bf16.mxu0 0
    %1976 = vmatpush1.bf16.msra.mxu0 0
    %1977 = vmatprep.subr.bf16.mxu0 0
    %1978 = vmatpush1.bf16.msra.mxu0 %v1914
    %1979 = vmatprep.subr.bf16.mxu0 0
    %1980 = vmatpush1.bf16.msra.mxu0 %v1911
    %1981 = vmatprep.subr.bf16.mxu0 0
    %1982 = vmatpush2.bf16.msra.mxu0 0
    %1983 = vmatprep.subr.bf16.mxu0 0
    %1984 = vmatpush2.bf16.msra.mxu0 0
    %1985 = vmatprep.subr.bf16.mxu0 0
    %1986 = vmatpush2.bf16.msra.mxu0 0
    %1987 = vmatprep.subr.bf16.mxu0 0
    %1988 = vmatpush2.bf16.msra.mxu0 0
    %1989 = vmatprep.subr.bf16.mxu0 0
    %1990 = vmatpush2.bf16.msra.mxu0 0
    %1991 = vmatprep.subr.bf16.mxu0 0
    %1992 = vmatpush2.bf16.msra.mxu0 0
    %1993 = vmatprep.subr.bf16.mxu0 0
    %1994 = vmatpush2.bf16.msra.mxu0 0
    %1995 = vmatprep.subr.bf16.mxu0 0
    %1996 = vmatpush2.bf16.msra.mxu0 0
    %1997 = vmatprep.mubr.bf16.mxu0 0
    %1998 = vmatmul.mubr.bf16.gmra.mxu0 %v1922
    %v1999 = vpop.f32.mrf.mxu0
    %v2000 = vadd.f32 0.0, %v1999
    %v2001 = vpop.f32.mrf.mxu0
    %v2002 = vpop.f32.mrf.mxu0
    %v2003 = vpop.f32.mrf.mxu0
    %2004 = vdwg.mxu0
    %v2005 = vadd.f32 %v1877, %v1959
    %v2006 = vxor.u32 %v2005, 2147483648
    %v2007 = vmul.f32 %v2006, 1.442695
    %v2008 = vpow.pop %v2007
    %v2009 = vadd.f32 %v2008, 1.0
    %v2010 = vrcp.pop %v2009
    %v2011 = vmul.f32 1.0, %v2010
    %v2012 = vadd.f32 %v1878, %v1961
    %v2013 = vxor.u32 %v2012, 2147483648
    %v2014 = vmul.f32 %v2013, 1.442695
    %v2015 = vpow.pop %v2014
    %v2016 = vadd.f32 %v2015, 1.0
    %v2017 = vrcp.pop %v2016
    %v2018 = vmul.f32 1.0, %v2017
    %v2019 = vadd.f32 %v2000, %v168
    %v2020 = vmul.f32 %v2011, %v2019
    %v2021 = vadd.f32 %v1879, %v2020
    %v2022 = vtanh.pop %v2021
    %v2023 = vsub.f32 1.0, %v2018
    %v2024 = vmul.f32 %v2023, %v2022
    %v2025 = vmul.f32 %v2018, %v1762
    %v2026 = vadd.f32 %v2024, %v2025
    %s2027 = scalar_lea.vmem [#allocation11], 48
    %2028 = vst [vmem:[%s2027] sm:$0xff] %v2026
    %2030 = dma.done %s195, 48
    %2032 = dma.done %s195, 48
    %2034 = dma.done %s195, 48
    %2036 = dma.done %s195, 48
    %2038 = dma.done %s195, 48
    %2040 = dma.done %s195, 48
    %2042 = dma.done %s195, 48
    %2044 = dma.done %s195, 48
    %v2045 = vld [vmem:[%s556] sm:$0xff]
    %v2046 = vld [vmem:[%s556 + $0x8] sm:$0xff]
    %v2047 = vld [vmem:[%s556 + $0x10] sm:$0xff]
    %v2048 = vpack.c.bf16 %v2026, %v2026
    %v2049 = vld [vmem:[#allocation8] sm:$0xff]
    %v2050 = vld [vmem:[#allocation8 + $0x8] sm:$0xf]
    %v2051 = vld [vmem:[#allocation8 + $0xc] sm:$0xff]
    %v2052 = vld [vmem:[#allocation8 + $0x14] sm:$0xf]
    %v2053 = vld [vmem:[#allocation8 + $0x18] sm:$0xff]
    %v2054 = vld [vmem:[#allocation8 + $0x20] sm:$0xf]
    %v2055 = vld [vmem:[#allocation8 + $0x24] sm:$0xff]
    %v2056 = vld [vmem:[#allocation8 + $0x2c] sm:$0xf]
    %v2065 = vunpack.c.l.b16 %v2049
    %v2066 = vunpack.c.h.b16 %v2049
    %v2067 = vunpack.c.l.b16 %v2050
    %v2068 = vunpack.c.l.b16 %v2051
    %v2069 = vunpack.c.h.b16 %v2051
    %v2070 = vunpack.c.l.b16 %v2052
    %v2071 = vunpack.c.l.b16 %v2053
    %v2072 = vunpack.c.h.b16 %v2053
    %v2073 = vunpack.c.l.b16 %v2054
    %v2074 = vunpack.c.l.b16 %v2055
    %v2075 = vunpack.c.h.b16 %v2055
    %v2076 = vunpack.c.l.b16 %v2056
    %v2077 = vpack.c.b16 %v2068, %v2065
    %v2078 = vpack.c.b16 %v2069, %v2066
    %v2079 = vpack.c.b16 %v2070, %v2067
    %v2080 = vpack.c.b16 %v2074, %v2071
    %v2081 = vpack.c.b16 %v2075, %v2072
    %v2082 = vpack.c.b16 %v2076, %v2073
    %v2090 = vsel %vm336, %v2048, 0
    %2092 = vmatprep.subr.bf16.mxu0 0
    %2093 = vmatpush1.bf16.msra.mxu0 0
    %2094 = vmatprep.subr.bf16.mxu0 0
    %2095 = vmatpush1.bf16.msra.mxu0 0
    %2096 = vmatprep.subr.bf16.mxu0 0
    %2097 = vmatpush1.bf16.msra.mxu0 0
    %2098 = vmatprep.subr.bf16.mxu0 0
    %2099 = vmatpush1.bf16.msra.mxu0 0
    %2100 = vmatprep.subr.bf16.mxu0 0
    %2101 = vmatpush1.bf16.msra.mxu0 0
    %2102 = vmatprep.subr.bf16.mxu0 0
    %2103 = vmatpush1.bf16.msra.mxu0 0
    %2104 = vmatprep.subr.bf16.mxu0 %v2081
    %2105 = vmatpush1.bf16.msra.mxu0 %v2080
    %2106 = vmatprep.subr.bf16.mxu0 %v2078
    %2107 = vmatpush1.bf16.msra.mxu0 %v2077
    %2108 = vmatprep.subr.bf16.mxu0 0
    %2109 = vmatpush2.bf16.msra.mxu0 0
    %2110 = vmatprep.subr.bf16.mxu0 0
    %2111 = vmatpush2.bf16.msra.mxu0 0
    %2112 = vmatprep.subr.bf16.mxu0 0
    %2113 = vmatpush2.bf16.msra.mxu0 0
    %2114 = vmatprep.subr.bf16.mxu0 0
    %2115 = vmatpush2.bf16.msra.mxu0 0
    %2116 = vmatprep.subr.bf16.mxu0 0
    %2117 = vmatpush2.bf16.msra.mxu0 0
    %2118 = vmatprep.subr.bf16.mxu0 0
    %2119 = vmatpush2.bf16.msra.mxu0 0
    %2120 = vmatprep.subr.bf16.mxu0 0
    %2121 = vmatpush2.bf16.msra.mxu0 0
    %2122 = vmatprep.subr.bf16.mxu0 0
    %2123 = vmatpush2.bf16.msra.mxu0 0
    %2124 = vmatprep.mubr.bf16.mxu0 0
    %2125 = vmatmul.mubr.bf16.gmra.mxu0 %v2090
    %v2126 = vpop.f32.mrf.mxu0
    %v2127 = vadd.f32 0.0, %v2126
    %v2128 = vpop.f32.mrf.mxu0
    %v2129 = vadd.f32 0.0, %v2128
    %v2130 = vpop.f32.mrf.mxu0
    %v2131 = vpop.f32.mrf.mxu0
    %2132 = vdwg.mxu0
    %2133 = vmatprep.subr.bf16.mxu0 0
    %2134 = vmatpush1.bf16.msra.mxu0 0
    %2135 = vmatprep.subr.bf16.mxu0 0
    %2136 = vmatpush1.bf16.msra.mxu0 0
    %2137 = vmatprep.subr.bf16.mxu0 0
    %2138 = vmatpush1.bf16.msra.mxu0 0
    %2139 = vmatprep.subr.bf16.mxu0 0
    %2140 = vmatpush1.bf16.msra.mxu0 0
    %2141 = vmatprep.subr.bf16.mxu0 0
    %2142 = vmatpush1.bf16.msra.mxu0 0
    %2143 = vmatprep.subr.bf16.mxu0 0
    %2144 = vmatpush1.bf16.msra.mxu0 0
    %2145 = vmatprep.subr.bf16.mxu0 0
    %2146 = vmatpush1.bf16.msra.mxu0 %v2082
    %2147 = vmatprep.subr.bf16.mxu0 0
    %2148 = vmatpush1.bf16.msra.mxu0 %v2079
    %2149 = vmatprep.subr.bf16.mxu0 0
    %2150 = vmatpush2.bf16.msra.mxu0 0
    %2151 = vmatprep.subr.bf16.mxu0 0
    %2152 = vmatpush2.bf16.msra.mxu0 0
    %2153 = vmatprep.subr.bf16.mxu0 0
    %2154 = vmatpush2.bf16.msra.mxu0 0
    %2155 = vmatprep.subr.bf16.mxu0 0
    %2156 = vmatpush2.bf16.msra.mxu0 0
    %2157 = vmatprep.subr.bf16.mxu0 0
    %2158 = vmatpush2.bf16.msra.mxu0 0
    %2159 = vmatprep.subr.bf16.mxu0 0
    %2160 = vmatpush2.bf16.msra.mxu0 0
    %2161 = vmatprep.subr.bf16.mxu0 0
    %2162 = vmatpush2.bf16.msra.mxu0 0
    %2163 = vmatprep.subr.bf16.mxu0 0
    %2164 = vmatpush2.bf16.msra.mxu0 0
    %2165 = vmatprep.mubr.bf16.mxu0 0
    %2166 = vmatmul.mubr.bf16.gmra.mxu0 %v2090
    %v2167 = vpop.f32.mrf.mxu0
    %v2168 = vadd.f32 0.0, %v2167
    %v2169 = vpop.f32.mrf.mxu0
    %v2170 = vpop.f32.mrf.mxu0
    %v2171 = vpop.f32.mrf.mxu0
    %2172 = vdwg.mxu0
    %v2173 = vadd.f32 %v2045, %v2127
    %v2174 = vxor.u32 %v2173, 2147483648
    %v2175 = vmul.f32 %v2174, 1.442695
    %v2176 = vpow.pop %v2175
    %v2177 = vadd.f32 %v2176, 1.0
    %v2178 = vrcp.pop %v2177
    %v2179 = vmul.f32 1.0, %v2178
    %v2180 = vadd.f32 %v2046, %v2129
    %v2181 = vxor.u32 %v2180, 2147483648
    %v2182 = vmul.f32 %v2181, 1.442695
    %v2183 = vpow.pop %v2182
    %v2184 = vadd.f32 %v2183, 1.0
    %v2185 = vrcp.pop %v2184
    %v2186 = vmul.f32 1.0, %v2185
    %v2187 = vadd.f32 %v2168, %v168
    %v2188 = vmul.f32 %v2179, %v2187
    %v2189 = vadd.f32 %v2047, %v2188
    %v2190 = vtanh.pop %v2189
    %v2191 = vsub.f32 1.0, %v2186
    %v2192 = vmul.f32 %v2191, %v2190
    %v2193 = vmul.f32 %v2186, %v2026
    %v2194 = vadd.f32 %v2192, %v2193
    %s2195 = scalar_lea.vmem [#allocation11], 56
    %2196 = vst [vmem:[%s2195] sm:$0xff] %v2194
    %2197 = vst [vmem:[#allocation12] sm:$0xff] %v2194
    // Predicated region
    $region30: #{tpu_custom_call.1} parent=1 // pred_check
      _
    $region31: #{tpu_custom_call.1} parent=1 // pred_check_branch
      %2199 = sbr.rel (0) target = $region33
    $region32: #{tpu_custom_call.1} parent=1 // pred_region
      %s2201 = ssub.s32 1024, 1024
      %2202 = vsyncadd [#allocation6], %s2201
      %s2203 = sshll.u32 [#allocation11], 4
      %s2204 = int_to_ptr.vmem [resolvable:$true] %s2203
      %2209 = dma.vmem_to_hbm [thread:$0]  %s2204, 1024, %s5, [#allocation6], 128, 128, 8
    $region33: #{tpu_custom_call.1} parent=1 // pred_fallthru
      _
    // Predicated region
    $region34: #{tpu_custom_call.1} parent=1 // pred_check
      _
    $region35: #{tpu_custom_call.1} parent=1 // pred_check_branch
      %2211 = sbr.rel (0) target = $region37
    $region36: #{tpu_custom_call.1} parent=1 // pred_region
      %s2213 = ssub.s32 128, 128
      %2214 = vsyncadd [#allocation13], %s2213
      %s2216 = sshll.u32 [#allocation12], 4
      %s2217 = int_to_ptr.vmem [resolvable:$true] %s2216
      %2219 = dma.vmem_to_hbm [thread:$0]  %s2217, 128, %s6, [#allocation13]
    $region37: #{tpu_custom_call.1} parent=1 // pred_fallthru
      _
    // Predicated region
    $region38: #{tpu_custom_call.1} parent=1 // pred_check
      _
    $region39: #{tpu_custom_call.1} parent=1 // pred_check_branch
      %2221 = sbr.rel (0) target = $region41
    $region40: #{tpu_custom_call.1} parent=1 // pred_region
      %2222 = dma.done [#allocation6], 1024
    $region41: #{tpu_custom_call.1} parent=1 // pred_fallthru
      _
    // Predicated region
    $region42: #{tpu_custom_call.1} parent=1 // pred_check
      _
    $region43: #{tpu_custom_call.1} parent=1 // pred_check_branch
      %2224 = sbr.rel (0) target = $region45
    $region44: #{tpu_custom_call.1} parent=1 // pred_region
      %2225 = dma.done [#allocation13], 128
    $region45: #{tpu_custom_call.1} parent=1 // pred_fallthru
      _
    %2226 = vsyncpa [#allocation5], 1
    %2227 = vsyncpa [#allocation10], 1
    %2228 = vsyncpa [#allocation6], 1
    %2229 = vsyncpa [#allocation13], 1
    %2230 = vsyncpa [#allocation7], 1
  %2231 = vsyncmov [#allocation3]
  %s2232 = vpop.sfrf %2231
  %p2233 = scmp.eq.s32.totalorder %s2232, 0
  %p2234 = pneg %p2233
  %2236 = shalt.err (%p2234)
  %s2237 = scalar_lea.sflag [#allocation3], 1
  %2238 = vsyncmov %s2237
  %s2239 = vpop.sfrf %2238
  %p2240 = scmp.eq.s32.totalorder %s2239, 0
  %p2241 = pneg %p2240
  %2243 = shalt.err (%p2241)

</llo_original>
